<compile_context>
chip_gen: v7x
topology: tpu7x:2x2x1
jax: 0.10.0
libtpu: 0.0.40
codegen_flags: <defaults>
</compile_context>

<pallas_src>
import numpy as np
import jax
import jax.numpy as jnp
from jax.experimental import pallas as pl
from jax.experimental.pallas import tpu as pltpu


# ----- synthetic `config` (mirrors the PyTorch config object, small sizes) -----
class config:
    kernel_size = 5
    padding = 2
    stride = 2
    fc_input = 4                          # spatial size right after the FC reshape
    decoder_channels = [16, 8, 4, 3]      # [size, c1, c2, image_channels]
    output_pad_dec = [True, True, True]   # output_padding=1 on every decoder block


Z_SIZE = 16
SIZE = 16      # `size` argument of Decoder
BATCH = 2
BN_EPS = 1e-5
K = config.kernel_size  # 5


# ============================ in-kernel helpers ============================

def _fc_head(zt, a_ref, s_ref, p_ref, g_ref, b_ref):
    """Linear(bias=False) + BatchNorm1d(batch stats) + ReLU, emitted directly in the
    (C*H, W*B) conv layout.  zt is the transposed latent (z_size, B)."""
    x = None
    for ww in range(config.fc_input):
        t = jnp.dot(a_ref[ww], zt, preferred_element_type=jnp.float32)     # (C*H, B)
        t = jnp.dot(t, s_ref[ww], preferred_element_type=jnp.float32)      # place at (ww, b) lanes
        x = t if x is None else x + t
    # BN1d: per feature = per (row, ww lane-group); batch lives on b within the group.
    mu = jnp.dot(x, p_ref[...], preferred_element_type=jnp.float32)
    ex2 = jnp.dot(x * x, p_ref[...], preferred_element_type=jnp.float32)
    var = jnp.maximum(ex2 - mu * mu, 0.0)
    x = (x - mu) * jax.lax.rsqrt(var + BN_EPS)
    return jnp.maximum(x * g_ref[...] + b_ref[...], 0.0)


def _conv_lr(x, l_ref, r_ref):
    """Conv / transposed conv factored as sum_kw  L_kw @ X @ R_kw  (f32 accumulate)."""
    acc = None
    for kw in range(K):
        t = jnp.dot(l_ref[kw], x, preferred_element_type=jnp.float32)
        t = jnp.dot(t, r_ref[kw], preferred_element_type=jnp.float32)
        acc = t if acc is None else acc + t
    return acc


def _bn2d_relu(y, g_ref, gt_ref, gamma_ref, beta_ref, count):
    """BatchNorm2d (training-mode batch stats, biased variance) + ReLU on the
    (Cout*H, W*B) layout.  Per-channel stats via tiny G / G^T aggregation matmuls."""
    rs = jnp.sum(y, axis=1, keepdims=True)                                  # (C*H, 1)
    rs2 = jnp.sum(y * y, axis=1, keepdims=True)
    s1 = jnp.dot(g_ref[...], rs, preferred_element_type=jnp.float32)        # (C, 1)
    s2 = jnp.dot(g_ref[...], rs2, preferred_element_type=jnp.float32)
    inv = 1.0 / count
    mean = s1 * inv
    var = jnp.maximum(s2 * inv - mean * mean, 0.0)                          # clamp (review)
    scale = gamma_ref[...] * jax.lax.rsqrt(var + BN_EPS)
    shift = beta_ref[...] - mean * scale
    scale_r = jnp.dot(gt_ref[...], scale, preferred_element_type=jnp.float32)   # (C*H, 1)
    shift_r = jnp.dot(gt_ref[...], shift, preferred_element_type=jnp.float32)
    return jnp.maximum(y * scale_r + shift_r, 0.0)


# ============================ fused Pallas kernel ============================

def _decoder_kernel(zt_ref,
                    fa_ref, fs_ref, fp_ref, fg_ref, fb_ref,
                    l0_ref, r0_ref, g0_ref, t0_ref, ga0_ref, be0_ref,
                    l1_ref, r1_ref, g1_ref, t1_ref, ga1_ref, be1_ref,
                    l2_ref, r2_ref, g2_ref, t2_ref, ga2_ref, be2_ref,
                    lo_ref, ro_ref, bo_ref,
                    out_ref):
    B = BATCH
    f = config.fc_input
    # FC head -> (16*4, 4*B) activation in conv layout.
    x = _fc_head(zt_ref[...], fa_ref, fs_ref, fp_ref, fg_ref, fb_ref)
    # Three ConvTranspose2d(k=5, s=2, p=2, op=1) + BN2d + ReLU blocks.
    x = _bn2d_relu(_conv_lr(x, l0_ref, r0_ref), g0_ref, t0_ref, ga0_ref, be0_ref,
                   float((2 * f) * (2 * f) * B))
    x = _bn2d_relu(_conv_lr(x, l1_ref, r1_ref), g1_ref, t1_ref, ga1_ref, be1_ref,
                   float((4 * f) * (4 * f) * B))
    x = _bn2d_relu(_conv_lr(x, l2_ref, r2_ref), g2_ref, t2_ref, ga2_ref, be2_ref,
                   float((8 * f) * (8 * f) * B))
    # Final Conv2d(k=5, s=1, p=2) + bias + Tanh.
    y = _conv_lr(x, lo_ref, ro_ref)
    out_ref[...] = jnp.tanh(y + bo_ref[...])


# ============================ pallas_call wrapper ============================

def decoder_forward(z, prep):
    Bv = z.shape[0]
    f = config.fc_input
    Hc = 8 * f                                   # final spatial size (32)
    c_img = config.decoder_channels[3]
    args = [z.T,
            prep["fc_A"], prep["fc_S"], prep["fc_P"], prep["fc_gamma"], prep["fc_beta"]]
    for li in range(3):
        args += [prep[f"dec{li}_L"], prep[f"dec{li}_R"], prep[f"dec{li}_G"],
                 prep[f"dec{li}_GT"], prep[f"dec{li}_gamma"], prep[f"dec{li}_beta"]]
    args += [prep["out_L"], prep["out_R"], prep["out_bias"]]

    vmem = pl.BlockSpec(memory_space=pltpu.MemorySpace.VMEM)   # full array, no pipeline
    y = pl.pallas_call(
        _decoder_kernel,
        out_shape=jax.ShapeDtypeStruct((c_img * Hc, Hc * Bv), jnp.float32),
        in_specs=[vmem] * len(args),
        out_specs=vmem,
    )(*args)
    # (c, h, w, b) -> NCHW: tiny XLA reshape/transpose on the 24 KB output.
    return jnp.transpose(y.reshape(c_img, Hc, Hc, Bv), (3, 0, 1, 2))


# ============================ host-side weight prep ============================

def prepare_params(p):
    """One-time host-side reformat of PyTorch-layout weights into matmul-ready form."""
    assert all(config.output_pad_dec)     # geometry below assumes output_padding=1
    B = BATCH
    fin = config.fc_input
    prep = {}

    # ---- FC head: Linear weight rows reordered to the (c, h, w) layout.
    Wfc = np.asarray(p["fc_w"], np.float32)                     # (256, z_size)
    g = np.asarray(p["fc_gamma"], np.float32)
    be = np.asarray(p["fc_beta"], np.float32)
    A = np.zeros((fin, SIZE * fin, Z_SIZE), np.float32)          # (ww, (c,h), k)
    gL = np.zeros((SIZE * fin, fin * B), np.float32)
    bL = np.zeros((SIZE * fin, fin * B), np.float32)
    for c in range(SIZE):
        for hh in range(fin):
            for ww in range(fin):
                feat = c * (fin * fin) + hh * fin + ww
                A[ww, c * fin + hh, :] = Wfc[feat, :]
                gL[c * fin + hh, ww * B:(ww + 1) * B] = g[feat]
                bL[c * fin + hh, ww * B:(ww + 1) * B] = be[feat]
    S = np.zeros((fin, B, fin * B), np.float32)                  # lane placement per ww
    for ww in range(fin):
        for b in range(B):
            S[ww, b, ww * B + b] = 1.0
    P = np.zeros((fin * B, fin * B), np.float32)                 # mean-over-batch within ww group
    for ww in range(fin):
        P[ww * B:(ww + 1) * B, ww * B:(ww + 1) * B] = 1.0 / B
    prep["fc_A"] = jnp.asarray(A)
    prep["fc_S"] = jnp.asarray(S)
    prep["fc_P"] = jnp.asarray(P)
    prep["fc_gamma"] = jnp.asarray(gL)
    prep["fc_beta"] = jnp.asarray(bL)

    # ---- decoder blocks: ConvTranspose2d(k=5, s=2, p=2, output_padding=1, bias=False)
    #      out[co,h',w'] += x[ci,u,v] * Wt[ci,co,kh,kw]  with  h' = 2u-2+kh, w' = 2v-2+kw
    res = [fin, 2 * fin, 4 * fin]
    for li in range(3):
        Wt = np.asarray(p[f"dec{li}_w"], np.float32)             # (Cin, Cout, 5, 5)
        Cin, Cout = Wt.shape[0], Wt.shape[1]
        Hi = res[li]
        Ho = 2 * Hi
        L = np.zeros((K, Cout * Ho, Cin * Hi), np.float32)
        co_idx = np.arange(Cout)[:, None] * Ho
        ci_idx = np.arange(Cin)[None, :] * Hi
        for kw in range(K):
            for u in range(Hi):
                for kh in range(K):
                    hp = 2 * u - config.padding + kh
                    if 0 <= hp < Ho:
                        L[kw, hp + co_idx, u + ci_idx] = Wt[:, :, kh, kw].T
        R = np.zeros((K, Hi * B, Ho * B), np.float32)
        for kw in range(K):
            for v in range(Hi):
                wp = 2 * v - config.padding + kw
                if 0 <= wp < Ho:
                    for b in range(B):
                        R[kw, v * B + b, wp * B + b] = 1.0
        G = np.zeros((Cout, Cout * Ho), np.float32)
        for co in range(Cout):
            G[co, co * Ho:(co + 1) * Ho] = 1.0
        prep[f"dec{li}_L"] = jnp.asarray(L)
        prep[f"dec{li}_R"] = jnp.asarray(R)
        prep[f"dec{li}_G"] = jnp.asarray(G)
        prep[f"dec{li}_GT"] = jnp.asarray(G.T.copy())
        prep[f"dec{li}_gamma"] = jnp.asarray(
            np.asarray(p[f"dec{li}_gamma"], np.float32).reshape(-1, 1))
        prep[f"dec{li}_beta"] = jnp.asarray(
            np.asarray(p[f"dec{li}_beta"], np.float32).reshape(-1, 1))

    # ---- final Conv2d(k=5, s=1, p=2) + bias:
    #      out[co,h',w'] = sum Wc[co,ci,kh,kw] * x[ci, h'+kh-2, w'+kw-2] + bias[co]
    Wc = np.asarray(p["out_w"], np.float32)                      # (Cout, Cin, 5, 5)
    Co, Ci = Wc.shape[0], Wc.shape[1]
    Hc = 8 * fin
    Lo = np.zeros((K, Co * Hc, Ci * Hc), np.float32)
    co_idx = np.arange(Co)[:, None] * Hc
    ci_idx = np.arange(Ci)[None, :] * Hc
    for kw in range(K):
        for hp in range(Hc):
            for kh in range(K):
                u = hp + kh - config.padding
                if 0 <= u < Hc:
                    Lo[kw, hp + co_idx, u + ci_idx] = Wc[:, :, kh, kw]
    Ro = np.zeros((K, Hc * B, Hc * B), np.float32)
    for kw in range(K):
        for wp in range(Hc):
            v = wp + kw - config.padding
            if 0 <= v < Hc:
                for b in range(B):
                    Ro[kw, v * B + b, wp * B + b] = 1.0
    prep["out_L"] = jnp.asarray(Lo)
    prep["out_R"] = jnp.asarray(Ro)
    prep["out_bias"] = jnp.asarray(
        np.repeat(np.asarray(p["out_b"], np.float32), Hc).reshape(-1, 1))
    return prep


# ============================ params / reference ============================

def init_params(key):
    F = config.fc_input * config.fc_input * SIZE
    keys = jax.random.split(key, 16)
    p = {}
    p["fc_w"] = 0.1 * jax.random.normal(keys[0], (F, Z_SIZE), jnp.float32)
    p["fc_gamma"] = 1.0 + 0.1 * jax.random.normal(keys[1], (F,), jnp.float32)
    p["fc_beta"] = 0.1 * jax.random.normal(keys[2], (F,), jnp.float32)
    block_io = [(SIZE, SIZE),
                (SIZE, config.decoder_channels[1]),
                (config.decoder_channels[1], config.decoder_channels[2])]
    k = 3
    for li, (cin, cout) in enumerate(block_io):
        p[f"dec{li}_w"] = 0.1 * jax.random.normal(
            keys[k], (cin, cout, config.kernel_size, config.kernel_size), jnp.float32)
        k += 1
        p[f"dec{li}_gamma"] = 1.0 + 0.1 * jax.random.normal(keys[k], (cout,), jnp.float32)
        k += 1
        p[f"dec{li}_beta"] = 0.1 * jax.random.normal(keys[k], (cout,), jnp.float32)
        k += 1
    p["out_w"] = 0.1 * jax.random.normal(
        keys[k], (config.decoder_channels[3], config.decoder_channels[2], 5, 5),
        jnp.float32)
    k += 1
    p["out_b"] = 0.1 * jax.random.normal(keys[k], (config.decoder_channels[3],),
                                         jnp.float32)
    return p


def decoder_reference(z, params):
    """Pure-XLA reference with identical semantics (for validating the kernel)."""
    hp = jax.lax.Precision.HIGHEST
    h = jnp.dot(z, params["fc_w"].T, precision=hp)
    mean = h.mean(0, keepdims=True)
    var = ((h - mean) ** 2).mean(0, keepdims=True)
    h = (h - mean) * jax.lax.rsqrt(var + BN_EPS) * params["fc_gamma"] + params["fc_beta"]
    x = jnp.maximum(h, 0.0).reshape(z.shape[0], SIZE, config.fc_input, config.fc_input)
    for li in range(3):
        w_t = params[f"dec{li}_w"]
        w_eq = jnp.transpose(w_t[:, :, ::-1, ::-1], (1, 0, 2, 3))
        lo = K - 1 - config.padding
        hi = lo + (1 if config.output_pad_dec[li] else 0)
        x = jax.lax.conv_general_dilated(
            x, w_eq, (1, 1), [(lo, hi), (lo, hi)],
            lhs_dilation=(config.stride, config.stride),
            dimension_numbers=("NCHW", "OIHW", "NCHW"), precision=hp)
        mean = x.mean((0, 2, 3), keepdims=True)
        var = ((x - mean) ** 2).mean((0, 2, 3), keepdims=True)
        g = params[f"dec{li}_gamma"].reshape(1, -1, 1, 1)
        b = params[f"dec{li}_beta"].reshape(1, -1, 1, 1)
        x = jnp.maximum((x - mean) * jax.lax.rsqrt(var + BN_EPS) * g + b, 0.0)
    x = jax.lax.conv_general_dilated(
        x, params["out_w"], (1, 1), [(2, 2), (2, 2)],
        dimension_numbers=("NCHW", "OIHW", "NCHW"), precision=hp)
    return jnp.tanh(x + params["out_b"].reshape(1, -1, 1, 1))


# TODO(synk): BatchNorm running-stat (momentum=0.9) buffer updates are a training-time
# side effect and are not materialized; normalization uses batch statistics as in
# PyTorch training mode.

if __name__ == "__main__":
    key = jax.random.PRNGKey(0)
    pkey, zkey = jax.random.split(key)
    params = init_params(pkey)
    prep = prepare_params(params)          # host-side, once, outside the jitted hot path
    z = jax.random.normal(zkey, (BATCH, Z_SIZE), jnp.float32)

    out = jax.block_until_ready(jax.jit(decoder_forward)(z, prep))

    expected_spatial = config.fc_input * (2 ** 3)   # three stride-2 upsamples
    assert out.shape == (BATCH, config.decoder_channels[3],
                         expected_spatial, expected_spatial), out.shape
    assert bool(jnp.all(jnp.isfinite(out)))
    assert bool(jnp.all(jnp.abs(out) <= 1.0 + 1e-5))   # tanh output range

    ref = jax.block_until_ready(jax.jit(decoder_reference)(z, params))
    max_err = float(jnp.max(jnp.abs(out - ref)))
    assert max_err < 3e-2, max_err

    print("KERNEL_OK")
</pallas_src>

<mosaic_0001>
module attributes {stable_mosaic.version = 11 : i64} {
  func.func @_decoder_kernel(%arg0: memref<16x2xf32, #tpu.memory_space<vmem>>, %arg1: memref<4x64x16xf32, #tpu.memory_space<vmem>>, %arg2: memref<4x2x8xf32, #tpu.memory_space<vmem>>, %arg3: memref<8x8xf32, #tpu.memory_space<vmem>>, %arg4: memref<64x8xf32, #tpu.memory_space<vmem>>, %arg5: memref<64x8xf32, #tpu.memory_space<vmem>>, %arg6: memref<5x128x64xf32, #tpu.memory_space<vmem>>, %arg7: memref<5x8x16xf32, #tpu.memory_space<vmem>>, %arg8: memref<16x128xf32, #tpu.memory_space<vmem>>, %arg9: memref<128x16xf32, #tpu.memory_space<vmem>>, %arg10: memref<16x1xf32, #tpu.memory_space<vmem>>, %arg11: memref<16x1xf32, #tpu.memory_space<vmem>>, %arg12: memref<5x128x128xf32, #tpu.memory_space<vmem>>, %arg13: memref<5x16x32xf32, #tpu.memory_space<vmem>>, %arg14: memref<8x128xf32, #tpu.memory_space<vmem>>, %arg15: memref<128x8xf32, #tpu.memory_space<vmem>>, %arg16: memref<8x1xf32, #tpu.memory_space<vmem>>, %arg17: memref<8x1xf32, #tpu.memory_space<vmem>>, %arg18: memref<5x128x128xf32, #tpu.memory_space<vmem>>, %arg19: memref<5x32x64xf32, #tpu.memory_space<vmem>>, %arg20: memref<4x128xf32, #tpu.memory_space<vmem>>, %arg21: memref<128x4xf32, #tpu.memory_space<vmem>>, %arg22: memref<4x1xf32, #tpu.memory_space<vmem>>, %arg23: memref<4x1xf32, #tpu.memory_space<vmem>>, %arg24: memref<5x96x128xf32, #tpu.memory_space<vmem>>, %arg25: memref<5x64x64xf32, #tpu.memory_space<vmem>>, %arg26: memref<96x1xf32, #tpu.memory_space<vmem>>, %arg27: memref<96x64xf32, #tpu.memory_space<vmem>>) attributes {dimension_semantics = [], scalar_prefetch = 0 : i64, scratch_operands = 0 : i64, tpu.core_type = #tpu.core_type<tc>} {
    %c0 = arith.constant 0 : index
    %c0_0 = arith.constant 0 : index
    %0 = vector.load %arg0[%c0, %c0_0] : memref<16x2xf32, #tpu.memory_space<vmem>>, vector<16x2xf32>
    %c0_1 = arith.constant 0 : index
    %c0_2 = arith.constant 0 : index
    %c0_3 = arith.constant 0 : index
    %1 = vector.load %arg1[%c0_1, %c0_2, %c0_3] : memref<4x64x16xf32, #tpu.memory_space<vmem>>, vector<1x64x16xf32>
    %2 = vector.shape_cast %1 : vector<1x64x16xf32> to vector<64x16xf32>
    %cst = arith.constant dense<0.000000e+00> : vector<64x2xf32>
    %3 = tpu.matmul %2, %0, %cst {dimension_numbers = #tpu.dot_dimension_numbers<[1], [0], [0], [1], [0, 0, 1, 1], [], []>} : vector<64x16xf32>, vector<16x2xf32>, vector<64x2xf32> -> vector<64x2xf32>
    %c0_4 = arith.constant 0 : index
    %c0_5 = arith.constant 0 : index
    %c0_6 = arith.constant 0 : index
    %4 = vector.load %arg2[%c0_4, %c0_5, %c0_6] : memref<4x2x8xf32, #tpu.memory_space<vmem>>, vector<1x2x8xf32>
    %5 = vector.shape_cast %4 : vector<1x2x8xf32> to vector<2x8xf32>
    %cst_7 = arith.constant dense<0.000000e+00> : vector<64x8xf32>
    %6 = tpu.matmul %3, %5, %cst_7 {dimension_numbers = #tpu.dot_dimension_numbers<[1], [0], [0], [1], [0, 0, 1, 1], [], []>} : vector<64x2xf32>, vector<2x8xf32>, vector<64x8xf32> -> vector<64x8xf32>
    %c1 = arith.constant 1 : index
    %c0_8 = arith.constant 0 : index
    %c0_9 = arith.constant 0 : index
    %7 = vector.load %arg1[%c1, %c0_8, %c0_9] : memref<4x64x16xf32, #tpu.memory_space<vmem>>, vector<1x64x16xf32>
    %8 = vector.shape_cast %7 : vector<1x64x16xf32> to vector<64x16xf32>
    %cst_10 = arith.constant dense<0.000000e+00> : vector<64x2xf32>
    %9 = tpu.matmul %8, %0, %cst_10 {dimension_numbers = #tpu.dot_dimension_numbers<[1], [0], [0], [1], [0, 0, 1, 1], [], []>} : vector<64x16xf32>, vector<16x2xf32>, vector<64x2xf32> -> vector<64x2xf32>
    %c1_11 = arith.constant 1 : index
    %c0_12 = arith.constant 0 : index
    %c0_13 = arith.constant 0 : index
    %10 = vector.load %arg2[%c1_11, %c0_12, %c0_13] : memref<4x2x8xf32, #tpu.memory_space<vmem>>, vector<1x2x8xf32>
    %11 = vector.shape_cast %10 : vector<1x2x8xf32> to vector<2x8xf32>
    %cst_14 = arith.constant dense<0.000000e+00> : vector<64x8xf32>
    %12 = tpu.matmul %9, %11, %cst_14 {dimension_numbers = #tpu.dot_dimension_numbers<[1], [0], [0], [1], [0, 0, 1, 1], [], []>} : vector<64x2xf32>, vector<2x8xf32>, vector<64x8xf32> -> vector<64x8xf32>
    %13 = arith.addf %6, %12 : vector<64x8xf32>
    %c2 = arith.constant 2 : index
    %c0_15 = arith.constant 0 : index
    %c0_16 = arith.constant 0 : index
    %14 = vector.load %arg1[%c2, %c0_15, %c0_16] : memref<4x64x16xf32, #tpu.memory_space<vmem>>, vector<1x64x16xf32>
    %15 = vector.shape_cast %14 : vector<1x64x16xf32> to vector<64x16xf32>
    %cst_17 = arith.constant dense<0.000000e+00> : vector<64x2xf32>
    %16 = tpu.matmul %15, %0, %cst_17 {dimension_numbers = #tpu.dot_dimension_numbers<[1], [0], [0], [1], [0, 0, 1, 1], [], []>} : vector<64x16xf32>, vector<16x2xf32>, vector<64x2xf32> -> vector<64x2xf32>
    %c2_18 = arith.constant 2 : index
    %c0_19 = arith.constant 0 : index
    %c0_20 = arith.constant 0 : index
    %17 = vector.load %arg2[%c2_18, %c0_19, %c0_20] : memref<4x2x8xf32, #tpu.memory_space<vmem>>, vector<1x2x8xf32>
    %18 = vector.shape_cast %17 : vector<1x2x8xf32> to vector<2x8xf32>
    %cst_21 = arith.constant dense<0.000000e+00> : vector<64x8xf32>
    %19 = tpu.matmul %16, %18, %cst_21 {dimension_numbers = #tpu.dot_dimension_numbers<[1], [0], [0], [1], [0, 0, 1, 1], [], []>} : vector<64x2xf32>, vector<2x8xf32>, vector<64x8xf32> -> vector<64x8xf32>
    %20 = arith.addf %13, %19 : vector<64x8xf32>
    %c3 = arith.constant 3 : index
    %c0_22 = arith.constant 0 : index
    %c0_23 = arith.constant 0 : index
    %21 = vector.load %arg1[%c3, %c0_22, %c0_23] : memref<4x64x16xf32, #tpu.memory_space<vmem>>, vector<1x64x16xf32>
    %22 = vector.shape_cast %21 : vector<1x64x16xf32> to vector<64x16xf32>
    %cst_24 = arith.constant dense<0.000000e+00> : vector<64x2xf32>
    %23 = tpu.matmul %22, %0, %cst_24 {dimension_numbers = #tpu.dot_dimension_numbers<[1], [0], [0], [1], [0, 0, 1, 1], [], []>} : vector<64x16xf32>, vector<16x2xf32>, vector<64x2xf32> -> vector<64x2xf32>
    %c3_25 = arith.constant 3 : index
    %c0_26 = arith.constant 0 : index
    %c0_27 = arith.constant 0 : index
    %24 = vector.load %arg2[%c3_25, %c0_26, %c0_27] : memref<4x2x8xf32, #tpu.memory_space<vmem>>, vector<1x2x8xf32>
    %25 = vector.shape_cast %24 : vector<1x2x8xf32> to vector<2x8xf32>
    %cst_28 = arith.constant dense<0.000000e+00> : vector<64x8xf32>
    %26 = tpu.matmul %23, %25, %cst_28 {dimension_numbers = #tpu.dot_dimension_numbers<[1], [0], [0], [1], [0, 0, 1, 1], [], []>} : vector<64x2xf32>, vector<2x8xf32>, vector<64x8xf32> -> vector<64x8xf32>
    %27 = arith.addf %20, %26 : vector<64x8xf32>
    %c0_29 = arith.constant 0 : index
    %c0_30 = arith.constant 0 : index
    %28 = vector.load %arg3[%c0_29, %c0_30] : memref<8x8xf32, #tpu.memory_space<vmem>>, vector<8x8xf32>
    %cst_31 = arith.constant dense<0.000000e+00> : vector<64x8xf32>
    %29 = tpu.matmul %27, %28, %cst_31 {dimension_numbers = #tpu.dot_dimension_numbers<[1], [0], [0], [1], [0, 0, 1, 1], [], []>} : vector<64x8xf32>, vector<8x8xf32>, vector<64x8xf32> -> vector<64x8xf32>
    %30 = arith.mulf %27, %27 : vector<64x8xf32>
    %c0_32 = arith.constant 0 : index
    %c0_33 = arith.constant 0 : index
    %31 = vector.load %arg3[%c0_32, %c0_33] : memref<8x8xf32, #tpu.memory_space<vmem>>, vector<8x8xf32>
    %cst_34 = arith.constant dense<0.000000e+00> : vector<64x8xf32>
    %32 = tpu.matmul %30, %31, %cst_34 {dimension_numbers = #tpu.dot_dimension_numbers<[1], [0], [0], [1], [0, 0, 1, 1], [], []>} : vector<64x8xf32>, vector<8x8xf32>, vector<64x8xf32> -> vector<64x8xf32>
    %33 = arith.mulf %29, %29 : vector<64x8xf32>
    %34 = arith.subf %32, %33 : vector<64x8xf32>
    %cst_35 = arith.constant 0.000000e+00 : f32
    %35 = vector.broadcast %cst_35 : f32 to vector<64x8xf32>
    %36 = arith.maximumf %34, %35 : vector<64x8xf32>
    %37 = arith.subf %27, %29 : vector<64x8xf32>
    %cst_36 = arith.constant 9.99999974E-6 : f32
    %38 = vector.broadcast %cst_36 : f32 to vector<64x8xf32>
    %39 = arith.addf %36, %38 : vector<64x8xf32>
    %40 = math.rsqrt %39 : vector<64x8xf32>
    %41 = arith.mulf %37, %40 : vector<64x8xf32>
    %c0_37 = arith.constant 0 : index
    %c0_38 = arith.constant 0 : index
    %42 = vector.load %arg4[%c0_37, %c0_38] : memref<64x8xf32, #tpu.memory_space<vmem>>, vector<64x8xf32>
    %43 = arith.mulf %41, %42 : vector<64x8xf32>
    %c0_39 = arith.constant 0 : index
    %c0_40 = arith.constant 0 : index
    %44 = vector.load %arg5[%c0_39, %c0_40] : memref<64x8xf32, #tpu.memory_space<vmem>>, vector<64x8xf32>
    %45 = arith.addf %43, %44 : vector<64x8xf32>
    %cst_41 = arith.constant 0.000000e+00 : f32
    %46 = vector.broadcast %cst_41 : f32 to vector<64x8xf32>
    %47 = arith.maximumf %45, %46 : vector<64x8xf32>
    %c0_42 = arith.constant 0 : index
    %c0_43 = arith.constant 0 : index
    %c0_44 = arith.constant 0 : index
    %48 = vector.load %arg6[%c0_42, %c0_43, %c0_44] : memref<5x128x64xf32, #tpu.memory_space<vmem>>, vector<1x128x64xf32>
    %49 = vector.shape_cast %48 : vector<1x128x64xf32> to vector<128x64xf32>
    %cst_45 = arith.constant dense<0.000000e+00> : vector<128x8xf32>
    %50 = tpu.matmul %49, %47, %cst_45 {dimension_numbers = #tpu.dot_dimension_numbers<[1], [0], [0], [1], [0, 0, 1, 1], [], []>} : vector<128x64xf32>, vector<64x8xf32>, vector<128x8xf32> -> vector<128x8xf32>
    %c0_46 = arith.constant 0 : index
    %c0_47 = arith.constant 0 : index
    %c0_48 = arith.constant 0 : index
    %51 = vector.load %arg7[%c0_46, %c0_47, %c0_48] : memref<5x8x16xf32, #tpu.memory_space<vmem>>, vector<1x8x16xf32>
    %52 = vector.shape_cast %51 : vector<1x8x16xf32> to vector<8x16xf32>
    %cst_49 = arith.constant dense<0.000000e+00> : vector<128x16xf32>
    %53 = tpu.matmul %50, %52, %cst_49 {dimension_numbers = #tpu.dot_dimension_numbers<[1], [0], [0], [1], [0, 0, 1, 1], [], []>} : vector<128x8xf32>, vector<8x16xf32>, vector<128x16xf32> -> vector<128x16xf32>
    %c1_50 = arith.constant 1 : index
    %c0_51 = arith.constant 0 : index
    %c0_52 = arith.constant 0 : index
    %54 = vector.load %arg6[%c1_50, %c0_51, %c0_52] : memref<5x128x64xf32, #tpu.memory_space<vmem>>, vector<1x128x64xf32>
    %55 = vector.shape_cast %54 : vector<1x128x64xf32> to vector<128x64xf32>
    %cst_53 = arith.constant dense<0.000000e+00> : vector<128x8xf32>
    %56 = tpu.matmul %55, %47, %cst_53 {dimension_numbers = #tpu.dot_dimension_numbers<[1], [0], [0], [1], [0, 0, 1, 1], [], []>} : vector<128x64xf32>, vector<64x8xf32>, vector<128x8xf32> -> vector<128x8xf32>
    %c1_54 = arith.constant 1 : index
    %c0_55 = arith.constant 0 : index
    %c0_56 = arith.constant 0 : index
    %57 = vector.load %arg7[%c1_54, %c0_55, %c0_56] : memref<5x8x16xf32, #tpu.memory_space<vmem>>, vector<1x8x16xf32>
    %58 = vector.shape_cast %57 : vector<1x8x16xf32> to vector<8x16xf32>
    %cst_57 = arith.constant dense<0.000000e+00> : vector<128x16xf32>
    %59 = tpu.matmul %56, %58, %cst_57 {dimension_numbers = #tpu.dot_dimension_numbers<[1], [0], [0], [1], [0, 0, 1, 1], [], []>} : vector<128x8xf32>, vector<8x16xf32>, vector<128x16xf32> -> vector<128x16xf32>
    %60 = arith.addf %53, %59 : vector<128x16xf32>
    %c2_58 = arith.constant 2 : index
    %c0_59 = arith.constant 0 : index
    %c0_60 = arith.constant 0 : index
    %61 = vector.load %arg6[%c2_58, %c0_59, %c0_60] : memref<5x128x64xf32, #tpu.memory_space<vmem>>, vector<1x128x64xf32>
    %62 = vector.shape_cast %61 : vector<1x128x64xf32> to vector<128x64xf32>
    %cst_61 = arith.constant dense<0.000000e+00> : vector<128x8xf32>
    %63 = tpu.matmul %62, %47, %cst_61 {dimension_numbers = #tpu.dot_dimension_numbers<[1], [0], [0], [1], [0, 0, 1, 1], [], []>} : vector<128x64xf32>, vector<64x8xf32>, vector<128x8xf32> -> vector<128x8xf32>
    %c2_62 = arith.constant 2 : index
    %c0_63 = arith.constant 0 : index
    %c0_64 = arith.constant 0 : index
    %64 = vector.load %arg7[%c2_62, %c0_63, %c0_64] : memref<5x8x16xf32, #tpu.memory_space<vmem>>, vector<1x8x16xf32>
    %65 = vector.shape_cast %64 : vector<1x8x16xf32> to vector<8x16xf32>
    %cst_65 = arith.constant dense<0.000000e+00> : vector<128x16xf32>
    %66 = tpu.matmul %63, %65, %cst_65 {dimension_numbers = #tpu.dot_dimension_numbers<[1], [0], [0], [1], [0, 0, 1, 1], [], []>} : vector<128x8xf32>, vector<8x16xf32>, vector<128x16xf32> -> vector<128x16xf32>
    %67 = arith.addf %60, %66 : vector<128x16xf32>
    %c3_66 = arith.constant 3 : index
    %c0_67 = arith.constant 0 : index
    %c0_68 = arith.constant 0 : index
    %68 = vector.load %arg6[%c3_66, %c0_67, %c0_68] : memref<5x128x64xf32, #tpu.memory_space<vmem>>, vector<1x128x64xf32>
    %69 = vector.shape_cast %68 : vector<1x128x64xf32> to vector<128x64xf32>
    %cst_69 = arith.constant dense<0.000000e+00> : vector<128x8xf32>
    %70 = tpu.matmul %69, %47, %cst_69 {dimension_numbers = #tpu.dot_dimension_numbers<[1], [0], [0], [1], [0, 0, 1, 1], [], []>} : vector<128x64xf32>, vector<64x8xf32>, vector<128x8xf32> -> vector<128x8xf32>
    %c3_70 = arith.constant 3 : index
    %c0_71 = arith.constant 0 : index
    %c0_72 = arith.constant 0 : index
    %71 = vector.load %arg7[%c3_70, %c0_71, %c0_72] : memref<5x8x16xf32, #tpu.memory_space<vmem>>, vector<1x8x16xf32>
    %72 = vector.shape_cast %71 : vector<1x8x16xf32> to vector<8x16xf32>
    %cst_73 = arith.constant dense<0.000000e+00> : vector<128x16xf32>
    %73 = tpu.matmul %70, %72, %cst_73 {dimension_numbers = #tpu.dot_dimension_numbers<[1], [0], [0], [1], [0, 0, 1, 1], [], []>} : vector<128x8xf32>, vector<8x16xf32>, vector<128x16xf32> -> vector<128x16xf32>
    %74 = arith.addf %67, %73 : vector<128x16xf32>
    %c4 = arith.constant 4 : index
    %c0_74 = arith.constant 0 : index
    %c0_75 = arith.constant 0 : index
    %75 = vector.load %arg6[%c4, %c0_74, %c0_75] : memref<5x128x64xf32, #tpu.memory_space<vmem>>, vector<1x128x64xf32>
    %76 = vector.shape_cast %75 : vector<1x128x64xf32> to vector<128x64xf32>
    %cst_76 = arith.constant dense<0.000000e+00> : vector<128x8xf32>
    %77 = tpu.matmul %76, %47, %cst_76 {dimension_numbers = #tpu.dot_dimension_numbers<[1], [0], [0], [1], [0, 0, 1, 1], [], []>} : vector<128x64xf32>, vector<64x8xf32>, vector<128x8xf32> -> vector<128x8xf32>
    %c4_77 = arith.constant 4 : index
    %c0_78 = arith.constant 0 : index
    %c0_79 = arith.constant 0 : index
    %78 = vector.load %arg7[%c4_77, %c0_78, %c0_79] : memref<5x8x16xf32, #tpu.memory_space<vmem>>, vector<1x8x16xf32>
    %79 = vector.shape_cast %78 : vector<1x8x16xf32> to vector<8x16xf32>
    %cst_80 = arith.constant dense<0.000000e+00> : vector<128x16xf32>
    %80 = tpu.matmul %77, %79, %cst_80 {dimension_numbers = #tpu.dot_dimension_numbers<[1], [0], [0], [1], [0, 0, 1, 1], [], []>} : vector<128x8xf32>, vector<8x16xf32>, vector<128x16xf32> -> vector<128x16xf32>
    %81 = arith.addf %74, %80 : vector<128x16xf32>
    %cst_81 = arith.constant dense<0.000000e+00> : vector<128xf32>
    %82 = vector.multi_reduction <add>, %81, %cst_81 [1] : vector<128x16xf32> to vector<128xf32>
    %83 = vector.shape_cast %82 : vector<128xf32> to vector<128x1xf32>
    %84 = arith.mulf %81, %81 : vector<128x16xf32>
    %cst_82 = arith.constant dense<0.000000e+00> : vector<128xf32>
    %85 = vector.multi_reduction <add>, %84, %cst_82 [1] : vector<128x16xf32> to vector<128xf32>
    %86 = vector.shape_cast %85 : vector<128xf32> to vector<128x1xf32>
    %c0_83 = arith.constant 0 : index
    %c0_84 = arith.constant 0 : index
    %87 = vector.load %arg8[%c0_83, %c0_84] : memref<16x128xf32, #tpu.memory_space<vmem>>, vector<16x128xf32>
    %cst_85 = arith.constant dense<0.000000e+00> : vector<16x1xf32>
    %88 = tpu.matmul %87, %83, %cst_85 {dimension_numbers = #tpu.dot_dimension_numbers<[1], [0], [0], [1], [0, 0, 1, 1], [], []>} : vector<16x128xf32>, vector<128x1xf32>, vector<16x1xf32> -> vector<16x1xf32>
    %c0_86 = arith.constant 0 : index
    %c0_87 = arith.constant 0 : index
    %89 = vector.load %arg8[%c0_86, %c0_87] : memref<16x128xf32, #tpu.memory_space<vmem>>, vector<16x128xf32>
    %cst_88 = arith.constant dense<0.000000e+00> : vector<16x1xf32>
    %90 = tpu.matmul %89, %86, %cst_88 {dimension_numbers = #tpu.dot_dimension_numbers<[1], [0], [0], [1], [0, 0, 1, 1], [], []>} : vector<16x128xf32>, vector<128x1xf32>, vector<16x1xf32> -> vector<16x1xf32>
    %cst_89 = arith.constant 7.812500e-03 : f32
    %91 = vector.broadcast %cst_89 : f32 to vector<16x1xf32>
    %92 = arith.mulf %88, %91 : vector<16x1xf32>
    %cst_90 = arith.constant 7.812500e-03 : f32
    %93 = vector.broadcast %cst_90 : f32 to vector<16x1xf32>
    %94 = arith.mulf %90, %93 : vector<16x1xf32>
    %95 = arith.mulf %92, %92 : vector<16x1xf32>
    %96 = arith.subf %94, %95 : vector<16x1xf32>
    %cst_91 = arith.constant 0.000000e+00 : f32
    %97 = vector.broadcast %cst_91 : f32 to vector<16x1xf32>
    %98 = arith.maximumf %96, %97 : vector<16x1xf32>
    %c0_92 = arith.constant 0 : index
    %c0_93 = arith.constant 0 : index
    %99 = vector.load %arg10[%c0_92, %c0_93] : memref<16x1xf32, #tpu.memory_space<vmem>>, vector<16x1xf32>
    %cst_94 = arith.constant 9.99999974E-6 : f32
    %100 = vector.broadcast %cst_94 : f32 to vector<16x1xf32>
    %101 = arith.addf %98, %100 : vector<16x1xf32>
    %102 = math.rsqrt %101 : vector<16x1xf32>
    %103 = arith.mulf %99, %102 : vector<16x1xf32>
    %c0_95 = arith.constant 0 : index
    %c0_96 = arith.constant 0 : index
    %104 = vector.load %arg11[%c0_95, %c0_96] : memref<16x1xf32, #tpu.memory_space<vmem>>, vector<16x1xf32>
    %105 = arith.mulf %92, %103 : vector<16x1xf32>
    %106 = arith.subf %104, %105 : vector<16x1xf32>
    %c0_97 = arith.constant 0 : index
    %c0_98 = arith.constant 0 : index
    %107 = vector.load %arg9[%c0_97, %c0_98] : memref<128x16xf32, #tpu.memory_space<vmem>>, vector<128x16xf32>
    %cst_99 = arith.constant dense<0.000000e+00> : vector<128x1xf32>
    %108 = tpu.matmul %107, %103, %cst_99 {dimension_numbers = #tpu.dot_dimension_numbers<[1], [0], [0], [1], [0, 0, 1, 1], [], []>} : vector<128x16xf32>, vector<16x1xf32>, vector<128x1xf32> -> vector<128x1xf32>
    %c0_100 = arith.constant 0 : index
    %c0_101 = arith.constant 0 : index
    %109 = vector.load %arg9[%c0_100, %c0_101] : memref<128x16xf32, #tpu.memory_space<vmem>>, vector<128x16xf32>
    %cst_102 = arith.constant dense<0.000000e+00> : vector<128x1xf32>
    %110 = tpu.matmul %109, %106, %cst_102 {dimension_numbers = #tpu.dot_dimension_numbers<[1], [0], [0], [1], [0, 0, 1, 1], [], []>} : vector<128x16xf32>, vector<16x1xf32>, vector<128x1xf32> -> vector<128x1xf32>
    %111 = vector.broadcast %108 : vector<128x1xf32> to vector<128x16xf32>
    %112 = arith.mulf %81, %111 : vector<128x16xf32>
    %113 = vector.broadcast %110 : vector<128x1xf32> to vector<128x16xf32>
    %114 = arith.addf %112, %113 : vector<128x16xf32>
    %cst_103 = arith.constant 0.000000e+00 : f32
    %115 = vector.broadcast %cst_103 : f32 to vector<128x16xf32>
    %116 = arith.maximumf %114, %115 : vector<128x16xf32>
    %c0_104 = arith.constant 0 : index
    %c0_105 = arith.constant 0 : index
    %c0_106 = arith.constant 0 : index
    %117 = vector.load %arg12[%c0_104, %c0_105, %c0_106] : memref<5x128x128xf32, #tpu.memory_space<vmem>>, vector<1x128x128xf32>
    %118 = vector.shape_cast %117 : vector<1x128x128xf32> to vector<128x128xf32>
    %cst_107 = arith.constant dense<0.000000e+00> : vector<128x16xf32>
    %119 = tpu.matmul %118, %116, %cst_107 {dimension_numbers = #tpu.dot_dimension_numbers<[1], [0], [0], [1], [0, 0, 1, 1], [], []>} : vector<128x128xf32>, vector<128x16xf32>, vector<128x16xf32> -> vector<128x16xf32>
    %c0_108 = arith.constant 0 : index
    %c0_109 = arith.constant 0 : index
    %c0_110 = arith.constant 0 : index
    %120 = vector.load %arg13[%c0_108, %c0_109, %c0_110] : memref<5x16x32xf32, #tpu.memory_space<vmem>>, vector<1x16x32xf32>
    %121 = vector.shape_cast %120 : vector<1x16x32xf32> to vector<16x32xf32>
    %cst_111 = arith.constant dense<0.000000e+00> : vector<128x32xf32>
    %122 = tpu.matmul %119, %121, %cst_111 {dimension_numbers = #tpu.dot_dimension_numbers<[1], [0], [0], [1], [0, 0, 1, 1], [], []>} : vector<128x16xf32>, vector<16x32xf32>, vector<128x32xf32> -> vector<128x32xf32>
    %c1_112 = arith.constant 1 : index
    %c0_113 = arith.constant 0 : index
    %c0_114 = arith.constant 0 : index
    %123 = vector.load %arg12[%c1_112, %c0_113, %c0_114] : memref<5x128x128xf32, #tpu.memory_space<vmem>>, vector<1x128x128xf32>
    %124 = vector.shape_cast %123 : vector<1x128x128xf32> to vector<128x128xf32>
    %cst_115 = arith.constant dense<0.000000e+00> : vector<128x16xf32>
    %125 = tpu.matmul %124, %116, %cst_115 {dimension_numbers = #tpu.dot_dimension_numbers<[1], [0], [0], [1], [0, 0, 1, 1], [], []>} : vector<128x128xf32>, vector<128x16xf32>, vector<128x16xf32> -> vector<128x16xf32>
    %c1_116 = arith.constant 1 : index
    %c0_117 = arith.constant 0 : index
    %c0_118 = arith.constant 0 : index
    %126 = vector.load %arg13[%c1_116, %c0_117, %c0_118] : memref<5x16x32xf32, #tpu.memory_space<vmem>>, vector<1x16x32xf32>
    %127 = vector.shape_cast %126 : vector<1x16x32xf32> to vector<16x32xf32>
    %cst_119 = arith.constant dense<0.000000e+00> : vector<128x32xf32>
    %128 = tpu.matmul %125, %127, %cst_119 {dimension_numbers = #tpu.dot_dimension_numbers<[1], [0], [0], [1], [0, 0, 1, 1], [], []>} : vector<128x16xf32>, vector<16x32xf32>, vector<128x32xf32> -> vector<128x32xf32>
    %129 = arith.addf %122, %128 : vector<128x32xf32>
    %c2_120 = arith.constant 2 : index
    %c0_121 = arith.constant 0 : index
    %c0_122 = arith.constant 0 : index
    %130 = vector.load %arg12[%c2_120, %c0_121, %c0_122] : memref<5x128x128xf32, #tpu.memory_space<vmem>>, vector<1x128x128xf32>
    %131 = vector.shape_cast %130 : vector<1x128x128xf32> to vector<128x128xf32>
    %cst_123 = arith.constant dense<0.000000e+00> : vector<128x16xf32>
    %132 = tpu.matmul %131, %116, %cst_123 {dimension_numbers = #tpu.dot_dimension_numbers<[1], [0], [0], [1], [0, 0, 1, 1], [], []>} : vector<128x128xf32>, vector<128x16xf32>, vector<128x16xf32> -> vector<128x16xf32>
    %c2_124 = arith.constant 2 : index
    %c0_125 = arith.constant 0 : index
    %c0_126 = arith.constant 0 : index
    %133 = vector.load %arg13[%c2_124, %c0_125, %c0_126] : memref<5x16x32xf32, #tpu.memory_space<vmem>>, vector<1x16x32xf32>
    %134 = vector.shape_cast %133 : vector<1x16x32xf32> to vector<16x32xf32>
    %cst_127 = arith.constant dense<0.000000e+00> : vector<128x32xf32>
    %135 = tpu.matmul %132, %134, %cst_127 {dimension_numbers = #tpu.dot_dimension_numbers<[1], [0], [0], [1], [0, 0, 1, 1], [], []>} : vector<128x16xf32>, vector<16x32xf32>, vector<128x32xf32> -> vector<128x32xf32>
    %136 = arith.addf %129, %135 : vector<128x32xf32>
    %c3_128 = arith.constant 3 : index
    %c0_129 = arith.constant 0 : index
    %c0_130 = arith.constant 0 : index
    %137 = vector.load %arg12[%c3_128, %c0_129, %c0_130] : memref<5x128x128xf32, #tpu.memory_space<vmem>>, vector<1x128x128xf32>
    %138 = vector.shape_cast %137 : vector<1x128x128xf32> to vector<128x128xf32>
    %cst_131 = arith.constant dense<0.000000e+00> : vector<128x16xf32>
    %139 = tpu.matmul %138, %116, %cst_131 {dimension_numbers = #tpu.dot_dimension_numbers<[1], [0], [0], [1], [0, 0, 1, 1], [], []>} : vector<128x128xf32>, vector<128x16xf32>, vector<128x16xf32> -> vector<128x16xf32>
    %c3_132 = arith.constant 3 : index
    %c0_133 = arith.constant 0 : index
    %c0_134 = arith.constant 0 : index
    %140 = vector.load %arg13[%c3_132, %c0_133, %c0_134] : memref<5x16x32xf32, #tpu.memory_space<vmem>>, vector<1x16x32xf32>
    %141 = vector.shape_cast %140 : vector<1x16x32xf32> to vector<16x32xf32>
    %cst_135 = arith.constant dense<0.000000e+00> : vector<128x32xf32>
    %142 = tpu.matmul %139, %141, %cst_135 {dimension_numbers = #tpu.dot_dimension_numbers<[1], [0], [0], [1], [0, 0, 1, 1], [], []>} : vector<128x16xf32>, vector<16x32xf32>, vector<128x32xf32> -> vector<128x32xf32>
    %143 = arith.addf %136, %142 : vector<128x32xf32>
    %c4_136 = arith.constant 4 : index
    %c0_137 = arith.constant 0 : index
    %c0_138 = arith.constant 0 : index
    %144 = vector.load %arg12[%c4_136, %c0_137, %c0_138] : memref<5x128x128xf32, #tpu.memory_space<vmem>>, vector<1x128x128xf32>
    %145 = vector.shape_cast %144 : vector<1x128x128xf32> to vector<128x128xf32>
    %cst_139 = arith.constant dense<0.000000e+00> : vector<128x16xf32>
    %146 = tpu.matmul %145, %116, %cst_139 {dimension_numbers = #tpu.dot_dimension_numbers<[1], [0], [0], [1], [0, 0, 1, 1], [], []>} : vector<128x128xf32>, vector<128x16xf32>, vector<128x16xf32> -> vector<128x16xf32>
    %c4_140 = arith.constant 4 : index
    %c0_141 = arith.constant 0 : index
    %c0_142 = arith.constant 0 : index
    %147 = vector.load %arg13[%c4_140, %c0_141, %c0_142] : memref<5x16x32xf32, #tpu.memory_space<vmem>>, vector<1x16x32xf32>
    %148 = vector.shape_cast %147 : vector<1x16x32xf32> to vector<16x32xf32>
    %cst_143 = arith.constant dense<0.000000e+00> : vector<128x32xf32>
    %149 = tpu.matmul %146, %148, %cst_143 {dimension_numbers = #tpu.dot_dimension_numbers<[1], [0], [0], [1], [0, 0, 1, 1], [], []>} : vector<128x16xf32>, vector<16x32xf32>, vector<128x32xf32> -> vector<128x32xf32>
    %150 = arith.addf %143, %149 : vector<128x32xf32>
    %cst_144 = arith.constant dense<0.000000e+00> : vector<128xf32>
    %151 = vector.multi_reduction <add>, %150, %cst_144 [1] : vector<128x32xf32> to vector<128xf32>
    %152 = vector.shape_cast %151 : vector<128xf32> to vector<128x1xf32>
    %153 = arith.mulf %150, %150 : vector<128x32xf32>
    %cst_145 = arith.constant dense<0.000000e+00> : vector<128xf32>
    %154 = vector.multi_reduction <add>, %153, %cst_145 [1] : vector<128x32xf32> to vector<128xf32>
    %155 = vector.shape_cast %154 : vector<128xf32> to vector<128x1xf32>
    %c0_146 = arith.constant 0 : index
    %c0_147 = arith.constant 0 : index
    %156 = vector.load %arg14[%c0_146, %c0_147] : memref<8x128xf32, #tpu.memory_space<vmem>>, vector<8x128xf32>
    %cst_148 = arith.constant dense<0.000000e+00> : vector<8x1xf32>
    %157 = tpu.matmul %156, %152, %cst_148 {dimension_numbers = #tpu.dot_dimension_numbers<[1], [0], [0], [1], [0, 0, 1, 1], [], []>} : vector<8x128xf32>, vector<128x1xf32>, vector<8x1xf32> -> vector<8x1xf32>
    %c0_149 = arith.constant 0 : index
    %c0_150 = arith.constant 0 : index
    %158 = vector.load %arg14[%c0_149, %c0_150] : memref<8x128xf32, #tpu.memory_space<vmem>>, vector<8x128xf32>
    %cst_151 = arith.constant dense<0.000000e+00> : vector<8x1xf32>
    %159 = tpu.matmul %158, %155, %cst_151 {dimension_numbers = #tpu.dot_dimension_numbers<[1], [0], [0], [1], [0, 0, 1, 1], [], []>} : vector<8x128xf32>, vector<128x1xf32>, vector<8x1xf32> -> vector<8x1xf32>
    %cst_152 = arith.constant 0.001953125 : f32
    %160 = vector.broadcast %cst_152 : f32 to vector<8x1xf32>
    %161 = arith.mulf %157, %160 : vector<8x1xf32>
    %cst_153 = arith.constant 0.001953125 : f32
    %162 = vector.broadcast %cst_153 : f32 to vector<8x1xf32>
    %163 = arith.mulf %159, %162 : vector<8x1xf32>
    %164 = arith.mulf %161, %161 : vector<8x1xf32>
    %165 = arith.subf %163, %164 : vector<8x1xf32>
    %cst_154 = arith.constant 0.000000e+00 : f32
    %166 = vector.broadcast %cst_154 : f32 to vector<8x1xf32>
    %167 = arith.maximumf %165, %166 : vector<8x1xf32>
    %c0_155 = arith.constant 0 : index
    %c0_156 = arith.constant 0 : index
    %168 = vector.load %arg16[%c0_155, %c0_156] : memref<8x1xf32, #tpu.memory_space<vmem>>, vector<8x1xf32>
    %cst_157 = arith.constant 9.99999974E-6 : f32
    %169 = vector.broadcast %cst_157 : f32 to vector<8x1xf32>
    %170 = arith.addf %167, %169 : vector<8x1xf32>
    %171 = math.rsqrt %170 : vector<8x1xf32>
    %172 = arith.mulf %168, %171 : vector<8x1xf32>
    %c0_158 = arith.constant 0 : index
    %c0_159 = arith.constant 0 : index
    %173 = vector.load %arg17[%c0_158, %c0_159] : memref<8x1xf32, #tpu.memory_space<vmem>>, vector<8x1xf32>
    %174 = arith.mulf %161, %172 : vector<8x1xf32>
    %175 = arith.subf %173, %174 : vector<8x1xf32>
    %c0_160 = arith.constant 0 : index
    %c0_161 = arith.constant 0 : index
    %176 = vector.load %arg15[%c0_160, %c0_161] : memref<128x8xf32, #tpu.memory_space<vmem>>, vector<128x8xf32>
    %cst_162 = arith.constant dense<0.000000e+00> : vector<128x1xf32>
    %177 = tpu.matmul %176, %172, %cst_162 {dimension_numbers = #tpu.dot_dimension_numbers<[1], [0], [0], [1], [0, 0, 1, 1], [], []>} : vector<128x8xf32>, vector<8x1xf32>, vector<128x1xf32> -> vector<128x1xf32>
    %c0_163 = arith.constant 0 : index
    %c0_164 = arith.constant 0 : index
    %178 = vector.load %arg15[%c0_163, %c0_164] : memref<128x8xf32, #tpu.memory_space<vmem>>, vector<128x8xf32>
    %cst_165 = arith.constant dense<0.000000e+00> : vector<128x1xf32>
    %179 = tpu.matmul %178, %175, %cst_165 {dimension_numbers = #tpu.dot_dimension_numbers<[1], [0], [0], [1], [0, 0, 1, 1], [], []>} : vector<128x8xf32>, vector<8x1xf32>, vector<128x1xf32> -> vector<128x1xf32>
    %180 = vector.broadcast %177 : vector<128x1xf32> to vector<128x32xf32>
    %181 = arith.mulf %150, %180 : vector<128x32xf32>
    %182 = vector.broadcast %179 : vector<128x1xf32> to vector<128x32xf32>
    %183 = arith.addf %181, %182 : vector<128x32xf32>
    %cst_166 = arith.constant 0.000000e+00 : f32
    %184 = vector.broadcast %cst_166 : f32 to vector<128x32xf32>
    %185 = arith.maximumf %183, %184 : vector<128x32xf32>
    %c0_167 = arith.constant 0 : index
    %c0_168 = arith.constant 0 : index
    %c0_169 = arith.constant 0 : index
    %186 = vector.load %arg18[%c0_167, %c0_168, %c0_169] : memref<5x128x128xf32, #tpu.memory_space<vmem>>, vector<1x128x128xf32>
    %187 = vector.shape_cast %186 : vector<1x128x128xf32> to vector<128x128xf32>
    %cst_170 = arith.constant dense<0.000000e+00> : vector<128x32xf32>
    %188 = tpu.matmul %187, %185, %cst_170 {dimension_numbers = #tpu.dot_dimension_numbers<[1], [0], [0], [1], [0, 0, 1, 1], [], []>} : vector<128x128xf32>, vector<128x32xf32>, vector<128x32xf32> -> vector<128x32xf32>
    %c0_171 = arith.constant 0 : index
    %c0_172 = arith.constant 0 : index
    %c0_173 = arith.constant 0 : index
    %189 = vector.load %arg19[%c0_171, %c0_172, %c0_173] : memref<5x32x64xf32, #tpu.memory_space<vmem>>, vector<1x32x64xf32>
    %190 = vector.shape_cast %189 : vector<1x32x64xf32> to vector<32x64xf32>
    %cst_174 = arith.constant dense<0.000000e+00> : vector<128x64xf32>
    %191 = tpu.matmul %188, %190, %cst_174 {dimension_numbers = #tpu.dot_dimension_numbers<[1], [0], [0], [1], [0, 0, 1, 1], [], []>} : vector<128x32xf32>, vector<32x64xf32>, vector<128x64xf32> -> vector<128x64xf32>
    %c1_175 = arith.constant 1 : index
    %c0_176 = arith.constant 0 : index
    %c0_177 = arith.constant 0 : index
    %192 = vector.load %arg18[%c1_175, %c0_176, %c0_177] : memref<5x128x128xf32, #tpu.memory_space<vmem>>, vector<1x128x128xf32>
    %193 = vector.shape_cast %192 : vector<1x128x128xf32> to vector<128x128xf32>
    %cst_178 = arith.constant dense<0.000000e+00> : vector<128x32xf32>
    %194 = tpu.matmul %193, %185, %cst_178 {dimension_numbers = #tpu.dot_dimension_numbers<[1], [0], [0], [1], [0, 0, 1, 1], [], []>} : vector<128x128xf32>, vector<128x32xf32>, vector<128x32xf32> -> vector<128x32xf32>
    %c1_179 = arith.constant 1 : index
    %c0_180 = arith.constant 0 : index
    %c0_181 = arith.constant 0 : index
    %195 = vector.load %arg19[%c1_179, %c0_180, %c0_181] : memref<5x32x64xf32, #tpu.memory_space<vmem>>, vector<1x32x64xf32>
    %196 = vector.shape_cast %195 : vector<1x32x64xf32> to vector<32x64xf32>
    %cst_182 = arith.constant dense<0.000000e+00> : vector<128x64xf32>
    %197 = tpu.matmul %194, %196, %cst_182 {dimension_numbers = #tpu.dot_dimension_numbers<[1], [0], [0], [1], [0, 0, 1, 1], [], []>} : vector<128x32xf32>, vector<32x64xf32>, vector<128x64xf32> -> vector<128x64xf32>
    %198 = arith.addf %191, %197 : vector<128x64xf32>
    %c2_183 = arith.constant 2 : index
    %c0_184 = arith.constant 0 : index
    %c0_185 = arith.constant 0 : index
    %199 = vector.load %arg18[%c2_183, %c0_184, %c0_185] : memref<5x128x128xf32, #tpu.memory_space<vmem>>, vector<1x128x128xf32>
    %200 = vector.shape_cast %199 : vector<1x128x128xf32> to vector<128x128xf32>
    %cst_186 = arith.constant dense<0.000000e+00> : vector<128x32xf32>
    %201 = tpu.matmul %200, %185, %cst_186 {dimension_numbers = #tpu.dot_dimension_numbers<[1], [0], [0], [1], [0, 0, 1, 1], [], []>} : vector<128x128xf32>, vector<128x32xf32>, vector<128x32xf32> -> vector<128x32xf32>
    %c2_187 = arith.constant 2 : index
    %c0_188 = arith.constant 0 : index
    %c0_189 = arith.constant 0 : index
    %202 = vector.load %arg19[%c2_187, %c0_188, %c0_189] : memref<5x32x64xf32, #tpu.memory_space<vmem>>, vector<1x32x64xf32>
    %203 = vector.shape_cast %202 : vector<1x32x64xf32> to vector<32x64xf32>
    %cst_190 = arith.constant dense<0.000000e+00> : vector<128x64xf32>
    %204 = tpu.matmul %201, %203, %cst_190 {dimension_numbers = #tpu.dot_dimension_numbers<[1], [0], [0], [1], [0, 0, 1, 1], [], []>} : vector<128x32xf32>, vector<32x64xf32>, vector<128x64xf32> -> vector<128x64xf32>
    %205 = arith.addf %198, %204 : vector<128x64xf32>
    %c3_191 = arith.constant 3 : index
    %c0_192 = arith.constant 0 : index
    %c0_193 = arith.constant 0 : index
    %206 = vector.load %arg18[%c3_191, %c0_192, %c0_193] : memref<5x128x128xf32, #tpu.memory_space<vmem>>, vector<1x128x128xf32>
    %207 = vector.shape_cast %206 : vector<1x128x128xf32> to vector<128x128xf32>
    %cst_194 = arith.constant dense<0.000000e+00> : vector<128x32xf32>
    %208 = tpu.matmul %207, %185, %cst_194 {dimension_numbers = #tpu.dot_dimension_numbers<[1], [0], [0], [1], [0, 0, 1, 1], [], []>} : vector<128x128xf32>, vector<128x32xf32>, vector<128x32xf32> -> vector<128x32xf32>
    %c3_195 = arith.constant 3 : index
    %c0_196 = arith.constant 0 : index
    %c0_197 = arith.constant 0 : index
    %209 = vector.load %arg19[%c3_195, %c0_196, %c0_197] : memref<5x32x64xf32, #tpu.memory_space<vmem>>, vector<1x32x64xf32>
    %210 = vector.shape_cast %209 : vector<1x32x64xf32> to vector<32x64xf32>
    %cst_198 = arith.constant dense<0.000000e+00> : vector<128x64xf32>
    %211 = tpu.matmul %208, %210, %cst_198 {dimension_numbers = #tpu.dot_dimension_numbers<[1], [0], [0], [1], [0, 0, 1, 1], [], []>} : vector<128x32xf32>, vector<32x64xf32>, vector<128x64xf32> -> vector<128x64xf32>
    %212 = arith.addf %205, %211 : vector<128x64xf32>
    %c4_199 = arith.constant 4 : index
    %c0_200 = arith.constant 0 : index
    %c0_201 = arith.constant 0 : index
    %213 = vector.load %arg18[%c4_199, %c0_200, %c0_201] : memref<5x128x128xf32, #tpu.memory_space<vmem>>, vector<1x128x128xf32>
    %214 = vector.shape_cast %213 : vector<1x128x128xf32> to vector<128x128xf32>
    %cst_202 = arith.constant dense<0.000000e+00> : vector<128x32xf32>
    %215 = tpu.matmul %214, %185, %cst_202 {dimension_numbers = #tpu.dot_dimension_numbers<[1], [0], [0], [1], [0, 0, 1, 1], [], []>} : vector<128x128xf32>, vector<128x32xf32>, vector<128x32xf32> -> vector<128x32xf32>
    %c4_203 = arith.constant 4 : index
    %c0_204 = arith.constant 0 : index
    %c0_205 = arith.constant 0 : index
    %216 = vector.load %arg19[%c4_203, %c0_204, %c0_205] : memref<5x32x64xf32, #tpu.memory_space<vmem>>, vector<1x32x64xf32>
    %217 = vector.shape_cast %216 : vector<1x32x64xf32> to vector<32x64xf32>
    %cst_206 = arith.constant dense<0.000000e+00> : vector<128x64xf32>
    %218 = tpu.matmul %215, %217, %cst_206 {dimension_numbers = #tpu.dot_dimension_numbers<[1], [0], [0], [1], [0, 0, 1, 1], [], []>} : vector<128x32xf32>, vector<32x64xf32>, vector<128x64xf32> -> vector<128x64xf32>
    %219 = arith.addf %212, %218 : vector<128x64xf32>
    %cst_207 = arith.constant dense<0.000000e+00> : vector<128xf32>
    %220 = vector.multi_reduction <add>, %219, %cst_207 [1] : vector<128x64xf32> to vector<128xf32>
    %221 = vector.shape_cast %220 : vector<128xf32> to vector<128x1xf32>
    %222 = arith.mulf %219, %219 : vector<128x64xf32>
    %cst_208 = arith.constant dense<0.000000e+00> : vector<128xf32>
    %223 = vector.multi_reduction <add>, %222, %cst_208 [1] : vector<128x64xf32> to vector<128xf32>
    %224 = vector.shape_cast %223 : vector<128xf32> to vector<128x1xf32>
    %c0_209 = arith.constant 0 : index
    %c0_210 = arith.constant 0 : index
    %225 = vector.load %arg20[%c0_209, %c0_210] : memref<4x128xf32, #tpu.memory_space<vmem>>, vector<4x128xf32>
    %cst_211 = arith.constant dense<0.000000e+00> : vector<4x1xf32>
    %226 = tpu.matmul %225, %221, %cst_211 {dimension_numbers = #tpu.dot_dimension_numbers<[1], [0], [0], [1], [0, 0, 1, 1], [], []>} : vector<4x128xf32>, vector<128x1xf32>, vector<4x1xf32> -> vector<4x1xf32>
    %c0_212 = arith.constant 0 : index
    %c0_213 = arith.constant 0 : index
    %227 = vector.load %arg20[%c0_212, %c0_213] : memref<4x128xf32, #tpu.memory_space<vmem>>, vector<4x128xf32>
    %cst_214 = arith.constant dense<0.000000e+00> : vector<4x1xf32>
    %228 = tpu.matmul %227, %224, %cst_214 {dimension_numbers = #tpu.dot_dimension_numbers<[1], [0], [0], [1], [0, 0, 1, 1], [], []>} : vector<4x128xf32>, vector<128x1xf32>, vector<4x1xf32> -> vector<4x1xf32>
    %cst_215 = arith.constant 4.8828125E-4 : f32
    %229 = vector.broadcast %cst_215 : f32 to vector<4x1xf32>
    %230 = arith.mulf %226, %229 : vector<4x1xf32>
    %cst_216 = arith.constant 4.8828125E-4 : f32
    %231 = vector.broadcast %cst_216 : f32 to vector<4x1xf32>
    %232 = arith.mulf %228, %231 : vector<4x1xf32>
    %233 = arith.mulf %230, %230 : vector<4x1xf32>
    %234 = arith.subf %232, %233 : vector<4x1xf32>
    %cst_217 = arith.constant 0.000000e+00 : f32
    %235 = vector.broadcast %cst_217 : f32 to vector<4x1xf32>
    %236 = arith.maximumf %234, %235 : vector<4x1xf32>
    %c0_218 = arith.constant 0 : index
    %c0_219 = arith.constant 0 : index
    %237 = vector.load %arg22[%c0_218, %c0_219] : memref<4x1xf32, #tpu.memory_space<vmem>>, vector<4x1xf32>
    %cst_220 = arith.constant 9.99999974E-6 : f32
    %238 = vector.broadcast %cst_220 : f32 to vector<4x1xf32>
    %239 = arith.addf %236, %238 : vector<4x1xf32>
    %240 = math.rsqrt %239 : vector<4x1xf32>
    %241 = arith.mulf %237, %240 : vector<4x1xf32>
    %c0_221 = arith.constant 0 : index
    %c0_222 = arith.constant 0 : index
    %242 = vector.load %arg23[%c0_221, %c0_222] : memref<4x1xf32, #tpu.memory_space<vmem>>, vector<4x1xf32>
    %243 = arith.mulf %230, %241 : vector<4x1xf32>
    %244 = arith.subf %242, %243 : vector<4x1xf32>
    %c0_223 = arith.constant 0 : index
    %c0_224 = arith.constant 0 : index
    %245 = vector.load %arg21[%c0_223, %c0_224] : memref<128x4xf32, #tpu.memory_space<vmem>>, vector<128x4xf32>
    %cst_225 = arith.constant dense<0.000000e+00> : vector<128x1xf32>
    %246 = tpu.matmul %245, %241, %cst_225 {dimension_numbers = #tpu.dot_dimension_numbers<[1], [0], [0], [1], [0, 0, 1, 1], [], []>} : vector<128x4xf32>, vector<4x1xf32>, vector<128x1xf32> -> vector<128x1xf32>
    %c0_226 = arith.constant 0 : index
    %c0_227 = arith.constant 0 : index
    %247 = vector.load %arg21[%c0_226, %c0_227] : memref<128x4xf32, #tpu.memory_space<vmem>>, vector<128x4xf32>
    %cst_228 = arith.constant dense<0.000000e+00> : vector<128x1xf32>
    %248 = tpu.matmul %247, %244, %cst_228 {dimension_numbers = #tpu.dot_dimension_numbers<[1], [0], [0], [1], [0, 0, 1, 1], [], []>} : vector<128x4xf32>, vector<4x1xf32>, vector<128x1xf32> -> vector<128x1xf32>
    %249 = vector.broadcast %246 : vector<128x1xf32> to vector<128x64xf32>
    %250 = arith.mulf %219, %249 : vector<128x64xf32>
    %251 = vector.broadcast %248 : vector<128x1xf32> to vector<128x64xf32>
    %252 = arith.addf %250, %251 : vector<128x64xf32>
    %cst_229 = arith.constant 0.000000e+00 : f32
    %253 = vector.broadcast %cst_229 : f32 to vector<128x64xf32>
    %254 = arith.maximumf %252, %253 : vector<128x64xf32>
    %c0_230 = arith.constant 0 : index
    %c0_231 = arith.constant 0 : index
    %c0_232 = arith.constant 0 : index
    %255 = vector.load %arg24[%c0_230, %c0_231, %c0_232] : memref<5x96x128xf32, #tpu.memory_space<vmem>>, vector<1x96x128xf32>
    %256 = vector.shape_cast %255 : vector<1x96x128xf32> to vector<96x128xf32>
    %cst_233 = arith.constant dense<0.000000e+00> : vector<96x64xf32>
    %257 = tpu.matmul %256, %254, %cst_233 {dimension_numbers = #tpu.dot_dimension_numbers<[1], [0], [0], [1], [0, 0, 1, 1], [], []>} : vector<96x128xf32>, vector<128x64xf32>, vector<96x64xf32> -> vector<96x64xf32>
    %c0_234 = arith.constant 0 : index
    %c0_235 = arith.constant 0 : index
    %c0_236 = arith.constant 0 : index
    %258 = vector.load %arg25[%c0_234, %c0_235, %c0_236] : memref<5x64x64xf32, #tpu.memory_space<vmem>>, vector<1x64x64xf32>
    %259 = vector.shape_cast %258 : vector<1x64x64xf32> to vector<64x64xf32>
    %cst_237 = arith.constant dense<0.000000e+00> : vector<96x64xf32>
    %260 = tpu.matmul %257, %259, %cst_237 {dimension_numbers = #tpu.dot_dimension_numbers<[1], [0], [0], [1], [0, 0, 1, 1], [], []>} : vector<96x64xf32>, vector<64x64xf32>, vector<96x64xf32> -> vector<96x64xf32>
    %c1_238 = arith.constant 1 : index
    %c0_239 = arith.constant 0 : index
    %c0_240 = arith.constant 0 : index
    %261 = vector.load %arg24[%c1_238, %c0_239, %c0_240] : memref<5x96x128xf32, #tpu.memory_space<vmem>>, vector<1x96x128xf32>
    %262 = vector.shape_cast %261 : vector<1x96x128xf32> to vector<96x128xf32>
    %cst_241 = arith.constant dense<0.000000e+00> : vector<96x64xf32>
    %263 = tpu.matmul %262, %254, %cst_241 {dimension_numbers = #tpu.dot_dimension_numbers<[1], [0], [0], [1], [0, 0, 1, 1], [], []>} : vector<96x128xf32>, vector<128x64xf32>, vector<96x64xf32> -> vector<96x64xf32>
    %c1_242 = arith.constant 1 : index
    %c0_243 = arith.constant 0 : index
    %c0_244 = arith.constant 0 : index
    %264 = vector.load %arg25[%c1_242, %c0_243, %c0_244] : memref<5x64x64xf32, #tpu.memory_space<vmem>>, vector<1x64x64xf32>
    %265 = vector.shape_cast %264 : vector<1x64x64xf32> to vector<64x64xf32>
    %cst_245 = arith.constant dense<0.000000e+00> : vector<96x64xf32>
    %266 = tpu.matmul %263, %265, %cst_245 {dimension_numbers = #tpu.dot_dimension_numbers<[1], [0], [0], [1], [0, 0, 1, 1], [], []>} : vector<96x64xf32>, vector<64x64xf32>, vector<96x64xf32> -> vector<96x64xf32>
    %267 = arith.addf %260, %266 : vector<96x64xf32>
    %c2_246 = arith.constant 2 : index
    %c0_247 = arith.constant 0 : index
    %c0_248 = arith.constant 0 : index
    %268 = vector.load %arg24[%c2_246, %c0_247, %c0_248] : memref<5x96x128xf32, #tpu.memory_space<vmem>>, vector<1x96x128xf32>
    %269 = vector.shape_cast %268 : vector<1x96x128xf32> to vector<96x128xf32>
    %cst_249 = arith.constant dense<0.000000e+00> : vector<96x64xf32>
    %270 = tpu.matmul %269, %254, %cst_249 {dimension_numbers = #tpu.dot_dimension_numbers<[1], [0], [0], [1], [0, 0, 1, 1], [], []>} : vector<96x128xf32>, vector<128x64xf32>, vector<96x64xf32> -> vector<96x64xf32>
    %c2_250 = arith.constant 2 : index
    %c0_251 = arith.constant 0 : index
    %c0_252 = arith.constant 0 : index
    %271 = vector.load %arg25[%c2_250, %c0_251, %c0_252] : memref<5x64x64xf32, #tpu.memory_space<vmem>>, vector<1x64x64xf32>
    %272 = vector.shape_cast %271 : vector<1x64x64xf32> to vector<64x64xf32>
    %cst_253 = arith.constant dense<0.000000e+00> : vector<96x64xf32>
    %273 = tpu.matmul %270, %272, %cst_253 {dimension_numbers = #tpu.dot_dimension_numbers<[1], [0], [0], [1], [0, 0, 1, 1], [], []>} : vector<96x64xf32>, vector<64x64xf32>, vector<96x64xf32> -> vector<96x64xf32>
    %274 = arith.addf %267, %273 : vector<96x64xf32>
    %c3_254 = arith.constant 3 : index
    %c0_255 = arith.constant 0 : index
    %c0_256 = arith.constant 0 : index
    %275 = vector.load %arg24[%c3_254, %c0_255, %c0_256] : memref<5x96x128xf32, #tpu.memory_space<vmem>>, vector<1x96x128xf32>
    %276 = vector.shape_cast %275 : vector<1x96x128xf32> to vector<96x128xf32>
    %cst_257 = arith.constant dense<0.000000e+00> : vector<96x64xf32>
    %277 = tpu.matmul %276, %254, %cst_257 {dimension_numbers = #tpu.dot_dimension_numbers<[1], [0], [0], [1], [0, 0, 1, 1], [], []>} : vector<96x128xf32>, vector<128x64xf32>, vector<96x64xf32> -> vector<96x64xf32>
    %c3_258 = arith.constant 3 : index
    %c0_259 = arith.constant 0 : index
    %c0_260 = arith.constant 0 : index
    %278 = vector.load %arg25[%c3_258, %c0_259, %c0_260] : memref<5x64x64xf32, #tpu.memory_space<vmem>>, vector<1x64x64xf32>
    %279 = vector.shape_cast %278 : vector<1x64x64xf32> to vector<64x64xf32>
    %cst_261 = arith.constant dense<0.000000e+00> : vector<96x64xf32>
    %280 = tpu.matmul %277, %279, %cst_261 {dimension_numbers = #tpu.dot_dimension_numbers<[1], [0], [0], [1], [0, 0, 1, 1], [], []>} : vector<96x64xf32>, vector<64x64xf32>, vector<96x64xf32> -> vector<96x64xf32>
    %281 = arith.addf %274, %280 : vector<96x64xf32>
    %c4_262 = arith.constant 4 : index
    %c0_263 = arith.constant 0 : index
    %c0_264 = arith.constant 0 : index
    %282 = vector.load %arg24[%c4_262, %c0_263, %c0_264] : memref<5x96x128xf32, #tpu.memory_space<vmem>>, vector<1x96x128xf32>
    %283 = vector.shape_cast %282 : vector<1x96x128xf32> to vector<96x128xf32>
    %cst_265 = arith.constant dense<0.000000e+00> : vector<96x64xf32>
    %284 = tpu.matmul %283, %254, %cst_265 {dimension_numbers = #tpu.dot_dimension_numbers<[1], [0], [0], [1], [0, 0, 1, 1], [], []>} : vector<96x128xf32>, vector<128x64xf32>, vector<96x64xf32> -> vector<96x64xf32>
    %c4_266 = arith.constant 4 : index
    %c0_267 = arith.constant 0 : index
    %c0_268 = arith.constant 0 : index
    %285 = vector.load %arg25[%c4_266, %c0_267, %c0_268] : memref<5x64x64xf32, #tpu.memory_space<vmem>>, vector<1x64x64xf32>
    %286 = vector.shape_cast %285 : vector<1x64x64xf32> to vector<64x64xf32>
    %cst_269 = arith.constant dense<0.000000e+00> : vector<96x64xf32>
    %287 = tpu.matmul %284, %286, %cst_269 {dimension_numbers = #tpu.dot_dimension_numbers<[1], [0], [0], [1], [0, 0, 1, 1], [], []>} : vector<96x64xf32>, vector<64x64xf32>, vector<96x64xf32> -> vector<96x64xf32>
    %288 = arith.addf %281, %287 : vector<96x64xf32>
    %c0_270 = arith.constant 0 : index
    %c0_271 = arith.constant 0 : index
    %289 = vector.load %arg26[%c0_270, %c0_271] : memref<96x1xf32, #tpu.memory_space<vmem>>, vector<96x1xf32>
    %290 = vector.broadcast %289 : vector<96x1xf32> to vector<96x64xf32>
    %291 = arith.addf %288, %290 : vector<96x64xf32>
    %292 = math.tanh %291 : vector<96x64xf32>
    %c0_272 = arith.constant 0 : index
    %c0_273 = arith.constant 0 : index
    %293 = vector.load %arg27[%c0_272, %c0_273] : memref<96x64xf32, #tpu.memory_space<vmem>>, vector<96x64xf32>
    tpu.vector_store %arg27[%c0_272, %c0_273], %292 {strides = array<i32>} : memref<96x64xf32, #tpu.memory_space<vmem>>, vector<96x64xf32>,
    return
  }
}

</mosaic_0001>

<llo_original>
// kernel: decoder_forward.1
$region0: #{decoder_forward.1}
  #allocation0 [shape = 'u32[]', space=smem, size = 0x4, offset = 0x4, fixed_abs, tag = 'smem constant byte address 0x4 - core index']
  #allocation1 [shape = 'u32[144,128]{1,0:T(1,128)}', space=vmem, size = 0x12000, scoped, tag = 'internal scratch']
  %s0 = inlined_call_operand.vmem [shape: f32[16,2], index: 0, kind: input, shape index: {}]
  %s1 = inlined_call_operand.vmem [shape: f32[4,64,16], index: 1, kind: input, shape index: {}]
  %s2 = inlined_call_operand.hbm [shape: f32[4,2,8], index: 2, kind: input, shape index: {}]
  %s3 = inlined_call_operand.hbm [shape: f32[8,8], index: 3, kind: input, shape index: {}]
  %s4 = inlined_call_operand.vmem [shape: f32[64,8], index: 4, kind: input, shape index: {}]
  %s5 = inlined_call_operand.vmem [shape: f32[64,8], index: 5, kind: input, shape index: {}]
  %s6 = inlined_call_operand.vmem [shape: f32[5,128,64], index: 6, kind: input, shape index: {}]
  %s7 = inlined_call_operand.hbm [shape: f32[5,8,16], index: 7, kind: input, shape index: {}]
  %s8 = inlined_call_operand.hbm [shape: f32[16,128], index: 8, kind: input, shape index: {}]
  %s9 = inlined_call_operand.vmem [shape: f32[128,16], index: 9, kind: input, shape index: {}]
  %s10 = inlined_call_operand.vmem [shape: f32[16,1], index: 10, kind: input, shape index: {}]
  %s11 = inlined_call_operand.vmem [shape: f32[16,1], index: 11, kind: input, shape index: {}]
  %s12 = inlined_call_operand.vmem [shape: f32[5,128,128], index: 12, kind: input, shape index: {}]
  %s13 = inlined_call_operand.hbm [shape: f32[5,16,32], index: 13, kind: input, shape index: {}]
  %s14 = inlined_call_operand.hbm [shape: f32[8,128], index: 14, kind: input, shape index: {}]
  %s15 = inlined_call_operand.vmem [shape: f32[128,8], index: 15, kind: input, shape index: {}]
  %s16 = inlined_call_operand.vmem [shape: f32[8,1], index: 16, kind: input, shape index: {}]
  %s17 = inlined_call_operand.vmem [shape: f32[8,1], index: 17, kind: input, shape index: {}]
  %s18 = inlined_call_operand.vmem [shape: f32[5,128,128], index: 18, kind: input, shape index: {}]
  %s19 = inlined_call_operand.hbm [shape: f32[5,32,64], index: 19, kind: input, shape index: {}]
  %s20 = inlined_call_operand.hbm [shape: f32[4,128], index: 20, kind: input, shape index: {}]
  %s21 = inlined_call_operand.vmem [shape: f32[128,4], index: 21, kind: input, shape index: {}]
  %s22 = inlined_call_operand.vmem [shape: f32[4,1], index: 22, kind: input, shape index: {}]
  %s23 = inlined_call_operand.vmem [shape: f32[4,1], index: 23, kind: input, shape index: {}]
  %s24 = inlined_call_operand.vmem [shape: f32[5,96,128], index: 24, kind: input, shape index: {}]
  %s25 = inlined_call_operand.vmem [shape: f32[5,64,64], index: 25, kind: input, shape index: {}]
  %s26 = inlined_call_operand.vmem [shape: f32[96,1], index: 26, kind: input, shape index: {}]
  %s27 = inlined_call_operand.vmem [shape: f32[96,64], index: 27, kind: output, shape index: {}]
  %s28 = sld [smem:[#allocation0]]
  $region150: #{decoder_forward.1} parent=0
    _
  %s30 = ssub.s32 1, %s28
  %s31 = scalar_select 0, %s30, %s28
  $region1: #{decoder_forward.1} parent=0
    #allocation2 [shape = 'u8[4096]{0}', space=vmem, size = 0x1000, scoped, tag = 'input window, operand 2, single buffered']
    #allocation3 [shape = 's32[1]{0}', space=sflag, size = 0x4, scoped, tag = 'scoped memory for decoder_forward.1']
    #allocation4 [shape = 'u8[4096]{0}', space=vmem, size = 0x1000, scoped, tag = 'input window, operand 3, single buffered']
    #allocation5 [shape = 's32[1]{0}', space=sflag, size = 0x4, scoped, tag = 'scoped memory for decoder_forward.1']
    #allocation6 [shape = 'u8[20480]{0}', space=vmem, size = 0x5000, scoped, tag = 'input window, operand 7, single buffered']
    #allocation7 [shape = 'u8[8192]{0}', space=vmem, size = 0x2000, scoped, tag = 'input window, operand 8, single buffered']
    #allocation8 [shape = 's32[1]{0}', space=sflag, size = 0x4, scoped, tag = 'scoped memory for decoder_forward.1']
    #allocation9 [shape = 'u8[40960]{0}', space=vmem, size = 0xa000, scoped, tag = 'input window, operand 13, single buffered']
    #allocation10 [shape = 'u8[4096]{0}', space=vmem, size = 0x1000, scoped, tag = 'input window, operand 14, single buffered']
    #allocation11 [shape = 's32[1]{0}', space=sflag, size = 0x4, scoped, tag = 'scoped memory for decoder_forward.1']
    #allocation12 [shape = 'u8[81920]{0}', space=vmem, size = 0x14000, scoped, tag = 'input window, operand 19, single buffered']
    #allocation13 [shape = 'u8[2048]{0}', space=vmem, size = 0x800, scoped, tag = 'input window, operand 20, single buffered']
    #allocation14 [shape = 's32[1]{0}', space=sflag, size = 0x4, scoped, tag = 'scoped memory for decoder_forward.1']
    %32 = vsyncpa [#allocation3], 0
    %33 = vsyncpa [#allocation5], 0
    %34 = vsyncpa [#allocation8], 0
    %35 = vsyncpa [#allocation11], 0
    %36 = vsyncpa [#allocation14], 0
    // Predicated region
    $region2: #{decoder_forward.1} parent=1 // pred_check
      _
    $region3: #{decoder_forward.1} parent=1 // pred_check_branch
      %38 = sbr.rel (0) target = $region5
    $region4: #{decoder_forward.1} parent=1 // pred_region
      _
    $region5: #{decoder_forward.1} parent=1 // pred_fallthru
      _
    // Predicated region
    $region6: #{decoder_forward.1} parent=1 // pred_check
      _
    $region7: #{decoder_forward.1} parent=1 // pred_check_branch
      %40 = sbr.rel (0) target = $region9
    $region8: #{decoder_forward.1} parent=1 // pred_region
      _
    $region9: #{decoder_forward.1} parent=1 // pred_fallthru
      _
    // Predicated region
    $region10: #{decoder_forward.1} parent=1 // pred_check
      _
    $region11: #{decoder_forward.1} parent=1 // pred_check_branch
      %42 = sbr.rel (0) target = $region13
    $region12: #{decoder_forward.1} parent=1 // pred_region
      %s44 = ssub.s32 128, 128
      %45 = vsyncadd [#allocation3], %s44
      %s46 = sshll.u32 [#allocation2], 4
      %s47 = int_to_ptr.vmem [resolvable:$true] %s46
      %52 = dma.hbm_to_vmem [thread:$0]  %s2, 128, %s47, [#allocation3], 32, 32, 2
    $region13: #{decoder_forward.1} parent=1 // pred_fallthru
      _
    // Predicated region
    $region14: #{decoder_forward.1} parent=1 // pred_check
      _
    $region15: #{decoder_forward.1} parent=1 // pred_check_branch
      %54 = sbr.rel (0) target = $region17
    $region16: #{decoder_forward.1} parent=1 // pred_region
      %s56 = ssub.s32 128, 128
      %57 = vsyncadd [#allocation5], %s56
      %s59 = sshll.u32 [#allocation4], 4
      %s60 = int_to_ptr.vmem [resolvable:$true] %s59
      %62 = dma.hbm_to_vmem [thread:$0]  %s3, 128, %s60, [#allocation5]
    $region17: #{decoder_forward.1} parent=1 // pred_fallthru
      _
    // Predicated region
    $region18: #{decoder_forward.1} parent=1 // pred_check
      _
    $region19: #{decoder_forward.1} parent=1 // pred_check_branch
      %64 = sbr.rel (0) target = $region21
    $region20: #{decoder_forward.1} parent=1 // pred_region
      _
    $region21: #{decoder_forward.1} parent=1 // pred_fallthru
      _
    // Predicated region
    $region22: #{decoder_forward.1} parent=1 // pred_check
      _
    $region23: #{decoder_forward.1} parent=1 // pred_check_branch
      %66 = sbr.rel (0) target = $region25
    $region24: #{decoder_forward.1} parent=1 // pred_region
      _
    $region25: #{decoder_forward.1} parent=1 // pred_fallthru
      _
    // Predicated region
    $region26: #{decoder_forward.1} parent=1 // pred_check
      _
    $region27: #{decoder_forward.1} parent=1 // pred_check_branch
      %68 = sbr.rel (0) target = $region29
    $region28: #{decoder_forward.1} parent=1 // pred_region
      _
    $region29: #{decoder_forward.1} parent=1 // pred_fallthru
      _
    // Predicated region
    $region30: #{decoder_forward.1} parent=1 // pred_check
      _
    $region31: #{decoder_forward.1} parent=1 // pred_check_branch
      %70 = sbr.rel (0) target = $region33
    $region32: #{decoder_forward.1} parent=1 // pred_region
      %s72 = ssub.s32 640, 640
      %73 = vsyncadd [#allocation5], %s72
      %s74 = sshll.u32 [#allocation6], 4
      %s75 = int_to_ptr.vmem [resolvable:$true] %s74
      %80 = dma.hbm_to_vmem [thread:$0]  %s7, 640, %s75, [#allocation5], 128, 128, 8
    $region33: #{decoder_forward.1} parent=1 // pred_fallthru
      _
    // Predicated region
    $region34: #{decoder_forward.1} parent=1 // pred_check
      _
    $region35: #{decoder_forward.1} parent=1 // pred_check_branch
      %82 = sbr.rel (0) target = $region37
    $region36: #{decoder_forward.1} parent=1 // pred_region
      %s84 = ssub.s32 256, 256
      %85 = vsyncadd [#allocation8], %s84
      %s86 = sshll.u32 [#allocation7], 4
      %s87 = int_to_ptr.vmem [resolvable:$true] %s86
      %92 = dma.hbm_to_vmem [thread:$0]  %s8, 256, %s87, [#allocation8], 128, 128, 8
    $region37: #{decoder_forward.1} parent=1 // pred_fallthru
      _
    // Predicated region
    $region38: #{decoder_forward.1} parent=1 // pred_check
      _
    $region39: #{decoder_forward.1} parent=1 // pred_check_branch
      %94 = sbr.rel (0) target = $region41
    $region40: #{decoder_forward.1} parent=1 // pred_region
      _
    $region41: #{decoder_forward.1} parent=1 // pred_fallthru
      _
    // Predicated region
    $region42: #{decoder_forward.1} parent=1 // pred_check
      _
    $region43: #{decoder_forward.1} parent=1 // pred_check_branch
      %96 = sbr.rel (0) target = $region45
    $region44: #{decoder_forward.1} parent=1 // pred_region
      _
    $region45: #{decoder_forward.1} parent=1 // pred_fallthru
      _
    // Predicated region
    $region46: #{decoder_forward.1} parent=1 // pred_check
      _
    $region47: #{decoder_forward.1} parent=1 // pred_check_branch
      %98 = sbr.rel (0) target = $region49
    $region48: #{decoder_forward.1} parent=1 // pred_region
      _
    $region49: #{decoder_forward.1} parent=1 // pred_fallthru
      _
    // Predicated region
    $region50: #{decoder_forward.1} parent=1 // pred_check
      _
    $region51: #{decoder_forward.1} parent=1 // pred_check_branch
      %100 = sbr.rel (0) target = $region53
    $region52: #{decoder_forward.1} parent=1 // pred_region
      _
    $region53: #{decoder_forward.1} parent=1 // pred_fallthru
      _
    // Predicated region
    $region54: #{decoder_forward.1} parent=1 // pred_check
      _
    $region55: #{decoder_forward.1} parent=1 // pred_check_branch
      %102 = sbr.rel (0) target = $region57
    $region56: #{decoder_forward.1} parent=1 // pred_region
      %s104 = ssub.s32 1280, 1280
      %105 = vsyncadd [#allocation8], %s104
      %s106 = sshll.u32 [#allocation9], 4
      %s107 = int_to_ptr.vmem [resolvable:$true] %s106
      %112 = dma.hbm_to_vmem [thread:$0]  %s13, 1280, %s107, [#allocation8], 128, 128, 8
    $region57: #{decoder_forward.1} parent=1 // pred_fallthru
      _
    // Predicated region
    $region58: #{decoder_forward.1} parent=1 // pred_check
      _
    $region59: #{decoder_forward.1} parent=1 // pred_check_branch
      %114 = sbr.rel (0) target = $region61
    $region60: #{decoder_forward.1} parent=1 // pred_region
      %s116 = ssub.s32 128, 128
      %117 = vsyncadd [#allocation11], %s116
      %s119 = sshll.u32 [#allocation10], 4
      %s120 = int_to_ptr.vmem [resolvable:$true] %s119
      %122 = dma.hbm_to_vmem [thread:$0]  %s14, 128, %s120, [#allocation11]
    $region61: #{decoder_forward.1} parent=1 // pred_fallthru
      _
    // Predicated region
    $region62: #{decoder_forward.1} parent=1 // pred_check
      _
    $region63: #{decoder_forward.1} parent=1 // pred_check_branch
      %124 = sbr.rel (0) target = $region65
    $region64: #{decoder_forward.1} parent=1 // pred_region
      _
    $region65: #{decoder_forward.1} parent=1 // pred_fallthru
      _
    // Predicated region
    $region66: #{decoder_forward.1} parent=1 // pred_check
      _
    $region67: #{decoder_forward.1} parent=1 // pred_check_branch
      %126 = sbr.rel (0) target = $region69
    $region68: #{decoder_forward.1} parent=1 // pred_region
      _
    $region69: #{decoder_forward.1} parent=1 // pred_fallthru
      _
    // Predicated region
    $region70: #{decoder_forward.1} parent=1 // pred_check
      _
    $region71: #{decoder_forward.1} parent=1 // pred_check_branch
      %128 = sbr.rel (0) target = $region73
    $region72: #{decoder_forward.1} parent=1 // pred_region
      _
    $region73: #{decoder_forward.1} parent=1 // pred_fallthru
      _
    // Predicated region
    $region74: #{decoder_forward.1} parent=1 // pred_check
      _
    $region75: #{decoder_forward.1} parent=1 // pred_check_branch
      %130 = sbr.rel (0) target = $region77
    $region76: #{decoder_forward.1} parent=1 // pred_region
      _
    $region77: #{decoder_forward.1} parent=1 // pred_fallthru
      _
    // Predicated region
    $region78: #{decoder_forward.1} parent=1 // pred_check
      _
    $region79: #{decoder_forward.1} parent=1 // pred_check_branch
      %132 = sbr.rel (0) target = $region81
    $region80: #{decoder_forward.1} parent=1 // pred_region
      %s134 = ssub.s32 2560, 2560
      %135 = vsyncadd [#allocation11], %s134
      %s136 = sshll.u32 [#allocation12], 4
      %s137 = int_to_ptr.vmem [resolvable:$true] %s136
      %142 = dma.hbm_to_vmem [thread:$0]  %s19, 2560, %s137, [#allocation11], 128, 128, 8
    $region81: #{decoder_forward.1} parent=1 // pred_fallthru
      _
    // Predicated region
    $region82: #{decoder_forward.1} parent=1 // pred_check
      _
    $region83: #{decoder_forward.1} parent=1 // pred_check_branch
      %144 = sbr.rel (0) target = $region85
    $region84: #{decoder_forward.1} parent=1 // pred_region
      %s146 = ssub.s32 64, 64
      %147 = vsyncadd [#allocation14], %s146
      %s149 = sshll.u32 [#allocation13], 4
      %s150 = int_to_ptr.vmem [resolvable:$true] %s149
      %152 = dma.hbm_to_vmem [thread:$0]  %s20, 64, %s150, [#allocation14]
    $region85: #{decoder_forward.1} parent=1 // pred_fallthru
      _
    // Predicated region
    $region86: #{decoder_forward.1} parent=1 // pred_check
      _
    $region87: #{decoder_forward.1} parent=1 // pred_check_branch
      %154 = sbr.rel (0) target = $region89
    $region88: #{decoder_forward.1} parent=1 // pred_region
      _
    $region89: #{decoder_forward.1} parent=1 // pred_fallthru
      _
    // Predicated region
    $region90: #{decoder_forward.1} parent=1 // pred_check
      _
    $region91: #{decoder_forward.1} parent=1 // pred_check_branch
      %156 = sbr.rel (0) target = $region93
    $region92: #{decoder_forward.1} parent=1 // pred_region
      _
    $region93: #{decoder_forward.1} parent=1 // pred_fallthru
      _
    // Predicated region
    $region94: #{decoder_forward.1} parent=1 // pred_check
      _
    $region95: #{decoder_forward.1} parent=1 // pred_check_branch
      %158 = sbr.rel (0) target = $region97
    $region96: #{decoder_forward.1} parent=1 // pred_region
      _
    $region97: #{decoder_forward.1} parent=1 // pred_fallthru
      _
    // Predicated region
    $region98: #{decoder_forward.1} parent=1 // pred_check
      _
    $region99: #{decoder_forward.1} parent=1 // pred_check_branch
      %160 = sbr.rel (0) target = $region101
    $region100: #{decoder_forward.1} parent=1 // pred_region
      _
    $region101: #{decoder_forward.1} parent=1 // pred_fallthru
      _
    // Predicated region
    $region102: #{decoder_forward.1} parent=1 // pred_check
      _
    $region103: #{decoder_forward.1} parent=1 // pred_check_branch
      %162 = sbr.rel (0) target = $region105
    $region104: #{decoder_forward.1} parent=1 // pred_region
      _
    $region105: #{decoder_forward.1} parent=1 // pred_fallthru
      _
    // Predicated region
    $region106: #{decoder_forward.1} parent=1 // pred_check
      _
    $region107: #{decoder_forward.1} parent=1 // pred_check_branch
      %164 = sbr.rel (0) target = $region109
    $region108: #{decoder_forward.1} parent=1 // pred_region
      _
    $region109: #{decoder_forward.1} parent=1 // pred_fallthru
      _
    // Predicated region
    $region110: #{decoder_forward.1} parent=1 // pred_check
      _
    $region111: #{decoder_forward.1} parent=1 // pred_check_branch
      %166 = sbr.rel (0) target = $region113
    $region112: #{decoder_forward.1} parent=1 // pred_region
      %167 = dma.done [#allocation3], 128
    $region113: #{decoder_forward.1} parent=1 // pred_fallthru
      _
    // Predicated region
    $region114: #{decoder_forward.1} parent=1 // pred_check
      _
    $region115: #{decoder_forward.1} parent=1 // pred_check_branch
      %169 = sbr.rel (0) target = $region117
    $region116: #{decoder_forward.1} parent=1 // pred_region
      %170 = dma.done [#allocation5], 128
    $region117: #{decoder_forward.1} parent=1 // pred_fallthru
      _
    // Predicated region
    $region118: #{decoder_forward.1} parent=1 // pred_check
      _
    $region119: #{decoder_forward.1} parent=1 // pred_check_branch
      %172 = sbr.rel (0) target = $region121
    $region120: #{decoder_forward.1} parent=1 // pred_region
      %173 = dma.done [#allocation5], 640
    $region121: #{decoder_forward.1} parent=1 // pred_fallthru
      _
    // Predicated region
    $region122: #{decoder_forward.1} parent=1 // pred_check
      _
    $region123: #{decoder_forward.1} parent=1 // pred_check_branch
      %175 = sbr.rel (0) target = $region125
    $region124: #{decoder_forward.1} parent=1 // pred_region
      %176 = dma.done [#allocation8], 256
    $region125: #{decoder_forward.1} parent=1 // pred_fallthru
      _
    // Predicated region
    $region126: #{decoder_forward.1} parent=1 // pred_check
      _
    $region127: #{decoder_forward.1} parent=1 // pred_check_branch
      %178 = sbr.rel (0) target = $region129
    $region128: #{decoder_forward.1} parent=1 // pred_region
      %179 = dma.done [#allocation8], 1280
    $region129: #{decoder_forward.1} parent=1 // pred_fallthru
      _
    // Predicated region
    $region130: #{decoder_forward.1} parent=1 // pred_check
      _
    $region131: #{decoder_forward.1} parent=1 // pred_check_branch
      %181 = sbr.rel (0) target = $region133
    $region132: #{decoder_forward.1} parent=1 // pred_region
      %182 = dma.done [#allocation11], 128
    $region133: #{decoder_forward.1} parent=1 // pred_fallthru
      _
    // Predicated region
    $region134: #{decoder_forward.1} parent=1 // pred_check
      _
    $region135: #{decoder_forward.1} parent=1 // pred_check_branch
      %184 = sbr.rel (0) target = $region137
    $region136: #{decoder_forward.1} parent=1 // pred_region
      %185 = dma.done [#allocation11], 2560
    $region137: #{decoder_forward.1} parent=1 // pred_fallthru
      _
    // Predicated region
    $region138: #{decoder_forward.1} parent=1 // pred_check
      _
    $region139: #{decoder_forward.1} parent=1 // pred_check_branch
      %187 = sbr.rel (0) target = $region141
    $region140: #{decoder_forward.1} parent=1 // pred_region
      %188 = dma.done [#allocation14], 64
    $region141: #{decoder_forward.1} parent=1 // pred_fallthru
      _
    %v189 = vld [vmem:[%s0] sm:$0xff]
    %v190 = vld [vmem:[%s0 + $0x8] sm:$0xff]
    %v191 = vld [vmem:[%s1] sm:$0xff]
    %v192 = vld [vmem:[%s1 + $0x8] sm:$0xff]
    %v193 = vld [vmem:[%s1 + $0x10] sm:$0xff]
    %v194 = vld [vmem:[%s1 + $0x18] sm:$0xff]
    %v195 = vld [vmem:[%s1 + $0x20] sm:$0xff]
    %v196 = vld [vmem:[%s1 + $0x28] sm:$0xff]
    %v197 = vld [vmem:[%s1 + $0x30] sm:$0xff]
    %v198 = vld [vmem:[%s1 + $0x38] sm:$0xff]
    %vm199 = vcmask 130048
    %v201 = vsel %vm199, %v191, 0
    %v204 = vsel %vm199, %v192, 0
    %v207 = vsel %vm199, %v193, 0
    %v210 = vsel %vm199, %v194, 0
    %v213 = vsel %vm199, %v195, 0
    %v216 = vsel %vm199, %v196, 0
    %v219 = vsel %vm199, %v197, 0
    %v222 = vsel %vm199, %v198, 0
    %224 = vmatprep.subr.mxu0 0.0
    %225 = vmatpush1.msra.mxu0 %v189
    %226 = vmatprep.subr.mxu0 0.0
    %227 = vmatpush1.msra.mxu0 %v190
    %228 = vmatprep.subr.mxu0 0.0
    %229 = vmatpush1.msra.mxu0 0.0
    %230 = vmatprep.subr.mxu0 0.0
    %231 = vmatpush1.msra.mxu0 0.0
    %232 = vmatprep.subr.mxu0 0.0
    %233 = vmatpush1.msra.mxu0 0.0
    %234 = vmatprep.subr.mxu0 0.0
    %235 = vmatpush1.msra.mxu0 0.0
    %236 = vmatprep.subr.mxu0 0.0
    %237 = vmatpush1.msra.mxu0 0.0
    %238 = vmatprep.subr.mxu0 0.0
    %239 = vmatpush1.msra.mxu0 0.0
    %240 = vmatprep.subr.mxu0 0.0
    %241 = vmatpush1.msra.mxu0 0.0
    %242 = vmatprep.subr.mxu0 0.0
    %243 = vmatpush1.msra.mxu0 0.0
    %244 = vmatprep.subr.mxu0 0.0
    %245 = vmatpush1.msra.mxu0 0.0
    %246 = vmatprep.subr.mxu0 0.0
    %247 = vmatpush1.msra.mxu0 0.0
    %248 = vmatprep.subr.mxu0 0.0
    %249 = vmatpush1.msra.mxu0 0.0
    %250 = vmatprep.subr.mxu0 0.0
    %251 = vmatpush1.msra.mxu0 0.0
    %252 = vmatprep.subr.mxu0 0.0
    %253 = vmatpush1.msra.mxu0 0.0
    %254 = vmatprep.subr.mxu0 0.0
    %255 = vmatpush1.msra.mxu0 0.0
    %256 = vmatprep.subr.mxu0 0.0
    %257 = vmatpush1.msra.mxu0 0.0
    %258 = vmatprep.subr.mxu0 0.0
    %259 = vmatpush1.msra.mxu0 0.0
    %260 = vmatprep.subr.mxu0 0.0
    %261 = vmatpush1.msra.mxu0 0.0
    %262 = vmatprep.subr.mxu0 0.0
    %263 = vmatpush1.msra.mxu0 0.0
    %264 = vmatprep.subr.mxu0 0.0
    %265 = vmatpush1.msra.mxu0 0.0
    %266 = vmatprep.subr.mxu0 0.0
    %267 = vmatpush1.msra.mxu0 0.0
    %268 = vmatprep.subr.mxu0 0.0
    %269 = vmatpush1.msra.mxu0 0.0
    %270 = vmatprep.subr.mxu0 0.0
    %271 = vmatpush1.msra.mxu0 0.0
    %272 = vmatprep.subr.mxu0 0.0
    %273 = vmatpush1.msra.mxu0 0.0
    %274 = vmatprep.subr.mxu0 0.0
    %275 = vmatpush1.msra.mxu0 0.0
    %276 = vmatprep.subr.mxu0 0.0
    %277 = vmatpush1.msra.mxu0 0.0
    %278 = vmatprep.subr.mxu0 0.0
    %279 = vmatpush1.msra.mxu0 0.0
    %280 = vmatprep.subr.mxu0 0.0
    %281 = vmatpush1.msra.mxu0 0.0
    %282 = vmatprep.subr.mxu0 0.0
    %283 = vmatpush1.msra.mxu0 0.0
    %284 = vmatprep.subr.mxu0 0.0
    %285 = vmatpush1.msra.mxu0 0.0
    %286 = vmatprep.subr.mxu0 0.0
    %287 = vmatpush1.msra.mxu0 0.0
    %288 = vmatprep.mubr.f32.mxu0 0.0
    %289 = vmatmul.mubr.f32.gmra.mrb[0].mxu0 %v201
    %v290 = vpop.f32.mrb[0].mxu0
    %v291 = vadd.f32 0.0, %v290
    %v292 = vpop.f32.mrb[0].mxu0
    %293 = vmatprep.mubr.f32.mxu0 0.0
    %294 = vmatmul.mubr.f32.gmra.mrb[0].mxu0 %v204
    %v295 = vpop.f32.mrb[0].mxu0
    %v296 = vadd.f32 0.0, %v295
    %v297 = vpop.f32.mrb[0].mxu0
    %298 = vmatprep.mubr.f32.mxu0 0.0
    %299 = vmatmul.mubr.f32.gmra.mrb[0].mxu0 %v207
    %v300 = vpop.f32.mrb[0].mxu0
    %v301 = vadd.f32 0.0, %v300
    %v302 = vpop.f32.mrb[0].mxu0
    %303 = vmatprep.mubr.f32.mxu0 0.0
    %304 = vmatmul.mubr.f32.gmra.mrb[0].mxu0 %v210
    %v305 = vpop.f32.mrb[0].mxu0
    %v306 = vadd.f32 0.0, %v305
    %v307 = vpop.f32.mrb[0].mxu0
    %308 = vmatprep.mubr.f32.mxu0 0.0
    %309 = vmatmul.mubr.f32.gmra.mrb[0].mxu0 %v213
    %v310 = vpop.f32.mrb[0].mxu0
    %v311 = vadd.f32 0.0, %v310
    %v312 = vpop.f32.mrb[0].mxu0
    %313 = vmatprep.mubr.f32.mxu0 0.0
    %314 = vmatmul.mubr.f32.gmra.mrb[0].mxu0 %v216
    %v315 = vpop.f32.mrb[0].mxu0
    %v316 = vadd.f32 0.0, %v315
    %v317 = vpop.f32.mrb[0].mxu0
    %318 = vmatprep.mubr.f32.mxu0 0.0
    %319 = vmatmul.mubr.f32.gmra.mrb[0].mxu0 %v219
    %v320 = vpop.f32.mrb[0].mxu0
    %v321 = vadd.f32 0.0, %v320
    %v322 = vpop.f32.mrb[0].mxu0
    %323 = vmatprep.mubr.f32.mxu0 0.0
    %324 = vmatmul.mubr.f32.gmra.mrb[0].mxu0 %v222
    %v325 = vpop.f32.mrb[0].mxu0
    %v326 = vadd.f32 0.0, %v325
    %v327 = vpop.f32.mrb[0].mxu0
    %328 = vdwg.mxu0
    %v329 = vld [vmem:[#allocation2] sm:$0x3]
    %s330 = scalar_lea.vmem %s1, 64
    %v331 = vld [vmem:[%s330] sm:$0xff]
    %v332 = vld [vmem:[%s330 + $0x8] sm:$0xff]
    %v333 = vld [vmem:[%s330 + $0x10] sm:$0xff]
    %v334 = vld [vmem:[%s330 + $0x18] sm:$0xff]
    %v335 = vld [vmem:[%s330 + $0x20] sm:$0xff]
    %v336 = vld [vmem:[%s330 + $0x28] sm:$0xff]
    %v337 = vld [vmem:[%s330 + $0x30] sm:$0xff]
    %v338 = vld [vmem:[%s330 + $0x38] sm:$0xff]
    %v340 = vsel %vm199, %v331, 0
    %v343 = vsel %vm199, %v332, 0
    %v346 = vsel %vm199, %v333, 0
    %v349 = vsel %vm199, %v334, 0
    %v352 = vsel %vm199, %v335, 0
    %v355 = vsel %vm199, %v336, 0
    %v358 = vsel %vm199, %v337, 0
    %v361 = vsel %vm199, %v338, 0
    %363 = vmatprep.subr.mxu0 0.0
    %364 = vmatpush1.msra.mxu0 %v189
    %365 = vmatprep.subr.mxu0 0.0
    %366 = vmatpush1.msra.mxu0 %v190
    %367 = vmatprep.subr.mxu0 0.0
    %368 = vmatpush1.msra.mxu0 0.0
    %369 = vmatprep.subr.mxu0 0.0
    %370 = vmatpush1.msra.mxu0 0.0
    %371 = vmatprep.subr.mxu0 0.0
    %372 = vmatpush1.msra.mxu0 0.0
    %373 = vmatprep.subr.mxu0 0.0
    %374 = vmatpush1.msra.mxu0 0.0
    %375 = vmatprep.subr.mxu0 0.0
    %376 = vmatpush1.msra.mxu0 0.0
    %377 = vmatprep.subr.mxu0 0.0
    %378 = vmatpush1.msra.mxu0 0.0
    %379 = vmatprep.subr.mxu0 0.0
    %380 = vmatpush1.msra.mxu0 0.0
    %381 = vmatprep.subr.mxu0 0.0
    %382 = vmatpush1.msra.mxu0 0.0
    %383 = vmatprep.subr.mxu0 0.0
    %384 = vmatpush1.msra.mxu0 0.0
    %385 = vmatprep.subr.mxu0 0.0
    %386 = vmatpush1.msra.mxu0 0.0
    %387 = vmatprep.subr.mxu0 0.0
    %388 = vmatpush1.msra.mxu0 0.0
    %389 = vmatprep.subr.mxu0 0.0
    %390 = vmatpush1.msra.mxu0 0.0
    %391 = vmatprep.subr.mxu0 0.0
    %392 = vmatpush1.msra.mxu0 0.0
    %393 = vmatprep.subr.mxu0 0.0
    %394 = vmatpush1.msra.mxu0 0.0
    %395 = vmatprep.subr.mxu0 0.0
    %396 = vmatpush1.msra.mxu0 0.0
    %397 = vmatprep.subr.mxu0 0.0
    %398 = vmatpush1.msra.mxu0 0.0
    %399 = vmatprep.subr.mxu0 0.0
    %400 = vmatpush1.msra.mxu0 0.0
    %401 = vmatprep.subr.mxu0 0.0
    %402 = vmatpush1.msra.mxu0 0.0
    %403 = vmatprep.subr.mxu0 0.0
    %404 = vmatpush1.msra.mxu0 0.0
    %405 = vmatprep.subr.mxu0 0.0
    %406 = vmatpush1.msra.mxu0 0.0
    %407 = vmatprep.subr.mxu0 0.0
    %408 = vmatpush1.msra.mxu0 0.0
    %409 = vmatprep.subr.mxu0 0.0
    %410 = vmatpush1.msra.mxu0 0.0
    %411 = vmatprep.subr.mxu0 0.0
    %412 = vmatpush1.msra.mxu0 0.0
    %413 = vmatprep.subr.mxu0 0.0
    %414 = vmatpush1.msra.mxu0 0.0
    %415 = vmatprep.subr.mxu0 0.0
    %416 = vmatpush1.msra.mxu0 0.0
    %417 = vmatprep.subr.mxu0 0.0
    %418 = vmatpush1.msra.mxu0 0.0
    %419 = vmatprep.subr.mxu0 0.0
    %420 = vmatpush1.msra.mxu0 0.0
    %421 = vmatprep.subr.mxu0 0.0
    %422 = vmatpush1.msra.mxu0 0.0
    %423 = vmatprep.subr.mxu0 0.0
    %424 = vmatpush1.msra.mxu0 0.0
    %425 = vmatprep.subr.mxu0 0.0
    %426 = vmatpush1.msra.mxu0 0.0
    %427 = vmatprep.mubr.f32.mxu0 0.0
    %428 = vmatmul.mubr.f32.gmra.mrb[0].mxu0 %v340
    %v429 = vpop.f32.mrb[0].mxu0
    %v430 = vadd.f32 0.0, %v429
    %v431 = vpop.f32.mrb[0].mxu0
    %432 = vmatprep.mubr.f32.mxu0 0.0
    %433 = vmatmul.mubr.f32.gmra.mrb[0].mxu0 %v343
    %v434 = vpop.f32.mrb[0].mxu0
    %v435 = vadd.f32 0.0, %v434
    %v436 = vpop.f32.mrb[0].mxu0
    %437 = vmatprep.mubr.f32.mxu0 0.0
    %438 = vmatmul.mubr.f32.gmra.mrb[0].mxu0 %v346
    %v439 = vpop.f32.mrb[0].mxu0
    %v440 = vadd.f32 0.0, %v439
    %v441 = vpop.f32.mrb[0].mxu0
    %442 = vmatprep.mubr.f32.mxu0 0.0
    %443 = vmatmul.mubr.f32.gmra.mrb[0].mxu0 %v349
    %v444 = vpop.f32.mrb[0].mxu0
    %v445 = vadd.f32 0.0, %v444
    %v446 = vpop.f32.mrb[0].mxu0
    %447 = vmatprep.mubr.f32.mxu0 0.0
    %448 = vmatmul.mubr.f32.gmra.mrb[0].mxu0 %v352
    %v449 = vpop.f32.mrb[0].mxu0
    %v450 = vadd.f32 0.0, %v449
    %v451 = vpop.f32.mrb[0].mxu0
    %452 = vmatprep.mubr.f32.mxu0 0.0
    %453 = vmatmul.mubr.f32.gmra.mrb[0].mxu0 %v355
    %v454 = vpop.f32.mrb[0].mxu0
    %v455 = vadd.f32 0.0, %v454
    %v456 = vpop.f32.mrb[0].mxu0
    %457 = vmatprep.mubr.f32.mxu0 0.0
    %458 = vmatmul.mubr.f32.gmra.mrb[0].mxu0 %v358
    %v459 = vpop.f32.mrb[0].mxu0
    %v460 = vadd.f32 0.0, %v459
    %v461 = vpop.f32.mrb[0].mxu0
    %462 = vmatprep.mubr.f32.mxu0 0.0
    %463 = vmatmul.mubr.f32.gmra.mrb[0].mxu0 %v361
    %v464 = vpop.f32.mrb[0].mxu0
    %v465 = vadd.f32 0.0, %v464
    %v466 = vpop.f32.mrb[0].mxu0
    %467 = vdwg.mxu0
    %s468 = scalar_lea.vmem [#allocation2], 2
    %v469 = vld [vmem:[%s468] sm:$0x3]
    %vm470 = vcmask 15360
    %v472 = vsel %vm470, %v430, 0
    %v475 = vsel %vm470, %v435, 0
    %v478 = vsel %vm470, %v440, 0
    %v481 = vsel %vm470, %v445, 0
    %v484 = vsel %vm470, %v450, 0
    %v487 = vsel %vm470, %v455, 0
    %v490 = vsel %vm470, %v460, 0
    %v493 = vsel %vm470, %v465, 0
    %vm495 = vcmask 1041408
    %v497 = vsel %vm495, %v469, 0
    %499 = vmatprep.subr.mxu0 0.0
    %500 = vmatpush1.msra.mxu0 %v497
    %501 = vmatprep.subr.mxu0 0.0
    %502 = vmatpush1.msra.mxu0 0.0
    %503 = vmatprep.subr.mxu0 0.0
    %504 = vmatpush1.msra.mxu0 0.0
    %505 = vmatprep.subr.mxu0 0.0
    %506 = vmatpush1.msra.mxu0 0.0
    %507 = vmatprep.subr.mxu0 0.0
    %508 = vmatpush1.msra.mxu0 0.0
    %509 = vmatprep.subr.mxu0 0.0
    %510 = vmatpush1.msra.mxu0 0.0
    %511 = vmatprep.subr.mxu0 0.0
    %512 = vmatpush1.msra.mxu0 0.0
    %513 = vmatprep.subr.mxu0 0.0
    %514 = vmatpush1.msra.mxu0 0.0
    %515 = vmatprep.subr.mxu0 0.0
    %516 = vmatpush1.msra.mxu0 0.0
    %517 = vmatprep.subr.mxu0 0.0
    %518 = vmatpush1.msra.mxu0 0.0
    %519 = vmatprep.subr.mxu0 0.0
    %520 = vmatpush1.msra.mxu0 0.0
    %521 = vmatprep.subr.mxu0 0.0
    %522 = vmatpush1.msra.mxu0 0.0
    %523 = vmatprep.subr.mxu0 0.0
    %524 = vmatpush1.msra.mxu0 0.0
    %525 = vmatprep.subr.mxu0 0.0
    %526 = vmatpush1.msra.mxu0 0.0
    %527 = vmatprep.subr.mxu0 0.0
    %528 = vmatpush1.msra.mxu0 0.0
    %529 = vmatprep.subr.mxu0 0.0
    %530 = vmatpush1.msra.mxu0 0.0
    %531 = vmatprep.subr.mxu0 0.0
    %532 = vmatpush1.msra.mxu0 0.0
    %533 = vmatprep.subr.mxu0 0.0
    %534 = vmatpush1.msra.mxu0 0.0
    %535 = vmatprep.subr.mxu0 0.0
    %536 = vmatpush1.msra.mxu0 0.0
    %537 = vmatprep.subr.mxu0 0.0
    %538 = vmatpush1.msra.mxu0 0.0
    %539 = vmatprep.subr.mxu0 0.0
    %540 = vmatpush1.msra.mxu0 0.0
    %541 = vmatprep.subr.mxu0 0.0
    %542 = vmatpush1.msra.mxu0 0.0
    %543 = vmatprep.subr.mxu0 0.0
    %544 = vmatpush1.msra.mxu0 0.0
    %545 = vmatprep.subr.mxu0 0.0
    %546 = vmatpush1.msra.mxu0 0.0
    %547 = vmatprep.subr.mxu0 0.0
    %548 = vmatpush1.msra.mxu0 0.0
    %549 = vmatprep.subr.mxu0 0.0
    %550 = vmatpush1.msra.mxu0 0.0
    %551 = vmatprep.subr.mxu0 0.0
    %552 = vmatpush1.msra.mxu0 0.0
    %553 = vmatprep.subr.mxu0 0.0
    %554 = vmatpush1.msra.mxu0 0.0
    %555 = vmatprep.subr.mxu0 0.0
    %556 = vmatpush1.msra.mxu0 0.0
    %557 = vmatprep.subr.mxu0 0.0
    %558 = vmatpush1.msra.mxu0 0.0
    %559 = vmatprep.subr.mxu0 0.0
    %560 = vmatpush1.msra.mxu0 0.0
    %561 = vmatprep.subr.mxu0 0.0
    %562 = vmatpush1.msra.mxu0 0.0
    %563 = vmatprep.mubr.f32.mxu0 0.0
    %564 = vmatmul.mubr.f32.gmra.mrb[0].mxu0 %v472
    %v565 = vpop.f32.mrb[0].mxu0
    %v566 = vadd.f32 0.0, %v565
    %v567 = vpop.f32.mrb[0].mxu0
    %568 = vmatprep.mubr.f32.mxu0 0.0
    %569 = vmatmul.mubr.f32.gmra.mrb[0].mxu0 %v475
    %v570 = vpop.f32.mrb[0].mxu0
    %v571 = vadd.f32 0.0, %v570
    %v572 = vpop.f32.mrb[0].mxu0
    %573 = vmatprep.mubr.f32.mxu0 0.0
    %574 = vmatmul.mubr.f32.gmra.mrb[0].mxu0 %v478
    %v575 = vpop.f32.mrb[0].mxu0
    %v576 = vadd.f32 0.0, %v575
    %v577 = vpop.f32.mrb[0].mxu0
    %578 = vmatprep.mubr.f32.mxu0 0.0
    %579 = vmatmul.mubr.f32.gmra.mrb[0].mxu0 %v481
    %v580 = vpop.f32.mrb[0].mxu0
    %v581 = vadd.f32 0.0, %v580
    %v582 = vpop.f32.mrb[0].mxu0
    %583 = vmatprep.mubr.f32.mxu0 0.0
    %584 = vmatmul.mubr.f32.gmra.mrb[0].mxu0 %v484
    %v585 = vpop.f32.mrb[0].mxu0
    %v586 = vadd.f32 0.0, %v585
    %v587 = vpop.f32.mrb[0].mxu0
    %588 = vmatprep.mubr.f32.mxu0 0.0
    %589 = vmatmul.mubr.f32.gmra.mrb[0].mxu0 %v487
    %v590 = vpop.f32.mrb[0].mxu0
    %v591 = vadd.f32 0.0, %v590
    %v592 = vpop.f32.mrb[0].mxu0
    %593 = vmatprep.mubr.f32.mxu0 0.0
    %594 = vmatmul.mubr.f32.gmra.mrb[0].mxu0 %v490
    %v595 = vpop.f32.mrb[0].mxu0
    %v596 = vadd.f32 0.0, %v595
    %v597 = vpop.f32.mrb[0].mxu0
    %598 = vmatprep.mubr.f32.mxu0 0.0
    %599 = vmatmul.mubr.f32.gmra.mrb[0].mxu0 %v493
    %v600 = vpop.f32.mrb[0].mxu0
    %v601 = vadd.f32 0.0, %v600
    %v602 = vpop.f32.mrb[0].mxu0
    %603 = vdwg.mxu0
    %v605 = vsel %vm470, %v291, 0
    %v608 = vsel %vm470, %v296, 0
    %v611 = vsel %vm470, %v301, 0
    %v614 = vsel %vm470, %v306, 0
    %v617 = vsel %vm470, %v311, 0
    %v620 = vsel %vm470, %v316, 0
    %v623 = vsel %vm470, %v321, 0
    %v626 = vsel %vm470, %v326, 0
    %v629 = vsel %vm495, %v329, 0
    %631 = vmatprep.subr.mxu0 0.0
    %632 = vmatpush1.msra.mxu0 %v629
    %633 = vmatprep.subr.mxu0 0.0
    %634 = vmatpush1.msra.mxu0 0.0
    %635 = vmatprep.subr.mxu0 0.0
    %636 = vmatpush1.msra.mxu0 0.0
    %637 = vmatprep.subr.mxu0 0.0
    %638 = vmatpush1.msra.mxu0 0.0
    %639 = vmatprep.subr.mxu0 0.0
    %640 = vmatpush1.msra.mxu0 0.0
    %641 = vmatprep.subr.mxu0 0.0
    %642 = vmatpush1.msra.mxu0 0.0
    %643 = vmatprep.subr.mxu0 0.0
    %644 = vmatpush1.msra.mxu0 0.0
    %645 = vmatprep.subr.mxu0 0.0
    %646 = vmatpush1.msra.mxu0 0.0
    %647 = vmatprep.subr.mxu0 0.0
    %648 = vmatpush1.msra.mxu0 0.0
    %649 = vmatprep.subr.mxu0 0.0
    %650 = vmatpush1.msra.mxu0 0.0
    %651 = vmatprep.subr.mxu0 0.0
    %652 = vmatpush1.msra.mxu0 0.0
    %653 = vmatprep.subr.mxu0 0.0
    %654 = vmatpush1.msra.mxu0 0.0
    %655 = vmatprep.subr.mxu0 0.0
    %656 = vmatpush1.msra.mxu0 0.0
    %657 = vmatprep.subr.mxu0 0.0
    %658 = vmatpush1.msra.mxu0 0.0
    %659 = vmatprep.subr.mxu0 0.0
    %660 = vmatpush1.msra.mxu0 0.0
    %661 = vmatprep.subr.mxu0 0.0
    %662 = vmatpush1.msra.mxu0 0.0
    %663 = vmatprep.subr.mxu0 0.0
    %664 = vmatpush1.msra.mxu0 0.0
    %665 = vmatprep.subr.mxu0 0.0
    %666 = vmatpush1.msra.mxu0 0.0
    %667 = vmatprep.subr.mxu0 0.0
    %668 = vmatpush1.msra.mxu0 0.0
    %669 = vmatprep.subr.mxu0 0.0
    %670 = vmatpush1.msra.mxu0 0.0
    %671 = vmatprep.subr.mxu0 0.0
    %672 = vmatpush1.msra.mxu0 0.0
    %673 = vmatprep.subr.mxu0 0.0
    %674 = vmatpush1.msra.mxu0 0.0
    %675 = vmatprep.subr.mxu0 0.0
    %676 = vmatpush1.msra.mxu0 0.0
    %677 = vmatprep.subr.mxu0 0.0
    %678 = vmatpush1.msra.mxu0 0.0
    %679 = vmatprep.subr.mxu0 0.0
    %680 = vmatpush1.msra.mxu0 0.0
    %681 = vmatprep.subr.mxu0 0.0
    %682 = vmatpush1.msra.mxu0 0.0
    %683 = vmatprep.subr.mxu0 0.0
    %684 = vmatpush1.msra.mxu0 0.0
    %685 = vmatprep.subr.mxu0 0.0
    %686 = vmatpush1.msra.mxu0 0.0
    %687 = vmatprep.subr.mxu0 0.0
    %688 = vmatpush1.msra.mxu0 0.0
    %689 = vmatprep.subr.mxu0 0.0
    %690 = vmatpush1.msra.mxu0 0.0
    %691 = vmatprep.subr.mxu0 0.0
    %692 = vmatpush1.msra.mxu0 0.0
    %693 = vmatprep.subr.mxu0 0.0
    %694 = vmatpush1.msra.mxu0 0.0
    %695 = vmatprep.mubr.f32.mxu0 0.0
    %696 = vmatmul.mubr.f32.gmra.mrb[0].mxu0 %v605
    %v697 = vpop.f32.mrb[0].mxu0
    %v698 = vadd.f32 %v566, %v697
    %v699 = vpop.f32.mrb[0].mxu0
    %700 = vmatprep.mubr.f32.mxu0 0.0
    %701 = vmatmul.mubr.f32.gmra.mrb[0].mxu0 %v608
    %v702 = vpop.f32.mrb[0].mxu0
    %v703 = vadd.f32 %v571, %v702
    %v704 = vpop.f32.mrb[0].mxu0
    %705 = vmatprep.mubr.f32.mxu0 0.0
    %706 = vmatmul.mubr.f32.gmra.mrb[0].mxu0 %v611
    %v707 = vpop.f32.mrb[0].mxu0
    %v708 = vadd.f32 %v576, %v707
    %v709 = vpop.f32.mrb[0].mxu0
    %710 = vmatprep.mubr.f32.mxu0 0.0
    %711 = vmatmul.mubr.f32.gmra.mrb[0].mxu0 %v614
    %v712 = vpop.f32.mrb[0].mxu0
    %v713 = vadd.f32 %v581, %v712
    %v714 = vpop.f32.mrb[0].mxu0
    %715 = vmatprep.mubr.f32.mxu0 0.0
    %716 = vmatmul.mubr.f32.gmra.mrb[0].mxu0 %v617
    %v717 = vpop.f32.mrb[0].mxu0
    %v718 = vadd.f32 %v586, %v717
    %v719 = vpop.f32.mrb[0].mxu0
    %720 = vmatprep.mubr.f32.mxu0 0.0
    %721 = vmatmul.mubr.f32.gmra.mrb[0].mxu0 %v620
    %v722 = vpop.f32.mrb[0].mxu0
    %v723 = vadd.f32 %v591, %v722
    %v724 = vpop.f32.mrb[0].mxu0
    %725 = vmatprep.mubr.f32.mxu0 0.0
    %726 = vmatmul.mubr.f32.gmra.mrb[0].mxu0 %v623
    %v727 = vpop.f32.mrb[0].mxu0
    %v728 = vadd.f32 %v596, %v727
    %v729 = vpop.f32.mrb[0].mxu0
    %730 = vmatprep.mubr.f32.mxu0 0.0
    %731 = vmatmul.mubr.f32.gmra.mrb[0].mxu0 %v626
    %v732 = vpop.f32.mrb[0].mxu0
    %v733 = vadd.f32 %v601, %v732
    %v734 = vpop.f32.mrb[0].mxu0
    %735 = vdwg.mxu0
    %s736 = scalar_lea.vmem %s1, 128
    %v737 = vld [vmem:[%s736] sm:$0xff]
    %v738 = vld [vmem:[%s736 + $0x8] sm:$0xff]
    %v739 = vld [vmem:[%s736 + $0x10] sm:$0xff]
    %v740 = vld [vmem:[%s736 + $0x18] sm:$0xff]
    %v741 = vld [vmem:[%s736 + $0x20] sm:$0xff]
    %v742 = vld [vmem:[%s736 + $0x28] sm:$0xff]
    %v743 = vld [vmem:[%s736 + $0x30] sm:$0xff]
    %v744 = vld [vmem:[%s736 + $0x38] sm:$0xff]
    %v746 = vsel %vm199, %v737, 0
    %v749 = vsel %vm199, %v738, 0
    %v752 = vsel %vm199, %v739, 0
    %v755 = vsel %vm199, %v740, 0
    %v758 = vsel %vm199, %v741, 0
    %v761 = vsel %vm199, %v742, 0
    %v764 = vsel %vm199, %v743, 0
    %v767 = vsel %vm199, %v744, 0
    %769 = vmatprep.subr.mxu0 0.0
    %770 = vmatpush1.msra.mxu0 %v189
    %771 = vmatprep.subr.mxu0 0.0
    %772 = vmatpush1.msra.mxu0 %v190
    %773 = vmatprep.subr.mxu0 0.0
    %774 = vmatpush1.msra.mxu0 0.0
    %775 = vmatprep.subr.mxu0 0.0
    %776 = vmatpush1.msra.mxu0 0.0
    %777 = vmatprep.subr.mxu0 0.0
    %778 = vmatpush1.msra.mxu0 0.0
    %779 = vmatprep.subr.mxu0 0.0
    %780 = vmatpush1.msra.mxu0 0.0
    %781 = vmatprep.subr.mxu0 0.0
    %782 = vmatpush1.msra.mxu0 0.0
    %783 = vmatprep.subr.mxu0 0.0
    %784 = vmatpush1.msra.mxu0 0.0
    %785 = vmatprep.subr.mxu0 0.0
    %786 = vmatpush1.msra.mxu0 0.0
    %787 = vmatprep.subr.mxu0 0.0
    %788 = vmatpush1.msra.mxu0 0.0
    %789 = vmatprep.subr.mxu0 0.0
    %790 = vmatpush1.msra.mxu0 0.0
    %791 = vmatprep.subr.mxu0 0.0
    %792 = vmatpush1.msra.mxu0 0.0
    %793 = vmatprep.subr.mxu0 0.0
    %794 = vmatpush1.msra.mxu0 0.0
    %795 = vmatprep.subr.mxu0 0.0
    %796 = vmatpush1.msra.mxu0 0.0
    %797 = vmatprep.subr.mxu0 0.0
    %798 = vmatpush1.msra.mxu0 0.0
    %799 = vmatprep.subr.mxu0 0.0
    %800 = vmatpush1.msra.mxu0 0.0
    %801 = vmatprep.subr.mxu0 0.0
    %802 = vmatpush1.msra.mxu0 0.0
    %803 = vmatprep.subr.mxu0 0.0
    %804 = vmatpush1.msra.mxu0 0.0
    %805 = vmatprep.subr.mxu0 0.0
    %806 = vmatpush1.msra.mxu0 0.0
    %807 = vmatprep.subr.mxu0 0.0
    %808 = vmatpush1.msra.mxu0 0.0
    %809 = vmatprep.subr.mxu0 0.0
    %810 = vmatpush1.msra.mxu0 0.0
    %811 = vmatprep.subr.mxu0 0.0
    %812 = vmatpush1.msra.mxu0 0.0
    %813 = vmatprep.subr.mxu0 0.0
    %814 = vmatpush1.msra.mxu0 0.0
    %815 = vmatprep.subr.mxu0 0.0
    %816 = vmatpush1.msra.mxu0 0.0
    %817 = vmatprep.subr.mxu0 0.0
    %818 = vmatpush1.msra.mxu0 0.0
    %819 = vmatprep.subr.mxu0 0.0
    %820 = vmatpush1.msra.mxu0 0.0
    %821 = vmatprep.subr.mxu0 0.0
    %822 = vmatpush1.msra.mxu0 0.0
    %823 = vmatprep.subr.mxu0 0.0
    %824 = vmatpush1.msra.mxu0 0.0
    %825 = vmatprep.subr.mxu0 0.0
    %826 = vmatpush1.msra.mxu0 0.0
    %827 = vmatprep.subr.mxu0 0.0
    %828 = vmatpush1.msra.mxu0 0.0
    %829 = vmatprep.subr.mxu0 0.0
    %830 = vmatpush1.msra.mxu0 0.0
    %831 = vmatprep.subr.mxu0 0.0
    %832 = vmatpush1.msra.mxu0 0.0
    %833 = vmatprep.mubr.f32.mxu0 0.0
    %834 = vmatmul.mubr.f32.gmra.mrb[0].mxu0 %v746
    %v835 = vpop.f32.mrb[0].mxu0
    %v836 = vadd.f32 0.0, %v835
    %v837 = vpop.f32.mrb[0].mxu0
    %838 = vmatprep.mubr.f32.mxu0 0.0
    %839 = vmatmul.mubr.f32.gmra.mrb[0].mxu0 %v749
    %v840 = vpop.f32.mrb[0].mxu0
    %v841 = vadd.f32 0.0, %v840
    %v842 = vpop.f32.mrb[0].mxu0
    %843 = vmatprep.mubr.f32.mxu0 0.0
    %844 = vmatmul.mubr.f32.gmra.mrb[0].mxu0 %v752
    %v845 = vpop.f32.mrb[0].mxu0
    %v846 = vadd.f32 0.0, %v845
    %v847 = vpop.f32.mrb[0].mxu0
    %848 = vmatprep.mubr.f32.mxu0 0.0
    %849 = vmatmul.mubr.f32.gmra.mrb[0].mxu0 %v755
    %v850 = vpop.f32.mrb[0].mxu0
    %v851 = vadd.f32 0.0, %v850
    %v852 = vpop.f32.mrb[0].mxu0
    %853 = vmatprep.mubr.f32.mxu0 0.0
    %854 = vmatmul.mubr.f32.gmra.mrb[0].mxu0 %v758
    %v855 = vpop.f32.mrb[0].mxu0
    %v856 = vadd.f32 0.0, %v855
    %v857 = vpop.f32.mrb[0].mxu0
    %858 = vmatprep.mubr.f32.mxu0 0.0
    %859 = vmatmul.mubr.f32.gmra.mrb[0].mxu0 %v761
    %v860 = vpop.f32.mrb[0].mxu0
    %v861 = vadd.f32 0.0, %v860
    %v862 = vpop.f32.mrb[0].mxu0
    %863 = vmatprep.mubr.f32.mxu0 0.0
    %864 = vmatmul.mubr.f32.gmra.mrb[0].mxu0 %v764
    %v865 = vpop.f32.mrb[0].mxu0
    %v866 = vadd.f32 0.0, %v865
    %v867 = vpop.f32.mrb[0].mxu0
    %868 = vmatprep.mubr.f32.mxu0 0.0
    %869 = vmatmul.mubr.f32.gmra.mrb[0].mxu0 %v767
    %v870 = vpop.f32.mrb[0].mxu0
    %v871 = vadd.f32 0.0, %v870
    %v872 = vpop.f32.mrb[0].mxu0
    %873 = vdwg.mxu0
    %s874 = scalar_lea.vmem [#allocation2], 4
    %v875 = vld [vmem:[%s874] sm:$0x3]
    %v877 = vsel %vm470, %v836, 0
    %v880 = vsel %vm470, %v841, 0
    %v883 = vsel %vm470, %v846, 0
    %v886 = vsel %vm470, %v851, 0
    %v889 = vsel %vm470, %v856, 0
    %v892 = vsel %vm470, %v861, 0
    %v895 = vsel %vm470, %v866, 0
    %v898 = vsel %vm470, %v871, 0
    %v901 = vsel %vm495, %v875, 0
    %903 = vmatprep.subr.mxu0 0.0
    %904 = vmatpush1.msra.mxu0 %v901
    %905 = vmatprep.subr.mxu0 0.0
    %906 = vmatpush1.msra.mxu0 0.0
    %907 = vmatprep.subr.mxu0 0.0
    %908 = vmatpush1.msra.mxu0 0.0
    %909 = vmatprep.subr.mxu0 0.0
    %910 = vmatpush1.msra.mxu0 0.0
    %911 = vmatprep.subr.mxu0 0.0
    %912 = vmatpush1.msra.mxu0 0.0
    %913 = vmatprep.subr.mxu0 0.0
    %914 = vmatpush1.msra.mxu0 0.0
    %915 = vmatprep.subr.mxu0 0.0
    %916 = vmatpush1.msra.mxu0 0.0
    %917 = vmatprep.subr.mxu0 0.0
    %918 = vmatpush1.msra.mxu0 0.0
    %919 = vmatprep.subr.mxu0 0.0
    %920 = vmatpush1.msra.mxu0 0.0
    %921 = vmatprep.subr.mxu0 0.0
    %922 = vmatpush1.msra.mxu0 0.0
    %923 = vmatprep.subr.mxu0 0.0
    %924 = vmatpush1.msra.mxu0 0.0
    %925 = vmatprep.subr.mxu0 0.0
    %926 = vmatpush1.msra.mxu0 0.0
    %927 = vmatprep.subr.mxu0 0.0
    %928 = vmatpush1.msra.mxu0 0.0
    %929 = vmatprep.subr.mxu0 0.0
    %930 = vmatpush1.msra.mxu0 0.0
    %931 = vmatprep.subr.mxu0 0.0
    %932 = vmatpush1.msra.mxu0 0.0
    %933 = vmatprep.subr.mxu0 0.0
    %934 = vmatpush1.msra.mxu0 0.0
    %935 = vmatprep.subr.mxu0 0.0
    %936 = vmatpush1.msra.mxu0 0.0
    %937 = vmatprep.subr.mxu0 0.0
    %938 = vmatpush1.msra.mxu0 0.0
    %939 = vmatprep.subr.mxu0 0.0
    %940 = vmatpush1.msra.mxu0 0.0
    %941 = vmatprep.subr.mxu0 0.0
    %942 = vmatpush1.msra.mxu0 0.0
    %943 = vmatprep.subr.mxu0 0.0
    %944 = vmatpush1.msra.mxu0 0.0
    %945 = vmatprep.subr.mxu0 0.0
    %946 = vmatpush1.msra.mxu0 0.0
    %947 = vmatprep.subr.mxu0 0.0
    %948 = vmatpush1.msra.mxu0 0.0
    %949 = vmatprep.subr.mxu0 0.0
    %950 = vmatpush1.msra.mxu0 0.0
    %951 = vmatprep.subr.mxu0 0.0
    %952 = vmatpush1.msra.mxu0 0.0
    %953 = vmatprep.subr.mxu0 0.0
    %954 = vmatpush1.msra.mxu0 0.0
    %955 = vmatprep.subr.mxu0 0.0
    %956 = vmatpush1.msra.mxu0 0.0
    %957 = vmatprep.subr.mxu0 0.0
    %958 = vmatpush1.msra.mxu0 0.0
    %959 = vmatprep.subr.mxu0 0.0
    %960 = vmatpush1.msra.mxu0 0.0
    %961 = vmatprep.subr.mxu0 0.0
    %962 = vmatpush1.msra.mxu0 0.0
    %963 = vmatprep.subr.mxu0 0.0
    %964 = vmatpush1.msra.mxu0 0.0
    %965 = vmatprep.subr.mxu0 0.0
    %966 = vmatpush1.msra.mxu0 0.0
    %967 = vmatprep.mubr.f32.mxu0 0.0
    %968 = vmatmul.mubr.f32.gmra.mrb[0].mxu0 %v877
    %v969 = vpop.f32.mrb[0].mxu0
    %v970 = vadd.f32 0.0, %v969
    %v971 = vpop.f32.mrb[0].mxu0
    %972 = vmatprep.mubr.f32.mxu0 0.0
    %973 = vmatmul.mubr.f32.gmra.mrb[0].mxu0 %v880
    %v974 = vpop.f32.mrb[0].mxu0
    %v975 = vadd.f32 0.0, %v974
    %v976 = vpop.f32.mrb[0].mxu0
    %977 = vmatprep.mubr.f32.mxu0 0.0
    %978 = vmatmul.mubr.f32.gmra.mrb[0].mxu0 %v883
    %v979 = vpop.f32.mrb[0].mxu0
    %v980 = vadd.f32 0.0, %v979
    %v981 = vpop.f32.mrb[0].mxu0
    %982 = vmatprep.mubr.f32.mxu0 0.0
    %983 = vmatmul.mubr.f32.gmra.mrb[0].mxu0 %v886
    %v984 = vpop.f32.mrb[0].mxu0
    %v985 = vadd.f32 0.0, %v984
    %v986 = vpop.f32.mrb[0].mxu0
    %987 = vmatprep.mubr.f32.mxu0 0.0
    %988 = vmatmul.mubr.f32.gmra.mrb[0].mxu0 %v889
    %v989 = vpop.f32.mrb[0].mxu0
    %v990 = vadd.f32 0.0, %v989
    %v991 = vpop.f32.mrb[0].mxu0
    %992 = vmatprep.mubr.f32.mxu0 0.0
    %993 = vmatmul.mubr.f32.gmra.mrb[0].mxu0 %v892
    %v994 = vpop.f32.mrb[0].mxu0
    %v995 = vadd.f32 0.0, %v994
    %v996 = vpop.f32.mrb[0].mxu0
    %997 = vmatprep.mubr.f32.mxu0 0.0
    %998 = vmatmul.mubr.f32.gmra.mrb[0].mxu0 %v895
    %v999 = vpop.f32.mrb[0].mxu0
    %v1000 = vadd.f32 0.0, %v999
    %v1001 = vpop.f32.mrb[0].mxu0
    %1002 = vmatprep.mubr.f32.mxu0 0.0
    %1003 = vmatmul.mubr.f32.gmra.mrb[0].mxu0 %v898
    %v1004 = vpop.f32.mrb[0].mxu0
    %v1005 = vadd.f32 0.0, %v1004
    %v1006 = vpop.f32.mrb[0].mxu0
    %1007 = vdwg.mxu0
    %v1008 = vadd.f32 %v698, %v970
    %v1009 = vadd.f32 %v703, %v975
    %v1010 = vadd.f32 %v708, %v980
    %v1011 = vadd.f32 %v713, %v985
    %v1012 = vadd.f32 %v718, %v990
    %v1013 = vadd.f32 %v723, %v995
    %v1014 = vadd.f32 %v728, %v1000
    %v1015 = vadd.f32 %v733, %v1005
    %s1016 = scalar_lea.vmem %s1, 192
    %v1017 = vld [vmem:[%s1016] sm:$0xff]
    %v1018 = vld [vmem:[%s1016 + $0x8] sm:$0xff]
    %v1019 = vld [vmem:[%s1016 + $0x10] sm:$0xff]
    %v1020 = vld [vmem:[%s1016 + $0x18] sm:$0xff]
    %v1021 = vld [vmem:[%s1016 + $0x20] sm:$0xff]
    %v1022 = vld [vmem:[%s1016 + $0x28] sm:$0xff]
    %v1023 = vld [vmem:[%s1016 + $0x30] sm:$0xff]
    %v1024 = vld [vmem:[%s1016 + $0x38] sm:$0xff]
    %v1026 = vsel %vm199, %v1017, 0
    %v1029 = vsel %vm199, %v1018, 0
    %v1032 = vsel %vm199, %v1019, 0
    %v1035 = vsel %vm199, %v1020, 0
    %v1038 = vsel %vm199, %v1021, 0
    %v1041 = vsel %vm199, %v1022, 0
    %v1044 = vsel %vm199, %v1023, 0
    %v1047 = vsel %vm199, %v1024, 0
    %1049 = vmatprep.subr.mxu0 0.0
    %1050 = vmatpush1.msra.mxu0 %v189
    %1051 = vmatprep.subr.mxu0 0.0
    %1052 = vmatpush1.msra.mxu0 %v190
    %1053 = vmatprep.subr.mxu0 0.0
    %1054 = vmatpush1.msra.mxu0 0.0
    %1055 = vmatprep.subr.mxu0 0.0
    %1056 = vmatpush1.msra.mxu0 0.0
    %1057 = vmatprep.subr.mxu0 0.0
    %1058 = vmatpush1.msra.mxu0 0.0
    %1059 = vmatprep.subr.mxu0 0.0
    %1060 = vmatpush1.msra.mxu0 0.0
    %1061 = vmatprep.subr.mxu0 0.0
    %1062 = vmatpush1.msra.mxu0 0.0
    %1063 = vmatprep.subr.mxu0 0.0
    %1064 = vmatpush1.msra.mxu0 0.0
    %1065 = vmatprep.subr.mxu0 0.0
    %1066 = vmatpush1.msra.mxu0 0.0
    %1067 = vmatprep.subr.mxu0 0.0
    %1068 = vmatpush1.msra.mxu0 0.0
    %1069 = vmatprep.subr.mxu0 0.0
    %1070 = vmatpush1.msra.mxu0 0.0
    %1071 = vmatprep.subr.mxu0 0.0
    %1072 = vmatpush1.msra.mxu0 0.0
    %1073 = vmatprep.subr.mxu0 0.0
    %1074 = vmatpush1.msra.mxu0 0.0
    %1075 = vmatprep.subr.mxu0 0.0
    %1076 = vmatpush1.msra.mxu0 0.0
    %1077 = vmatprep.subr.mxu0 0.0
    %1078 = vmatpush1.msra.mxu0 0.0
    %1079 = vmatprep.subr.mxu0 0.0
    %1080 = vmatpush1.msra.mxu0 0.0
    %1081 = vmatprep.subr.mxu0 0.0
    %1082 = vmatpush1.msra.mxu0 0.0
    %1083 = vmatprep.subr.mxu0 0.0
    %1084 = vmatpush1.msra.mxu0 0.0
    %1085 = vmatprep.subr.mxu0 0.0
    %1086 = vmatpush1.msra.mxu0 0.0
    %1087 = vmatprep.subr.mxu0 0.0
    %1088 = vmatpush1.msra.mxu0 0.0
    %1089 = vmatprep.subr.mxu0 0.0
    %1090 = vmatpush1.msra.mxu0 0.0
    %1091 = vmatprep.subr.mxu0 0.0
    %1092 = vmatpush1.msra.mxu0 0.0
    %1093 = vmatprep.subr.mxu0 0.0
    %1094 = vmatpush1.msra.mxu0 0.0
    %1095 = vmatprep.subr.mxu0 0.0
    %1096 = vmatpush1.msra.mxu0 0.0
    %1097 = vmatprep.subr.mxu0 0.0
    %1098 = vmatpush1.msra.mxu0 0.0
    %1099 = vmatprep.subr.mxu0 0.0
    %1100 = vmatpush1.msra.mxu0 0.0
    %1101 = vmatprep.subr.mxu0 0.0
    %1102 = vmatpush1.msra.mxu0 0.0
    %1103 = vmatprep.subr.mxu0 0.0
    %1104 = vmatpush1.msra.mxu0 0.0
    %1105 = vmatprep.subr.mxu0 0.0
    %1106 = vmatpush1.msra.mxu0 0.0
    %1107 = vmatprep.subr.mxu0 0.0
    %1108 = vmatpush1.msra.mxu0 0.0
    %1109 = vmatprep.subr.mxu0 0.0
    %1110 = vmatpush1.msra.mxu0 0.0
    %1111 = vmatprep.subr.mxu0 0.0
    %1112 = vmatpush1.msra.mxu0 0.0
    %1113 = vmatprep.mubr.f32.mxu0 0.0
    %1114 = vmatmul.mubr.f32.gmra.mrb[0].mxu0 %v1026
    %v1115 = vpop.f32.mrb[0].mxu0
    %v1116 = vadd.f32 0.0, %v1115
    %v1117 = vpop.f32.mrb[0].mxu0
    %1118 = vmatprep.mubr.f32.mxu0 0.0
    %1119 = vmatmul.mubr.f32.gmra.mrb[0].mxu0 %v1029
    %v1120 = vpop.f32.mrb[0].mxu0
    %v1121 = vadd.f32 0.0, %v1120
    %v1122 = vpop.f32.mrb[0].mxu0
    %1123 = vmatprep.mubr.f32.mxu0 0.0
    %1124 = vmatmul.mubr.f32.gmra.mrb[0].mxu0 %v1032
    %v1125 = vpop.f32.mrb[0].mxu0
    %v1126 = vadd.f32 0.0, %v1125
    %v1127 = vpop.f32.mrb[0].mxu0
    %1128 = vmatprep.mubr.f32.mxu0 0.0
    %1129 = vmatmul.mubr.f32.gmra.mrb[0].mxu0 %v1035
    %v1130 = vpop.f32.mrb[0].mxu0
    %v1131 = vadd.f32 0.0, %v1130
    %v1132 = vpop.f32.mrb[0].mxu0
    %1133 = vmatprep.mubr.f32.mxu0 0.0
    %1134 = vmatmul.mubr.f32.gmra.mrb[0].mxu0 %v1038
    %v1135 = vpop.f32.mrb[0].mxu0
    %v1136 = vadd.f32 0.0, %v1135
    %v1137 = vpop.f32.mrb[0].mxu0
    %1138 = vmatprep.mubr.f32.mxu0 0.0
    %1139 = vmatmul.mubr.f32.gmra.mrb[0].mxu0 %v1041
    %v1140 = vpop.f32.mrb[0].mxu0
    %v1141 = vadd.f32 0.0, %v1140
    %v1142 = vpop.f32.mrb[0].mxu0
    %1143 = vmatprep.mubr.f32.mxu0 0.0
    %1144 = vmatmul.mubr.f32.gmra.mrb[0].mxu0 %v1044
    %v1145 = vpop.f32.mrb[0].mxu0
    %v1146 = vadd.f32 0.0, %v1145
    %v1147 = vpop.f32.mrb[0].mxu0
    %1148 = vmatprep.mubr.f32.mxu0 0.0
    %1149 = vmatmul.mubr.f32.gmra.mrb[0].mxu0 %v1047
    %v1150 = vpop.f32.mrb[0].mxu0
    %v1151 = vadd.f32 0.0, %v1150
    %v1152 = vpop.f32.mrb[0].mxu0
    %1153 = vdwg.mxu0
    %s1154 = scalar_lea.vmem [#allocation2], 6
    %v1155 = vld [vmem:[%s1154] sm:$0x3]
    %v1157 = vsel %vm470, %v1116, 0
    %v1160 = vsel %vm470, %v1121, 0
    %v1163 = vsel %vm470, %v1126, 0
    %v1166 = vsel %vm470, %v1131, 0
    %v1169 = vsel %vm470, %v1136, 0
    %v1172 = vsel %vm470, %v1141, 0
    %v1175 = vsel %vm470, %v1146, 0
    %v1178 = vsel %vm470, %v1151, 0
    %v1181 = vsel %vm495, %v1155, 0
    %1183 = vmatprep.subr.mxu0 0.0
    %1184 = vmatpush1.msra.mxu0 %v1181
    %1185 = vmatprep.subr.mxu0 0.0
    %1186 = vmatpush1.msra.mxu0 0.0
    %1187 = vmatprep.subr.mxu0 0.0
    %1188 = vmatpush1.msra.mxu0 0.0
    %1189 = vmatprep.subr.mxu0 0.0
    %1190 = vmatpush1.msra.mxu0 0.0
    %1191 = vmatprep.subr.mxu0 0.0
    %1192 = vmatpush1.msra.mxu0 0.0
    %1193 = vmatprep.subr.mxu0 0.0
    %1194 = vmatpush1.msra.mxu0 0.0
    %1195 = vmatprep.subr.mxu0 0.0
    %1196 = vmatpush1.msra.mxu0 0.0
    %1197 = vmatprep.subr.mxu0 0.0
    %1198 = vmatpush1.msra.mxu0 0.0
    %1199 = vmatprep.subr.mxu0 0.0
    %1200 = vmatpush1.msra.mxu0 0.0
    %1201 = vmatprep.subr.mxu0 0.0
    %1202 = vmatpush1.msra.mxu0 0.0
    %1203 = vmatprep.subr.mxu0 0.0
    %1204 = vmatpush1.msra.mxu0 0.0
    %1205 = vmatprep.subr.mxu0 0.0
    %1206 = vmatpush1.msra.mxu0 0.0
    %1207 = vmatprep.subr.mxu0 0.0
    %1208 = vmatpush1.msra.mxu0 0.0
    %1209 = vmatprep.subr.mxu0 0.0
    %1210 = vmatpush1.msra.mxu0 0.0
    %1211 = vmatprep.subr.mxu0 0.0
    %1212 = vmatpush1.msra.mxu0 0.0
    %1213 = vmatprep.subr.mxu0 0.0
    %1214 = vmatpush1.msra.mxu0 0.0
    %1215 = vmatprep.subr.mxu0 0.0
    %1216 = vmatpush1.msra.mxu0 0.0
    %1217 = vmatprep.subr.mxu0 0.0
    %1218 = vmatpush1.msra.mxu0 0.0
    %1219 = vmatprep.subr.mxu0 0.0
    %1220 = vmatpush1.msra.mxu0 0.0
    %1221 = vmatprep.subr.mxu0 0.0
    %1222 = vmatpush1.msra.mxu0 0.0
    %1223 = vmatprep.subr.mxu0 0.0
    %1224 = vmatpush1.msra.mxu0 0.0
    %1225 = vmatprep.subr.mxu0 0.0
    %1226 = vmatpush1.msra.mxu0 0.0
    %1227 = vmatprep.subr.mxu0 0.0
    %1228 = vmatpush1.msra.mxu0 0.0
    %1229 = vmatprep.subr.mxu0 0.0
    %1230 = vmatpush1.msra.mxu0 0.0
    %1231 = vmatprep.subr.mxu0 0.0
    %1232 = vmatpush1.msra.mxu0 0.0
    %1233 = vmatprep.subr.mxu0 0.0
    %1234 = vmatpush1.msra.mxu0 0.0
    %1235 = vmatprep.subr.mxu0 0.0
    %1236 = vmatpush1.msra.mxu0 0.0
    %1237 = vmatprep.subr.mxu0 0.0
    %1238 = vmatpush1.msra.mxu0 0.0
    %1239 = vmatprep.subr.mxu0 0.0
    %1240 = vmatpush1.msra.mxu0 0.0
    %1241 = vmatprep.subr.mxu0 0.0
    %1242 = vmatpush1.msra.mxu0 0.0
    %1243 = vmatprep.subr.mxu0 0.0
    %1244 = vmatpush1.msra.mxu0 0.0
    %1245 = vmatprep.subr.mxu0 0.0
    %1246 = vmatpush1.msra.mxu0 0.0
    %1247 = vmatprep.mubr.f32.mxu0 0.0
    %1248 = vmatmul.mubr.f32.gmra.mrb[0].mxu0 %v1157
    %v1249 = vpop.f32.mrb[0].mxu0
    %v1250 = vadd.f32 0.0, %v1249
    %v1251 = vpop.f32.mrb[0].mxu0
    %1252 = vmatprep.mubr.f32.mxu0 0.0
    %1253 = vmatmul.mubr.f32.gmra.mrb[0].mxu0 %v1160
    %v1254 = vpop.f32.mrb[0].mxu0
    %v1255 = vadd.f32 0.0, %v1254
    %v1256 = vpop.f32.mrb[0].mxu0
    %1257 = vmatprep.mubr.f32.mxu0 0.0
    %1258 = vmatmul.mubr.f32.gmra.mrb[0].mxu0 %v1163
    %v1259 = vpop.f32.mrb[0].mxu0
    %v1260 = vadd.f32 0.0, %v1259
    %v1261 = vpop.f32.mrb[0].mxu0
    %1262 = vmatprep.mubr.f32.mxu0 0.0
    %1263 = vmatmul.mubr.f32.gmra.mrb[0].mxu0 %v1166
    %v1264 = vpop.f32.mrb[0].mxu0
    %v1265 = vadd.f32 0.0, %v1264
    %v1266 = vpop.f32.mrb[0].mxu0
    %1267 = vmatprep.mubr.f32.mxu0 0.0
    %1268 = vmatmul.mubr.f32.gmra.mrb[0].mxu0 %v1169
    %v1269 = vpop.f32.mrb[0].mxu0
    %v1270 = vadd.f32 0.0, %v1269
    %v1271 = vpop.f32.mrb[0].mxu0
    %1272 = vmatprep.mubr.f32.mxu0 0.0
    %1273 = vmatmul.mubr.f32.gmra.mrb[0].mxu0 %v1172
    %v1274 = vpop.f32.mrb[0].mxu0
    %v1275 = vadd.f32 0.0, %v1274
    %v1276 = vpop.f32.mrb[0].mxu0
    %1277 = vmatprep.mubr.f32.mxu0 0.0
    %1278 = vmatmul.mubr.f32.gmra.mrb[0].mxu0 %v1175
    %v1279 = vpop.f32.mrb[0].mxu0
    %v1280 = vadd.f32 0.0, %v1279
    %v1281 = vpop.f32.mrb[0].mxu0
    %1282 = vmatprep.mubr.f32.mxu0 0.0
    %1283 = vmatmul.mubr.f32.gmra.mrb[0].mxu0 %v1178
    %v1284 = vpop.f32.mrb[0].mxu0
    %v1285 = vadd.f32 0.0, %v1284
    %v1286 = vpop.f32.mrb[0].mxu0
    %1287 = vdwg.mxu0
    %v1288 = vadd.f32 %v1008, %v1250
    %v1289 = vadd.f32 %v1009, %v1255
    %v1290 = vadd.f32 %v1010, %v1260
    %v1291 = vadd.f32 %v1011, %v1265
    %v1292 = vadd.f32 %v1012, %v1270
    %v1293 = vadd.f32 %v1013, %v1275
    %v1294 = vadd.f32 %v1014, %v1280
    %v1295 = vadd.f32 %v1015, %v1285
    %v1296 = vld [vmem:[#allocation4] sm:$0xff]
    %vm1297 = vcmask 64512
    %v1299 = vsel %vm1297, %v1288, 0
    %v1302 = vsel %vm1297, %v1289, 0
    %v1305 = vsel %vm1297, %v1290, 0
    %v1308 = vsel %vm1297, %v1291, 0
    %v1311 = vsel %vm1297, %v1292, 0
    %v1314 = vsel %vm1297, %v1293, 0
    %v1317 = vsel %vm1297, %v1294, 0
    %v1320 = vsel %vm1297, %v1295, 0
    %1322 = vmatprep.subr.mxu0 0.0
    %1323 = vmatpush1.msra.mxu0 %v1296
    %1324 = vmatprep.subr.mxu0 0.0
    %1325 = vmatpush1.msra.mxu0 0.0
    %1326 = vmatprep.subr.mxu0 0.0
    %1327 = vmatpush1.msra.mxu0 0.0
    %1328 = vmatprep.subr.mxu0 0.0
    %1329 = vmatpush1.msra.mxu0 0.0
    %1330 = vmatprep.subr.mxu0 0.0
    %1331 = vmatpush1.msra.mxu0 0.0
    %1332 = vmatprep.subr.mxu0 0.0
    %1333 = vmatpush1.msra.mxu0 0.0
    %1334 = vmatprep.subr.mxu0 0.0
    %1335 = vmatpush1.msra.mxu0 0.0
    %1336 = vmatprep.subr.mxu0 0.0
    %1337 = vmatpush1.msra.mxu0 0.0
    %1338 = vmatprep.subr.mxu0 0.0
    %1339 = vmatpush1.msra.mxu0 0.0
    %1340 = vmatprep.subr.mxu0 0.0
    %1341 = vmatpush1.msra.mxu0 0.0
    %1342 = vmatprep.subr.mxu0 0.0
    %1343 = vmatpush1.msra.mxu0 0.0
    %1344 = vmatprep.subr.mxu0 0.0
    %1345 = vmatpush1.msra.mxu0 0.0
    %1346 = vmatprep.subr.mxu0 0.0
    %1347 = vmatpush1.msra.mxu0 0.0
    %1348 = vmatprep.subr.mxu0 0.0
    %1349 = vmatpush1.msra.mxu0 0.0
    %1350 = vmatprep.subr.mxu0 0.0
    %1351 = vmatpush1.msra.mxu0 0.0
    %1352 = vmatprep.subr.mxu0 0.0
    %1353 = vmatpush1.msra.mxu0 0.0
    %1354 = vmatprep.subr.mxu0 0.0
    %1355 = vmatpush1.msra.mxu0 0.0
    %1356 = vmatprep.subr.mxu0 0.0
    %1357 = vmatpush1.msra.mxu0 0.0
    %1358 = vmatprep.subr.mxu0 0.0
    %1359 = vmatpush1.msra.mxu0 0.0
    %1360 = vmatprep.subr.mxu0 0.0
    %1361 = vmatpush1.msra.mxu0 0.0
    %1362 = vmatprep.subr.mxu0 0.0
    %1363 = vmatpush1.msra.mxu0 0.0
    %1364 = vmatprep.subr.mxu0 0.0
    %1365 = vmatpush1.msra.mxu0 0.0
    %1366 = vmatprep.subr.mxu0 0.0
    %1367 = vmatpush1.msra.mxu0 0.0
    %1368 = vmatprep.subr.mxu0 0.0
    %1369 = vmatpush1.msra.mxu0 0.0
    %1370 = vmatprep.subr.mxu0 0.0
    %1371 = vmatpush1.msra.mxu0 0.0
    %1372 = vmatprep.subr.mxu0 0.0
    %1373 = vmatpush1.msra.mxu0 0.0
    %1374 = vmatprep.subr.mxu0 0.0
    %1375 = vmatpush1.msra.mxu0 0.0
    %1376 = vmatprep.subr.mxu0 0.0
    %1377 = vmatpush1.msra.mxu0 0.0
    %1378 = vmatprep.subr.mxu0 0.0
    %1379 = vmatpush1.msra.mxu0 0.0
    %1380 = vmatprep.subr.mxu0 0.0
    %1381 = vmatpush1.msra.mxu0 0.0
    %1382 = vmatprep.subr.mxu0 0.0
    %1383 = vmatpush1.msra.mxu0 0.0
    %1384 = vmatprep.subr.mxu0 0.0
    %1385 = vmatpush1.msra.mxu0 0.0
    %1386 = vmatprep.mubr.f32.mxu0 0.0
    %1387 = vmatmul.mubr.f32.gmra.mrb[0].mxu0 %v1299
    %v1388 = vpop.f32.mrb[0].mxu0
    %v1389 = vadd.f32 0.0, %v1388
    %v1390 = vpop.f32.mrb[0].mxu0
    %1391 = vmatprep.mubr.f32.mxu0 0.0
    %1392 = vmatmul.mubr.f32.gmra.mrb[0].mxu0 %v1302
    %v1393 = vpop.f32.mrb[0].mxu0
    %v1394 = vadd.f32 0.0, %v1393
    %v1395 = vpop.f32.mrb[0].mxu0
    %1396 = vmatprep.mubr.f32.mxu0 0.0
    %1397 = vmatmul.mubr.f32.gmra.mrb[0].mxu0 %v1305
    %v1398 = vpop.f32.mrb[0].mxu0
    %v1399 = vadd.f32 0.0, %v1398
    %v1400 = vpop.f32.mrb[0].mxu0
    %1401 = vmatprep.mubr.f32.mxu0 0.0
    %1402 = vmatmul.mubr.f32.gmra.mrb[0].mxu0 %v1308
    %v1403 = vpop.f32.mrb[0].mxu0
    %v1404 = vadd.f32 0.0, %v1403
    %v1405 = vpop.f32.mrb[0].mxu0
    %1406 = vmatprep.mubr.f32.mxu0 0.0
    %1407 = vmatmul.mubr.f32.gmra.mrb[0].mxu0 %v1311
    %v1408 = vpop.f32.mrb[0].mxu0
    %v1409 = vadd.f32 0.0, %v1408
    %v1410 = vpop.f32.mrb[0].mxu0
    %1411 = vmatprep.mubr.f32.mxu0 0.0
    %1412 = vmatmul.mubr.f32.gmra.mrb[0].mxu0 %v1314
    %v1413 = vpop.f32.mrb[0].mxu0
    %v1414 = vadd.f32 0.0, %v1413
    %v1415 = vpop.f32.mrb[0].mxu0
    %1416 = vmatprep.mubr.f32.mxu0 0.0
    %1417 = vmatmul.mubr.f32.gmra.mrb[0].mxu0 %v1317
    %v1418 = vpop.f32.mrb[0].mxu0
    %v1419 = vadd.f32 0.0, %v1418
    %v1420 = vpop.f32.mrb[0].mxu0
    %1421 = vmatprep.mubr.f32.mxu0 0.0
    %1422 = vmatmul.mubr.f32.gmra.mrb[0].mxu0 %v1320
    %v1423 = vpop.f32.mrb[0].mxu0
    %v1424 = vadd.f32 0.0, %v1423
    %v1425 = vpop.f32.mrb[0].mxu0
    %1426 = vdwg.mxu0
    %v1427 = vmul.f32 %v1288, %v1288
    %v1428 = vmul.f32 %v1289, %v1289
    %v1429 = vmul.f32 %v1290, %v1290
    %v1430 = vmul.f32 %v1291, %v1291
    %v1431 = vmul.f32 %v1292, %v1292
    %v1432 = vmul.f32 %v1293, %v1293
    %v1433 = vmul.f32 %v1294, %v1294
    %v1434 = vmul.f32 %v1295, %v1295
    %v1436 = vsel %vm1297, %v1427, 0
    %v1439 = vsel %vm1297, %v1428, 0
    %v1442 = vsel %vm1297, %v1429, 0
    %v1445 = vsel %vm1297, %v1430, 0
    %v1448 = vsel %vm1297, %v1431, 0
    %v1451 = vsel %vm1297, %v1432, 0
    %v1454 = vsel %vm1297, %v1433, 0
    %v1457 = vsel %vm1297, %v1434, 0
    %1459 = vmatprep.subr.mxu0 0.0
    %1460 = vmatpush1.msra.mxu0 %v1296
    %1461 = vmatprep.subr.mxu0 0.0
    %1462 = vmatpush1.msra.mxu0 0.0
    %1463 = vmatprep.subr.mxu0 0.0
    %1464 = vmatpush1.msra.mxu0 0.0
    %1465 = vmatprep.subr.mxu0 0.0
    %1466 = vmatpush1.msra.mxu0 0.0
    %1467 = vmatprep.subr.mxu0 0.0
    %1468 = vmatpush1.msra.mxu0 0.0
    %1469 = vmatprep.subr.mxu0 0.0
    %1470 = vmatpush1.msra.mxu0 0.0
    %1471 = vmatprep.subr.mxu0 0.0
    %1472 = vmatpush1.msra.mxu0 0.0
    %1473 = vmatprep.subr.mxu0 0.0
    %1474 = vmatpush1.msra.mxu0 0.0
    %1475 = vmatprep.subr.mxu0 0.0
    %1476 = vmatpush1.msra.mxu0 0.0
    %1477 = vmatprep.subr.mxu0 0.0
    %1478 = vmatpush1.msra.mxu0 0.0
    %1479 = vmatprep.subr.mxu0 0.0
    %1480 = vmatpush1.msra.mxu0 0.0
    %1481 = vmatprep.subr.mxu0 0.0
    %1482 = vmatpush1.msra.mxu0 0.0
    %1483 = vmatprep.subr.mxu0 0.0
    %1484 = vmatpush1.msra.mxu0 0.0
    %1485 = vmatprep.subr.mxu0 0.0
    %1486 = vmatpush1.msra.mxu0 0.0
    %1487 = vmatprep.subr.mxu0 0.0
    %1488 = vmatpush1.msra.mxu0 0.0
    %1489 = vmatprep.subr.mxu0 0.0
    %1490 = vmatpush1.msra.mxu0 0.0
    %1491 = vmatprep.subr.mxu0 0.0
    %1492 = vmatpush1.msra.mxu0 0.0
    %1493 = vmatprep.subr.mxu0 0.0
    %1494 = vmatpush1.msra.mxu0 0.0
    %1495 = vmatprep.subr.mxu0 0.0
    %1496 = vmatpush1.msra.mxu0 0.0
    %1497 = vmatprep.subr.mxu0 0.0
    %1498 = vmatpush1.msra.mxu0 0.0
    %1499 = vmatprep.subr.mxu0 0.0
    %1500 = vmatpush1.msra.mxu0 0.0
    %1501 = vmatprep.subr.mxu0 0.0
    %1502 = vmatpush1.msra.mxu0 0.0
    %1503 = vmatprep.subr.mxu0 0.0
    %1504 = vmatpush1.msra.mxu0 0.0
    %1505 = vmatprep.subr.mxu0 0.0
    %1506 = vmatpush1.msra.mxu0 0.0
    %1507 = vmatprep.subr.mxu0 0.0
    %1508 = vmatpush1.msra.mxu0 0.0
    %1509 = vmatprep.subr.mxu0 0.0
    %1510 = vmatpush1.msra.mxu0 0.0
    %1511 = vmatprep.subr.mxu0 0.0
    %1512 = vmatpush1.msra.mxu0 0.0
    %1513 = vmatprep.subr.mxu0 0.0
    %1514 = vmatpush1.msra.mxu0 0.0
    %1515 = vmatprep.subr.mxu0 0.0
    %1516 = vmatpush1.msra.mxu0 0.0
    %1517 = vmatprep.subr.mxu0 0.0
    %1518 = vmatpush1.msra.mxu0 0.0
    %1519 = vmatprep.subr.mxu0 0.0
    %1520 = vmatpush1.msra.mxu0 0.0
    %1521 = vmatprep.subr.mxu0 0.0
    %1522 = vmatpush1.msra.mxu0 0.0
    %1523 = vmatprep.mubr.f32.mxu0 0.0
    %1524 = vmatmul.mubr.f32.gmra.mrb[0].mxu0 %v1436
    %v1525 = vpop.f32.mrb[0].mxu0
    %v1526 = vadd.f32 0.0, %v1525
    %v1527 = vpop.f32.mrb[0].mxu0
    %1528 = vmatprep.mubr.f32.mxu0 0.0
    %1529 = vmatmul.mubr.f32.gmra.mrb[0].mxu0 %v1439
    %v1530 = vpop.f32.mrb[0].mxu0
    %v1531 = vadd.f32 0.0, %v1530
    %v1532 = vpop.f32.mrb[0].mxu0
    %1533 = vmatprep.mubr.f32.mxu0 0.0
    %1534 = vmatmul.mubr.f32.gmra.mrb[0].mxu0 %v1442
    %v1535 = vpop.f32.mrb[0].mxu0
    %v1536 = vadd.f32 0.0, %v1535
    %v1537 = vpop.f32.mrb[0].mxu0
    %1538 = vmatprep.mubr.f32.mxu0 0.0
    %1539 = vmatmul.mubr.f32.gmra.mrb[0].mxu0 %v1445
    %v1540 = vpop.f32.mrb[0].mxu0
    %v1541 = vadd.f32 0.0, %v1540
    %v1542 = vpop.f32.mrb[0].mxu0
    %1543 = vmatprep.mubr.f32.mxu0 0.0
    %1544 = vmatmul.mubr.f32.gmra.mrb[0].mxu0 %v1448
    %v1545 = vpop.f32.mrb[0].mxu0
    %v1546 = vadd.f32 0.0, %v1545
    %v1547 = vpop.f32.mrb[0].mxu0
    %1548 = vmatprep.mubr.f32.mxu0 0.0
    %1549 = vmatmul.mubr.f32.gmra.mrb[0].mxu0 %v1451
    %v1550 = vpop.f32.mrb[0].mxu0
    %v1551 = vadd.f32 0.0, %v1550
    %v1552 = vpop.f32.mrb[0].mxu0
    %1553 = vmatprep.mubr.f32.mxu0 0.0
    %1554 = vmatmul.mubr.f32.gmra.mrb[0].mxu0 %v1454
    %v1555 = vpop.f32.mrb[0].mxu0
    %v1556 = vadd.f32 0.0, %v1555
    %v1557 = vpop.f32.mrb[0].mxu0
    %1558 = vmatprep.mubr.f32.mxu0 0.0
    %1559 = vmatmul.mubr.f32.gmra.mrb[0].mxu0 %v1457
    %v1560 = vpop.f32.mrb[0].mxu0
    %v1561 = vadd.f32 0.0, %v1560
    %v1562 = vpop.f32.mrb[0].mxu0
    %1563 = vdwg.mxu0
    %v1564 = vmul.f32 %v1389, %v1389
    %v1565 = vmul.f32 %v1394, %v1394
    %v1566 = vmul.f32 %v1399, %v1399
    %v1567 = vmul.f32 %v1404, %v1404
    %v1568 = vmul.f32 %v1409, %v1409
    %v1569 = vmul.f32 %v1414, %v1414
    %v1570 = vmul.f32 %v1419, %v1419
    %v1571 = vmul.f32 %v1424, %v1424
    %v1572 = vsub.f32 %v1526, %v1564
    %v1573 = vsub.f32 %v1531, %v1565
    %v1574 = vsub.f32 %v1536, %v1566
    %v1575 = vsub.f32 %v1541, %v1567
    %v1576 = vsub.f32 %v1546, %v1568
    %v1577 = vsub.f32 %v1551, %v1569
    %v1578 = vsub.f32 %v1556, %v1570
    %v1579 = vsub.f32 %v1561, %v1571
    %v1580 = vmax.f32 %v1572, 0.0
    %v1581 = vmax.f32 %v1573, 0.0
    %v1582 = vmax.f32 %v1574, 0.0
    %v1583 = vmax.f32 %v1575, 0.0
    %v1584 = vmax.f32 %v1576, 0.0
    %v1585 = vmax.f32 %v1577, 0.0
    %v1586 = vmax.f32 %v1578, 0.0
    %v1587 = vmax.f32 %v1579, 0.0
    %v1588 = vsub.f32 %v1288, %v1389
    %v1589 = vsub.f32 %v1289, %v1394
    %v1590 = vsub.f32 %v1290, %v1399
    %v1591 = vsub.f32 %v1291, %v1404
    %v1592 = vsub.f32 %v1292, %v1409
    %v1593 = vsub.f32 %v1293, %v1414
    %v1594 = vsub.f32 %v1294, %v1419
    %v1595 = vsub.f32 %v1295, %v1424
    %v1596 = vadd.f32 %v1580, 1e-05
    %v1597 = vadd.f32 %v1581, 1e-05
    %v1598 = vadd.f32 %v1582, 1e-05
    %v1599 = vadd.f32 %v1583, 1e-05
    %v1600 = vadd.f32 %v1584, 1e-05
    %v1601 = vadd.f32 %v1585, 1e-05
    %v1602 = vadd.f32 %v1586, 1e-05
    %v1603 = vadd.f32 %v1587, 1e-05
    %v1604 = vrsqrt.pop %v1596
    %v1605 = vrsqrt.pop %v1597
    %v1606 = vrsqrt.pop %v1598
    %v1607 = vrsqrt.pop %v1599
    %v1608 = vrsqrt.pop %v1600
    %v1609 = vrsqrt.pop %v1601
    %v1610 = vrsqrt.pop %v1602
    %v1611 = vrsqrt.pop %v1603
    %v1612 = vmul.f32 %v1588, %v1604
    %v1613 = vmul.f32 %v1589, %v1605
    %v1614 = vmul.f32 %v1590, %v1606
    %v1615 = vmul.f32 %v1591, %v1607
    %v1616 = vmul.f32 %v1592, %v1608
    %v1617 = vmul.f32 %v1593, %v1609
    %v1618 = vmul.f32 %v1594, %v1610
    %v1619 = vmul.f32 %v1595, %v1611
    %v1620 = vld [vmem:[%s4] sm:$0xff]
    %v1621 = vld [vmem:[%s4 + $0x8] sm:$0xff]
    %v1622 = vld [vmem:[%s4 + $0x10] sm:$0xff]
    %v1623 = vld [vmem:[%s4 + $0x18] sm:$0xff]
    %v1624 = vld [vmem:[%s4 + $0x20] sm:$0xff]
    %v1625 = vld [vmem:[%s4 + $0x28] sm:$0xff]
    %v1626 = vld [vmem:[%s4 + $0x30] sm:$0xff]
    %v1627 = vld [vmem:[%s4 + $0x38] sm:$0xff]
    %v1628 = vmul.f32 %v1612, %v1620
    %v1629 = vmul.f32 %v1613, %v1621
    %v1630 = vmul.f32 %v1614, %v1622
    %v1631 = vmul.f32 %v1615, %v1623
    %v1632 = vmul.f32 %v1616, %v1624
    %v1633 = vmul.f32 %v1617, %v1625
    %v1634 = vmul.f32 %v1618, %v1626
    %v1635 = vmul.f32 %v1619, %v1627
    %v1636 = vld [vmem:[%s5] sm:$0xff]
    %v1637 = vld [vmem:[%s5 + $0x8] sm:$0xff]
    %v1638 = vld [vmem:[%s5 + $0x10] sm:$0xff]
    %v1639 = vld [vmem:[%s5 + $0x18] sm:$0xff]
    %v1640 = vld [vmem:[%s5 + $0x20] sm:$0xff]
    %v1641 = vld [vmem:[%s5 + $0x28] sm:$0xff]
    %v1642 = vld [vmem:[%s5 + $0x30] sm:$0xff]
    %v1643 = vld [vmem:[%s5 + $0x38] sm:$0xff]
    %v1644 = vadd.f32 %v1628, %v1636
    %v1645 = vadd.f32 %v1629, %v1637
    %v1646 = vadd.f32 %v1630, %v1638
    %v1647 = vadd.f32 %v1631, %v1639
    %v1648 = vadd.f32 %v1632, %v1640
    %v1649 = vadd.f32 %v1633, %v1641
    %v1650 = vadd.f32 %v1634, %v1642
    %v1651 = vadd.f32 %v1635, %v1643
    %v1652 = vmax.f32 %v1644, 0.0
    %v1653 = vmax.f32 %v1645, 0.0
    %v1654 = vmax.f32 %v1646, 0.0
    %v1655 = vmax.f32 %v1647, 0.0
    %v1656 = vmax.f32 %v1648, 0.0
    %v1657 = vmax.f32 %v1649, 0.0
    %v1658 = vmax.f32 %v1650, 0.0
    %v1659 = vmax.f32 %v1651, 0.0
    %v1660 = vld [vmem:[%s6] sm:$0xff]
    %v1661 = vld [vmem:[%s6 + $0x8] sm:$0xff]
    %v1662 = vld [vmem:[%s6 + $0x10] sm:$0xff]
    %v1663 = vld [vmem:[%s6 + $0x18] sm:$0xff]
    %v1664 = vld [vmem:[%s6 + $0x20] sm:$0xff]
    %v1665 = vld [vmem:[%s6 + $0x28] sm:$0xff]
    %v1666 = vld [vmem:[%s6 + $0x30] sm:$0xff]
    %v1667 = vld [vmem:[%s6 + $0x38] sm:$0xff]
    %v1668 = vld [vmem:[%s6 + $0x40] sm:$0xff]
    %v1669 = vld [vmem:[%s6 + $0x48] sm:$0xff]
    %v1670 = vld [vmem:[%s6 + $0x50] sm:$0xff]
    %v1671 = vld [vmem:[%s6 + $0x58] sm:$0xff]
    %v1672 = vld [vmem:[%s6 + $0x60] sm:$0xff]
    %v1673 = vld [vmem:[%s6 + $0x68] sm:$0xff]
    %v1674 = vld [vmem:[%s6 + $0x70] sm:$0xff]
    %v1675 = vld [vmem:[%s6 + $0x78] sm:$0xff]
    %vm1676 = vcmask 523264
    %v1678 = vsel %vm1676, %v1660, 0
    %v1681 = vsel %vm1676, %v1661, 0
    %v1684 = vsel %vm1676, %v1662, 0
    %v1687 = vsel %vm1676, %v1663, 0
    %v1690 = vsel %vm1676, %v1664, 0
    %v1693 = vsel %vm1676, %v1665, 0
    %v1696 = vsel %vm1676, %v1666, 0
    %v1699 = vsel %vm1676, %v1667, 0
    %v1702 = vsel %vm1676, %v1668, 0
    %v1705 = vsel %vm1676, %v1669, 0
    %v1708 = vsel %vm1676, %v1670, 0
    %v1711 = vsel %vm1676, %v1671, 0
    %v1714 = vsel %vm1676, %v1672, 0
    %v1717 = vsel %vm1676, %v1673, 0
    %v1720 = vsel %vm1676, %v1674, 0
    %v1723 = vsel %vm1676, %v1675, 0
    %1725 = vmatprep.subr.mxu0 0.0
    %1726 = vmatpush1.msra.mxu0 %v1652
    %1727 = vmatprep.subr.mxu0 0.0
    %1728 = vmatpush1.msra.mxu0 %v1653
    %1729 = vmatprep.subr.mxu0 0.0
    %1730 = vmatpush1.msra.mxu0 %v1654
    %1731 = vmatprep.subr.mxu0 0.0
    %1732 = vmatpush1.msra.mxu0 %v1655
    %1733 = vmatprep.subr.mxu0 0.0
    %1734 = vmatpush1.msra.mxu0 %v1656
    %1735 = vmatprep.subr.mxu0 0.0
    %1736 = vmatpush1.msra.mxu0 %v1657
    %1737 = vmatprep.subr.mxu0 0.0
    %1738 = vmatpush1.msra.mxu0 %v1658
    %1739 = vmatprep.subr.mxu0 0.0
    %1740 = vmatpush1.msra.mxu0 %v1659
    %1741 = vmatprep.subr.mxu0 0.0
    %1742 = vmatpush1.msra.mxu0 0.0
    %1743 = vmatprep.subr.mxu0 0.0
    %1744 = vmatpush1.msra.mxu0 0.0
    %1745 = vmatprep.subr.mxu0 0.0
    %1746 = vmatpush1.msra.mxu0 0.0
    %1747 = vmatprep.subr.mxu0 0.0
    %1748 = vmatpush1.msra.mxu0 0.0
    %1749 = vmatprep.subr.mxu0 0.0
    %1750 = vmatpush1.msra.mxu0 0.0
    %1751 = vmatprep.subr.mxu0 0.0
    %1752 = vmatpush1.msra.mxu0 0.0
    %1753 = vmatprep.subr.mxu0 0.0
    %1754 = vmatpush1.msra.mxu0 0.0
    %1755 = vmatprep.subr.mxu0 0.0
    %1756 = vmatpush1.msra.mxu0 0.0
    %1757 = vmatprep.subr.mxu0 0.0
    %1758 = vmatpush1.msra.mxu0 0.0
    %1759 = vmatprep.subr.mxu0 0.0
    %1760 = vmatpush1.msra.mxu0 0.0
    %1761 = vmatprep.subr.mxu0 0.0
    %1762 = vmatpush1.msra.mxu0 0.0
    %1763 = vmatprep.subr.mxu0 0.0
    %1764 = vmatpush1.msra.mxu0 0.0
    %1765 = vmatprep.subr.mxu0 0.0
    %1766 = vmatpush1.msra.mxu0 0.0
    %1767 = vmatprep.subr.mxu0 0.0
    %1768 = vmatpush1.msra.mxu0 0.0
    %1769 = vmatprep.subr.mxu0 0.0
    %1770 = vmatpush1.msra.mxu0 0.0
    %1771 = vmatprep.subr.mxu0 0.0
    %1772 = vmatpush1.msra.mxu0 0.0
    %1773 = vmatprep.subr.mxu0 0.0
    %1774 = vmatpush1.msra.mxu0 0.0
    %1775 = vmatprep.subr.mxu0 0.0
    %1776 = vmatpush1.msra.mxu0 0.0
    %1777 = vmatprep.subr.mxu0 0.0
    %1778 = vmatpush1.msra.mxu0 0.0
    %1779 = vmatprep.subr.mxu0 0.0
    %1780 = vmatpush1.msra.mxu0 0.0
    %1781 = vmatprep.subr.mxu0 0.0
    %1782 = vmatpush1.msra.mxu0 0.0
    %1783 = vmatprep.subr.mxu0 0.0
    %1784 = vmatpush1.msra.mxu0 0.0
    %1785 = vmatprep.subr.mxu0 0.0
    %1786 = vmatpush1.msra.mxu0 0.0
    %1787 = vmatprep.subr.mxu0 0.0
    %1788 = vmatpush1.msra.mxu0 0.0
    %1789 = vmatprep.mubr.f32.mxu0 0.0
    %1790 = vmatmul.mubr.f32.gmra.mrb[0].mxu0 %v1678
    %v1791 = vpop.f32.mrb[0].mxu0
    %v1792 = vadd.f32 0.0, %v1791
    %v1793 = vpop.f32.mrb[0].mxu0
    %1794 = vmatprep.mubr.f32.mxu0 0.0
    %1795 = vmatmul.mubr.f32.gmra.mrb[0].mxu0 %v1681
    %v1796 = vpop.f32.mrb[0].mxu0
    %v1797 = vadd.f32 0.0, %v1796
    %v1798 = vpop.f32.mrb[0].mxu0
    %1799 = vmatprep.mubr.f32.mxu0 0.0
    %1800 = vmatmul.mubr.f32.gmra.mrb[0].mxu0 %v1684
    %v1801 = vpop.f32.mrb[0].mxu0
    %v1802 = vadd.f32 0.0, %v1801
    %v1803 = vpop.f32.mrb[0].mxu0
    %1804 = vmatprep.mubr.f32.mxu0 0.0
    %1805 = vmatmul.mubr.f32.gmra.mrb[0].mxu0 %v1687
    %v1806 = vpop.f32.mrb[0].mxu0
    %v1807 = vadd.f32 0.0, %v1806
    %v1808 = vpop.f32.mrb[0].mxu0
    %1809 = vmatprep.mubr.f32.mxu0 0.0
    %1810 = vmatmul.mubr.f32.gmra.mrb[0].mxu0 %v1690
    %v1811 = vpop.f32.mrb[0].mxu0
    %v1812 = vadd.f32 0.0, %v1811
    %v1813 = vpop.f32.mrb[0].mxu0
    %1814 = vmatprep.mubr.f32.mxu0 0.0
    %1815 = vmatmul.mubr.f32.gmra.mrb[0].mxu0 %v1693
    %v1816 = vpop.f32.mrb[0].mxu0
    %v1817 = vadd.f32 0.0, %v1816
    %v1818 = vpop.f32.mrb[0].mxu0
    %1819 = vmatprep.mubr.f32.mxu0 0.0
    %1820 = vmatmul.mubr.f32.gmra.mrb[0].mxu0 %v1696
    %v1821 = vpop.f32.mrb[0].mxu0
    %v1822 = vadd.f32 0.0, %v1821
    %v1823 = vpop.f32.mrb[0].mxu0
    %1824 = vmatprep.mubr.f32.mxu0 0.0
    %1825 = vmatmul.mubr.f32.gmra.mrb[0].mxu0 %v1699
    %v1826 = vpop.f32.mrb[0].mxu0
    %v1827 = vadd.f32 0.0, %v1826
    %v1828 = vpop.f32.mrb[0].mxu0
    %1829 = vmatprep.mubr.f32.mxu0 0.0
    %1830 = vmatmul.mubr.f32.gmra.mrb[0].mxu0 %v1702
    %v1831 = vpop.f32.mrb[0].mxu0
    %v1832 = vadd.f32 0.0, %v1831
    %v1833 = vpop.f32.mrb[0].mxu0
    %1834 = vmatprep.mubr.f32.mxu0 0.0
    %1835 = vmatmul.mubr.f32.gmra.mrb[0].mxu0 %v1705
    %v1836 = vpop.f32.mrb[0].mxu0
    %v1837 = vadd.f32 0.0, %v1836
    %v1838 = vpop.f32.mrb[0].mxu0
    %1839 = vmatprep.mubr.f32.mxu0 0.0
    %1840 = vmatmul.mubr.f32.gmra.mrb[0].mxu0 %v1708
    %v1841 = vpop.f32.mrb[0].mxu0
    %v1842 = vadd.f32 0.0, %v1841
    %v1843 = vpop.f32.mrb[0].mxu0
    %1844 = vmatprep.mubr.f32.mxu0 0.0
    %1845 = vmatmul.mubr.f32.gmra.mrb[0].mxu0 %v1711
    %v1846 = vpop.f32.mrb[0].mxu0
    %v1847 = vadd.f32 0.0, %v1846
    %v1848 = vpop.f32.mrb[0].mxu0
    %1849 = vmatprep.mubr.f32.mxu0 0.0
    %1850 = vmatmul.mubr.f32.gmra.mrb[0].mxu0 %v1714
    %v1851 = vpop.f32.mrb[0].mxu0
    %v1852 = vadd.f32 0.0, %v1851
    %v1853 = vpop.f32.mrb[0].mxu0
    %1854 = vmatprep.mubr.f32.mxu0 0.0
    %1855 = vmatmul.mubr.f32.gmra.mrb[0].mxu0 %v1717
    %v1856 = vpop.f32.mrb[0].mxu0
    %v1857 = vadd.f32 0.0, %v1856
    %v1858 = vpop.f32.mrb[0].mxu0
    %1859 = vmatprep.mubr.f32.mxu0 0.0
    %1860 = vmatmul.mubr.f32.gmra.mrb[0].mxu0 %v1720
    %v1861 = vpop.f32.mrb[0].mxu0
    %v1862 = vadd.f32 0.0, %v1861
    %v1863 = vpop.f32.mrb[0].mxu0
    %1864 = vmatprep.mubr.f32.mxu0 0.0
    %1865 = vmatmul.mubr.f32.gmra.mrb[0].mxu0 %v1723
    %v1866 = vpop.f32.mrb[0].mxu0
    %v1867 = vadd.f32 0.0, %v1866
    %v1868 = vpop.f32.mrb[0].mxu0
    %1869 = vdwg.mxu0
    %v1870 = vld [vmem:[#allocation6] sm:$0xff]
    %s1871 = scalar_lea.vmem %s6, 128
    %v1872 = vld [vmem:[%s1871] sm:$0xff]
    %v1873 = vld [vmem:[%s1871 + $0x8] sm:$0xff]
    %v1874 = vld [vmem:[%s1871 + $0x10] sm:$0xff]
    %v1875 = vld [vmem:[%s1871 + $0x18] sm:$0xff]
    %v1876 = vld [vmem:[%s1871 + $0x20] sm:$0xff]
    %v1877 = vld [vmem:[%s1871 + $0x28] sm:$0xff]
    %v1878 = vld [vmem:[%s1871 + $0x30] sm:$0xff]
    %v1879 = vld [vmem:[%s1871 + $0x38] sm:$0xff]
    %v1880 = vld [vmem:[%s1871 + $0x40] sm:$0xff]
    %v1881 = vld [vmem:[%s1871 + $0x48] sm:$0xff]
    %v1882 = vld [vmem:[%s1871 + $0x50] sm:$0xff]
    %v1883 = vld [vmem:[%s1871 + $0x58] sm:$0xff]
    %v1884 = vld [vmem:[%s1871 + $0x60] sm:$0xff]
    %v1885 = vld [vmem:[%s1871 + $0x68] sm:$0xff]
    %v1886 = vld [vmem:[%s1871 + $0x70] sm:$0xff]
    %v1887 = vld [vmem:[%s1871 + $0x78] sm:$0xff]
    %v1889 = vsel %vm1676, %v1872, 0
    %v1892 = vsel %vm1676, %v1873, 0
    %v1895 = vsel %vm1676, %v1874, 0
    %v1898 = vsel %vm1676, %v1875, 0
    %v1901 = vsel %vm1676, %v1876, 0
    %v1904 = vsel %vm1676, %v1877, 0
    %v1907 = vsel %vm1676, %v1878, 0
    %v1910 = vsel %vm1676, %v1879, 0
    %v1913 = vsel %vm1676, %v1880, 0
    %v1916 = vsel %vm1676, %v1881, 0
    %v1919 = vsel %vm1676, %v1882, 0
    %v1922 = vsel %vm1676, %v1883, 0
    %v1925 = vsel %vm1676, %v1884, 0
    %v1928 = vsel %vm1676, %v1885, 0
    %v1931 = vsel %vm1676, %v1886, 0
    %v1934 = vsel %vm1676, %v1887, 0
    %1936 = vmatprep.subr.mxu0 0.0
    %1937 = vmatpush1.msra.mxu0 %v1652
    %1938 = vmatprep.subr.mxu0 0.0
    %1939 = vmatpush1.msra.mxu0 %v1653
    %1940 = vmatprep.subr.mxu0 0.0
    %1941 = vmatpush1.msra.mxu0 %v1654
    %1942 = vmatprep.subr.mxu0 0.0
    %1943 = vmatpush1.msra.mxu0 %v1655
    %1944 = vmatprep.subr.mxu0 0.0
    %1945 = vmatpush1.msra.mxu0 %v1656
    %1946 = vmatprep.subr.mxu0 0.0
    %1947 = vmatpush1.msra.mxu0 %v1657
    %1948 = vmatprep.subr.mxu0 0.0
    %1949 = vmatpush1.msra.mxu0 %v1658
    %1950 = vmatprep.subr.mxu0 0.0
    %1951 = vmatpush1.msra.mxu0 %v1659
    %1952 = vmatprep.subr.mxu0 0.0
    %1953 = vmatpush1.msra.mxu0 0.0
    %1954 = vmatprep.subr.mxu0 0.0
    %1955 = vmatpush1.msra.mxu0 0.0
    %1956 = vmatprep.subr.mxu0 0.0
    %1957 = vmatpush1.msra.mxu0 0.0
    %1958 = vmatprep.subr.mxu0 0.0
    %1959 = vmatpush1.msra.mxu0 0.0
    %1960 = vmatprep.subr.mxu0 0.0
    %1961 = vmatpush1.msra.mxu0 0.0
    %1962 = vmatprep.subr.mxu0 0.0
    %1963 = vmatpush1.msra.mxu0 0.0
    %1964 = vmatprep.subr.mxu0 0.0
    %1965 = vmatpush1.msra.mxu0 0.0
    %1966 = vmatprep.subr.mxu0 0.0
    %1967 = vmatpush1.msra.mxu0 0.0
    %1968 = vmatprep.subr.mxu0 0.0
    %1969 = vmatpush1.msra.mxu0 0.0
    %1970 = vmatprep.subr.mxu0 0.0
    %1971 = vmatpush1.msra.mxu0 0.0
    %1972 = vmatprep.subr.mxu0 0.0
    %1973 = vmatpush1.msra.mxu0 0.0
    %1974 = vmatprep.subr.mxu0 0.0
    %1975 = vmatpush1.msra.mxu0 0.0
    %1976 = vmatprep.subr.mxu0 0.0
    %1977 = vmatpush1.msra.mxu0 0.0
    %1978 = vmatprep.subr.mxu0 0.0
    %1979 = vmatpush1.msra.mxu0 0.0
    %1980 = vmatprep.subr.mxu0 0.0
    %1981 = vmatpush1.msra.mxu0 0.0
    %1982 = vmatprep.subr.mxu0 0.0
    %1983 = vmatpush1.msra.mxu0 0.0
    %1984 = vmatprep.subr.mxu0 0.0
    %1985 = vmatpush1.msra.mxu0 0.0
    %1986 = vmatprep.subr.mxu0 0.0
    %1987 = vmatpush1.msra.mxu0 0.0
    %1988 = vmatprep.subr.mxu0 0.0
    %1989 = vmatpush1.msra.mxu0 0.0
    %1990 = vmatprep.subr.mxu0 0.0
    %1991 = vmatpush1.msra.mxu0 0.0
    %1992 = vmatprep.subr.mxu0 0.0
    %1993 = vmatpush1.msra.mxu0 0.0
    %1994 = vmatprep.subr.mxu0 0.0
    %1995 = vmatpush1.msra.mxu0 0.0
    %1996 = vmatprep.subr.mxu0 0.0
    %1997 = vmatpush1.msra.mxu0 0.0
    %1998 = vmatprep.subr.mxu0 0.0
    %1999 = vmatpush1.msra.mxu0 0.0
    %2000 = vmatprep.mubr.f32.mxu0 0.0
    %2001 = vmatmul.mubr.f32.gmra.mrb[0].mxu0 %v1889
    %v2002 = vpop.f32.mrb[0].mxu0
    %v2003 = vadd.f32 0.0, %v2002
    %v2004 = vpop.f32.mrb[0].mxu0
    %2005 = vmatprep.mubr.f32.mxu0 0.0
    %2006 = vmatmul.mubr.f32.gmra.mrb[0].mxu0 %v1892
    %v2007 = vpop.f32.mrb[0].mxu0
    %v2008 = vadd.f32 0.0, %v2007
    %v2009 = vpop.f32.mrb[0].mxu0
    %2010 = vmatprep.mubr.f32.mxu0 0.0
    %2011 = vmatmul.mubr.f32.gmra.mrb[0].mxu0 %v1895
    %v2012 = vpop.f32.mrb[0].mxu0
    %v2013 = vadd.f32 0.0, %v2012
    %v2014 = vpop.f32.mrb[0].mxu0
    %2015 = vmatprep.mubr.f32.mxu0 0.0
    %2016 = vmatmul.mubr.f32.gmra.mrb[0].mxu0 %v1898
    %v2017 = vpop.f32.mrb[0].mxu0
    %v2018 = vadd.f32 0.0, %v2017
    %v2019 = vpop.f32.mrb[0].mxu0
    %2020 = vmatprep.mubr.f32.mxu0 0.0
    %2021 = vmatmul.mubr.f32.gmra.mrb[0].mxu0 %v1901
    %v2022 = vpop.f32.mrb[0].mxu0
    %v2023 = vadd.f32 0.0, %v2022
    %v2024 = vpop.f32.mrb[0].mxu0
    %2025 = vmatprep.mubr.f32.mxu0 0.0
    %2026 = vmatmul.mubr.f32.gmra.mrb[0].mxu0 %v1904
    %v2027 = vpop.f32.mrb[0].mxu0
    %v2028 = vadd.f32 0.0, %v2027
    %v2029 = vpop.f32.mrb[0].mxu0
    %2030 = vmatprep.mubr.f32.mxu0 0.0
    %2031 = vmatmul.mubr.f32.gmra.mrb[0].mxu0 %v1907
    %v2032 = vpop.f32.mrb[0].mxu0
    %v2033 = vadd.f32 0.0, %v2032
    %v2034 = vpop.f32.mrb[0].mxu0
    %2035 = vmatprep.mubr.f32.mxu0 0.0
    %2036 = vmatmul.mubr.f32.gmra.mrb[0].mxu0 %v1910
    %v2037 = vpop.f32.mrb[0].mxu0
    %v2038 = vadd.f32 0.0, %v2037
    %v2039 = vpop.f32.mrb[0].mxu0
    %2040 = vmatprep.mubr.f32.mxu0 0.0
    %2041 = vmatmul.mubr.f32.gmra.mrb[0].mxu0 %v1913
    %v2042 = vpop.f32.mrb[0].mxu0
    %v2043 = vadd.f32 0.0, %v2042
    %v2044 = vpop.f32.mrb[0].mxu0
    %2045 = vmatprep.mubr.f32.mxu0 0.0
    %2046 = vmatmul.mubr.f32.gmra.mrb[0].mxu0 %v1916
    %v2047 = vpop.f32.mrb[0].mxu0
    %v2048 = vadd.f32 0.0, %v2047
    %v2049 = vpop.f32.mrb[0].mxu0
    %2050 = vmatprep.mubr.f32.mxu0 0.0
    %2051 = vmatmul.mubr.f32.gmra.mrb[0].mxu0 %v1919
    %v2052 = vpop.f32.mrb[0].mxu0
    %v2053 = vadd.f32 0.0, %v2052
    %v2054 = vpop.f32.mrb[0].mxu0
    %2055 = vmatprep.mubr.f32.mxu0 0.0
    %2056 = vmatmul.mubr.f32.gmra.mrb[0].mxu0 %v1922
    %v2057 = vpop.f32.mrb[0].mxu0
    %v2058 = vadd.f32 0.0, %v2057
    %v2059 = vpop.f32.mrb[0].mxu0
    %2060 = vmatprep.mubr.f32.mxu0 0.0
    %2061 = vmatmul.mubr.f32.gmra.mrb[0].mxu0 %v1925
    %v2062 = vpop.f32.mrb[0].mxu0
    %v2063 = vadd.f32 0.0, %v2062
    %v2064 = vpop.f32.mrb[0].mxu0
    %2065 = vmatprep.mubr.f32.mxu0 0.0
    %2066 = vmatmul.mubr.f32.gmra.mrb[0].mxu0 %v1928
    %v2067 = vpop.f32.mrb[0].mxu0
    %v2068 = vadd.f32 0.0, %v2067
    %v2069 = vpop.f32.mrb[0].mxu0
    %2070 = vmatprep.mubr.f32.mxu0 0.0
    %2071 = vmatmul.mubr.f32.gmra.mrb[0].mxu0 %v1931
    %v2072 = vpop.f32.mrb[0].mxu0
    %v2073 = vadd.f32 0.0, %v2072
    %v2074 = vpop.f32.mrb[0].mxu0
    %2075 = vmatprep.mubr.f32.mxu0 0.0
    %2076 = vmatmul.mubr.f32.gmra.mrb[0].mxu0 %v1934
    %v2077 = vpop.f32.mrb[0].mxu0
    %v2078 = vadd.f32 0.0, %v2077
    %v2079 = vpop.f32.mrb[0].mxu0
    %2080 = vdwg.mxu0
    %s2081 = scalar_lea.vmem [#allocation6], 8
    %v2082 = vld [vmem:[%s2081] sm:$0xff]
    %v2084 = vsel %vm1297, %v2003, 0
    %v2087 = vsel %vm1297, %v2008, 0
    %v2090 = vsel %vm1297, %v2013, 0
    %v2093 = vsel %vm1297, %v2018, 0
    %v2096 = vsel %vm1297, %v2023, 0
    %v2099 = vsel %vm1297, %v2028, 0
    %v2102 = vsel %vm1297, %v2033, 0
    %v2105 = vsel %vm1297, %v2038, 0
    %v2108 = vsel %vm1297, %v2043, 0
    %v2111 = vsel %vm1297, %v2048, 0
    %v2114 = vsel %vm1297, %v2053, 0
    %v2117 = vsel %vm1297, %v2058, 0
    %v2120 = vsel %vm1297, %v2063, 0
    %v2123 = vsel %vm1297, %v2068, 0
    %v2126 = vsel %vm1297, %v2073, 0
    %v2129 = vsel %vm1297, %v2078, 0
    %2131 = vmatprep.subr.mxu0 0.0
    %2132 = vmatpush1.msra.mxu0 %v2082
    %2133 = vmatprep.subr.mxu0 0.0
    %2134 = vmatpush1.msra.mxu0 0.0
    %2135 = vmatprep.subr.mxu0 0.0
    %2136 = vmatpush1.msra.mxu0 0.0
    %2137 = vmatprep.subr.mxu0 0.0
    %2138 = vmatpush1.msra.mxu0 0.0
    %2139 = vmatprep.subr.mxu0 0.0
    %2140 = vmatpush1.msra.mxu0 0.0
    %2141 = vmatprep.subr.mxu0 0.0
    %2142 = vmatpush1.msra.mxu0 0.0
    %2143 = vmatprep.subr.mxu0 0.0
    %2144 = vmatpush1.msra.mxu0 0.0
    %2145 = vmatprep.subr.mxu0 0.0
    %2146 = vmatpush1.msra.mxu0 0.0
    %2147 = vmatprep.subr.mxu0 0.0
    %2148 = vmatpush1.msra.mxu0 0.0
    %2149 = vmatprep.subr.mxu0 0.0
    %2150 = vmatpush1.msra.mxu0 0.0
    %2151 = vmatprep.subr.mxu0 0.0
    %2152 = vmatpush1.msra.mxu0 0.0
    %2153 = vmatprep.subr.mxu0 0.0
    %2154 = vmatpush1.msra.mxu0 0.0
    %2155 = vmatprep.subr.mxu0 0.0
    %2156 = vmatpush1.msra.mxu0 0.0
    %2157 = vmatprep.subr.mxu0 0.0
    %2158 = vmatpush1.msra.mxu0 0.0
    %2159 = vmatprep.subr.mxu0 0.0
    %2160 = vmatpush1.msra.mxu0 0.0
    %2161 = vmatprep.subr.mxu0 0.0
    %2162 = vmatpush1.msra.mxu0 0.0
    %2163 = vmatprep.subr.mxu0 0.0
    %2164 = vmatpush1.msra.mxu0 0.0
    %2165 = vmatprep.subr.mxu0 0.0
    %2166 = vmatpush1.msra.mxu0 0.0
    %2167 = vmatprep.subr.mxu0 0.0
    %2168 = vmatpush1.msra.mxu0 0.0
    %2169 = vmatprep.subr.mxu0 0.0
    %2170 = vmatpush1.msra.mxu0 0.0
    %2171 = vmatprep.subr.mxu0 0.0
    %2172 = vmatpush1.msra.mxu0 0.0
    %2173 = vmatprep.subr.mxu0 0.0
    %2174 = vmatpush1.msra.mxu0 0.0
    %2175 = vmatprep.subr.mxu0 0.0
    %2176 = vmatpush1.msra.mxu0 0.0
    %2177 = vmatprep.subr.mxu0 0.0
    %2178 = vmatpush1.msra.mxu0 0.0
    %2179 = vmatprep.subr.mxu0 0.0
    %2180 = vmatpush1.msra.mxu0 0.0
    %2181 = vmatprep.subr.mxu0 0.0
    %2182 = vmatpush1.msra.mxu0 0.0
    %2183 = vmatprep.subr.mxu0 0.0
    %2184 = vmatpush1.msra.mxu0 0.0
    %2185 = vmatprep.subr.mxu0 0.0
    %2186 = vmatpush1.msra.mxu0 0.0
    %2187 = vmatprep.subr.mxu0 0.0
    %2188 = vmatpush1.msra.mxu0 0.0
    %2189 = vmatprep.subr.mxu0 0.0
    %2190 = vmatpush1.msra.mxu0 0.0
    %2191 = vmatprep.subr.mxu0 0.0
    %2192 = vmatpush1.msra.mxu0 0.0
    %2193 = vmatprep.subr.mxu0 0.0
    %2194 = vmatpush1.msra.mxu0 0.0
    %2195 = vmatprep.mubr.f32.mxu0 0.0
    %2196 = vmatmul.mubr.f32.gmra.mrb[0].mxu0 %v2084
    %v2197 = vpop.f32.mrb[0].mxu0
    %v2198 = vadd.f32 0.0, %v2197
    %v2199 = vpop.f32.mrb[0].mxu0
    %2200 = vmatprep.mubr.f32.mxu0 0.0
    %2201 = vmatmul.mubr.f32.gmra.mrb[0].mxu0 %v2087
    %v2202 = vpop.f32.mrb[0].mxu0
    %v2203 = vadd.f32 0.0, %v2202
    %v2204 = vpop.f32.mrb[0].mxu0
    %2205 = vmatprep.mubr.f32.mxu0 0.0
    %2206 = vmatmul.mubr.f32.gmra.mrb[0].mxu0 %v2090
    %v2207 = vpop.f32.mrb[0].mxu0
    %v2208 = vadd.f32 0.0, %v2207
    %v2209 = vpop.f32.mrb[0].mxu0
    %2210 = vmatprep.mubr.f32.mxu0 0.0
    %2211 = vmatmul.mubr.f32.gmra.mrb[0].mxu0 %v2093
    %v2212 = vpop.f32.mrb[0].mxu0
    %v2213 = vadd.f32 0.0, %v2212
    %v2214 = vpop.f32.mrb[0].mxu0
    %2215 = vmatprep.mubr.f32.mxu0 0.0
    %2216 = vmatmul.mubr.f32.gmra.mrb[0].mxu0 %v2096
    %v2217 = vpop.f32.mrb[0].mxu0
    %v2218 = vadd.f32 0.0, %v2217
    %v2219 = vpop.f32.mrb[0].mxu0
    %2220 = vmatprep.mubr.f32.mxu0 0.0
    %2221 = vmatmul.mubr.f32.gmra.mrb[0].mxu0 %v2099
    %v2222 = vpop.f32.mrb[0].mxu0
    %v2223 = vadd.f32 0.0, %v2222
    %v2224 = vpop.f32.mrb[0].mxu0
    %2225 = vmatprep.mubr.f32.mxu0 0.0
    %2226 = vmatmul.mubr.f32.gmra.mrb[0].mxu0 %v2102
    %v2227 = vpop.f32.mrb[0].mxu0
    %v2228 = vadd.f32 0.0, %v2227
    %v2229 = vpop.f32.mrb[0].mxu0
    %2230 = vmatprep.mubr.f32.mxu0 0.0
    %2231 = vmatmul.mubr.f32.gmra.mrb[0].mxu0 %v2105
    %v2232 = vpop.f32.mrb[0].mxu0
    %v2233 = vadd.f32 0.0, %v2232
    %v2234 = vpop.f32.mrb[0].mxu0
    %2235 = vmatprep.mubr.f32.mxu0 0.0
    %2236 = vmatmul.mubr.f32.gmra.mrb[0].mxu0 %v2108
    %v2237 = vpop.f32.mrb[0].mxu0
    %v2238 = vadd.f32 0.0, %v2237
    %v2239 = vpop.f32.mrb[0].mxu0
    %2240 = vmatprep.mubr.f32.mxu0 0.0
    %2241 = vmatmul.mubr.f32.gmra.mrb[0].mxu0 %v2111
    %v2242 = vpop.f32.mrb[0].mxu0
    %v2243 = vadd.f32 0.0, %v2242
    %v2244 = vpop.f32.mrb[0].mxu0
    %2245 = vmatprep.mubr.f32.mxu0 0.0
    %2246 = vmatmul.mubr.f32.gmra.mrb[0].mxu0 %v2114
    %v2247 = vpop.f32.mrb[0].mxu0
    %v2248 = vadd.f32 0.0, %v2247
    %v2249 = vpop.f32.mrb[0].mxu0
    %2250 = vmatprep.mubr.f32.mxu0 0.0
    %2251 = vmatmul.mubr.f32.gmra.mrb[0].mxu0 %v2117
    %v2252 = vpop.f32.mrb[0].mxu0
    %v2253 = vadd.f32 0.0, %v2252
    %v2254 = vpop.f32.mrb[0].mxu0
    %2255 = vmatprep.mubr.f32.mxu0 0.0
    %2256 = vmatmul.mubr.f32.gmra.mrb[0].mxu0 %v2120
    %v2257 = vpop.f32.mrb[0].mxu0
    %v2258 = vadd.f32 0.0, %v2257
    %v2259 = vpop.f32.mrb[0].mxu0
    %2260 = vmatprep.mubr.f32.mxu0 0.0
    %2261 = vmatmul.mubr.f32.gmra.mrb[0].mxu0 %v2123
    %v2262 = vpop.f32.mrb[0].mxu0
    %v2263 = vadd.f32 0.0, %v2262
    %v2264 = vpop.f32.mrb[0].mxu0
    %2265 = vmatprep.mubr.f32.mxu0 0.0
    %2266 = vmatmul.mubr.f32.gmra.mrb[0].mxu0 %v2126
    %v2267 = vpop.f32.mrb[0].mxu0
    %v2268 = vadd.f32 0.0, %v2267
    %v2269 = vpop.f32.mrb[0].mxu0
    %2270 = vmatprep.mubr.f32.mxu0 0.0
    %2271 = vmatmul.mubr.f32.gmra.mrb[0].mxu0 %v2129
    %v2272 = vpop.f32.mrb[0].mxu0
    %v2273 = vadd.f32 0.0, %v2272
    %v2274 = vpop.f32.mrb[0].mxu0
    %2275 = vdwg.mxu0
    %v2277 = vsel %vm1297, %v1792, 0
    %v2280 = vsel %vm1297, %v1797, 0
    %v2283 = vsel %vm1297, %v1802, 0
    %v2286 = vsel %vm1297, %v1807, 0
    %v2289 = vsel %vm1297, %v1812, 0
    %v2292 = vsel %vm1297, %v1817, 0
    %v2295 = vsel %vm1297, %v1822, 0
    %v2298 = vsel %vm1297, %v1827, 0
    %v2301 = vsel %vm1297, %v1832, 0
    %v2304 = vsel %vm1297, %v1837, 0
    %v2307 = vsel %vm1297, %v1842, 0
    %v2310 = vsel %vm1297, %v1847, 0
    %v2313 = vsel %vm1297, %v1852, 0
    %v2316 = vsel %vm1297, %v1857, 0
    %v2319 = vsel %vm1297, %v1862, 0
    %v2322 = vsel %vm1297, %v1867, 0
    %2324 = vmatprep.subr.mxu0 0.0
    %2325 = vmatpush1.msra.mxu0 %v1870
    %2326 = vmatprep.subr.mxu0 0.0
    %2327 = vmatpush1.msra.mxu0 0.0
    %2328 = vmatprep.subr.mxu0 0.0
    %2329 = vmatpush1.msra.mxu0 0.0
    %2330 = vmatprep.subr.mxu0 0.0
    %2331 = vmatpush1.msra.mxu0 0.0
    %2332 = vmatprep.subr.mxu0 0.0
    %2333 = vmatpush1.msra.mxu0 0.0
    %2334 = vmatprep.subr.mxu0 0.0
    %2335 = vmatpush1.msra.mxu0 0.0
    %2336 = vmatprep.subr.mxu0 0.0
    %2337 = vmatpush1.msra.mxu0 0.0
    %2338 = vmatprep.subr.mxu0 0.0
    %2339 = vmatpush1.msra.mxu0 0.0
    %2340 = vmatprep.subr.mxu0 0.0
    %2341 = vmatpush1.msra.mxu0 0.0
    %2342 = vmatprep.subr.mxu0 0.0
    %2343 = vmatpush1.msra.mxu0 0.0
    %2344 = vmatprep.subr.mxu0 0.0
    %2345 = vmatpush1.msra.mxu0 0.0
    %2346 = vmatprep.subr.mxu0 0.0
    %2347 = vmatpush1.msra.mxu0 0.0
    %2348 = vmatprep.subr.mxu0 0.0
    %2349 = vmatpush1.msra.mxu0 0.0
    %2350 = vmatprep.subr.mxu0 0.0
    %2351 = vmatpush1.msra.mxu0 0.0
    %2352 = vmatprep.subr.mxu0 0.0
    %2353 = vmatpush1.msra.mxu0 0.0
    %2354 = vmatprep.subr.mxu0 0.0
    %2355 = vmatpush1.msra.mxu0 0.0
    %2356 = vmatprep.subr.mxu0 0.0
    %2357 = vmatpush1.msra.mxu0 0.0
    %2358 = vmatprep.subr.mxu0 0.0
    %2359 = vmatpush1.msra.mxu0 0.0
    %2360 = vmatprep.subr.mxu0 0.0
    %2361 = vmatpush1.msra.mxu0 0.0
    %2362 = vmatprep.subr.mxu0 0.0
    %2363 = vmatpush1.msra.mxu0 0.0
    %2364 = vmatprep.subr.mxu0 0.0
    %2365 = vmatpush1.msra.mxu0 0.0
    %2366 = vmatprep.subr.mxu0 0.0
    %2367 = vmatpush1.msra.mxu0 0.0
    %2368 = vmatprep.subr.mxu0 0.0
    %2369 = vmatpush1.msra.mxu0 0.0
    %2370 = vmatprep.subr.mxu0 0.0
    %2371 = vmatpush1.msra.mxu0 0.0
    %2372 = vmatprep.subr.mxu0 0.0
    %2373 = vmatpush1.msra.mxu0 0.0
    %2374 = vmatprep.subr.mxu0 0.0
    %2375 = vmatpush1.msra.mxu0 0.0
    %2376 = vmatprep.subr.mxu0 0.0
    %2377 = vmatpush1.msra.mxu0 0.0
    %2378 = vmatprep.subr.mxu0 0.0
    %2379 = vmatpush1.msra.mxu0 0.0
    %2380 = vmatprep.subr.mxu0 0.0
    %2381 = vmatpush1.msra.mxu0 0.0
    %2382 = vmatprep.subr.mxu0 0.0
    %2383 = vmatpush1.msra.mxu0 0.0
    %2384 = vmatprep.subr.mxu0 0.0
    %2385 = vmatpush1.msra.mxu0 0.0
    %2386 = vmatprep.subr.mxu0 0.0
    %2387 = vmatpush1.msra.mxu0 0.0
    %2388 = vmatprep.mubr.f32.mxu0 0.0
    %2389 = vmatmul.mubr.f32.gmra.mrb[0].mxu0 %v2277
    %v2390 = vpop.f32.mrb[0].mxu0
    %v2391 = vadd.f32 %v2198, %v2390
    %v2392 = vpop.f32.mrb[0].mxu0
    %2393 = vmatprep.mubr.f32.mxu0 0.0
    %2394 = vmatmul.mubr.f32.gmra.mrb[0].mxu0 %v2280
    %v2395 = vpop.f32.mrb[0].mxu0
    %v2396 = vadd.f32 %v2203, %v2395
    %v2397 = vpop.f32.mrb[0].mxu0
    %2398 = vmatprep.mubr.f32.mxu0 0.0
    %2399 = vmatmul.mubr.f32.gmra.mrb[0].mxu0 %v2283
    %v2400 = vpop.f32.mrb[0].mxu0
    %v2401 = vadd.f32 %v2208, %v2400
    %v2402 = vpop.f32.mrb[0].mxu0
    %2403 = vmatprep.mubr.f32.mxu0 0.0
    %2404 = vmatmul.mubr.f32.gmra.mrb[0].mxu0 %v2286
    %v2405 = vpop.f32.mrb[0].mxu0
    %v2406 = vadd.f32 %v2213, %v2405
    %v2407 = vpop.f32.mrb[0].mxu0
    %2408 = vmatprep.mubr.f32.mxu0 0.0
    %2409 = vmatmul.mubr.f32.gmra.mrb[0].mxu0 %v2289
    %v2410 = vpop.f32.mrb[0].mxu0
    %v2411 = vadd.f32 %v2218, %v2410
    %v2412 = vpop.f32.mrb[0].mxu0
    %2413 = vmatprep.mubr.f32.mxu0 0.0
    %2414 = vmatmul.mubr.f32.gmra.mrb[0].mxu0 %v2292
    %v2415 = vpop.f32.mrb[0].mxu0
    %v2416 = vadd.f32 %v2223, %v2415
    %v2417 = vpop.f32.mrb[0].mxu0
    %2418 = vmatprep.mubr.f32.mxu0 0.0
    %2419 = vmatmul.mubr.f32.gmra.mrb[0].mxu0 %v2295
    %v2420 = vpop.f32.mrb[0].mxu0
    %v2421 = vadd.f32 %v2228, %v2420
    %v2422 = vpop.f32.mrb[0].mxu0
    %2423 = vmatprep.mubr.f32.mxu0 0.0
    %2424 = vmatmul.mubr.f32.gmra.mrb[0].mxu0 %v2298
    %v2425 = vpop.f32.mrb[0].mxu0
    %v2426 = vadd.f32 %v2233, %v2425
    %v2427 = vpop.f32.mrb[0].mxu0
    %2428 = vmatprep.mubr.f32.mxu0 0.0
    %2429 = vmatmul.mubr.f32.gmra.mrb[0].mxu0 %v2301
    %v2430 = vpop.f32.mrb[0].mxu0
    %v2431 = vadd.f32 %v2238, %v2430
    %v2432 = vpop.f32.mrb[0].mxu0
    %2433 = vmatprep.mubr.f32.mxu0 0.0
    %2434 = vmatmul.mubr.f32.gmra.mrb[0].mxu0 %v2304
    %v2435 = vpop.f32.mrb[0].mxu0
    %v2436 = vadd.f32 %v2243, %v2435
    %v2437 = vpop.f32.mrb[0].mxu0
    %2438 = vmatprep.mubr.f32.mxu0 0.0
    %2439 = vmatmul.mubr.f32.gmra.mrb[0].mxu0 %v2307
    %v2440 = vpop.f32.mrb[0].mxu0
    %v2441 = vadd.f32 %v2248, %v2440
    %v2442 = vpop.f32.mrb[0].mxu0
    %2443 = vmatprep.mubr.f32.mxu0 0.0
    %2444 = vmatmul.mubr.f32.gmra.mrb[0].mxu0 %v2310
    %v2445 = vpop.f32.mrb[0].mxu0
    %v2446 = vadd.f32 %v2253, %v2445
    %v2447 = vpop.f32.mrb[0].mxu0
    %2448 = vmatprep.mubr.f32.mxu0 0.0
    %2449 = vmatmul.mubr.f32.gmra.mrb[0].mxu0 %v2313
    %v2450 = vpop.f32.mrb[0].mxu0
    %v2451 = vadd.f32 %v2258, %v2450
    %v2452 = vpop.f32.mrb[0].mxu0
    %2453 = vmatprep.mubr.f32.mxu0 0.0
    %2454 = vmatmul.mubr.f32.gmra.mrb[0].mxu0 %v2316
    %v2455 = vpop.f32.mrb[0].mxu0
    %v2456 = vadd.f32 %v2263, %v2455
    %v2457 = vpop.f32.mrb[0].mxu0
    %2458 = vmatprep.mubr.f32.mxu0 0.0
    %2459 = vmatmul.mubr.f32.gmra.mrb[0].mxu0 %v2319
    %v2460 = vpop.f32.mrb[0].mxu0
    %v2461 = vadd.f32 %v2268, %v2460
    %v2462 = vpop.f32.mrb[0].mxu0
    %2463 = vmatprep.mubr.f32.mxu0 0.0
    %2464 = vmatmul.mubr.f32.gmra.mrb[0].mxu0 %v2322
    %v2465 = vpop.f32.mrb[0].mxu0
    %v2466 = vadd.f32 %v2273, %v2465
    %v2467 = vpop.f32.mrb[0].mxu0
    %2468 = vdwg.mxu0
    %s2469 = scalar_lea.vmem %s6, 256
    %v2470 = vld [vmem:[%s2469] sm:$0xff]
    %v2471 = vld [vmem:[%s2469 + $0x8] sm:$0xff]
    %v2472 = vld [vmem:[%s2469 + $0x10] sm:$0xff]
    %v2473 = vld [vmem:[%s2469 + $0x18] sm:$0xff]
    %v2474 = vld [vmem:[%s2469 + $0x20] sm:$0xff]
    %v2475 = vld [vmem:[%s2469 + $0x28] sm:$0xff]
    %v2476 = vld [vmem:[%s2469 + $0x30] sm:$0xff]
    %v2477 = vld [vmem:[%s2469 + $0x38] sm:$0xff]
    %v2478 = vld [vmem:[%s2469 + $0x40] sm:$0xff]
    %v2479 = vld [vmem:[%s2469 + $0x48] sm:$0xff]
    %v2480 = vld [vmem:[%s2469 + $0x50] sm:$0xff]
    %v2481 = vld [vmem:[%s2469 + $0x58] sm:$0xff]
    %v2482 = vld [vmem:[%s2469 + $0x60] sm:$0xff]
    %v2483 = vld [vmem:[%s2469 + $0x68] sm:$0xff]
    %v2484 = vld [vmem:[%s2469 + $0x70] sm:$0xff]
    %v2485 = vld [vmem:[%s2469 + $0x78] sm:$0xff]
    %v2487 = vsel %vm1676, %v2470, 0
    %v2490 = vsel %vm1676, %v2471, 0
    %v2493 = vsel %vm1676, %v2472, 0
    %v2496 = vsel %vm1676, %v2473, 0
    %v2499 = vsel %vm1676, %v2474, 0
    %v2502 = vsel %vm1676, %v2475, 0
    %v2505 = vsel %vm1676, %v2476, 0
    %v2508 = vsel %vm1676, %v2477, 0
    %v2511 = vsel %vm1676, %v2478, 0
    %v2514 = vsel %vm1676, %v2479, 0
    %v2517 = vsel %vm1676, %v2480, 0
    %v2520 = vsel %vm1676, %v2481, 0
    %v2523 = vsel %vm1676, %v2482, 0
    %v2526 = vsel %vm1676, %v2483, 0
    %v2529 = vsel %vm1676, %v2484, 0
    %v2532 = vsel %vm1676, %v2485, 0
    %2534 = vmatprep.subr.mxu0 0.0
    %2535 = vmatpush1.msra.mxu0 %v1652
    %2536 = vmatprep.subr.mxu0 0.0
    %2537 = vmatpush1.msra.mxu0 %v1653
    %2538 = vmatprep.subr.mxu0 0.0
    %2539 = vmatpush1.msra.mxu0 %v1654
    %2540 = vmatprep.subr.mxu0 0.0
    %2541 = vmatpush1.msra.mxu0 %v1655
    %2542 = vmatprep.subr.mxu0 0.0
    %2543 = vmatpush1.msra.mxu0 %v1656
    %2544 = vmatprep.subr.mxu0 0.0
    %2545 = vmatpush1.msra.mxu0 %v1657
    %2546 = vmatprep.subr.mxu0 0.0
    %2547 = vmatpush1.msra.mxu0 %v1658
    %2548 = vmatprep.subr.mxu0 0.0
    %2549 = vmatpush1.msra.mxu0 %v1659
    %2550 = vmatprep.subr.mxu0 0.0
    %2551 = vmatpush1.msra.mxu0 0.0
    %2552 = vmatprep.subr.mxu0 0.0
    %2553 = vmatpush1.msra.mxu0 0.0
    %2554 = vmatprep.subr.mxu0 0.0
    %2555 = vmatpush1.msra.mxu0 0.0
    %2556 = vmatprep.subr.mxu0 0.0
    %2557 = vmatpush1.msra.mxu0 0.0
    %2558 = vmatprep.subr.mxu0 0.0
    %2559 = vmatpush1.msra.mxu0 0.0
    %2560 = vmatprep.subr.mxu0 0.0
    %2561 = vmatpush1.msra.mxu0 0.0
    %2562 = vmatprep.subr.mxu0 0.0
    %2563 = vmatpush1.msra.mxu0 0.0
    %2564 = vmatprep.subr.mxu0 0.0
    %2565 = vmatpush1.msra.mxu0 0.0
    %2566 = vmatprep.subr.mxu0 0.0
    %2567 = vmatpush1.msra.mxu0 0.0
    %2568 = vmatprep.subr.mxu0 0.0
    %2569 = vmatpush1.msra.mxu0 0.0
    %2570 = vmatprep.subr.mxu0 0.0
    %2571 = vmatpush1.msra.mxu0 0.0
    %2572 = vmatprep.subr.mxu0 0.0
    %2573 = vmatpush1.msra.mxu0 0.0
    %2574 = vmatprep.subr.mxu0 0.0
    %2575 = vmatpush1.msra.mxu0 0.0
    %2576 = vmatprep.subr.mxu0 0.0
    %2577 = vmatpush1.msra.mxu0 0.0
    %2578 = vmatprep.subr.mxu0 0.0
    %2579 = vmatpush1.msra.mxu0 0.0
    %2580 = vmatprep.subr.mxu0 0.0
    %2581 = vmatpush1.msra.mxu0 0.0
    %2582 = vmatprep.subr.mxu0 0.0
    %2583 = vmatpush1.msra.mxu0 0.0
    %2584 = vmatprep.subr.mxu0 0.0
    %2585 = vmatpush1.msra.mxu0 0.0
    %2586 = vmatprep.subr.mxu0 0.0
    %2587 = vmatpush1.msra.mxu0 0.0
    %2588 = vmatprep.subr.mxu0 0.0
    %2589 = vmatpush1.msra.mxu0 0.0
    %2590 = vmatprep.subr.mxu0 0.0
    %2591 = vmatpush1.msra.mxu0 0.0
    %2592 = vmatprep.subr.mxu0 0.0
    %2593 = vmatpush1.msra.mxu0 0.0
    %2594 = vmatprep.subr.mxu0 0.0
    %2595 = vmatpush1.msra.mxu0 0.0
    %2596 = vmatprep.subr.mxu0 0.0
    %2597 = vmatpush1.msra.mxu0 0.0
    %2598 = vmatprep.mubr.f32.mxu0 0.0
    %2599 = vmatmul.mubr.f32.gmra.mrb[0].mxu0 %v2487
    %v2600 = vpop.f32.mrb[0].mxu0
    %v2601 = vadd.f32 0.0, %v2600
    %v2602 = vpop.f32.mrb[0].mxu0
    %2603 = vmatprep.mubr.f32.mxu0 0.0
    %2604 = vmatmul.mubr.f32.gmra.mrb[0].mxu0 %v2490
    %v2605 = vpop.f32.mrb[0].mxu0
    %v2606 = vadd.f32 0.0, %v2605
    %v2607 = vpop.f32.mrb[0].mxu0
    %2608 = vmatprep.mubr.f32.mxu0 0.0
    %2609 = vmatmul.mubr.f32.gmra.mrb[0].mxu0 %v2493
    %v2610 = vpop.f32.mrb[0].mxu0
    %v2611 = vadd.f32 0.0, %v2610
    %v2612 = vpop.f32.mrb[0].mxu0
    %2613 = vmatprep.mubr.f32.mxu0 0.0
    %2614 = vmatmul.mubr.f32.gmra.mrb[0].mxu0 %v2496
    %v2615 = vpop.f32.mrb[0].mxu0
    %v2616 = vadd.f32 0.0, %v2615
    %v2617 = vpop.f32.mrb[0].mxu0
    %2618 = vmatprep.mubr.f32.mxu0 0.0
    %2619 = vmatmul.mubr.f32.gmra.mrb[0].mxu0 %v2499
    %v2620 = vpop.f32.mrb[0].mxu0
    %v2621 = vadd.f32 0.0, %v2620
    %v2622 = vpop.f32.mrb[0].mxu0
    %2623 = vmatprep.mubr.f32.mxu0 0.0
    %2624 = vmatmul.mubr.f32.gmra.mrb[0].mxu0 %v2502
    %v2625 = vpop.f32.mrb[0].mxu0
    %v2626 = vadd.f32 0.0, %v2625
    %v2627 = vpop.f32.mrb[0].mxu0
    %2628 = vmatprep.mubr.f32.mxu0 0.0
    %2629 = vmatmul.mubr.f32.gmra.mrb[0].mxu0 %v2505
    %v2630 = vpop.f32.mrb[0].mxu0
    %v2631 = vadd.f32 0.0, %v2630
    %v2632 = vpop.f32.mrb[0].mxu0
    %2633 = vmatprep.mubr.f32.mxu0 0.0
    %2634 = vmatmul.mubr.f32.gmra.mrb[0].mxu0 %v2508
    %v2635 = vpop.f32.mrb[0].mxu0
    %v2636 = vadd.f32 0.0, %v2635
    %v2637 = vpop.f32.mrb[0].mxu0
    %2638 = vmatprep.mubr.f32.mxu0 0.0
    %2639 = vmatmul.mubr.f32.gmra.mrb[0].mxu0 %v2511
    %v2640 = vpop.f32.mrb[0].mxu0
    %v2641 = vadd.f32 0.0, %v2640
    %v2642 = vpop.f32.mrb[0].mxu0
    %2643 = vmatprep.mubr.f32.mxu0 0.0
    %2644 = vmatmul.mubr.f32.gmra.mrb[0].mxu0 %v2514
    %v2645 = vpop.f32.mrb[0].mxu0
    %v2646 = vadd.f32 0.0, %v2645
    %v2647 = vpop.f32.mrb[0].mxu0
    %2648 = vmatprep.mubr.f32.mxu0 0.0
    %2649 = vmatmul.mubr.f32.gmra.mrb[0].mxu0 %v2517
    %v2650 = vpop.f32.mrb[0].mxu0
    %v2651 = vadd.f32 0.0, %v2650
    %v2652 = vpop.f32.mrb[0].mxu0
    %2653 = vmatprep.mubr.f32.mxu0 0.0
    %2654 = vmatmul.mubr.f32.gmra.mrb[0].mxu0 %v2520
    %v2655 = vpop.f32.mrb[0].mxu0
    %v2656 = vadd.f32 0.0, %v2655
    %v2657 = vpop.f32.mrb[0].mxu0
    %2658 = vmatprep.mubr.f32.mxu0 0.0
    %2659 = vmatmul.mubr.f32.gmra.mrb[0].mxu0 %v2523
    %v2660 = vpop.f32.mrb[0].mxu0
    %v2661 = vadd.f32 0.0, %v2660
    %v2662 = vpop.f32.mrb[0].mxu0
    %2663 = vmatprep.mubr.f32.mxu0 0.0
    %2664 = vmatmul.mubr.f32.gmra.mrb[0].mxu0 %v2526
    %v2665 = vpop.f32.mrb[0].mxu0
    %v2666 = vadd.f32 0.0, %v2665
    %v2667 = vpop.f32.mrb[0].mxu0
    %2668 = vmatprep.mubr.f32.mxu0 0.0
    %2669 = vmatmul.mubr.f32.gmra.mrb[0].mxu0 %v2529
    %v2670 = vpop.f32.mrb[0].mxu0
    %v2671 = vadd.f32 0.0, %v2670
    %v2672 = vpop.f32.mrb[0].mxu0
    %2673 = vmatprep.mubr.f32.mxu0 0.0
    %2674 = vmatmul.mubr.f32.gmra.mrb[0].mxu0 %v2532
    %v2675 = vpop.f32.mrb[0].mxu0
    %v2676 = vadd.f32 0.0, %v2675
    %v2677 = vpop.f32.mrb[0].mxu0
    %2678 = vdwg.mxu0
    %s2679 = scalar_lea.vmem [#allocation6], 16
    %v2680 = vld [vmem:[%s2679] sm:$0xff]
    %v2682 = vsel %vm1297, %v2601, 0
    %v2685 = vsel %vm1297, %v2606, 0
    %v2688 = vsel %vm1297, %v2611, 0
    %v2691 = vsel %vm1297, %v2616, 0
    %v2694 = vsel %vm1297, %v2621, 0
    %v2697 = vsel %vm1297, %v2626, 0
    %v2700 = vsel %vm1297, %v2631, 0
    %v2703 = vsel %vm1297, %v2636, 0
    %v2706 = vsel %vm1297, %v2641, 0
    %v2709 = vsel %vm1297, %v2646, 0
    %v2712 = vsel %vm1297, %v2651, 0
    %v2715 = vsel %vm1297, %v2656, 0
    %v2718 = vsel %vm1297, %v2661, 0
    %v2721 = vsel %vm1297, %v2666, 0
    %v2724 = vsel %vm1297, %v2671, 0
    %v2727 = vsel %vm1297, %v2676, 0
    %2729 = vmatprep.subr.mxu0 0.0
    %2730 = vmatpush1.msra.mxu0 %v2680
    %2731 = vmatprep.subr.mxu0 0.0
    %2732 = vmatpush1.msra.mxu0 0.0
    %2733 = vmatprep.subr.mxu0 0.0
    %2734 = vmatpush1.msra.mxu0 0.0
    %2735 = vmatprep.subr.mxu0 0.0
    %2736 = vmatpush1.msra.mxu0 0.0
    %2737 = vmatprep.subr.mxu0 0.0
    %2738 = vmatpush1.msra.mxu0 0.0
    %2739 = vmatprep.subr.mxu0 0.0
    %2740 = vmatpush1.msra.mxu0 0.0
    %2741 = vmatprep.subr.mxu0 0.0
    %2742 = vmatpush1.msra.mxu0 0.0
    %2743 = vmatprep.subr.mxu0 0.0
    %2744 = vmatpush1.msra.mxu0 0.0
    %2745 = vmatprep.subr.mxu0 0.0
    %2746 = vmatpush1.msra.mxu0 0.0
    %2747 = vmatprep.subr.mxu0 0.0
    %2748 = vmatpush1.msra.mxu0 0.0
    %2749 = vmatprep.subr.mxu0 0.0
    %2750 = vmatpush1.msra.mxu0 0.0
    %2751 = vmatprep.subr.mxu0 0.0
    %2752 = vmatpush1.msra.mxu0 0.0
    %2753 = vmatprep.subr.mxu0 0.0
    %2754 = vmatpush1.msra.mxu0 0.0
    %2755 = vmatprep.subr.mxu0 0.0
    %2756 = vmatpush1.msra.mxu0 0.0
    %2757 = vmatprep.subr.mxu0 0.0
    %2758 = vmatpush1.msra.mxu0 0.0
    %2759 = vmatprep.subr.mxu0 0.0
    %2760 = vmatpush1.msra.mxu0 0.0
    %2761 = vmatprep.subr.mxu0 0.0
    %2762 = vmatpush1.msra.mxu0 0.0
    %2763 = vmatprep.subr.mxu0 0.0
    %2764 = vmatpush1.msra.mxu0 0.0
    %2765 = vmatprep.subr.mxu0 0.0
    %2766 = vmatpush1.msra.mxu0 0.0
    %2767 = vmatprep.subr.mxu0 0.0
    %2768 = vmatpush1.msra.mxu0 0.0
    %2769 = vmatprep.subr.mxu0 0.0
    %2770 = vmatpush1.msra.mxu0 0.0
    %2771 = vmatprep.subr.mxu0 0.0
    %2772 = vmatpush1.msra.mxu0 0.0
    %2773 = vmatprep.subr.mxu0 0.0
    %2774 = vmatpush1.msra.mxu0 0.0
    %2775 = vmatprep.subr.mxu0 0.0
    %2776 = vmatpush1.msra.mxu0 0.0
    %2777 = vmatprep.subr.mxu0 0.0
    %2778 = vmatpush1.msra.mxu0 0.0
    %2779 = vmatprep.subr.mxu0 0.0
    %2780 = vmatpush1.msra.mxu0 0.0
    %2781 = vmatprep.subr.mxu0 0.0
    %2782 = vmatpush1.msra.mxu0 0.0
    %2783 = vmatprep.subr.mxu0 0.0
    %2784 = vmatpush1.msra.mxu0 0.0
    %2785 = vmatprep.subr.mxu0 0.0
    %2786 = vmatpush1.msra.mxu0 0.0
    %2787 = vmatprep.subr.mxu0 0.0
    %2788 = vmatpush1.msra.mxu0 0.0
    %2789 = vmatprep.subr.mxu0 0.0
    %2790 = vmatpush1.msra.mxu0 0.0
    %2791 = vmatprep.subr.mxu0 0.0
    %2792 = vmatpush1.msra.mxu0 0.0
    %2793 = vmatprep.mubr.f32.mxu0 0.0
    %2794 = vmatmul.mubr.f32.gmra.mrb[0].mxu0 %v2682
    %v2795 = vpop.f32.mrb[0].mxu0
    %v2796 = vadd.f32 0.0, %v2795
    %v2797 = vpop.f32.mrb[0].mxu0
    %2798 = vmatprep.mubr.f32.mxu0 0.0
    %2799 = vmatmul.mubr.f32.gmra.mrb[0].mxu0 %v2685
    %v2800 = vpop.f32.mrb[0].mxu0
    %v2801 = vadd.f32 0.0, %v2800
    %v2802 = vpop.f32.mrb[0].mxu0
    %2803 = vmatprep.mubr.f32.mxu0 0.0
    %2804 = vmatmul.mubr.f32.gmra.mrb[0].mxu0 %v2688
    %v2805 = vpop.f32.mrb[0].mxu0
    %v2806 = vadd.f32 0.0, %v2805
    %v2807 = vpop.f32.mrb[0].mxu0
    %2808 = vmatprep.mubr.f32.mxu0 0.0
    %2809 = vmatmul.mubr.f32.gmra.mrb[0].mxu0 %v2691
    %v2810 = vpop.f32.mrb[0].mxu0
    %v2811 = vadd.f32 0.0, %v2810
    %v2812 = vpop.f32.mrb[0].mxu0
    %2813 = vmatprep.mubr.f32.mxu0 0.0
    %2814 = vmatmul.mubr.f32.gmra.mrb[0].mxu0 %v2694
    %v2815 = vpop.f32.mrb[0].mxu0
    %v2816 = vadd.f32 0.0, %v2815
    %v2817 = vpop.f32.mrb[0].mxu0
    %2818 = vmatprep.mubr.f32.mxu0 0.0
    %2819 = vmatmul.mubr.f32.gmra.mrb[0].mxu0 %v2697
    %v2820 = vpop.f32.mrb[0].mxu0
    %v2821 = vadd.f32 0.0, %v2820
    %v2822 = vpop.f32.mrb[0].mxu0
    %2823 = vmatprep.mubr.f32.mxu0 0.0
    %2824 = vmatmul.mubr.f32.gmra.mrb[0].mxu0 %v2700
    %v2825 = vpop.f32.mrb[0].mxu0
    %v2826 = vadd.f32 0.0, %v2825
    %v2827 = vpop.f32.mrb[0].mxu0
    %2828 = vmatprep.mubr.f32.mxu0 0.0
    %2829 = vmatmul.mubr.f32.gmra.mrb[0].mxu0 %v2703
    %v2830 = vpop.f32.mrb[0].mxu0
    %v2831 = vadd.f32 0.0, %v2830
    %v2832 = vpop.f32.mrb[0].mxu0
    %2833 = vmatprep.mubr.f32.mxu0 0.0
    %2834 = vmatmul.mubr.f32.gmra.mrb[0].mxu0 %v2706
    %v2835 = vpop.f32.mrb[0].mxu0
    %v2836 = vadd.f32 0.0, %v2835
    %v2837 = vpop.f32.mrb[0].mxu0
    %2838 = vmatprep.mubr.f32.mxu0 0.0
    %2839 = vmatmul.mubr.f32.gmra.mrb[0].mxu0 %v2709
    %v2840 = vpop.f32.mrb[0].mxu0
    %v2841 = vadd.f32 0.0, %v2840
    %v2842 = vpop.f32.mrb[0].mxu0
    %2843 = vmatprep.mubr.f32.mxu0 0.0
    %2844 = vmatmul.mubr.f32.gmra.mrb[0].mxu0 %v2712
    %v2845 = vpop.f32.mrb[0].mxu0
    %v2846 = vadd.f32 0.0, %v2845
    %v2847 = vpop.f32.mrb[0].mxu0
    %2848 = vmatprep.mubr.f32.mxu0 0.0
    %2849 = vmatmul.mubr.f32.gmra.mrb[0].mxu0 %v2715
    %v2850 = vpop.f32.mrb[0].mxu0
    %v2851 = vadd.f32 0.0, %v2850
    %v2852 = vpop.f32.mrb[0].mxu0
    %2853 = vmatprep.mubr.f32.mxu0 0.0
    %2854 = vmatmul.mubr.f32.gmra.mrb[0].mxu0 %v2718
    %v2855 = vpop.f32.mrb[0].mxu0
    %v2856 = vadd.f32 0.0, %v2855
    %v2857 = vpop.f32.mrb[0].mxu0
    %2858 = vmatprep.mubr.f32.mxu0 0.0
    %2859 = vmatmul.mubr.f32.gmra.mrb[0].mxu0 %v2721
    %v2860 = vpop.f32.mrb[0].mxu0
    %v2861 = vadd.f32 0.0, %v2860
    %v2862 = vpop.f32.mrb[0].mxu0
    %2863 = vmatprep.mubr.f32.mxu0 0.0
    %2864 = vmatmul.mubr.f32.gmra.mrb[0].mxu0 %v2724
    %v2865 = vpop.f32.mrb[0].mxu0
    %v2866 = vadd.f32 0.0, %v2865
    %v2867 = vpop.f32.mrb[0].mxu0
    %2868 = vmatprep.mubr.f32.mxu0 0.0
    %2869 = vmatmul.mubr.f32.gmra.mrb[0].mxu0 %v2727
    %v2870 = vpop.f32.mrb[0].mxu0
    %v2871 = vadd.f32 0.0, %v2870
    %v2872 = vpop.f32.mrb[0].mxu0
    %2873 = vdwg.mxu0
    %v2874 = vadd.f32 %v2391, %v2796
    %v2875 = vadd.f32 %v2396, %v2801
    %v2876 = vadd.f32 %v2401, %v2806
    %v2877 = vadd.f32 %v2406, %v2811
    %v2878 = vadd.f32 %v2411, %v2816
    %v2879 = vadd.f32 %v2416, %v2821
    %v2880 = vadd.f32 %v2421, %v2826
    %v2881 = vadd.f32 %v2426, %v2831
    %v2882 = vadd.f32 %v2431, %v2836
    %v2883 = vadd.f32 %v2436, %v2841
    %v2884 = vadd.f32 %v2441, %v2846
    %v2885 = vadd.f32 %v2446, %v2851
    %v2886 = vadd.f32 %v2451, %v2856
    %v2887 = vadd.f32 %v2456, %v2861
    %v2888 = vadd.f32 %v2461, %v2866
    %v2889 = vadd.f32 %v2466, %v2871
    %s2890 = scalar_lea.vmem %s6, 384
    %v2891 = vld [vmem:[%s2890] sm:$0xff]
    %v2892 = vld [vmem:[%s2890 + $0x8] sm:$0xff]
    %v2893 = vld [vmem:[%s2890 + $0x10] sm:$0xff]
    %v2894 = vld [vmem:[%s2890 + $0x18] sm:$0xff]
    %v2895 = vld [vmem:[%s2890 + $0x20] sm:$0xff]
    %v2896 = vld [vmem:[%s2890 + $0x28] sm:$0xff]
    %v2897 = vld [vmem:[%s2890 + $0x30] sm:$0xff]
    %v2898 = vld [vmem:[%s2890 + $0x38] sm:$0xff]
    %v2899 = vld [vmem:[%s2890 + $0x40] sm:$0xff]
    %v2900 = vld [vmem:[%s2890 + $0x48] sm:$0xff]
    %v2901 = vld [vmem:[%s2890 + $0x50] sm:$0xff]
    %v2902 = vld [vmem:[%s2890 + $0x58] sm:$0xff]
    %v2903 = vld [vmem:[%s2890 + $0x60] sm:$0xff]
    %v2904 = vld [vmem:[%s2890 + $0x68] sm:$0xff]
    %v2905 = vld [vmem:[%s2890 + $0x70] sm:$0xff]
    %v2906 = vld [vmem:[%s2890 + $0x78] sm:$0xff]
    %v2908 = vsel %vm1676, %v2891, 0
    %v2911 = vsel %vm1676, %v2892, 0
    %v2914 = vsel %vm1676, %v2893, 0
    %v2917 = vsel %vm1676, %v2894, 0
    %v2920 = vsel %vm1676, %v2895, 0
    %v2923 = vsel %vm1676, %v2896, 0
    %v2926 = vsel %vm1676, %v2897, 0
    %v2929 = vsel %vm1676, %v2898, 0
    %v2932 = vsel %vm1676, %v2899, 0
    %v2935 = vsel %vm1676, %v2900, 0
    %v2938 = vsel %vm1676, %v2901, 0
    %v2941 = vsel %vm1676, %v2902, 0
    %v2944 = vsel %vm1676, %v2903, 0
    %v2947 = vsel %vm1676, %v2904, 0
    %v2950 = vsel %vm1676, %v2905, 0
    %v2953 = vsel %vm1676, %v2906, 0
    %2955 = vmatprep.subr.mxu0 0.0
    %2956 = vmatpush1.msra.mxu0 %v1652
    %2957 = vmatprep.subr.mxu0 0.0
    %2958 = vmatpush1.msra.mxu0 %v1653
    %2959 = vmatprep.subr.mxu0 0.0
    %2960 = vmatpush1.msra.mxu0 %v1654
    %2961 = vmatprep.subr.mxu0 0.0
    %2962 = vmatpush1.msra.mxu0 %v1655
    %2963 = vmatprep.subr.mxu0 0.0
    %2964 = vmatpush1.msra.mxu0 %v1656
    %2965 = vmatprep.subr.mxu0 0.0
    %2966 = vmatpush1.msra.mxu0 %v1657
    %2967 = vmatprep.subr.mxu0 0.0
    %2968 = vmatpush1.msra.mxu0 %v1658
    %2969 = vmatprep.subr.mxu0 0.0
    %2970 = vmatpush1.msra.mxu0 %v1659
    %2971 = vmatprep.subr.mxu0 0.0
    %2972 = vmatpush1.msra.mxu0 0.0
    %2973 = vmatprep.subr.mxu0 0.0
    %2974 = vmatpush1.msra.mxu0 0.0
    %2975 = vmatprep.subr.mxu0 0.0
    %2976 = vmatpush1.msra.mxu0 0.0
    %2977 = vmatprep.subr.mxu0 0.0
    %2978 = vmatpush1.msra.mxu0 0.0
    %2979 = vmatprep.subr.mxu0 0.0
    %2980 = vmatpush1.msra.mxu0 0.0
    %2981 = vmatprep.subr.mxu0 0.0
    %2982 = vmatpush1.msra.mxu0 0.0
    %2983 = vmatprep.subr.mxu0 0.0
    %2984 = vmatpush1.msra.mxu0 0.0
    %2985 = vmatprep.subr.mxu0 0.0
    %2986 = vmatpush1.msra.mxu0 0.0
    %2987 = vmatprep.subr.mxu0 0.0
    %2988 = vmatpush1.msra.mxu0 0.0
    %2989 = vmatprep.subr.mxu0 0.0
    %2990 = vmatpush1.msra.mxu0 0.0
    %2991 = vmatprep.subr.mxu0 0.0
    %2992 = vmatpush1.msra.mxu0 0.0
    %2993 = vmatprep.subr.mxu0 0.0
    %2994 = vmatpush1.msra.mxu0 0.0
    %2995 = vmatprep.subr.mxu0 0.0
    %2996 = vmatpush1.msra.mxu0 0.0
    %2997 = vmatprep.subr.mxu0 0.0
    %2998 = vmatpush1.msra.mxu0 0.0
    %2999 = vmatprep.subr.mxu0 0.0
    %3000 = vmatpush1.msra.mxu0 0.0
    %3001 = vmatprep.subr.mxu0 0.0
    %3002 = vmatpush1.msra.mxu0 0.0
    %3003 = vmatprep.subr.mxu0 0.0
    %3004 = vmatpush1.msra.mxu0 0.0
    %3005 = vmatprep.subr.mxu0 0.0
    %3006 = vmatpush1.msra.mxu0 0.0
    %3007 = vmatprep.subr.mxu0 0.0
    %3008 = vmatpush1.msra.mxu0 0.0
    %3009 = vmatprep.subr.mxu0 0.0
    %3010 = vmatpush1.msra.mxu0 0.0
    %3011 = vmatprep.subr.mxu0 0.0
    %3012 = vmatpush1.msra.mxu0 0.0
    %3013 = vmatprep.subr.mxu0 0.0
    %3014 = vmatpush1.msra.mxu0 0.0
    %3015 = vmatprep.subr.mxu0 0.0
    %3016 = vmatpush1.msra.mxu0 0.0
    %3017 = vmatprep.subr.mxu0 0.0
    %3018 = vmatpush1.msra.mxu0 0.0
    %3019 = vmatprep.mubr.f32.mxu0 0.0
    %3020 = vmatmul.mubr.f32.gmra.mrb[0].mxu0 %v2908
    %v3021 = vpop.f32.mrb[0].mxu0
    %v3022 = vadd.f32 0.0, %v3021
    %v3023 = vpop.f32.mrb[0].mxu0
    %3024 = vmatprep.mubr.f32.mxu0 0.0
    %3025 = vmatmul.mubr.f32.gmra.mrb[0].mxu0 %v2911
    %v3026 = vpop.f32.mrb[0].mxu0
    %v3027 = vadd.f32 0.0, %v3026
    %v3028 = vpop.f32.mrb[0].mxu0
    %3029 = vmatprep.mubr.f32.mxu0 0.0
    %3030 = vmatmul.mubr.f32.gmra.mrb[0].mxu0 %v2914
    %v3031 = vpop.f32.mrb[0].mxu0
    %v3032 = vadd.f32 0.0, %v3031
    %v3033 = vpop.f32.mrb[0].mxu0
    %3034 = vmatprep.mubr.f32.mxu0 0.0
    %3035 = vmatmul.mubr.f32.gmra.mrb[0].mxu0 %v2917
    %v3036 = vpop.f32.mrb[0].mxu0
    %v3037 = vadd.f32 0.0, %v3036
    %v3038 = vpop.f32.mrb[0].mxu0
    %3039 = vmatprep.mubr.f32.mxu0 0.0
    %3040 = vmatmul.mubr.f32.gmra.mrb[0].mxu0 %v2920
    %v3041 = vpop.f32.mrb[0].mxu0
    %v3042 = vadd.f32 0.0, %v3041
    %v3043 = vpop.f32.mrb[0].mxu0
    %3044 = vmatprep.mubr.f32.mxu0 0.0
    %3045 = vmatmul.mubr.f32.gmra.mrb[0].mxu0 %v2923
    %v3046 = vpop.f32.mrb[0].mxu0
    %v3047 = vadd.f32 0.0, %v3046
    %v3048 = vpop.f32.mrb[0].mxu0
    %3049 = vmatprep.mubr.f32.mxu0 0.0
    %3050 = vmatmul.mubr.f32.gmra.mrb[0].mxu0 %v2926
    %v3051 = vpop.f32.mrb[0].mxu0
    %v3052 = vadd.f32 0.0, %v3051
    %v3053 = vpop.f32.mrb[0].mxu0
    %3054 = vmatprep.mubr.f32.mxu0 0.0
    %3055 = vmatmul.mubr.f32.gmra.mrb[0].mxu0 %v2929
    %v3056 = vpop.f32.mrb[0].mxu0
    %v3057 = vadd.f32 0.0, %v3056
    %v3058 = vpop.f32.mrb[0].mxu0
    %3059 = vmatprep.mubr.f32.mxu0 0.0
    %3060 = vmatmul.mubr.f32.gmra.mrb[0].mxu0 %v2932
    %v3061 = vpop.f32.mrb[0].mxu0
    %v3062 = vadd.f32 0.0, %v3061
    %v3063 = vpop.f32.mrb[0].mxu0
    %3064 = vmatprep.mubr.f32.mxu0 0.0
    %3065 = vmatmul.mubr.f32.gmra.mrb[0].mxu0 %v2935
    %v3066 = vpop.f32.mrb[0].mxu0
    %v3067 = vadd.f32 0.0, %v3066
    %v3068 = vpop.f32.mrb[0].mxu0
    %3069 = vmatprep.mubr.f32.mxu0 0.0
    %3070 = vmatmul.mubr.f32.gmra.mrb[0].mxu0 %v2938
    %v3071 = vpop.f32.mrb[0].mxu0
    %v3072 = vadd.f32 0.0, %v3071
    %v3073 = vpop.f32.mrb[0].mxu0
    %3074 = vmatprep.mubr.f32.mxu0 0.0
    %3075 = vmatmul.mubr.f32.gmra.mrb[0].mxu0 %v2941
    %v3076 = vpop.f32.mrb[0].mxu0
    %v3077 = vadd.f32 0.0, %v3076
    %v3078 = vpop.f32.mrb[0].mxu0
    %3079 = vmatprep.mubr.f32.mxu0 0.0
    %3080 = vmatmul.mubr.f32.gmra.mrb[0].mxu0 %v2944
    %v3081 = vpop.f32.mrb[0].mxu0
    %v3082 = vadd.f32 0.0, %v3081
    %v3083 = vpop.f32.mrb[0].mxu0
    %3084 = vmatprep.mubr.f32.mxu0 0.0
    %3085 = vmatmul.mubr.f32.gmra.mrb[0].mxu0 %v2947
    %v3086 = vpop.f32.mrb[0].mxu0
    %v3087 = vadd.f32 0.0, %v3086
    %v3088 = vpop.f32.mrb[0].mxu0
    %3089 = vmatprep.mubr.f32.mxu0 0.0
    %3090 = vmatmul.mubr.f32.gmra.mrb[0].mxu0 %v2950
    %v3091 = vpop.f32.mrb[0].mxu0
    %v3092 = vadd.f32 0.0, %v3091
    %v3093 = vpop.f32.mrb[0].mxu0
    %3094 = vmatprep.mubr.f32.mxu0 0.0
    %3095 = vmatmul.mubr.f32.gmra.mrb[0].mxu0 %v2953
    %v3096 = vpop.f32.mrb[0].mxu0
    %v3097 = vadd.f32 0.0, %v3096
    %v3098 = vpop.f32.mrb[0].mxu0
    %3099 = vdwg.mxu0
    %s3100 = scalar_lea.vmem [#allocation6], 24
    %v3101 = vld [vmem:[%s3100] sm:$0xff]
    %v3103 = vsel %vm1297, %v3022, 0
    %v3106 = vsel %vm1297, %v3027, 0
    %v3109 = vsel %vm1297, %v3032, 0
    %v3112 = vsel %vm1297, %v3037, 0
    %v3115 = vsel %vm1297, %v3042, 0
    %v3118 = vsel %vm1297, %v3047, 0
    %v3121 = vsel %vm1297, %v3052, 0
    %v3124 = vsel %vm1297, %v3057, 0
    %v3127 = vsel %vm1297, %v3062, 0
    %v3130 = vsel %vm1297, %v3067, 0
    %v3133 = vsel %vm1297, %v3072, 0
    %v3136 = vsel %vm1297, %v3077, 0
    %v3139 = vsel %vm1297, %v3082, 0
    %v3142 = vsel %vm1297, %v3087, 0
    %v3145 = vsel %vm1297, %v3092, 0
    %v3148 = vsel %vm1297, %v3097, 0
    %3150 = vmatprep.subr.mxu0 0.0
    %3151 = vmatpush1.msra.mxu0 %v3101
    %3152 = vmatprep.subr.mxu0 0.0
    %3153 = vmatpush1.msra.mxu0 0.0
    %3154 = vmatprep.subr.mxu0 0.0
    %3155 = vmatpush1.msra.mxu0 0.0
    %3156 = vmatprep.subr.mxu0 0.0
    %3157 = vmatpush1.msra.mxu0 0.0
    %3158 = vmatprep.subr.mxu0 0.0
    %3159 = vmatpush1.msra.mxu0 0.0
    %3160 = vmatprep.subr.mxu0 0.0
    %3161 = vmatpush1.msra.mxu0 0.0
    %3162 = vmatprep.subr.mxu0 0.0
    %3163 = vmatpush1.msra.mxu0 0.0
    %3164 = vmatprep.subr.mxu0 0.0
    %3165 = vmatpush1.msra.mxu0 0.0
    %3166 = vmatprep.subr.mxu0 0.0
    %3167 = vmatpush1.msra.mxu0 0.0
    %3168 = vmatprep.subr.mxu0 0.0
    %3169 = vmatpush1.msra.mxu0 0.0
    %3170 = vmatprep.subr.mxu0 0.0
    %3171 = vmatpush1.msra.mxu0 0.0
    %3172 = vmatprep.subr.mxu0 0.0
    %3173 = vmatpush1.msra.mxu0 0.0
    %3174 = vmatprep.subr.mxu0 0.0
    %3175 = vmatpush1.msra.mxu0 0.0
    %3176 = vmatprep.subr.mxu0 0.0
    %3177 = vmatpush1.msra.mxu0 0.0
    %3178 = vmatprep.subr.mxu0 0.0
    %3179 = vmatpush1.msra.mxu0 0.0
    %3180 = vmatprep.subr.mxu0 0.0
    %3181 = vmatpush1.msra.mxu0 0.0
    %3182 = vmatprep.subr.mxu0 0.0
    %3183 = vmatpush1.msra.mxu0 0.0
    %3184 = vmatprep.subr.mxu0 0.0
    %3185 = vmatpush1.msra.mxu0 0.0
    %3186 = vmatprep.subr.mxu0 0.0
    %3187 = vmatpush1.msra.mxu0 0.0
    %3188 = vmatprep.subr.mxu0 0.0
    %3189 = vmatpush1.msra.mxu0 0.0
    %3190 = vmatprep.subr.mxu0 0.0
    %3191 = vmatpush1.msra.mxu0 0.0
    %3192 = vmatprep.subr.mxu0 0.0
    %3193 = vmatpush1.msra.mxu0 0.0
    %3194 = vmatprep.subr.mxu0 0.0
    %3195 = vmatpush1.msra.mxu0 0.0
    %3196 = vmatprep.subr.mxu0 0.0
    %3197 = vmatpush1.msra.mxu0 0.0
    %3198 = vmatprep.subr.mxu0 0.0
    %3199 = vmatpush1.msra.mxu0 0.0
    %3200 = vmatprep.subr.mxu0 0.0
    %3201 = vmatpush1.msra.mxu0 0.0
    %3202 = vmatprep.subr.mxu0 0.0
    %3203 = vmatpush1.msra.mxu0 0.0
    %3204 = vmatprep.subr.mxu0 0.0
    %3205 = vmatpush1.msra.mxu0 0.0
    %3206 = vmatprep.subr.mxu0 0.0
    %3207 = vmatpush1.msra.mxu0 0.0
    %3208 = vmatprep.subr.mxu0 0.0
    %3209 = vmatpush1.msra.mxu0 0.0
    %3210 = vmatprep.subr.mxu0 0.0
    %3211 = vmatpush1.msra.mxu0 0.0
    %3212 = vmatprep.subr.mxu0 0.0
    %3213 = vmatpush1.msra.mxu0 0.0
    %3214 = vmatprep.mubr.f32.mxu0 0.0
    %3215 = vmatmul.mubr.f32.gmra.mrb[0].mxu0 %v3103
    %v3216 = vpop.f32.mrb[0].mxu0
    %v3217 = vadd.f32 0.0, %v3216
    %v3218 = vpop.f32.mrb[0].mxu0
    %3219 = vmatprep.mubr.f32.mxu0 0.0
    %3220 = vmatmul.mubr.f32.gmra.mrb[0].mxu0 %v3106
    %v3221 = vpop.f32.mrb[0].mxu0
    %v3222 = vadd.f32 0.0, %v3221
    %v3223 = vpop.f32.mrb[0].mxu0
    %3224 = vmatprep.mubr.f32.mxu0 0.0
    %3225 = vmatmul.mubr.f32.gmra.mrb[0].mxu0 %v3109
    %v3226 = vpop.f32.mrb[0].mxu0
    %v3227 = vadd.f32 0.0, %v3226
    %v3228 = vpop.f32.mrb[0].mxu0
    %3229 = vmatprep.mubr.f32.mxu0 0.0
    %3230 = vmatmul.mubr.f32.gmra.mrb[0].mxu0 %v3112
    %v3231 = vpop.f32.mrb[0].mxu0
    %v3232 = vadd.f32 0.0, %v3231
    %v3233 = vpop.f32.mrb[0].mxu0
    %3234 = vmatprep.mubr.f32.mxu0 0.0
    %3235 = vmatmul.mubr.f32.gmra.mrb[0].mxu0 %v3115
    %v3236 = vpop.f32.mrb[0].mxu0
    %v3237 = vadd.f32 0.0, %v3236
    %v3238 = vpop.f32.mrb[0].mxu0
    %3239 = vmatprep.mubr.f32.mxu0 0.0
    %3240 = vmatmul.mubr.f32.gmra.mrb[0].mxu0 %v3118
    %v3241 = vpop.f32.mrb[0].mxu0
    %v3242 = vadd.f32 0.0, %v3241
    %v3243 = vpop.f32.mrb[0].mxu0
    %3244 = vmatprep.mubr.f32.mxu0 0.0
    %3245 = vmatmul.mubr.f32.gmra.mrb[0].mxu0 %v3121
    %v3246 = vpop.f32.mrb[0].mxu0
    %v3247 = vadd.f32 0.0, %v3246
    %v3248 = vpop.f32.mrb[0].mxu0
    %3249 = vmatprep.mubr.f32.mxu0 0.0
    %3250 = vmatmul.mubr.f32.gmra.mrb[0].mxu0 %v3124
    %v3251 = vpop.f32.mrb[0].mxu0
    %v3252 = vadd.f32 0.0, %v3251
    %v3253 = vpop.f32.mrb[0].mxu0
    %3254 = vmatprep.mubr.f32.mxu0 0.0
    %3255 = vmatmul.mubr.f32.gmra.mrb[0].mxu0 %v3127
    %v3256 = vpop.f32.mrb[0].mxu0
    %v3257 = vadd.f32 0.0, %v3256
    %v3258 = vpop.f32.mrb[0].mxu0
    %3259 = vmatprep.mubr.f32.mxu0 0.0
    %3260 = vmatmul.mubr.f32.gmra.mrb[0].mxu0 %v3130
    %v3261 = vpop.f32.mrb[0].mxu0
    %v3262 = vadd.f32 0.0, %v3261
    %v3263 = vpop.f32.mrb[0].mxu0
    %3264 = vmatprep.mubr.f32.mxu0 0.0
    %3265 = vmatmul.mubr.f32.gmra.mrb[0].mxu0 %v3133
    %v3266 = vpop.f32.mrb[0].mxu0
    %v3267 = vadd.f32 0.0, %v3266
    %v3268 = vpop.f32.mrb[0].mxu0
    %3269 = vmatprep.mubr.f32.mxu0 0.0
    %3270 = vmatmul.mubr.f32.gmra.mrb[0].mxu0 %v3136
    %v3271 = vpop.f32.mrb[0].mxu0
    %v3272 = vadd.f32 0.0, %v3271
    %v3273 = vpop.f32.mrb[0].mxu0
    %3274 = vmatprep.mubr.f32.mxu0 0.0
    %3275 = vmatmul.mubr.f32.gmra.mrb[0].mxu0 %v3139
    %v3276 = vpop.f32.mrb[0].mxu0
    %v3277 = vadd.f32 0.0, %v3276
    %v3278 = vpop.f32.mrb[0].mxu0
    %3279 = vmatprep.mubr.f32.mxu0 0.0
    %3280 = vmatmul.mubr.f32.gmra.mrb[0].mxu0 %v3142
    %v3281 = vpop.f32.mrb[0].mxu0
    %v3282 = vadd.f32 0.0, %v3281
    %v3283 = vpop.f32.mrb[0].mxu0
    %3284 = vmatprep.mubr.f32.mxu0 0.0
    %3285 = vmatmul.mubr.f32.gmra.mrb[0].mxu0 %v3145
    %v3286 = vpop.f32.mrb[0].mxu0
    %v3287 = vadd.f32 0.0, %v3286
    %v3288 = vpop.f32.mrb[0].mxu0
    %3289 = vmatprep.mubr.f32.mxu0 0.0
    %3290 = vmatmul.mubr.f32.gmra.mrb[0].mxu0 %v3148
    %v3291 = vpop.f32.mrb[0].mxu0
    %v3292 = vadd.f32 0.0, %v3291
    %v3293 = vpop.f32.mrb[0].mxu0
    %3294 = vdwg.mxu0
    %v3295 = vadd.f32 %v2874, %v3217
    %v3296 = vadd.f32 %v2875, %v3222
    %v3297 = vadd.f32 %v2876, %v3227
    %v3298 = vadd.f32 %v2877, %v3232
    %v3299 = vadd.f32 %v2878, %v3237
    %v3300 = vadd.f32 %v2879, %v3242
    %v3301 = vadd.f32 %v2880, %v3247
    %v3302 = vadd.f32 %v2881, %v3252
    %v3303 = vadd.f32 %v2882, %v3257
    %v3304 = vadd.f32 %v2883, %v3262
    %v3305 = vadd.f32 %v2884, %v3267
    %v3306 = vadd.f32 %v2885, %v3272
    %v3307 = vadd.f32 %v2886, %v3277
    %v3308 = vadd.f32 %v2887, %v3282
    %v3309 = vadd.f32 %v2888, %v3287
    %v3310 = vadd.f32 %v2889, %v3292
    %s3311 = scalar_lea.vmem %s6, 512
    %v3312 = vld [vmem:[%s3311] sm:$0xff]
    %v3313 = vld [vmem:[%s3311 + $0x8] sm:$0xff]
    %v3314 = vld [vmem:[%s3311 + $0x10] sm:$0xff]
    %v3315 = vld [vmem:[%s3311 + $0x18] sm:$0xff]
    %v3316 = vld [vmem:[%s3311 + $0x20] sm:$0xff]
    %v3317 = vld [vmem:[%s3311 + $0x28] sm:$0xff]
    %v3318 = vld [vmem:[%s3311 + $0x30] sm:$0xff]
    %v3319 = vld [vmem:[%s3311 + $0x38] sm:$0xff]
    %v3320 = vld [vmem:[%s3311 + $0x40] sm:$0xff]
    %v3321 = vld [vmem:[%s3311 + $0x48] sm:$0xff]
    %v3322 = vld [vmem:[%s3311 + $0x50] sm:$0xff]
    %v3323 = vld [vmem:[%s3311 + $0x58] sm:$0xff]
    %v3324 = vld [vmem:[%s3311 + $0x60] sm:$0xff]
    %v3325 = vld [vmem:[%s3311 + $0x68] sm:$0xff]
    %v3326 = vld [vmem:[%s3311 + $0x70] sm:$0xff]
    %v3327 = vld [vmem:[%s3311 + $0x78] sm:$0xff]
    %v3329 = vsel %vm1676, %v3312, 0
    %v3332 = vsel %vm1676, %v3313, 0
    %v3335 = vsel %vm1676, %v3314, 0
    %v3338 = vsel %vm1676, %v3315, 0
    %v3341 = vsel %vm1676, %v3316, 0
    %v3344 = vsel %vm1676, %v3317, 0
    %v3347 = vsel %vm1676, %v3318, 0
    %v3350 = vsel %vm1676, %v3319, 0
    %v3353 = vsel %vm1676, %v3320, 0
    %v3356 = vsel %vm1676, %v3321, 0
    %v3359 = vsel %vm1676, %v3322, 0
    %v3362 = vsel %vm1676, %v3323, 0
    %v3365 = vsel %vm1676, %v3324, 0
    %v3368 = vsel %vm1676, %v3325, 0
    %v3371 = vsel %vm1676, %v3326, 0
    %v3374 = vsel %vm1676, %v3327, 0
    %3376 = vmatprep.subr.mxu0 0.0
    %3377 = vmatpush1.msra.mxu0 %v1652
    %3378 = vmatprep.subr.mxu0 0.0
    %3379 = vmatpush1.msra.mxu0 %v1653
    %3380 = vmatprep.subr.mxu0 0.0
    %3381 = vmatpush1.msra.mxu0 %v1654
    %3382 = vmatprep.subr.mxu0 0.0
    %3383 = vmatpush1.msra.mxu0 %v1655
    %3384 = vmatprep.subr.mxu0 0.0
    %3385 = vmatpush1.msra.mxu0 %v1656
    %3386 = vmatprep.subr.mxu0 0.0
    %3387 = vmatpush1.msra.mxu0 %v1657
    %3388 = vmatprep.subr.mxu0 0.0
    %3389 = vmatpush1.msra.mxu0 %v1658
    %3390 = vmatprep.subr.mxu0 0.0
    %3391 = vmatpush1.msra.mxu0 %v1659
    %3392 = vmatprep.subr.mxu0 0.0
    %3393 = vmatpush1.msra.mxu0 0.0
    %3394 = vmatprep.subr.mxu0 0.0
    %3395 = vmatpush1.msra.mxu0 0.0
    %3396 = vmatprep.subr.mxu0 0.0
    %3397 = vmatpush1.msra.mxu0 0.0
    %3398 = vmatprep.subr.mxu0 0.0
    %3399 = vmatpush1.msra.mxu0 0.0
    %3400 = vmatprep.subr.mxu0 0.0
    %3401 = vmatpush1.msra.mxu0 0.0
    %3402 = vmatprep.subr.mxu0 0.0
    %3403 = vmatpush1.msra.mxu0 0.0
    %3404 = vmatprep.subr.mxu0 0.0
    %3405 = vmatpush1.msra.mxu0 0.0
    %3406 = vmatprep.subr.mxu0 0.0
    %3407 = vmatpush1.msra.mxu0 0.0
    %3408 = vmatprep.subr.mxu0 0.0
    %3409 = vmatpush1.msra.mxu0 0.0
    %3410 = vmatprep.subr.mxu0 0.0
    %3411 = vmatpush1.msra.mxu0 0.0
    %3412 = vmatprep.subr.mxu0 0.0
    %3413 = vmatpush1.msra.mxu0 0.0
    %3414 = vmatprep.subr.mxu0 0.0
    %3415 = vmatpush1.msra.mxu0 0.0
    %3416 = vmatprep.subr.mxu0 0.0
    %3417 = vmatpush1.msra.mxu0 0.0
    %3418 = vmatprep.subr.mxu0 0.0
    %3419 = vmatpush1.msra.mxu0 0.0
    %3420 = vmatprep.subr.mxu0 0.0
    %3421 = vmatpush1.msra.mxu0 0.0
    %3422 = vmatprep.subr.mxu0 0.0
    %3423 = vmatpush1.msra.mxu0 0.0
    %3424 = vmatprep.subr.mxu0 0.0
    %3425 = vmatpush1.msra.mxu0 0.0
    %3426 = vmatprep.subr.mxu0 0.0
    %3427 = vmatpush1.msra.mxu0 0.0
    %3428 = vmatprep.subr.mxu0 0.0
    %3429 = vmatpush1.msra.mxu0 0.0
    %3430 = vmatprep.subr.mxu0 0.0
    %3431 = vmatpush1.msra.mxu0 0.0
    %3432 = vmatprep.subr.mxu0 0.0
    %3433 = vmatpush1.msra.mxu0 0.0
    %3434 = vmatprep.subr.mxu0 0.0
    %3435 = vmatpush1.msra.mxu0 0.0
    %3436 = vmatprep.subr.mxu0 0.0
    %3437 = vmatpush1.msra.mxu0 0.0
    %3438 = vmatprep.subr.mxu0 0.0
    %3439 = vmatpush1.msra.mxu0 0.0
    %3440 = vmatprep.mubr.f32.mxu0 0.0
    %3441 = vmatmul.mubr.f32.gmra.mrb[0].mxu0 %v3329
    %v3442 = vpop.f32.mrb[0].mxu0
    %v3443 = vadd.f32 0.0, %v3442
    %v3444 = vpop.f32.mrb[0].mxu0
    %3445 = vmatprep.mubr.f32.mxu0 0.0
    %3446 = vmatmul.mubr.f32.gmra.mrb[0].mxu0 %v3332
    %v3447 = vpop.f32.mrb[0].mxu0
    %v3448 = vadd.f32 0.0, %v3447
    %v3449 = vpop.f32.mrb[0].mxu0
    %3450 = vmatprep.mubr.f32.mxu0 0.0
    %3451 = vmatmul.mubr.f32.gmra.mrb[0].mxu0 %v3335
    %v3452 = vpop.f32.mrb[0].mxu0
    %v3453 = vadd.f32 0.0, %v3452
    %v3454 = vpop.f32.mrb[0].mxu0
    %3455 = vmatprep.mubr.f32.mxu0 0.0
    %3456 = vmatmul.mubr.f32.gmra.mrb[0].mxu0 %v3338
    %v3457 = vpop.f32.mrb[0].mxu0
    %v3458 = vadd.f32 0.0, %v3457
    %v3459 = vpop.f32.mrb[0].mxu0
    %3460 = vmatprep.mubr.f32.mxu0 0.0
    %3461 = vmatmul.mubr.f32.gmra.mrb[0].mxu0 %v3341
    %v3462 = vpop.f32.mrb[0].mxu0
    %v3463 = vadd.f32 0.0, %v3462
    %v3464 = vpop.f32.mrb[0].mxu0
    %3465 = vmatprep.mubr.f32.mxu0 0.0
    %3466 = vmatmul.mubr.f32.gmra.mrb[0].mxu0 %v3344
    %v3467 = vpop.f32.mrb[0].mxu0
    %v3468 = vadd.f32 0.0, %v3467
    %v3469 = vpop.f32.mrb[0].mxu0
    %3470 = vmatprep.mubr.f32.mxu0 0.0
    %3471 = vmatmul.mubr.f32.gmra.mrb[0].mxu0 %v3347
    %v3472 = vpop.f32.mrb[0].mxu0
    %v3473 = vadd.f32 0.0, %v3472
    %v3474 = vpop.f32.mrb[0].mxu0
    %3475 = vmatprep.mubr.f32.mxu0 0.0
    %3476 = vmatmul.mubr.f32.gmra.mrb[0].mxu0 %v3350
    %v3477 = vpop.f32.mrb[0].mxu0
    %v3478 = vadd.f32 0.0, %v3477
    %v3479 = vpop.f32.mrb[0].mxu0
    %3480 = vmatprep.mubr.f32.mxu0 0.0
    %3481 = vmatmul.mubr.f32.gmra.mrb[0].mxu0 %v3353
    %v3482 = vpop.f32.mrb[0].mxu0
    %v3483 = vadd.f32 0.0, %v3482
    %v3484 = vpop.f32.mrb[0].mxu0
    %3485 = vmatprep.mubr.f32.mxu0 0.0
    %3486 = vmatmul.mubr.f32.gmra.mrb[0].mxu0 %v3356
    %v3487 = vpop.f32.mrb[0].mxu0
    %v3488 = vadd.f32 0.0, %v3487
    %v3489 = vpop.f32.mrb[0].mxu0
    %3490 = vmatprep.mubr.f32.mxu0 0.0
    %3491 = vmatmul.mubr.f32.gmra.mrb[0].mxu0 %v3359
    %v3492 = vpop.f32.mrb[0].mxu0
    %v3493 = vadd.f32 0.0, %v3492
    %v3494 = vpop.f32.mrb[0].mxu0
    %3495 = vmatprep.mubr.f32.mxu0 0.0
    %3496 = vmatmul.mubr.f32.gmra.mrb[0].mxu0 %v3362
    %v3497 = vpop.f32.mrb[0].mxu0
    %v3498 = vadd.f32 0.0, %v3497
    %v3499 = vpop.f32.mrb[0].mxu0
    %3500 = vmatprep.mubr.f32.mxu0 0.0
    %3501 = vmatmul.mubr.f32.gmra.mrb[0].mxu0 %v3365
    %v3502 = vpop.f32.mrb[0].mxu0
    %v3503 = vadd.f32 0.0, %v3502
    %v3504 = vpop.f32.mrb[0].mxu0
    %3505 = vmatprep.mubr.f32.mxu0 0.0
    %3506 = vmatmul.mubr.f32.gmra.mrb[0].mxu0 %v3368
    %v3507 = vpop.f32.mrb[0].mxu0
    %v3508 = vadd.f32 0.0, %v3507
    %v3509 = vpop.f32.mrb[0].mxu0
    %3510 = vmatprep.mubr.f32.mxu0 0.0
    %3511 = vmatmul.mubr.f32.gmra.mrb[0].mxu0 %v3371
    %v3512 = vpop.f32.mrb[0].mxu0
    %v3513 = vadd.f32 0.0, %v3512
    %v3514 = vpop.f32.mrb[0].mxu0
    %3515 = vmatprep.mubr.f32.mxu0 0.0
    %3516 = vmatmul.mubr.f32.gmra.mrb[0].mxu0 %v3374
    %v3517 = vpop.f32.mrb[0].mxu0
    %v3518 = vadd.f32 0.0, %v3517
    %v3519 = vpop.f32.mrb[0].mxu0
    %3520 = vdwg.mxu0
    %s3521 = scalar_lea.vmem [#allocation6], 32
    %v3522 = vld [vmem:[%s3521] sm:$0xff]
    %v3524 = vsel %vm1297, %v3443, 0
    %v3527 = vsel %vm1297, %v3448, 0
    %v3530 = vsel %vm1297, %v3453, 0
    %v3533 = vsel %vm1297, %v3458, 0
    %v3536 = vsel %vm1297, %v3463, 0
    %v3539 = vsel %vm1297, %v3468, 0
    %v3542 = vsel %vm1297, %v3473, 0
    %v3545 = vsel %vm1297, %v3478, 0
    %v3548 = vsel %vm1297, %v3483, 0
    %v3551 = vsel %vm1297, %v3488, 0
    %v3554 = vsel %vm1297, %v3493, 0
    %v3557 = vsel %vm1297, %v3498, 0
    %v3560 = vsel %vm1297, %v3503, 0
    %v3563 = vsel %vm1297, %v3508, 0
    %v3566 = vsel %vm1297, %v3513, 0
    %v3569 = vsel %vm1297, %v3518, 0
    %3571 = vmatprep.subr.mxu0 0.0
    %3572 = vmatpush1.msra.mxu0 %v3522
    %3573 = vmatprep.subr.mxu0 0.0
    %3574 = vmatpush1.msra.mxu0 0.0
    %3575 = vmatprep.subr.mxu0 0.0
    %3576 = vmatpush1.msra.mxu0 0.0
    %3577 = vmatprep.subr.mxu0 0.0
    %3578 = vmatpush1.msra.mxu0 0.0
    %3579 = vmatprep.subr.mxu0 0.0
    %3580 = vmatpush1.msra.mxu0 0.0
    %3581 = vmatprep.subr.mxu0 0.0
    %3582 = vmatpush1.msra.mxu0 0.0
    %3583 = vmatprep.subr.mxu0 0.0
    %3584 = vmatpush1.msra.mxu0 0.0
    %3585 = vmatprep.subr.mxu0 0.0
    %3586 = vmatpush1.msra.mxu0 0.0
    %3587 = vmatprep.subr.mxu0 0.0
    %3588 = vmatpush1.msra.mxu0 0.0
    %3589 = vmatprep.subr.mxu0 0.0
    %3590 = vmatpush1.msra.mxu0 0.0
    %3591 = vmatprep.subr.mxu0 0.0
    %3592 = vmatpush1.msra.mxu0 0.0
    %3593 = vmatprep.subr.mxu0 0.0
    %3594 = vmatpush1.msra.mxu0 0.0
    %3595 = vmatprep.subr.mxu0 0.0
    %3596 = vmatpush1.msra.mxu0 0.0
    %3597 = vmatprep.subr.mxu0 0.0
    %3598 = vmatpush1.msra.mxu0 0.0
    %3599 = vmatprep.subr.mxu0 0.0
    %3600 = vmatpush1.msra.mxu0 0.0
    %3601 = vmatprep.subr.mxu0 0.0
    %3602 = vmatpush1.msra.mxu0 0.0
    %3603 = vmatprep.subr.mxu0 0.0
    %3604 = vmatpush1.msra.mxu0 0.0
    %3605 = vmatprep.subr.mxu0 0.0
    %3606 = vmatpush1.msra.mxu0 0.0
    %3607 = vmatprep.subr.mxu0 0.0
    %3608 = vmatpush1.msra.mxu0 0.0
    %3609 = vmatprep.subr.mxu0 0.0
    %3610 = vmatpush1.msra.mxu0 0.0
    %3611 = vmatprep.subr.mxu0 0.0
    %3612 = vmatpush1.msra.mxu0 0.0
    %3613 = vmatprep.subr.mxu0 0.0
    %3614 = vmatpush1.msra.mxu0 0.0
    %3615 = vmatprep.subr.mxu0 0.0
    %3616 = vmatpush1.msra.mxu0 0.0
    %3617 = vmatprep.subr.mxu0 0.0
    %3618 = vmatpush1.msra.mxu0 0.0
    %3619 = vmatprep.subr.mxu0 0.0
    %3620 = vmatpush1.msra.mxu0 0.0
    %3621 = vmatprep.subr.mxu0 0.0
    %3622 = vmatpush1.msra.mxu0 0.0
    %3623 = vmatprep.subr.mxu0 0.0
    %3624 = vmatpush1.msra.mxu0 0.0
    %3625 = vmatprep.subr.mxu0 0.0
    %3626 = vmatpush1.msra.mxu0 0.0
    %3627 = vmatprep.subr.mxu0 0.0
    %3628 = vmatpush1.msra.mxu0 0.0
    %3629 = vmatprep.subr.mxu0 0.0
    %3630 = vmatpush1.msra.mxu0 0.0
    %3631 = vmatprep.subr.mxu0 0.0
    %3632 = vmatpush1.msra.mxu0 0.0
    %3633 = vmatprep.subr.mxu0 0.0
    %3634 = vmatpush1.msra.mxu0 0.0
    %3635 = vmatprep.mubr.f32.mxu0 0.0
    %3636 = vmatmul.mubr.f32.gmra.mrb[0].mxu0 %v3524
    %v3637 = vpop.f32.mrb[0].mxu0
    %v3638 = vadd.f32 0.0, %v3637
    %v3639 = vpop.f32.mrb[0].mxu0
    %3640 = vmatprep.mubr.f32.mxu0 0.0
    %3641 = vmatmul.mubr.f32.gmra.mrb[0].mxu0 %v3527
    %v3642 = vpop.f32.mrb[0].mxu0
    %v3643 = vadd.f32 0.0, %v3642
    %v3644 = vpop.f32.mrb[0].mxu0
    %3645 = vmatprep.mubr.f32.mxu0 0.0
    %3646 = vmatmul.mubr.f32.gmra.mrb[0].mxu0 %v3530
    %v3647 = vpop.f32.mrb[0].mxu0
    %v3648 = vadd.f32 0.0, %v3647
    %v3649 = vpop.f32.mrb[0].mxu0
    %3650 = vmatprep.mubr.f32.mxu0 0.0
    %3651 = vmatmul.mubr.f32.gmra.mrb[0].mxu0 %v3533
    %v3652 = vpop.f32.mrb[0].mxu0
    %v3653 = vadd.f32 0.0, %v3652
    %v3654 = vpop.f32.mrb[0].mxu0
    %3655 = vmatprep.mubr.f32.mxu0 0.0
    %3656 = vmatmul.mubr.f32.gmra.mrb[0].mxu0 %v3536
    %v3657 = vpop.f32.mrb[0].mxu0
    %v3658 = vadd.f32 0.0, %v3657
    %v3659 = vpop.f32.mrb[0].mxu0
    %3660 = vmatprep.mubr.f32.mxu0 0.0
    %3661 = vmatmul.mubr.f32.gmra.mrb[0].mxu0 %v3539
    %v3662 = vpop.f32.mrb[0].mxu0
    %v3663 = vadd.f32 0.0, %v3662
    %v3664 = vpop.f32.mrb[0].mxu0
    %3665 = vmatprep.mubr.f32.mxu0 0.0
    %3666 = vmatmul.mubr.f32.gmra.mrb[0].mxu0 %v3542
    %v3667 = vpop.f32.mrb[0].mxu0
    %v3668 = vadd.f32 0.0, %v3667
    %v3669 = vpop.f32.mrb[0].mxu0
    %3670 = vmatprep.mubr.f32.mxu0 0.0
    %3671 = vmatmul.mubr.f32.gmra.mrb[0].mxu0 %v3545
    %v3672 = vpop.f32.mrb[0].mxu0
    %v3673 = vadd.f32 0.0, %v3672
    %v3674 = vpop.f32.mrb[0].mxu0
    %3675 = vmatprep.mubr.f32.mxu0 0.0
    %3676 = vmatmul.mubr.f32.gmra.mrb[0].mxu0 %v3548
    %v3677 = vpop.f32.mrb[0].mxu0
    %v3678 = vadd.f32 0.0, %v3677
    %v3679 = vpop.f32.mrb[0].mxu0
    %3680 = vmatprep.mubr.f32.mxu0 0.0
    %3681 = vmatmul.mubr.f32.gmra.mrb[0].mxu0 %v3551
    %v3682 = vpop.f32.mrb[0].mxu0
    %v3683 = vadd.f32 0.0, %v3682
    %v3684 = vpop.f32.mrb[0].mxu0
    %3685 = vmatprep.mubr.f32.mxu0 0.0
    %3686 = vmatmul.mubr.f32.gmra.mrb[0].mxu0 %v3554
    %v3687 = vpop.f32.mrb[0].mxu0
    %v3688 = vadd.f32 0.0, %v3687
    %v3689 = vpop.f32.mrb[0].mxu0
    %3690 = vmatprep.mubr.f32.mxu0 0.0
    %3691 = vmatmul.mubr.f32.gmra.mrb[0].mxu0 %v3557
    %v3692 = vpop.f32.mrb[0].mxu0
    %v3693 = vadd.f32 0.0, %v3692
    %v3694 = vpop.f32.mrb[0].mxu0
    %3695 = vmatprep.mubr.f32.mxu0 0.0
    %3696 = vmatmul.mubr.f32.gmra.mrb[0].mxu0 %v3560
    %v3697 = vpop.f32.mrb[0].mxu0
    %v3698 = vadd.f32 0.0, %v3697
    %v3699 = vpop.f32.mrb[0].mxu0
    %3700 = vmatprep.mubr.f32.mxu0 0.0
    %3701 = vmatmul.mubr.f32.gmra.mrb[0].mxu0 %v3563
    %v3702 = vpop.f32.mrb[0].mxu0
    %v3703 = vadd.f32 0.0, %v3702
    %v3704 = vpop.f32.mrb[0].mxu0
    %3705 = vmatprep.mubr.f32.mxu0 0.0
    %3706 = vmatmul.mubr.f32.gmra.mrb[0].mxu0 %v3566
    %v3707 = vpop.f32.mrb[0].mxu0
    %v3708 = vadd.f32 0.0, %v3707
    %v3709 = vpop.f32.mrb[0].mxu0
    %3710 = vmatprep.mubr.f32.mxu0 0.0
    %3711 = vmatmul.mubr.f32.gmra.mrb[0].mxu0 %v3569
    %v3712 = vpop.f32.mrb[0].mxu0
    %v3713 = vadd.f32 0.0, %v3712
    %v3714 = vpop.f32.mrb[0].mxu0
    %3715 = vdwg.mxu0
    %v3716 = vadd.f32 %v3295, %v3638
    %v3717 = vadd.f32 %v3296, %v3643
    %v3718 = vadd.f32 %v3297, %v3648
    %v3719 = vadd.f32 %v3298, %v3653
    %v3720 = vadd.f32 %v3299, %v3658
    %v3721 = vadd.f32 %v3300, %v3663
    %v3722 = vadd.f32 %v3301, %v3668
    %v3723 = vadd.f32 %v3302, %v3673
    %v3724 = vadd.f32 %v3303, %v3678
    %v3725 = vadd.f32 %v3304, %v3683
    %v3726 = vadd.f32 %v3305, %v3688
    %v3727 = vadd.f32 %v3306, %v3693
    %v3728 = vadd.f32 %v3307, %v3698
    %v3729 = vadd.f32 %v3308, %v3703
    %v3730 = vadd.f32 %v3309, %v3708
    %v3731 = vadd.f32 %v3310, %v3713
    %v3732 = vsel %vm199, %v3716, 0.0
    %3733 = vadd.xlane.f32.xlu0 %v3732
    %v3734 = vpop.xlane.xlu0 %3733
    %v3735 = vsel %vm199, %v3717, 0.0
    %3736 = vadd.xlane.f32.xlu0 %v3735
    %v3737 = vpop.xlane.xlu0 %3736
    %v3738 = vsel %vm199, %v3718, 0.0
    %3739 = vadd.xlane.f32.xlu0 %v3738
    %v3740 = vpop.xlane.xlu0 %3739
    %v3741 = vsel %vm199, %v3719, 0.0
    %3742 = vadd.xlane.f32.xlu0 %v3741
    %v3743 = vpop.xlane.xlu0 %3742
    %v3744 = vsel %vm199, %v3720, 0.0
    %3745 = vadd.xlane.f32.xlu0 %v3744
    %v3746 = vpop.xlane.xlu0 %3745
    %v3747 = vsel %vm199, %v3721, 0.0
    %3748 = vadd.xlane.f32.xlu0 %v3747
    %v3749 = vpop.xlane.xlu0 %3748
    %v3750 = vsel %vm199, %v3722, 0.0
    %3751 = vadd.xlane.f32.xlu0 %v3750
    %v3752 = vpop.xlane.xlu0 %3751
    %v3753 = vsel %vm199, %v3723, 0.0
    %3754 = vadd.xlane.f32.xlu0 %v3753
    %v3755 = vpop.xlane.xlu0 %3754
    %v3756 = vsel %vm199, %v3724, 0.0
    %3757 = vadd.xlane.f32.xlu0 %v3756
    %v3758 = vpop.xlane.xlu0 %3757
    %v3759 = vsel %vm199, %v3725, 0.0
    %3760 = vadd.xlane.f32.xlu0 %v3759
    %v3761 = vpop.xlane.xlu0 %3760
    %v3762 = vsel %vm199, %v3726, 0.0
    %3763 = vadd.xlane.f32.xlu0 %v3762
    %v3764 = vpop.xlane.xlu0 %3763
    %v3765 = vsel %vm199, %v3727, 0.0
    %3766 = vadd.xlane.f32.xlu0 %v3765
    %v3767 = vpop.xlane.xlu0 %3766
    %v3768 = vsel %vm199, %v3728, 0.0
    %3769 = vadd.xlane.f32.xlu0 %v3768
    %v3770 = vpop.xlane.xlu0 %3769
    %v3771 = vsel %vm199, %v3729, 0.0
    %3772 = vadd.xlane.f32.xlu0 %v3771
    %v3773 = vpop.xlane.xlu0 %3772
    %v3774 = vsel %vm199, %v3730, 0.0
    %3775 = vadd.xlane.f32.xlu0 %v3774
    %v3776 = vpop.xlane.xlu0 %3775
    %v3777 = vsel %vm199, %v3731, 0.0
    %3778 = vadd.xlane.f32.xlu0 %v3777
    %v3779 = vpop.xlane.xlu0 %3778
    %v3780 = vmul.f32 %v3716, %v3716
    %v3781 = vmul.f32 %v3717, %v3717
    %v3782 = vmul.f32 %v3718, %v3718
    %v3783 = vmul.f32 %v3719, %v3719
    %v3784 = vmul.f32 %v3720, %v3720
    %v3785 = vmul.f32 %v3721, %v3721
    %v3786 = vmul.f32 %v3722, %v3722
    %v3787 = vmul.f32 %v3723, %v3723
    %v3788 = vmul.f32 %v3724, %v3724
    %v3789 = vmul.f32 %v3725, %v3725
    %v3790 = vmul.f32 %v3726, %v3726
    %v3791 = vmul.f32 %v3727, %v3727
    %v3792 = vmul.f32 %v3728, %v3728
    %v3793 = vmul.f32 %v3729, %v3729
    %v3794 = vmul.f32 %v3730, %v3730
    %v3795 = vmul.f32 %v3731, %v3731
    %v3796 = vsel %vm199, %v3780, 0.0
    %3797 = vadd.xlane.f32.xlu0 %v3796
    %v3798 = vpop.xlane.xlu0 %3797
    %v3799 = vsel %vm199, %v3781, 0.0
    %3800 = vadd.xlane.f32.xlu0 %v3799
    %v3801 = vpop.xlane.xlu0 %3800
    %v3802 = vsel %vm199, %v3782, 0.0
    %3803 = vadd.xlane.f32.xlu0 %v3802
    %v3804 = vpop.xlane.xlu0 %3803
    %v3805 = vsel %vm199, %v3783, 0.0
    %3806 = vadd.xlane.f32.xlu0 %v3805
    %v3807 = vpop.xlane.xlu0 %3806
    %v3808 = vsel %vm199, %v3784, 0.0
    %3809 = vadd.xlane.f32.xlu0 %v3808
    %v3810 = vpop.xlane.xlu0 %3809
    %v3811 = vsel %vm199, %v3785, 0.0
    %3812 = vadd.xlane.f32.xlu0 %v3811
    %v3813 = vpop.xlane.xlu0 %3812
    %v3814 = vsel %vm199, %v3786, 0.0
    %3815 = vadd.xlane.f32.xlu0 %v3814
    %v3816 = vpop.xlane.xlu0 %3815
    %v3817 = vsel %vm199, %v3787, 0.0
    %3818 = vadd.xlane.f32.xlu0 %v3817
    %v3819 = vpop.xlane.xlu0 %3818
    %v3820 = vsel %vm199, %v3788, 0.0
    %3821 = vadd.xlane.f32.xlu0 %v3820
    %v3822 = vpop.xlane.xlu0 %3821
    %v3823 = vsel %vm199, %v3789, 0.0
    %3824 = vadd.xlane.f32.xlu0 %v3823
    %v3825 = vpop.xlane.xlu0 %3824
    %v3826 = vsel %vm199, %v3790, 0.0
    %3827 = vadd.xlane.f32.xlu0 %v3826
    %v3828 = vpop.xlane.xlu0 %3827
    %v3829 = vsel %vm199, %v3791, 0.0
    %3830 = vadd.xlane.f32.xlu0 %v3829
    %v3831 = vpop.xlane.xlu0 %3830
    %v3832 = vsel %vm199, %v3792, 0.0
    %3833 = vadd.xlane.f32.xlu0 %v3832
    %v3834 = vpop.xlane.xlu0 %3833
    %v3835 = vsel %vm199, %v3793, 0.0
    %3836 = vadd.xlane.f32.xlu0 %v3835
    %v3837 = vpop.xlane.xlu0 %3836
    %v3838 = vsel %vm199, %v3794, 0.0
    %3839 = vadd.xlane.f32.xlu0 %v3838
    %v3840 = vpop.xlane.xlu0 %3839
    %v3841 = vsel %vm199, %v3795, 0.0
    %3842 = vadd.xlane.f32.xlu0 %v3841
    %v3843 = vpop.xlane.xlu0 %3842
    %v3844 = vld [vmem:[#allocation7] sm:$0xff]
    %v3845 = vld [vmem:[#allocation7 + $0x8] sm:$0xff]
    %3846 = vmatprep.subr.mxu0 0.0
    %3847 = vmatpush1.msra.mxu0 %v3734
    %3848 = vmatprep.subr.mxu0 0.0
    %3849 = vmatpush1.msra.mxu0 %v3737
    %3850 = vmatprep.subr.mxu0 0.0
    %3851 = vmatpush1.msra.mxu0 %v3740
    %3852 = vmatprep.subr.mxu0 0.0
    %3853 = vmatpush1.msra.mxu0 %v3743
    %3854 = vmatprep.subr.mxu0 0.0
    %3855 = vmatpush1.msra.mxu0 %v3746
    %3856 = vmatprep.subr.mxu0 0.0
    %3857 = vmatpush1.msra.mxu0 %v3749
    %3858 = vmatprep.subr.mxu0 0.0
    %3859 = vmatpush1.msra.mxu0 %v3752
    %3860 = vmatprep.subr.mxu0 0.0
    %3861 = vmatpush1.msra.mxu0 %v3755
    %3862 = vmatprep.subr.mxu0 0.0
    %3863 = vmatpush1.msra.mxu0 %v3758
    %3864 = vmatprep.subr.mxu0 0.0
    %3865 = vmatpush1.msra.mxu0 %v3761
    %3866 = vmatprep.subr.mxu0 0.0
    %3867 = vmatpush1.msra.mxu0 %v3764
    %3868 = vmatprep.subr.mxu0 0.0
    %3869 = vmatpush1.msra.mxu0 %v3767
    %3870 = vmatprep.subr.mxu0 0.0
    %3871 = vmatpush1.msra.mxu0 %v3770
    %3872 = vmatprep.subr.mxu0 0.0
    %3873 = vmatpush1.msra.mxu0 %v3773
    %3874 = vmatprep.subr.mxu0 0.0
    %3875 = vmatpush1.msra.mxu0 %v3776
    %3876 = vmatprep.subr.mxu0 0.0
    %3877 = vmatpush1.msra.mxu0 %v3779
    %3878 = vmatprep.subr.mxu0 0.0
    %3879 = vmatpush1.msra.mxu0 0.0
    %3880 = vmatprep.subr.mxu0 0.0
    %3881 = vmatpush1.msra.mxu0 0.0
    %3882 = vmatprep.subr.mxu0 0.0
    %3883 = vmatpush1.msra.mxu0 0.0
    %3884 = vmatprep.subr.mxu0 0.0
    %3885 = vmatpush1.msra.mxu0 0.0
    %3886 = vmatprep.subr.mxu0 0.0
    %3887 = vmatpush1.msra.mxu0 0.0
    %3888 = vmatprep.subr.mxu0 0.0
    %3889 = vmatpush1.msra.mxu0 0.0
    %3890 = vmatprep.subr.mxu0 0.0
    %3891 = vmatpush1.msra.mxu0 0.0
    %3892 = vmatprep.subr.mxu0 0.0
    %3893 = vmatpush1.msra.mxu0 0.0
    %3894 = vmatprep.subr.mxu0 0.0
    %3895 = vmatpush1.msra.mxu0 0.0
    %3896 = vmatprep.subr.mxu0 0.0
    %3897 = vmatpush1.msra.mxu0 0.0
    %3898 = vmatprep.subr.mxu0 0.0
    %3899 = vmatpush1.msra.mxu0 0.0
    %3900 = vmatprep.subr.mxu0 0.0
    %3901 = vmatpush1.msra.mxu0 0.0
    %3902 = vmatprep.subr.mxu0 0.0
    %3903 = vmatpush1.msra.mxu0 0.0
    %3904 = vmatprep.subr.mxu0 0.0
    %3905 = vmatpush1.msra.mxu0 0.0
    %3906 = vmatprep.subr.mxu0 0.0
    %3907 = vmatpush1.msra.mxu0 0.0
    %3908 = vmatprep.subr.mxu0 0.0
    %3909 = vmatpush1.msra.mxu0 0.0
    %3910 = vmatprep.mubr.f32.mxu0 0.0
    %3911 = vmatmul.mubr.f32.gmra.mrb[0].mxu0 %v3844
    %v3912 = vpop.f32.mrb[0].mxu0
    %v3913 = vadd.f32 0.0, %v3912
    %v3914 = vpop.f32.mrb[0].mxu0
    %3915 = vmatprep.mubr.f32.mxu0 0.0
    %3916 = vmatmul.mubr.f32.gmra.mrb[0].mxu0 %v3845
    %v3917 = vpop.f32.mrb[0].mxu0
    %v3918 = vadd.f32 0.0, %v3917
    %v3919 = vpop.f32.mrb[0].mxu0
    %3920 = vdwg.mxu0
    %3921 = vmatprep.subr.mxu0 0.0
    %3922 = vmatpush1.msra.mxu0 %v3798
    %3923 = vmatprep.subr.mxu0 0.0
    %3924 = vmatpush1.msra.mxu0 %v3801
    %3925 = vmatprep.subr.mxu0 0.0
    %3926 = vmatpush1.msra.mxu0 %v3804
    %3927 = vmatprep.subr.mxu0 0.0
    %3928 = vmatpush1.msra.mxu0 %v3807
    %3929 = vmatprep.subr.mxu0 0.0
    %3930 = vmatpush1.msra.mxu0 %v3810
    %3931 = vmatprep.subr.mxu0 0.0
    %3932 = vmatpush1.msra.mxu0 %v3813
    %3933 = vmatprep.subr.mxu0 0.0
    %3934 = vmatpush1.msra.mxu0 %v3816
    %3935 = vmatprep.subr.mxu0 0.0
    %3936 = vmatpush1.msra.mxu0 %v3819
    %3937 = vmatprep.subr.mxu0 0.0
    %3938 = vmatpush1.msra.mxu0 %v3822
    %3939 = vmatprep.subr.mxu0 0.0
    %3940 = vmatpush1.msra.mxu0 %v3825
    %3941 = vmatprep.subr.mxu0 0.0
    %3942 = vmatpush1.msra.mxu0 %v3828
    %3943 = vmatprep.subr.mxu0 0.0
    %3944 = vmatpush1.msra.mxu0 %v3831
    %3945 = vmatprep.subr.mxu0 0.0
    %3946 = vmatpush1.msra.mxu0 %v3834
    %3947 = vmatprep.subr.mxu0 0.0
    %3948 = vmatpush1.msra.mxu0 %v3837
    %3949 = vmatprep.subr.mxu0 0.0
    %3950 = vmatpush1.msra.mxu0 %v3840
    %3951 = vmatprep.subr.mxu0 0.0
    %3952 = vmatpush1.msra.mxu0 %v3843
    %3953 = vmatprep.subr.mxu0 0.0
    %3954 = vmatpush1.msra.mxu0 0.0
    %3955 = vmatprep.subr.mxu0 0.0
    %3956 = vmatpush1.msra.mxu0 0.0
    %3957 = vmatprep.subr.mxu0 0.0
    %3958 = vmatpush1.msra.mxu0 0.0
    %3959 = vmatprep.subr.mxu0 0.0
    %3960 = vmatpush1.msra.mxu0 0.0
    %3961 = vmatprep.subr.mxu0 0.0
    %3962 = vmatpush1.msra.mxu0 0.0
    %3963 = vmatprep.subr.mxu0 0.0
    %3964 = vmatpush1.msra.mxu0 0.0
    %3965 = vmatprep.subr.mxu0 0.0
    %3966 = vmatpush1.msra.mxu0 0.0
    %3967 = vmatprep.subr.mxu0 0.0
    %3968 = vmatpush1.msra.mxu0 0.0
    %3969 = vmatprep.subr.mxu0 0.0
    %3970 = vmatpush1.msra.mxu0 0.0
    %3971 = vmatprep.subr.mxu0 0.0
    %3972 = vmatpush1.msra.mxu0 0.0
    %3973 = vmatprep.subr.mxu0 0.0
    %3974 = vmatpush1.msra.mxu0 0.0
    %3975 = vmatprep.subr.mxu0 0.0
    %3976 = vmatpush1.msra.mxu0 0.0
    %3977 = vmatprep.subr.mxu0 0.0
    %3978 = vmatpush1.msra.mxu0 0.0
    %3979 = vmatprep.subr.mxu0 0.0
    %3980 = vmatpush1.msra.mxu0 0.0
    %3981 = vmatprep.subr.mxu0 0.0
    %3982 = vmatpush1.msra.mxu0 0.0
    %3983 = vmatprep.subr.mxu0 0.0
    %3984 = vmatpush1.msra.mxu0 0.0
    %3985 = vmatprep.mubr.f32.mxu0 0.0
    %3986 = vmatmul.mubr.f32.gmra.mrb[0].mxu0 %v3844
    %v3987 = vpop.f32.mrb[0].mxu0
    %v3988 = vadd.f32 0.0, %v3987
    %v3989 = vpop.f32.mrb[0].mxu0
    %3990 = vmatprep.mubr.f32.mxu0 0.0
    %3991 = vmatmul.mubr.f32.gmra.mrb[0].mxu0 %v3845
    %v3992 = vpop.f32.mrb[0].mxu0
    %v3993 = vadd.f32 0.0, %v3992
    %v3994 = vpop.f32.mrb[0].mxu0
    %3995 = vdwg.mxu0
    %v3996 = vmul.f32 %v3913, 0.0078125
    %v3997 = vmul.f32 %v3918, 0.0078125
    %v3998 = vmul.f32 %v3988, 0.0078125
    %v3999 = vmul.f32 %v3993, 0.0078125
    %v4000 = vmul.f32 %v3996, %v3996
    %v4001 = vmul.f32 %v3997, %v3997
    %v4002 = vsub.f32 %v3998, %v4000
    %v4003 = vsub.f32 %v3999, %v4001
    %v4004 = vmax.f32 %v4002, 0.0
    %v4005 = vmax.f32 %v4003, 0.0
    %v4006 = vld [vmem:[%s10] sm:$0xff]
    %v4007 = vld [vmem:[%s10 + $0x8] sm:$0xff]
    %v4008 = vadd.f32 %v4004, 1e-05
    %v4009 = vadd.f32 %v4005, 1e-05
    %v4010 = vrsqrt.pop %v4008
    %v4011 = vrsqrt.pop %v4009
    %v4012 = vmul.f32 %v4006, %v4010
    %v4013 = vmul.f32 %v4007, %v4011
    %v4014 = vld [vmem:[%s11] sm:$0xff]
    %v4015 = vld [vmem:[%s11 + $0x8] sm:$0xff]
    %v4016 = vmul.f32 %v3996, %v4012
    %v4017 = vmul.f32 %v3997, %v4013
    %v4018 = vsub.f32 %v4014, %v4016
    %v4019 = vsub.f32 %v4015, %v4017
    %v4020 = vld [vmem:[%s9] sm:$0xff]
    %v4021 = vld [vmem:[%s9 + $0x8] sm:$0xff]
    %v4022 = vld [vmem:[%s9 + $0x10] sm:$0xff]
    %v4023 = vld [vmem:[%s9 + $0x18] sm:$0xff]
    %v4024 = vld [vmem:[%s9 + $0x20] sm:$0xff]
    %v4025 = vld [vmem:[%s9 + $0x28] sm:$0xff]
    %v4026 = vld [vmem:[%s9 + $0x30] sm:$0xff]
    %v4027 = vld [vmem:[%s9 + $0x38] sm:$0xff]
    %v4028 = vld [vmem:[%s9 + $0x40] sm:$0xff]
    %v4029 = vld [vmem:[%s9 + $0x48] sm:$0xff]
    %v4030 = vld [vmem:[%s9 + $0x50] sm:$0xff]
    %v4031 = vld [vmem:[%s9 + $0x58] sm:$0xff]
    %v4032 = vld [vmem:[%s9 + $0x60] sm:$0xff]
    %v4033 = vld [vmem:[%s9 + $0x68] sm:$0xff]
    %v4034 = vld [vmem:[%s9 + $0x70] sm:$0xff]
    %v4035 = vld [vmem:[%s9 + $0x78] sm:$0xff]
    %v4037 = vsel %vm199, %v4020, 0
    %v4040 = vsel %vm199, %v4021, 0
    %v4043 = vsel %vm199, %v4022, 0
    %v4046 = vsel %vm199, %v4023, 0
    %v4049 = vsel %vm199, %v4024, 0
    %v4052 = vsel %vm199, %v4025, 0
    %v4055 = vsel %vm199, %v4026, 0
    %v4058 = vsel %vm199, %v4027, 0
    %v4061 = vsel %vm199, %v4028, 0
    %v4064 = vsel %vm199, %v4029, 0
    %v4067 = vsel %vm199, %v4030, 0
    %v4070 = vsel %vm199, %v4031, 0
    %v4073 = vsel %vm199, %v4032, 0
    %v4076 = vsel %vm199, %v4033, 0
    %v4079 = vsel %vm199, %v4034, 0
    %v4082 = vsel %vm199, %v4035, 0
    %4084 = vmatprep.subr.mxu0 0.0
    %4085 = vmatpush1.msra.mxu0 %v4012
    %4086 = vmatprep.subr.mxu0 0.0
    %4087 = vmatpush1.msra.mxu0 %v4013
    %4088 = vmatprep.subr.mxu0 0.0
    %4089 = vmatpush1.msra.mxu0 0.0
    %4090 = vmatprep.subr.mxu0 0.0
    %4091 = vmatpush1.msra.mxu0 0.0
    %4092 = vmatprep.subr.mxu0 0.0
    %4093 = vmatpush1.msra.mxu0 0.0
    %4094 = vmatprep.subr.mxu0 0.0
    %4095 = vmatpush1.msra.mxu0 0.0
    %4096 = vmatprep.subr.mxu0 0.0
    %4097 = vmatpush1.msra.mxu0 0.0
    %4098 = vmatprep.subr.mxu0 0.0
    %4099 = vmatpush1.msra.mxu0 0.0
    %4100 = vmatprep.subr.mxu0 0.0
    %4101 = vmatpush1.msra.mxu0 0.0
    %4102 = vmatprep.subr.mxu0 0.0
    %4103 = vmatpush1.msra.mxu0 0.0
    %4104 = vmatprep.subr.mxu0 0.0
    %4105 = vmatpush1.msra.mxu0 0.0
    %4106 = vmatprep.subr.mxu0 0.0
    %4107 = vmatpush1.msra.mxu0 0.0
    %4108 = vmatprep.subr.mxu0 0.0
    %4109 = vmatpush1.msra.mxu0 0.0
    %4110 = vmatprep.subr.mxu0 0.0
    %4111 = vmatpush1.msra.mxu0 0.0
    %4112 = vmatprep.subr.mxu0 0.0
    %4113 = vmatpush1.msra.mxu0 0.0
    %4114 = vmatprep.subr.mxu0 0.0
    %4115 = vmatpush1.msra.mxu0 0.0
    %4116 = vmatprep.subr.mxu0 0.0
    %4117 = vmatpush1.msra.mxu0 0.0
    %4118 = vmatprep.subr.mxu0 0.0
    %4119 = vmatpush1.msra.mxu0 0.0
    %4120 = vmatprep.subr.mxu0 0.0
    %4121 = vmatpush1.msra.mxu0 0.0
    %4122 = vmatprep.subr.mxu0 0.0
    %4123 = vmatpush1.msra.mxu0 0.0
    %4124 = vmatprep.subr.mxu0 0.0
    %4125 = vmatpush1.msra.mxu0 0.0
    %4126 = vmatprep.subr.mxu0 0.0
    %4127 = vmatpush1.msra.mxu0 0.0
    %4128 = vmatprep.subr.mxu0 0.0
    %4129 = vmatpush1.msra.mxu0 0.0
    %4130 = vmatprep.subr.mxu0 0.0
    %4131 = vmatpush1.msra.mxu0 0.0
    %4132 = vmatprep.subr.mxu0 0.0
    %4133 = vmatpush1.msra.mxu0 0.0
    %4134 = vmatprep.subr.mxu0 0.0
    %4135 = vmatpush1.msra.mxu0 0.0
    %4136 = vmatprep.subr.mxu0 0.0
    %4137 = vmatpush1.msra.mxu0 0.0
    %4138 = vmatprep.subr.mxu0 0.0
    %4139 = vmatpush1.msra.mxu0 0.0
    %4140 = vmatprep.subr.mxu0 0.0
    %4141 = vmatpush1.msra.mxu0 0.0
    %4142 = vmatprep.subr.mxu0 0.0
    %4143 = vmatpush1.msra.mxu0 0.0
    %4144 = vmatprep.subr.mxu0 0.0
    %4145 = vmatpush1.msra.mxu0 0.0
    %4146 = vmatprep.subr.mxu0 0.0
    %4147 = vmatpush1.msra.mxu0 0.0
    %4148 = vmatprep.mubr.f32.mxu0 0.0
    %4149 = vmatmul.mubr.f32.gmra.mrb[0].mxu0 %v4037
    %v4150 = vpop.f32.mrb[0].mxu0
    %v4151 = vadd.f32 0.0, %v4150
    %v4152 = vpop.f32.mrb[0].mxu0
    %4153 = vmatprep.mubr.f32.mxu0 0.0
    %4154 = vmatmul.mubr.f32.gmra.mrb[0].mxu0 %v4040
    %v4155 = vpop.f32.mrb[0].mxu0
    %v4156 = vadd.f32 0.0, %v4155
    %v4157 = vpop.f32.mrb[0].mxu0
    %4158 = vmatprep.mubr.f32.mxu0 0.0
    %4159 = vmatmul.mubr.f32.gmra.mrb[0].mxu0 %v4043
    %v4160 = vpop.f32.mrb[0].mxu0
    %v4161 = vadd.f32 0.0, %v4160
    %v4162 = vpop.f32.mrb[0].mxu0
    %4163 = vmatprep.mubr.f32.mxu0 0.0
    %4164 = vmatmul.mubr.f32.gmra.mrb[0].mxu0 %v4046
    %v4165 = vpop.f32.mrb[0].mxu0
    %v4166 = vadd.f32 0.0, %v4165
    %v4167 = vpop.f32.mrb[0].mxu0
    %4168 = vmatprep.mubr.f32.mxu0 0.0
    %4169 = vmatmul.mubr.f32.gmra.mrb[0].mxu0 %v4049
    %v4170 = vpop.f32.mrb[0].mxu0
    %v4171 = vadd.f32 0.0, %v4170
    %v4172 = vpop.f32.mrb[0].mxu0
    %4173 = vmatprep.mubr.f32.mxu0 0.0
    %4174 = vmatmul.mubr.f32.gmra.mrb[0].mxu0 %v4052
    %v4175 = vpop.f32.mrb[0].mxu0
    %v4176 = vadd.f32 0.0, %v4175
    %v4177 = vpop.f32.mrb[0].mxu0
    %4178 = vmatprep.mubr.f32.mxu0 0.0
    %4179 = vmatmul.mubr.f32.gmra.mrb[0].mxu0 %v4055
    %v4180 = vpop.f32.mrb[0].mxu0
    %v4181 = vadd.f32 0.0, %v4180
    %v4182 = vpop.f32.mrb[0].mxu0
    %4183 = vmatprep.mubr.f32.mxu0 0.0
    %4184 = vmatmul.mubr.f32.gmra.mrb[0].mxu0 %v4058
    %v4185 = vpop.f32.mrb[0].mxu0
    %v4186 = vadd.f32 0.0, %v4185
    %v4187 = vpop.f32.mrb[0].mxu0
    %4188 = vmatprep.mubr.f32.mxu0 0.0
    %4189 = vmatmul.mubr.f32.gmra.mrb[0].mxu0 %v4061
    %v4190 = vpop.f32.mrb[0].mxu0
    %v4191 = vadd.f32 0.0, %v4190
    %v4192 = vpop.f32.mrb[0].mxu0
    %4193 = vmatprep.mubr.f32.mxu0 0.0
    %4194 = vmatmul.mubr.f32.gmra.mrb[0].mxu0 %v4064
    %v4195 = vpop.f32.mrb[0].mxu0
    %v4196 = vadd.f32 0.0, %v4195
    %v4197 = vpop.f32.mrb[0].mxu0
    %4198 = vmatprep.mubr.f32.mxu0 0.0
    %4199 = vmatmul.mubr.f32.gmra.mrb[0].mxu0 %v4067
    %v4200 = vpop.f32.mrb[0].mxu0
    %v4201 = vadd.f32 0.0, %v4200
    %v4202 = vpop.f32.mrb[0].mxu0
    %4203 = vmatprep.mubr.f32.mxu0 0.0
    %4204 = vmatmul.mubr.f32.gmra.mrb[0].mxu0 %v4070
    %v4205 = vpop.f32.mrb[0].mxu0
    %v4206 = vadd.f32 0.0, %v4205
    %v4207 = vpop.f32.mrb[0].mxu0
    %4208 = vmatprep.mubr.f32.mxu0 0.0
    %4209 = vmatmul.mubr.f32.gmra.mrb[0].mxu0 %v4073
    %v4210 = vpop.f32.mrb[0].mxu0
    %v4211 = vadd.f32 0.0, %v4210
    %v4212 = vpop.f32.mrb[0].mxu0
    %4213 = vmatprep.mubr.f32.mxu0 0.0
    %4214 = vmatmul.mubr.f32.gmra.mrb[0].mxu0 %v4076
    %v4215 = vpop.f32.mrb[0].mxu0
    %v4216 = vadd.f32 0.0, %v4215
    %v4217 = vpop.f32.mrb[0].mxu0
    %4218 = vmatprep.mubr.f32.mxu0 0.0
    %4219 = vmatmul.mubr.f32.gmra.mrb[0].mxu0 %v4079
    %v4220 = vpop.f32.mrb[0].mxu0
    %v4221 = vadd.f32 0.0, %v4220
    %v4222 = vpop.f32.mrb[0].mxu0
    %4223 = vmatprep.mubr.f32.mxu0 0.0
    %4224 = vmatmul.mubr.f32.gmra.mrb[0].mxu0 %v4082
    %v4225 = vpop.f32.mrb[0].mxu0
    %v4226 = vadd.f32 0.0, %v4225
    %v4227 = vpop.f32.mrb[0].mxu0
    %4228 = vdwg.mxu0
    %4229 = vmatprep.subr.mxu0 0.0
    %4230 = vmatpush1.msra.mxu0 %v4018
    %4231 = vmatprep.subr.mxu0 0.0
    %4232 = vmatpush1.msra.mxu0 %v4019
    %4233 = vmatprep.subr.mxu0 0.0
    %4234 = vmatpush1.msra.mxu0 0.0
    %4235 = vmatprep.subr.mxu0 0.0
    %4236 = vmatpush1.msra.mxu0 0.0
    %4237 = vmatprep.subr.mxu0 0.0
    %4238 = vmatpush1.msra.mxu0 0.0
    %4239 = vmatprep.subr.mxu0 0.0
    %4240 = vmatpush1.msra.mxu0 0.0
    %4241 = vmatprep.subr.mxu0 0.0
    %4242 = vmatpush1.msra.mxu0 0.0
    %4243 = vmatprep.subr.mxu0 0.0
    %4244 = vmatpush1.msra.mxu0 0.0
    %4245 = vmatprep.subr.mxu0 0.0
    %4246 = vmatpush1.msra.mxu0 0.0
    %4247 = vmatprep.subr.mxu0 0.0
    %4248 = vmatpush1.msra.mxu0 0.0
    %4249 = vmatprep.subr.mxu0 0.0
    %4250 = vmatpush1.msra.mxu0 0.0
    %4251 = vmatprep.subr.mxu0 0.0
    %4252 = vmatpush1.msra.mxu0 0.0
    %4253 = vmatprep.subr.mxu0 0.0
    %4254 = vmatpush1.msra.mxu0 0.0
    %4255 = vmatprep.subr.mxu0 0.0
    %4256 = vmatpush1.msra.mxu0 0.0
    %4257 = vmatprep.subr.mxu0 0.0
    %4258 = vmatpush1.msra.mxu0 0.0
    %4259 = vmatprep.subr.mxu0 0.0
    %4260 = vmatpush1.msra.mxu0 0.0
    %4261 = vmatprep.subr.mxu0 0.0
    %4262 = vmatpush1.msra.mxu0 0.0
    %4263 = vmatprep.subr.mxu0 0.0
    %4264 = vmatpush1.msra.mxu0 0.0
    %4265 = vmatprep.subr.mxu0 0.0
    %4266 = vmatpush1.msra.mxu0 0.0
    %4267 = vmatprep.subr.mxu0 0.0
    %4268 = vmatpush1.msra.mxu0 0.0
    %4269 = vmatprep.subr.mxu0 0.0
    %4270 = vmatpush1.msra.mxu0 0.0
    %4271 = vmatprep.subr.mxu0 0.0
    %4272 = vmatpush1.msra.mxu0 0.0
    %4273 = vmatprep.subr.mxu0 0.0
    %4274 = vmatpush1.msra.mxu0 0.0
    %4275 = vmatprep.subr.mxu0 0.0
    %4276 = vmatpush1.msra.mxu0 0.0
    %4277 = vmatprep.subr.mxu0 0.0
    %4278 = vmatpush1.msra.mxu0 0.0
    %4279 = vmatprep.subr.mxu0 0.0
    %4280 = vmatpush1.msra.mxu0 0.0
    %4281 = vmatprep.subr.mxu0 0.0
    %4282 = vmatpush1.msra.mxu0 0.0
    %4283 = vmatprep.subr.mxu0 0.0
    %4284 = vmatpush1.msra.mxu0 0.0
    %4285 = vmatprep.subr.mxu0 0.0
    %4286 = vmatpush1.msra.mxu0 0.0
    %4287 = vmatprep.subr.mxu0 0.0
    %4288 = vmatpush1.msra.mxu0 0.0
    %4289 = vmatprep.subr.mxu0 0.0
    %4290 = vmatpush1.msra.mxu0 0.0
    %4291 = vmatprep.subr.mxu0 0.0
    %4292 = vmatpush1.msra.mxu0 0.0
    %4293 = vmatprep.mubr.f32.mxu0 0.0
    %4294 = vmatmul.mubr.f32.gmra.mrb[0].mxu0 %v4037
    %v4295 = vpop.f32.mrb[0].mxu0
    %v4296 = vadd.f32 0.0, %v4295
    %v4297 = vpop.f32.mrb[0].mxu0
    %4298 = vmatprep.mubr.f32.mxu0 0.0
    %4299 = vmatmul.mubr.f32.gmra.mrb[0].mxu0 %v4040
    %v4300 = vpop.f32.mrb[0].mxu0
    %v4301 = vadd.f32 0.0, %v4300
    %v4302 = vpop.f32.mrb[0].mxu0
    %4303 = vmatprep.mubr.f32.mxu0 0.0
    %4304 = vmatmul.mubr.f32.gmra.mrb[0].mxu0 %v4043
    %v4305 = vpop.f32.mrb[0].mxu0
    %v4306 = vadd.f32 0.0, %v4305
    %v4307 = vpop.f32.mrb[0].mxu0
    %4308 = vmatprep.mubr.f32.mxu0 0.0
    %4309 = vmatmul.mubr.f32.gmra.mrb[0].mxu0 %v4046
    %v4310 = vpop.f32.mrb[0].mxu0
    %v4311 = vadd.f32 0.0, %v4310
    %v4312 = vpop.f32.mrb[0].mxu0
    %4313 = vmatprep.mubr.f32.mxu0 0.0
    %4314 = vmatmul.mubr.f32.gmra.mrb[0].mxu0 %v4049
    %v4315 = vpop.f32.mrb[0].mxu0
    %v4316 = vadd.f32 0.0, %v4315
    %v4317 = vpop.f32.mrb[0].mxu0
    %4318 = vmatprep.mubr.f32.mxu0 0.0
    %4319 = vmatmul.mubr.f32.gmra.mrb[0].mxu0 %v4052
    %v4320 = vpop.f32.mrb[0].mxu0
    %v4321 = vadd.f32 0.0, %v4320
    %v4322 = vpop.f32.mrb[0].mxu0
    %4323 = vmatprep.mubr.f32.mxu0 0.0
    %4324 = vmatmul.mubr.f32.gmra.mrb[0].mxu0 %v4055
    %v4325 = vpop.f32.mrb[0].mxu0
    %v4326 = vadd.f32 0.0, %v4325
    %v4327 = vpop.f32.mrb[0].mxu0
    %4328 = vmatprep.mubr.f32.mxu0 0.0
    %4329 = vmatmul.mubr.f32.gmra.mrb[0].mxu0 %v4058
    %v4330 = vpop.f32.mrb[0].mxu0
    %v4331 = vadd.f32 0.0, %v4330
    %v4332 = vpop.f32.mrb[0].mxu0
    %4333 = vmatprep.mubr.f32.mxu0 0.0
    %4334 = vmatmul.mubr.f32.gmra.mrb[0].mxu0 %v4061
    %v4335 = vpop.f32.mrb[0].mxu0
    %v4336 = vadd.f32 0.0, %v4335
    %v4337 = vpop.f32.mrb[0].mxu0
    %4338 = vmatprep.mubr.f32.mxu0 0.0
    %4339 = vmatmul.mubr.f32.gmra.mrb[0].mxu0 %v4064
    %v4340 = vpop.f32.mrb[0].mxu0
    %v4341 = vadd.f32 0.0, %v4340
    %v4342 = vpop.f32.mrb[0].mxu0
    %4343 = vmatprep.mubr.f32.mxu0 0.0
    %4344 = vmatmul.mubr.f32.gmra.mrb[0].mxu0 %v4067
    %v4345 = vpop.f32.mrb[0].mxu0
    %v4346 = vadd.f32 0.0, %v4345
    %v4347 = vpop.f32.mrb[0].mxu0
    %4348 = vmatprep.mubr.f32.mxu0 0.0
    %4349 = vmatmul.mubr.f32.gmra.mrb[0].mxu0 %v4070
    %v4350 = vpop.f32.mrb[0].mxu0
    %v4351 = vadd.f32 0.0, %v4350
    %v4352 = vpop.f32.mrb[0].mxu0
    %4353 = vmatprep.mubr.f32.mxu0 0.0
    %4354 = vmatmul.mubr.f32.gmra.mrb[0].mxu0 %v4073
    %v4355 = vpop.f32.mrb[0].mxu0
    %v4356 = vadd.f32 0.0, %v4355
    %v4357 = vpop.f32.mrb[0].mxu0
    %4358 = vmatprep.mubr.f32.mxu0 0.0
    %4359 = vmatmul.mubr.f32.gmra.mrb[0].mxu0 %v4076
    %v4360 = vpop.f32.mrb[0].mxu0
    %v4361 = vadd.f32 0.0, %v4360
    %v4362 = vpop.f32.mrb[0].mxu0
    %4363 = vmatprep.mubr.f32.mxu0 0.0
    %4364 = vmatmul.mubr.f32.gmra.mrb[0].mxu0 %v4079
    %v4365 = vpop.f32.mrb[0].mxu0
    %v4366 = vadd.f32 0.0, %v4365
    %v4367 = vpop.f32.mrb[0].mxu0
    %4368 = vmatprep.mubr.f32.mxu0 0.0
    %4369 = vmatmul.mubr.f32.gmra.mrb[0].mxu0 %v4082
    %v4370 = vpop.f32.mrb[0].mxu0
    %v4371 = vadd.f32 0.0, %v4370
    %v4372 = vpop.f32.mrb[0].mxu0
    %4373 = vdwg.mxu0
    %4375 = vset.pattern.permute.xlu0 0
    %4376 = vperm.xlu0 %4375, %v4151
    %v4377 = vpop.permute.xlu0 %4376
    %4380 = vset.pattern.permute.xlu0 0
    %4381 = vperm.xlu0 %4380, %v4156
    %v4382 = vpop.permute.xlu0 %4381
    %4385 = vset.pattern.permute.xlu0 0
    %4386 = vperm.xlu0 %4385, %v4161
    %v4387 = vpop.permute.xlu0 %4386
    %4390 = vset.pattern.permute.xlu0 0
    %4391 = vperm.xlu0 %4390, %v4166
    %v4392 = vpop.permute.xlu0 %4391
    %4395 = vset.pattern.permute.xlu0 0
    %4396 = vperm.xlu0 %4395, %v4171
    %v4397 = vpop.permute.xlu0 %4396
    %4400 = vset.pattern.permute.xlu0 0
    %4401 = vperm.xlu0 %4400, %v4176
    %v4402 = vpop.permute.xlu0 %4401
    %4405 = vset.pattern.permute.xlu0 0
    %4406 = vperm.xlu0 %4405, %v4181
    %v4407 = vpop.permute.xlu0 %4406
    %4410 = vset.pattern.permute.xlu0 0
    %4411 = vperm.xlu0 %4410, %v4186
    %v4412 = vpop.permute.xlu0 %4411
    %4415 = vset.pattern.permute.xlu0 0
    %4416 = vperm.xlu0 %4415, %v4191
    %v4417 = vpop.permute.xlu0 %4416
    %4420 = vset.pattern.permute.xlu0 0
    %4421 = vperm.xlu0 %4420, %v4196
    %v4422 = vpop.permute.xlu0 %4421
    %4425 = vset.pattern.permute.xlu0 0
    %4426 = vperm.xlu0 %4425, %v4201
    %v4427 = vpop.permute.xlu0 %4426
    %4430 = vset.pattern.permute.xlu0 0
    %4431 = vperm.xlu0 %4430, %v4206
    %v4432 = vpop.permute.xlu0 %4431
    %4435 = vset.pattern.permute.xlu0 0
    %4436 = vperm.xlu0 %4435, %v4211
    %v4437 = vpop.permute.xlu0 %4436
    %4440 = vset.pattern.permute.xlu0 0
    %4441 = vperm.xlu0 %4440, %v4216
    %v4442 = vpop.permute.xlu0 %4441
    %4445 = vset.pattern.permute.xlu0 0
    %4446 = vperm.xlu0 %4445, %v4221
    %v4447 = vpop.permute.xlu0 %4446
    %4450 = vset.pattern.permute.xlu0 0
    %4451 = vperm.xlu0 %4450, %v4226
    %v4452 = vpop.permute.xlu0 %4451
    %v4454 = vmul.f32 %v3716, %v4377
    %v4455 = vmul.f32 %v3717, %v4382
    %v4456 = vmul.f32 %v3718, %v4387
    %v4457 = vmul.f32 %v3719, %v4392
    %v4458 = vmul.f32 %v3720, %v4397
    %v4459 = vmul.f32 %v3721, %v4402
    %v4460 = vmul.f32 %v3722, %v4407
    %v4461 = vmul.f32 %v3723, %v4412
    %v4462 = vmul.f32 %v3724, %v4417
    %v4463 = vmul.f32 %v3725, %v4422
    %v4464 = vmul.f32 %v3726, %v4427
    %v4465 = vmul.f32 %v3727, %v4432
    %v4466 = vmul.f32 %v3728, %v4437
    %v4467 = vmul.f32 %v3729, %v4442
    %v4468 = vmul.f32 %v3730, %v4447
    %v4469 = vmul.f32 %v3731, %v4452
    %4471 = vset.pattern.permute.xlu0 0
    %4472 = vperm.xlu0 %4471, %v4296
    %v4473 = vpop.permute.xlu0 %4472
    %4476 = vset.pattern.permute.xlu0 0
    %4477 = vperm.xlu0 %4476, %v4301
    %v4478 = vpop.permute.xlu0 %4477
    %4481 = vset.pattern.permute.xlu0 0
    %4482 = vperm.xlu0 %4481, %v4306
    %v4483 = vpop.permute.xlu0 %4482
    %4486 = vset.pattern.permute.xlu0 0
    %4487 = vperm.xlu0 %4486, %v4311
    %v4488 = vpop.permute.xlu0 %4487
    %4491 = vset.pattern.permute.xlu0 0
    %4492 = vperm.xlu0 %4491, %v4316
    %v4493 = vpop.permute.xlu0 %4492
    %4496 = vset.pattern.permute.xlu0 0
    %4497 = vperm.xlu0 %4496, %v4321
    %v4498 = vpop.permute.xlu0 %4497
    %4501 = vset.pattern.permute.xlu0 0
    %4502 = vperm.xlu0 %4501, %v4326
    %v4503 = vpop.permute.xlu0 %4502
    %4506 = vset.pattern.permute.xlu0 0
    %4507 = vperm.xlu0 %4506, %v4331
    %v4508 = vpop.permute.xlu0 %4507
    %4511 = vset.pattern.permute.xlu0 0
    %4512 = vperm.xlu0 %4511, %v4336
    %v4513 = vpop.permute.xlu0 %4512
    %4516 = vset.pattern.permute.xlu0 0
    %4517 = vperm.xlu0 %4516, %v4341
    %v4518 = vpop.permute.xlu0 %4517
    %4521 = vset.pattern.permute.xlu0 0
    %4522 = vperm.xlu0 %4521, %v4346
    %v4523 = vpop.permute.xlu0 %4522
    %4526 = vset.pattern.permute.xlu0 0
    %4527 = vperm.xlu0 %4526, %v4351
    %v4528 = vpop.permute.xlu0 %4527
    %4531 = vset.pattern.permute.xlu0 0
    %4532 = vperm.xlu0 %4531, %v4356
    %v4533 = vpop.permute.xlu0 %4532
    %4536 = vset.pattern.permute.xlu0 0
    %4537 = vperm.xlu0 %4536, %v4361
    %v4538 = vpop.permute.xlu0 %4537
    %4541 = vset.pattern.permute.xlu0 0
    %4542 = vperm.xlu0 %4541, %v4366
    %v4543 = vpop.permute.xlu0 %4542
    %4546 = vset.pattern.permute.xlu0 0
    %4547 = vperm.xlu0 %4546, %v4371
    %v4548 = vpop.permute.xlu0 %4547
    %v4550 = vadd.f32 %v4454, %v4473
    %v4551 = vadd.f32 %v4455, %v4478
    %v4552 = vadd.f32 %v4456, %v4483
    %v4553 = vadd.f32 %v4457, %v4488
    %v4554 = vadd.f32 %v4458, %v4493
    %v4555 = vadd.f32 %v4459, %v4498
    %v4556 = vadd.f32 %v4460, %v4503
    %v4557 = vadd.f32 %v4461, %v4508
    %v4558 = vadd.f32 %v4462, %v4513
    %v4559 = vadd.f32 %v4463, %v4518
    %v4560 = vadd.f32 %v4464, %v4523
    %v4561 = vadd.f32 %v4465, %v4528
    %v4562 = vadd.f32 %v4466, %v4533
    %v4563 = vadd.f32 %v4467, %v4538
    %v4564 = vadd.f32 %v4468, %v4543
    %v4565 = vadd.f32 %v4469, %v4548
    %v4566 = vmax.f32 %v4550, 0.0
    %v4567 = vmax.f32 %v4551, 0.0
    %v4568 = vmax.f32 %v4552, 0.0
    %v4569 = vmax.f32 %v4553, 0.0
    %v4570 = vmax.f32 %v4554, 0.0
    %v4571 = vmax.f32 %v4555, 0.0
    %v4572 = vmax.f32 %v4556, 0.0
    %v4573 = vmax.f32 %v4557, 0.0
    %v4574 = vmax.f32 %v4558, 0.0
    %v4575 = vmax.f32 %v4559, 0.0
    %v4576 = vmax.f32 %v4560, 0.0
    %v4577 = vmax.f32 %v4561, 0.0
    %v4578 = vmax.f32 %v4562, 0.0
    %v4579 = vmax.f32 %v4563, 0.0
    %v4580 = vmax.f32 %v4564, 0.0
    %v4581 = vmax.f32 %v4565, 0.0
    %v4582 = vld [vmem:[%s12] sm:$0xff]
    %v4583 = vld [vmem:[%s12 + $0x8] sm:$0xff]
    %v4584 = vld [vmem:[%s12 + $0x10] sm:$0xff]
    %v4585 = vld [vmem:[%s12 + $0x18] sm:$0xff]
    %v4586 = vld [vmem:[%s12 + $0x20] sm:$0xff]
    %v4587 = vld [vmem:[%s12 + $0x28] sm:$0xff]
    %v4588 = vld [vmem:[%s12 + $0x30] sm:$0xff]
    %v4589 = vld [vmem:[%s12 + $0x38] sm:$0xff]
    %v4590 = vld [vmem:[%s12 + $0x40] sm:$0xff]
    %v4591 = vld [vmem:[%s12 + $0x48] sm:$0xff]
    %v4592 = vld [vmem:[%s12 + $0x50] sm:$0xff]
    %v4593 = vld [vmem:[%s12 + $0x58] sm:$0xff]
    %v4594 = vld [vmem:[%s12 + $0x60] sm:$0xff]
    %v4595 = vld [vmem:[%s12 + $0x68] sm:$0xff]
    %v4596 = vld [vmem:[%s12 + $0x70] sm:$0xff]
    %v4597 = vld [vmem:[%s12 + $0x78] sm:$0xff]
    %4598 = vmatprep.subr.mxu0 0.0
    %4599 = vmatpush1.msra.mxu0 %v4566
    %4600 = vmatprep.subr.mxu0 0.0
    %4601 = vmatpush1.msra.mxu0 %v4567
    %4602 = vmatprep.subr.mxu0 0.0
    %4603 = vmatpush1.msra.mxu0 %v4568
    %4604 = vmatprep.subr.mxu0 0.0
    %4605 = vmatpush1.msra.mxu0 %v4569
    %4606 = vmatprep.subr.mxu0 0.0
    %4607 = vmatpush1.msra.mxu0 %v4570
    %4608 = vmatprep.subr.mxu0 0.0
    %4609 = vmatpush1.msra.mxu0 %v4571
    %4610 = vmatprep.subr.mxu0 0.0
    %4611 = vmatpush1.msra.mxu0 %v4572
    %4612 = vmatprep.subr.mxu0 0.0
    %4613 = vmatpush1.msra.mxu0 %v4573
    %4614 = vmatprep.subr.mxu0 0.0
    %4615 = vmatpush1.msra.mxu0 %v4574
    %4616 = vmatprep.subr.mxu0 0.0
    %4617 = vmatpush1.msra.mxu0 %v4575
    %4618 = vmatprep.subr.mxu0 0.0
    %4619 = vmatpush1.msra.mxu0 %v4576
    %4620 = vmatprep.subr.mxu0 0.0
    %4621 = vmatpush1.msra.mxu0 %v4577
    %4622 = vmatprep.subr.mxu0 0.0
    %4623 = vmatpush1.msra.mxu0 %v4578
    %4624 = vmatprep.subr.mxu0 0.0
    %4625 = vmatpush1.msra.mxu0 %v4579
    %4626 = vmatprep.subr.mxu0 0.0
    %4627 = vmatpush1.msra.mxu0 %v4580
    %4628 = vmatprep.subr.mxu0 0.0
    %4629 = vmatpush1.msra.mxu0 %v4581
    %4630 = vmatprep.subr.mxu0 0.0
    %4631 = vmatpush1.msra.mxu0 0.0
    %4632 = vmatprep.subr.mxu0 0.0
    %4633 = vmatpush1.msra.mxu0 0.0
    %4634 = vmatprep.subr.mxu0 0.0
    %4635 = vmatpush1.msra.mxu0 0.0
    %4636 = vmatprep.subr.mxu0 0.0
    %4637 = vmatpush1.msra.mxu0 0.0
    %4638 = vmatprep.subr.mxu0 0.0
    %4639 = vmatpush1.msra.mxu0 0.0
    %4640 = vmatprep.subr.mxu0 0.0
    %4641 = vmatpush1.msra.mxu0 0.0
    %4642 = vmatprep.subr.mxu0 0.0
    %4643 = vmatpush1.msra.mxu0 0.0
    %4644 = vmatprep.subr.mxu0 0.0
    %4645 = vmatpush1.msra.mxu0 0.0
    %4646 = vmatprep.subr.mxu0 0.0
    %4647 = vmatpush1.msra.mxu0 0.0
    %4648 = vmatprep.subr.mxu0 0.0
    %4649 = vmatpush1.msra.mxu0 0.0
    %4650 = vmatprep.subr.mxu0 0.0
    %4651 = vmatpush1.msra.mxu0 0.0
    %4652 = vmatprep.subr.mxu0 0.0
    %4653 = vmatpush1.msra.mxu0 0.0
    %4654 = vmatprep.subr.mxu0 0.0
    %4655 = vmatpush1.msra.mxu0 0.0
    %4656 = vmatprep.subr.mxu0 0.0
    %4657 = vmatpush1.msra.mxu0 0.0
    %4658 = vmatprep.subr.mxu0 0.0
    %4659 = vmatpush1.msra.mxu0 0.0
    %4660 = vmatprep.subr.mxu0 0.0
    %4661 = vmatpush1.msra.mxu0 0.0
    %4662 = vmatprep.mubr.f32.mxu0 0.0
    %4663 = vmatmul.mubr.f32.gmra.mrb[0].mxu0 %v4582
    %v4664 = vpop.f32.mrb[0].mxu0
    %v4665 = vadd.f32 0.0, %v4664
    %v4666 = vpop.f32.mrb[0].mxu0
    %4667 = vmatprep.mubr.f32.mxu0 0.0
    %4668 = vmatmul.mubr.f32.gmra.mrb[0].mxu0 %v4583
    %v4669 = vpop.f32.mrb[0].mxu0
    %v4670 = vadd.f32 0.0, %v4669
    %v4671 = vpop.f32.mrb[0].mxu0
    %4672 = vmatprep.mubr.f32.mxu0 0.0
    %4673 = vmatmul.mubr.f32.gmra.mrb[0].mxu0 %v4584
    %v4674 = vpop.f32.mrb[0].mxu0
    %v4675 = vadd.f32 0.0, %v4674
    %v4676 = vpop.f32.mrb[0].mxu0
    %4677 = vmatprep.mubr.f32.mxu0 0.0
    %4678 = vmatmul.mubr.f32.gmra.mrb[0].mxu0 %v4585
    %v4679 = vpop.f32.mrb[0].mxu0
    %v4680 = vadd.f32 0.0, %v4679
    %v4681 = vpop.f32.mrb[0].mxu0
    %4682 = vmatprep.mubr.f32.mxu0 0.0
    %4683 = vmatmul.mubr.f32.gmra.mrb[0].mxu0 %v4586
    %v4684 = vpop.f32.mrb[0].mxu0
    %v4685 = vadd.f32 0.0, %v4684
    %v4686 = vpop.f32.mrb[0].mxu0
    %4687 = vmatprep.mubr.f32.mxu0 0.0
    %4688 = vmatmul.mubr.f32.gmra.mrb[0].mxu0 %v4587
    %v4689 = vpop.f32.mrb[0].mxu0
    %v4690 = vadd.f32 0.0, %v4689
    %v4691 = vpop.f32.mrb[0].mxu0
    %4692 = vmatprep.mubr.f32.mxu0 0.0
    %4693 = vmatmul.mubr.f32.gmra.mrb[0].mxu0 %v4588
    %v4694 = vpop.f32.mrb[0].mxu0
    %v4695 = vadd.f32 0.0, %v4694
    %v4696 = vpop.f32.mrb[0].mxu0
    %4697 = vmatprep.mubr.f32.mxu0 0.0
    %4698 = vmatmul.mubr.f32.gmra.mrb[0].mxu0 %v4589
    %v4699 = vpop.f32.mrb[0].mxu0
    %v4700 = vadd.f32 0.0, %v4699
    %v4701 = vpop.f32.mrb[0].mxu0
    %4702 = vmatprep.mubr.f32.mxu0 0.0
    %4703 = vmatmul.mubr.f32.gmra.mrb[0].mxu0 %v4590
    %v4704 = vpop.f32.mrb[0].mxu0
    %v4705 = vadd.f32 0.0, %v4704
    %v4706 = vpop.f32.mrb[0].mxu0
    %4707 = vmatprep.mubr.f32.mxu0 0.0
    %4708 = vmatmul.mubr.f32.gmra.mrb[0].mxu0 %v4591
    %v4709 = vpop.f32.mrb[0].mxu0
    %v4710 = vadd.f32 0.0, %v4709
    %v4711 = vpop.f32.mrb[0].mxu0
    %4712 = vmatprep.mubr.f32.mxu0 0.0
    %4713 = vmatmul.mubr.f32.gmra.mrb[0].mxu0 %v4592
    %v4714 = vpop.f32.mrb[0].mxu0
    %v4715 = vadd.f32 0.0, %v4714
    %v4716 = vpop.f32.mrb[0].mxu0
    %4717 = vmatprep.mubr.f32.mxu0 0.0
    %4718 = vmatmul.mubr.f32.gmra.mrb[0].mxu0 %v4593
    %v4719 = vpop.f32.mrb[0].mxu0
    %v4720 = vadd.f32 0.0, %v4719
    %v4721 = vpop.f32.mrb[0].mxu0
    %4722 = vmatprep.mubr.f32.mxu0 0.0
    %4723 = vmatmul.mubr.f32.gmra.mrb[0].mxu0 %v4594
    %v4724 = vpop.f32.mrb[0].mxu0
    %v4725 = vadd.f32 0.0, %v4724
    %v4726 = vpop.f32.mrb[0].mxu0
    %4727 = vmatprep.mubr.f32.mxu0 0.0
    %4728 = vmatmul.mubr.f32.gmra.mrb[0].mxu0 %v4595
    %v4729 = vpop.f32.mrb[0].mxu0
    %v4730 = vadd.f32 0.0, %v4729
    %v4731 = vpop.f32.mrb[0].mxu0
    %4732 = vmatprep.mubr.f32.mxu0 0.0
    %4733 = vmatmul.mubr.f32.gmra.mrb[0].mxu0 %v4596
    %v4734 = vpop.f32.mrb[0].mxu0
    %v4735 = vadd.f32 0.0, %v4734
    %v4736 = vpop.f32.mrb[0].mxu0
    %4737 = vmatprep.mubr.f32.mxu0 0.0
    %4738 = vmatmul.mubr.f32.gmra.mrb[0].mxu0 %v4597
    %v4739 = vpop.f32.mrb[0].mxu0
    %v4740 = vadd.f32 0.0, %v4739
    %v4741 = vpop.f32.mrb[0].mxu0
    %4742 = vdwg.mxu0
    %v4743 = vld [vmem:[#allocation9] sm:$0xff]
    %v4744 = vld [vmem:[#allocation9 + $0x8] sm:$0xff]
    %s4745 = scalar_lea.vmem %s12, 128
    %v4746 = vld [vmem:[%s4745] sm:$0xff]
    %v4747 = vld [vmem:[%s4745 + $0x8] sm:$0xff]
    %v4748 = vld [vmem:[%s4745 + $0x10] sm:$0xff]
    %v4749 = vld [vmem:[%s4745 + $0x18] sm:$0xff]
    %v4750 = vld [vmem:[%s4745 + $0x20] sm:$0xff]
    %v4751 = vld [vmem:[%s4745 + $0x28] sm:$0xff]
    %v4752 = vld [vmem:[%s4745 + $0x30] sm:$0xff]
    %v4753 = vld [vmem:[%s4745 + $0x38] sm:$0xff]
    %v4754 = vld [vmem:[%s4745 + $0x40] sm:$0xff]
    %v4755 = vld [vmem:[%s4745 + $0x48] sm:$0xff]
    %v4756 = vld [vmem:[%s4745 + $0x50] sm:$0xff]
    %v4757 = vld [vmem:[%s4745 + $0x58] sm:$0xff]
    %v4758 = vld [vmem:[%s4745 + $0x60] sm:$0xff]
    %v4759 = vld [vmem:[%s4745 + $0x68] sm:$0xff]
    %v4760 = vld [vmem:[%s4745 + $0x70] sm:$0xff]
    %v4761 = vld [vmem:[%s4745 + $0x78] sm:$0xff]
    %4762 = vmatprep.subr.mxu0 0.0
    %4763 = vmatpush1.msra.mxu0 %v4566
    %4764 = vmatprep.subr.mxu0 0.0
    %4765 = vmatpush1.msra.mxu0 %v4567
    %4766 = vmatprep.subr.mxu0 0.0
    %4767 = vmatpush1.msra.mxu0 %v4568
    %4768 = vmatprep.subr.mxu0 0.0
    %4769 = vmatpush1.msra.mxu0 %v4569
    %4770 = vmatprep.subr.mxu0 0.0
    %4771 = vmatpush1.msra.mxu0 %v4570
    %4772 = vmatprep.subr.mxu0 0.0
    %4773 = vmatpush1.msra.mxu0 %v4571
    %4774 = vmatprep.subr.mxu0 0.0
    %4775 = vmatpush1.msra.mxu0 %v4572
    %4776 = vmatprep.subr.mxu0 0.0
    %4777 = vmatpush1.msra.mxu0 %v4573
    %4778 = vmatprep.subr.mxu0 0.0
    %4779 = vmatpush1.msra.mxu0 %v4574
    %4780 = vmatprep.subr.mxu0 0.0
    %4781 = vmatpush1.msra.mxu0 %v4575
    %4782 = vmatprep.subr.mxu0 0.0
    %4783 = vmatpush1.msra.mxu0 %v4576
    %4784 = vmatprep.subr.mxu0 0.0
    %4785 = vmatpush1.msra.mxu0 %v4577
    %4786 = vmatprep.subr.mxu0 0.0
    %4787 = vmatpush1.msra.mxu0 %v4578
    %4788 = vmatprep.subr.mxu0 0.0
    %4789 = vmatpush1.msra.mxu0 %v4579
    %4790 = vmatprep.subr.mxu0 0.0
    %4791 = vmatpush1.msra.mxu0 %v4580
    %4792 = vmatprep.subr.mxu0 0.0
    %4793 = vmatpush1.msra.mxu0 %v4581
    %4794 = vmatprep.subr.mxu0 0.0
    %4795 = vmatpush1.msra.mxu0 0.0
    %4796 = vmatprep.subr.mxu0 0.0
    %4797 = vmatpush1.msra.mxu0 0.0
    %4798 = vmatprep.subr.mxu0 0.0
    %4799 = vmatpush1.msra.mxu0 0.0
    %4800 = vmatprep.subr.mxu0 0.0
    %4801 = vmatpush1.msra.mxu0 0.0
    %4802 = vmatprep.subr.mxu0 0.0
    %4803 = vmatpush1.msra.mxu0 0.0
    %4804 = vmatprep.subr.mxu0 0.0
    %4805 = vmatpush1.msra.mxu0 0.0
    %4806 = vmatprep.subr.mxu0 0.0
    %4807 = vmatpush1.msra.mxu0 0.0
    %4808 = vmatprep.subr.mxu0 0.0
    %4809 = vmatpush1.msra.mxu0 0.0
    %4810 = vmatprep.subr.mxu0 0.0
    %4811 = vmatpush1.msra.mxu0 0.0
    %4812 = vmatprep.subr.mxu0 0.0
    %4813 = vmatpush1.msra.mxu0 0.0
    %4814 = vmatprep.subr.mxu0 0.0
    %4815 = vmatpush1.msra.mxu0 0.0
    %4816 = vmatprep.subr.mxu0 0.0
    %4817 = vmatpush1.msra.mxu0 0.0
    %4818 = vmatprep.subr.mxu0 0.0
    %4819 = vmatpush1.msra.mxu0 0.0
    %4820 = vmatprep.subr.mxu0 0.0
    %4821 = vmatpush1.msra.mxu0 0.0
    %4822 = vmatprep.subr.mxu0 0.0
    %4823 = vmatpush1.msra.mxu0 0.0
    %4824 = vmatprep.subr.mxu0 0.0
    %4825 = vmatpush1.msra.mxu0 0.0
    %4826 = vmatprep.mubr.f32.mxu0 0.0
    %4827 = vmatmul.mubr.f32.gmra.mrb[0].mxu0 %v4746
    %v4828 = vpop.f32.mrb[0].mxu0
    %v4829 = vadd.f32 0.0, %v4828
    %v4830 = vpop.f32.mrb[0].mxu0
    %4831 = vmatprep.mubr.f32.mxu0 0.0
    %4832 = vmatmul.mubr.f32.gmra.mrb[0].mxu0 %v4747
    %v4833 = vpop.f32.mrb[0].mxu0
    %v4834 = vadd.f32 0.0, %v4833
    %v4835 = vpop.f32.mrb[0].mxu0
    %4836 = vmatprep.mubr.f32.mxu0 0.0
    %4837 = vmatmul.mubr.f32.gmra.mrb[0].mxu0 %v4748
    %v4838 = vpop.f32.mrb[0].mxu0
    %v4839 = vadd.f32 0.0, %v4838
    %v4840 = vpop.f32.mrb[0].mxu0
    %4841 = vmatprep.mubr.f32.mxu0 0.0
    %4842 = vmatmul.mubr.f32.gmra.mrb[0].mxu0 %v4749
    %v4843 = vpop.f32.mrb[0].mxu0
    %v4844 = vadd.f32 0.0, %v4843
    %v4845 = vpop.f32.mrb[0].mxu0
    %4846 = vmatprep.mubr.f32.mxu0 0.0
    %4847 = vmatmul.mubr.f32.gmra.mrb[0].mxu0 %v4750
    %v4848 = vpop.f32.mrb[0].mxu0
    %v4849 = vadd.f32 0.0, %v4848
    %v4850 = vpop.f32.mrb[0].mxu0
    %4851 = vmatprep.mubr.f32.mxu0 0.0
    %4852 = vmatmul.mubr.f32.gmra.mrb[0].mxu0 %v4751
    %v4853 = vpop.f32.mrb[0].mxu0
    %v4854 = vadd.f32 0.0, %v4853
    %v4855 = vpop.f32.mrb[0].mxu0
    %4856 = vmatprep.mubr.f32.mxu0 0.0
    %4857 = vmatmul.mubr.f32.gmra.mrb[0].mxu0 %v4752
    %v4858 = vpop.f32.mrb[0].mxu0
    %v4859 = vadd.f32 0.0, %v4858
    %v4860 = vpop.f32.mrb[0].mxu0
    %4861 = vmatprep.mubr.f32.mxu0 0.0
    %4862 = vmatmul.mubr.f32.gmra.mrb[0].mxu0 %v4753
    %v4863 = vpop.f32.mrb[0].mxu0
    %v4864 = vadd.f32 0.0, %v4863
    %v4865 = vpop.f32.mrb[0].mxu0
    %4866 = vmatprep.mubr.f32.mxu0 0.0
    %4867 = vmatmul.mubr.f32.gmra.mrb[0].mxu0 %v4754
    %v4868 = vpop.f32.mrb[0].mxu0
    %v4869 = vadd.f32 0.0, %v4868
    %v4870 = vpop.f32.mrb[0].mxu0
    %4871 = vmatprep.mubr.f32.mxu0 0.0
    %4872 = vmatmul.mubr.f32.gmra.mrb[0].mxu0 %v4755
    %v4873 = vpop.f32.mrb[0].mxu0
    %v4874 = vadd.f32 0.0, %v4873
    %v4875 = vpop.f32.mrb[0].mxu0
    %4876 = vmatprep.mubr.f32.mxu0 0.0
    %4877 = vmatmul.mubr.f32.gmra.mrb[0].mxu0 %v4756
    %v4878 = vpop.f32.mrb[0].mxu0
    %v4879 = vadd.f32 0.0, %v4878
    %v4880 = vpop.f32.mrb[0].mxu0
    %4881 = vmatprep.mubr.f32.mxu0 0.0
    %4882 = vmatmul.mubr.f32.gmra.mrb[0].mxu0 %v4757
    %v4883 = vpop.f32.mrb[0].mxu0
    %v4884 = vadd.f32 0.0, %v4883
    %v4885 = vpop.f32.mrb[0].mxu0
    %4886 = vmatprep.mubr.f32.mxu0 0.0
    %4887 = vmatmul.mubr.f32.gmra.mrb[0].mxu0 %v4758
    %v4888 = vpop.f32.mrb[0].mxu0
    %v4889 = vadd.f32 0.0, %v4888
    %v4890 = vpop.f32.mrb[0].mxu0
    %4891 = vmatprep.mubr.f32.mxu0 0.0
    %4892 = vmatmul.mubr.f32.gmra.mrb[0].mxu0 %v4759
    %v4893 = vpop.f32.mrb[0].mxu0
    %v4894 = vadd.f32 0.0, %v4893
    %v4895 = vpop.f32.mrb[0].mxu0
    %4896 = vmatprep.mubr.f32.mxu0 0.0
    %4897 = vmatmul.mubr.f32.gmra.mrb[0].mxu0 %v4760
    %v4898 = vpop.f32.mrb[0].mxu0
    %v4899 = vadd.f32 0.0, %v4898
    %v4900 = vpop.f32.mrb[0].mxu0
    %4901 = vmatprep.mubr.f32.mxu0 0.0
    %4902 = vmatmul.mubr.f32.gmra.mrb[0].mxu0 %v4761
    %v4903 = vpop.f32.mrb[0].mxu0
    %v4904 = vadd.f32 0.0, %v4903
    %v4905 = vpop.f32.mrb[0].mxu0
    %4906 = vdwg.mxu0
    %s4907 = scalar_lea.vmem [#allocation9], 16
    %v4908 = vld [vmem:[%s4907] sm:$0xff]
    %v4909 = vld [vmem:[%s4907 + $0x8] sm:$0xff]
    %v4911 = vsel %vm199, %v4829, 0
    %v4914 = vsel %vm199, %v4834, 0
    %v4917 = vsel %vm199, %v4839, 0
    %v4920 = vsel %vm199, %v4844, 0
    %v4923 = vsel %vm199, %v4849, 0
    %v4926 = vsel %vm199, %v4854, 0
    %v4929 = vsel %vm199, %v4859, 0
    %v4932 = vsel %vm199, %v4864, 0
    %v4935 = vsel %vm199, %v4869, 0
    %v4938 = vsel %vm199, %v4874, 0
    %v4941 = vsel %vm199, %v4879, 0
    %v4944 = vsel %vm199, %v4884, 0
    %v4947 = vsel %vm199, %v4889, 0
    %v4950 = vsel %vm199, %v4894, 0
    %v4953 = vsel %vm199, %v4899, 0
    %v4956 = vsel %vm199, %v4904, 0
    %4958 = vmatprep.subr.mxu0 0.0
    %4959 = vmatpush1.msra.mxu0 %v4908
    %4960 = vmatprep.subr.mxu0 0.0
    %4961 = vmatpush1.msra.mxu0 %v4909
    %4962 = vmatprep.subr.mxu0 0.0
    %4963 = vmatpush1.msra.mxu0 0.0
    %4964 = vmatprep.subr.mxu0 0.0
    %4965 = vmatpush1.msra.mxu0 0.0
    %4966 = vmatprep.subr.mxu0 0.0
    %4967 = vmatpush1.msra.mxu0 0.0
    %4968 = vmatprep.subr.mxu0 0.0
    %4969 = vmatpush1.msra.mxu0 0.0
    %4970 = vmatprep.subr.mxu0 0.0
    %4971 = vmatpush1.msra.mxu0 0.0
    %4972 = vmatprep.subr.mxu0 0.0
    %4973 = vmatpush1.msra.mxu0 0.0
    %4974 = vmatprep.subr.mxu0 0.0
    %4975 = vmatpush1.msra.mxu0 0.0
    %4976 = vmatprep.subr.mxu0 0.0
    %4977 = vmatpush1.msra.mxu0 0.0
    %4978 = vmatprep.subr.mxu0 0.0
    %4979 = vmatpush1.msra.mxu0 0.0
    %4980 = vmatprep.subr.mxu0 0.0
    %4981 = vmatpush1.msra.mxu0 0.0
    %4982 = vmatprep.subr.mxu0 0.0
    %4983 = vmatpush1.msra.mxu0 0.0
    %4984 = vmatprep.subr.mxu0 0.0
    %4985 = vmatpush1.msra.mxu0 0.0
    %4986 = vmatprep.subr.mxu0 0.0
    %4987 = vmatpush1.msra.mxu0 0.0
    %4988 = vmatprep.subr.mxu0 0.0
    %4989 = vmatpush1.msra.mxu0 0.0
    %4990 = vmatprep.subr.mxu0 0.0
    %4991 = vmatpush1.msra.mxu0 0.0
    %4992 = vmatprep.subr.mxu0 0.0
    %4993 = vmatpush1.msra.mxu0 0.0
    %4994 = vmatprep.subr.mxu0 0.0
    %4995 = vmatpush1.msra.mxu0 0.0
    %4996 = vmatprep.subr.mxu0 0.0
    %4997 = vmatpush1.msra.mxu0 0.0
    %4998 = vmatprep.subr.mxu0 0.0
    %4999 = vmatpush1.msra.mxu0 0.0
    %5000 = vmatprep.subr.mxu0 0.0
    %5001 = vmatpush1.msra.mxu0 0.0
    %5002 = vmatprep.subr.mxu0 0.0
    %5003 = vmatpush1.msra.mxu0 0.0
    %5004 = vmatprep.subr.mxu0 0.0
    %5005 = vmatpush1.msra.mxu0 0.0
    %5006 = vmatprep.subr.mxu0 0.0
    %5007 = vmatpush1.msra.mxu0 0.0
    %5008 = vmatprep.subr.mxu0 0.0
    %5009 = vmatpush1.msra.mxu0 0.0
    %5010 = vmatprep.subr.mxu0 0.0
    %5011 = vmatpush1.msra.mxu0 0.0
    %5012 = vmatprep.subr.mxu0 0.0
    %5013 = vmatpush1.msra.mxu0 0.0
    %5014 = vmatprep.subr.mxu0 0.0
    %5015 = vmatpush1.msra.mxu0 0.0
    %5016 = vmatprep.subr.mxu0 0.0
    %5017 = vmatpush1.msra.mxu0 0.0
    %5018 = vmatprep.subr.mxu0 0.0
    %5019 = vmatpush1.msra.mxu0 0.0
    %5020 = vmatprep.subr.mxu0 0.0
    %5021 = vmatpush1.msra.mxu0 0.0
    %5022 = vmatprep.mubr.f32.mxu0 0.0
    %5023 = vmatmul.mubr.f32.gmra.mrb[0].mxu0 %v4911
    %v5024 = vpop.f32.mrb[0].mxu0
    %v5025 = vadd.f32 0.0, %v5024
    %v5026 = vpop.f32.mrb[0].mxu0
    %5027 = vmatprep.mubr.f32.mxu0 0.0
    %5028 = vmatmul.mubr.f32.gmra.mrb[0].mxu0 %v4914
    %v5029 = vpop.f32.mrb[0].mxu0
    %v5030 = vadd.f32 0.0, %v5029
    %v5031 = vpop.f32.mrb[0].mxu0
    %5032 = vmatprep.mubr.f32.mxu0 0.0
    %5033 = vmatmul.mubr.f32.gmra.mrb[0].mxu0 %v4917
    %v5034 = vpop.f32.mrb[0].mxu0
    %v5035 = vadd.f32 0.0, %v5034
    %v5036 = vpop.f32.mrb[0].mxu0
    %5037 = vmatprep.mubr.f32.mxu0 0.0
    %5038 = vmatmul.mubr.f32.gmra.mrb[0].mxu0 %v4920
    %v5039 = vpop.f32.mrb[0].mxu0
    %v5040 = vadd.f32 0.0, %v5039
    %v5041 = vpop.f32.mrb[0].mxu0
    %5042 = vmatprep.mubr.f32.mxu0 0.0
    %5043 = vmatmul.mubr.f32.gmra.mrb[0].mxu0 %v4923
    %v5044 = vpop.f32.mrb[0].mxu0
    %v5045 = vadd.f32 0.0, %v5044
    %v5046 = vpop.f32.mrb[0].mxu0
    %5047 = vmatprep.mubr.f32.mxu0 0.0
    %5048 = vmatmul.mubr.f32.gmra.mrb[0].mxu0 %v4926
    %v5049 = vpop.f32.mrb[0].mxu0
    %v5050 = vadd.f32 0.0, %v5049
    %v5051 = vpop.f32.mrb[0].mxu0
    %5052 = vmatprep.mubr.f32.mxu0 0.0
    %5053 = vmatmul.mubr.f32.gmra.mrb[0].mxu0 %v4929
    %v5054 = vpop.f32.mrb[0].mxu0
    %v5055 = vadd.f32 0.0, %v5054
    %v5056 = vpop.f32.mrb[0].mxu0
    %5057 = vmatprep.mubr.f32.mxu0 0.0
    %5058 = vmatmul.mubr.f32.gmra.mrb[0].mxu0 %v4932
    %v5059 = vpop.f32.mrb[0].mxu0
    %v5060 = vadd.f32 0.0, %v5059
    %v5061 = vpop.f32.mrb[0].mxu0
    %5062 = vmatprep.mubr.f32.mxu0 0.0
    %5063 = vmatmul.mubr.f32.gmra.mrb[0].mxu0 %v4935
    %v5064 = vpop.f32.mrb[0].mxu0
    %v5065 = vadd.f32 0.0, %v5064
    %v5066 = vpop.f32.mrb[0].mxu0
    %5067 = vmatprep.mubr.f32.mxu0 0.0
    %5068 = vmatmul.mubr.f32.gmra.mrb[0].mxu0 %v4938
    %v5069 = vpop.f32.mrb[0].mxu0
    %v5070 = vadd.f32 0.0, %v5069
    %v5071 = vpop.f32.mrb[0].mxu0
    %5072 = vmatprep.mubr.f32.mxu0 0.0
    %5073 = vmatmul.mubr.f32.gmra.mrb[0].mxu0 %v4941
    %v5074 = vpop.f32.mrb[0].mxu0
    %v5075 = vadd.f32 0.0, %v5074
    %v5076 = vpop.f32.mrb[0].mxu0
    %5077 = vmatprep.mubr.f32.mxu0 0.0
    %5078 = vmatmul.mubr.f32.gmra.mrb[0].mxu0 %v4944
    %v5079 = vpop.f32.mrb[0].mxu0
    %v5080 = vadd.f32 0.0, %v5079
    %v5081 = vpop.f32.mrb[0].mxu0
    %5082 = vmatprep.mubr.f32.mxu0 0.0
    %5083 = vmatmul.mubr.f32.gmra.mrb[0].mxu0 %v4947
    %v5084 = vpop.f32.mrb[0].mxu0
    %v5085 = vadd.f32 0.0, %v5084
    %v5086 = vpop.f32.mrb[0].mxu0
    %5087 = vmatprep.mubr.f32.mxu0 0.0
    %5088 = vmatmul.mubr.f32.gmra.mrb[0].mxu0 %v4950
    %v5089 = vpop.f32.mrb[0].mxu0
    %v5090 = vadd.f32 0.0, %v5089
    %v5091 = vpop.f32.mrb[0].mxu0
    %5092 = vmatprep.mubr.f32.mxu0 0.0
    %5093 = vmatmul.mubr.f32.gmra.mrb[0].mxu0 %v4953
    %v5094 = vpop.f32.mrb[0].mxu0
    %v5095 = vadd.f32 0.0, %v5094
    %v5096 = vpop.f32.mrb[0].mxu0
    %5097 = vmatprep.mubr.f32.mxu0 0.0
    %5098 = vmatmul.mubr.f32.gmra.mrb[0].mxu0 %v4956
    %v5099 = vpop.f32.mrb[0].mxu0
    %v5100 = vadd.f32 0.0, %v5099
    %v5101 = vpop.f32.mrb[0].mxu0
    %5102 = vdwg.mxu0
    %v5104 = vsel %vm199, %v4665, 0
    %v5107 = vsel %vm199, %v4670, 0
    %v5110 = vsel %vm199, %v4675, 0
    %v5113 = vsel %vm199, %v4680, 0
    %v5116 = vsel %vm199, %v4685, 0
    %v5119 = vsel %vm199, %v4690, 0
    %v5122 = vsel %vm199, %v4695, 0
    %v5125 = vsel %vm199, %v4700, 0
    %v5128 = vsel %vm199, %v4705, 0
    %v5131 = vsel %vm199, %v4710, 0
    %v5134 = vsel %vm199, %v4715, 0
    %v5137 = vsel %vm199, %v4720, 0
    %v5140 = vsel %vm199, %v4725, 0
    %v5143 = vsel %vm199, %v4730, 0
    %v5146 = vsel %vm199, %v4735, 0
    %v5149 = vsel %vm199, %v4740, 0
    %5151 = vmatprep.subr.mxu0 0.0
    %5152 = vmatpush1.msra.mxu0 %v4743
    %5153 = vmatprep.subr.mxu0 0.0
    %5154 = vmatpush1.msra.mxu0 %v4744
    %5155 = vmatprep.subr.mxu0 0.0
    %5156 = vmatpush1.msra.mxu0 0.0
    %5157 = vmatprep.subr.mxu0 0.0
    %5158 = vmatpush1.msra.mxu0 0.0
    %5159 = vmatprep.subr.mxu0 0.0
    %5160 = vmatpush1.msra.mxu0 0.0
    %5161 = vmatprep.subr.mxu0 0.0
    %5162 = vmatpush1.msra.mxu0 0.0
    %5163 = vmatprep.subr.mxu0 0.0
    %5164 = vmatpush1.msra.mxu0 0.0
    %5165 = vmatprep.subr.mxu0 0.0
    %5166 = vmatpush1.msra.mxu0 0.0
    %5167 = vmatprep.subr.mxu0 0.0
    %5168 = vmatpush1.msra.mxu0 0.0
    %5169 = vmatprep.subr.mxu0 0.0
    %5170 = vmatpush1.msra.mxu0 0.0
    %5171 = vmatprep.subr.mxu0 0.0
    %5172 = vmatpush1.msra.mxu0 0.0
    %5173 = vmatprep.subr.mxu0 0.0
    %5174 = vmatpush1.msra.mxu0 0.0
    %5175 = vmatprep.subr.mxu0 0.0
    %5176 = vmatpush1.msra.mxu0 0.0
    %5177 = vmatprep.subr.mxu0 0.0
    %5178 = vmatpush1.msra.mxu0 0.0
    %5179 = vmatprep.subr.mxu0 0.0
    %5180 = vmatpush1.msra.mxu0 0.0
    %5181 = vmatprep.subr.mxu0 0.0
    %5182 = vmatpush1.msra.mxu0 0.0
    %5183 = vmatprep.subr.mxu0 0.0
    %5184 = vmatpush1.msra.mxu0 0.0
    %5185 = vmatprep.subr.mxu0 0.0
    %5186 = vmatpush1.msra.mxu0 0.0
    %5187 = vmatprep.subr.mxu0 0.0
    %5188 = vmatpush1.msra.mxu0 0.0
    %5189 = vmatprep.subr.mxu0 0.0
    %5190 = vmatpush1.msra.mxu0 0.0
    %5191 = vmatprep.subr.mxu0 0.0
    %5192 = vmatpush1.msra.mxu0 0.0
    %5193 = vmatprep.subr.mxu0 0.0
    %5194 = vmatpush1.msra.mxu0 0.0
    %5195 = vmatprep.subr.mxu0 0.0
    %5196 = vmatpush1.msra.mxu0 0.0
    %5197 = vmatprep.subr.mxu0 0.0
    %5198 = vmatpush1.msra.mxu0 0.0
    %5199 = vmatprep.subr.mxu0 0.0
    %5200 = vmatpush1.msra.mxu0 0.0
    %5201 = vmatprep.subr.mxu0 0.0
    %5202 = vmatpush1.msra.mxu0 0.0
    %5203 = vmatprep.subr.mxu0 0.0
    %5204 = vmatpush1.msra.mxu0 0.0
    %5205 = vmatprep.subr.mxu0 0.0
    %5206 = vmatpush1.msra.mxu0 0.0
    %5207 = vmatprep.subr.mxu0 0.0
    %5208 = vmatpush1.msra.mxu0 0.0
    %5209 = vmatprep.subr.mxu0 0.0
    %5210 = vmatpush1.msra.mxu0 0.0
    %5211 = vmatprep.subr.mxu0 0.0
    %5212 = vmatpush1.msra.mxu0 0.0
    %5213 = vmatprep.subr.mxu0 0.0
    %5214 = vmatpush1.msra.mxu0 0.0
    %5215 = vmatprep.mubr.f32.mxu0 0.0
    %5216 = vmatmul.mubr.f32.gmra.mrb[0].mxu0 %v5104
    %v5217 = vpop.f32.mrb[0].mxu0
    %v5218 = vadd.f32 %v5025, %v5217
    %v5219 = vpop.f32.mrb[0].mxu0
    %5220 = vmatprep.mubr.f32.mxu0 0.0
    %5221 = vmatmul.mubr.f32.gmra.mrb[0].mxu0 %v5107
    %v5222 = vpop.f32.mrb[0].mxu0
    %v5223 = vadd.f32 %v5030, %v5222
    %v5224 = vpop.f32.mrb[0].mxu0
    %5225 = vmatprep.mubr.f32.mxu0 0.0
    %5226 = vmatmul.mubr.f32.gmra.mrb[0].mxu0 %v5110
    %v5227 = vpop.f32.mrb[0].mxu0
    %v5228 = vadd.f32 %v5035, %v5227
    %v5229 = vpop.f32.mrb[0].mxu0
    %5230 = vmatprep.mubr.f32.mxu0 0.0
    %5231 = vmatmul.mubr.f32.gmra.mrb[0].mxu0 %v5113
    %v5232 = vpop.f32.mrb[0].mxu0
    %v5233 = vadd.f32 %v5040, %v5232
    %v5234 = vpop.f32.mrb[0].mxu0
    %5235 = vmatprep.mubr.f32.mxu0 0.0
    %5236 = vmatmul.mubr.f32.gmra.mrb[0].mxu0 %v5116
    %v5237 = vpop.f32.mrb[0].mxu0
    %v5238 = vadd.f32 %v5045, %v5237
    %v5239 = vpop.f32.mrb[0].mxu0
    %5240 = vmatprep.mubr.f32.mxu0 0.0
    %5241 = vmatmul.mubr.f32.gmra.mrb[0].mxu0 %v5119
    %v5242 = vpop.f32.mrb[0].mxu0
    %v5243 = vadd.f32 %v5050, %v5242
    %v5244 = vpop.f32.mrb[0].mxu0
    %5245 = vmatprep.mubr.f32.mxu0 0.0
    %5246 = vmatmul.mubr.f32.gmra.mrb[0].mxu0 %v5122
    %v5247 = vpop.f32.mrb[0].mxu0
    %v5248 = vadd.f32 %v5055, %v5247
    %v5249 = vpop.f32.mrb[0].mxu0
    %5250 = vmatprep.mubr.f32.mxu0 0.0
    %5251 = vmatmul.mubr.f32.gmra.mrb[0].mxu0 %v5125
    %v5252 = vpop.f32.mrb[0].mxu0
    %v5253 = vadd.f32 %v5060, %v5252
    %v5254 = vpop.f32.mrb[0].mxu0
    %5255 = vmatprep.mubr.f32.mxu0 0.0
    %5256 = vmatmul.mubr.f32.gmra.mrb[0].mxu0 %v5128
    %v5257 = vpop.f32.mrb[0].mxu0
    %v5258 = vadd.f32 %v5065, %v5257
    %v5259 = vpop.f32.mrb[0].mxu0
    %5260 = vmatprep.mubr.f32.mxu0 0.0
    %5261 = vmatmul.mubr.f32.gmra.mrb[0].mxu0 %v5131
    %v5262 = vpop.f32.mrb[0].mxu0
    %v5263 = vadd.f32 %v5070, %v5262
    %v5264 = vpop.f32.mrb[0].mxu0
    %5265 = vmatprep.mubr.f32.mxu0 0.0
    %5266 = vmatmul.mubr.f32.gmra.mrb[0].mxu0 %v5134
    %v5267 = vpop.f32.mrb[0].mxu0
    %v5268 = vadd.f32 %v5075, %v5267
    %v5269 = vpop.f32.mrb[0].mxu0
    %5270 = vmatprep.mubr.f32.mxu0 0.0
    %5271 = vmatmul.mubr.f32.gmra.mrb[0].mxu0 %v5137
    %v5272 = vpop.f32.mrb[0].mxu0
    %v5273 = vadd.f32 %v5080, %v5272
    %v5274 = vpop.f32.mrb[0].mxu0
    %5275 = vmatprep.mubr.f32.mxu0 0.0
    %5276 = vmatmul.mubr.f32.gmra.mrb[0].mxu0 %v5140
    %v5277 = vpop.f32.mrb[0].mxu0
    %v5278 = vadd.f32 %v5085, %v5277
    %v5279 = vpop.f32.mrb[0].mxu0
    %5280 = vmatprep.mubr.f32.mxu0 0.0
    %5281 = vmatmul.mubr.f32.gmra.mrb[0].mxu0 %v5143
    %v5282 = vpop.f32.mrb[0].mxu0
    %v5283 = vadd.f32 %v5090, %v5282
    %v5284 = vpop.f32.mrb[0].mxu0
    %5285 = vmatprep.mubr.f32.mxu0 0.0
    %5286 = vmatmul.mubr.f32.gmra.mrb[0].mxu0 %v5146
    %v5287 = vpop.f32.mrb[0].mxu0
    %v5288 = vadd.f32 %v5095, %v5287
    %v5289 = vpop.f32.mrb[0].mxu0
    %5290 = vmatprep.mubr.f32.mxu0 0.0
    %5291 = vmatmul.mubr.f32.gmra.mrb[0].mxu0 %v5149
    %v5292 = vpop.f32.mrb[0].mxu0
    %v5293 = vadd.f32 %v5100, %v5292
    %v5294 = vpop.f32.mrb[0].mxu0
    %5295 = vdwg.mxu0
    %s5296 = scalar_lea.vmem %s12, 256
    %v5297 = vld [vmem:[%s5296] sm:$0xff]
    %v5298 = vld [vmem:[%s5296 + $0x8] sm:$0xff]
    %v5299 = vld [vmem:[%s5296 + $0x10] sm:$0xff]
    %v5300 = vld [vmem:[%s5296 + $0x18] sm:$0xff]
    %v5301 = vld [vmem:[%s5296 + $0x20] sm:$0xff]
    %v5302 = vld [vmem:[%s5296 + $0x28] sm:$0xff]
    %v5303 = vld [vmem:[%s5296 + $0x30] sm:$0xff]
    %v5304 = vld [vmem:[%s5296 + $0x38] sm:$0xff]
    %v5305 = vld [vmem:[%s5296 + $0x40] sm:$0xff]
    %v5306 = vld [vmem:[%s5296 + $0x48] sm:$0xff]
    %v5307 = vld [vmem:[%s5296 + $0x50] sm:$0xff]
    %v5308 = vld [vmem:[%s5296 + $0x58] sm:$0xff]
    %v5309 = vld [vmem:[%s5296 + $0x60] sm:$0xff]
    %v5310 = vld [vmem:[%s5296 + $0x68] sm:$0xff]
    %v5311 = vld [vmem:[%s5296 + $0x70] sm:$0xff]
    %v5312 = vld [vmem:[%s5296 + $0x78] sm:$0xff]
    %5313 = vmatprep.subr.mxu0 0.0
    %5314 = vmatpush1.msra.mxu0 %v4566
    %5315 = vmatprep.subr.mxu0 0.0
    %5316 = vmatpush1.msra.mxu0 %v4567
    %5317 = vmatprep.subr.mxu0 0.0
    %5318 = vmatpush1.msra.mxu0 %v4568
    %5319 = vmatprep.subr.mxu0 0.0
    %5320 = vmatpush1.msra.mxu0 %v4569
    %5321 = vmatprep.subr.mxu0 0.0
    %5322 = vmatpush1.msra.mxu0 %v4570
    %5323 = vmatprep.subr.mxu0 0.0
    %5324 = vmatpush1.msra.mxu0 %v4571
    %5325 = vmatprep.subr.mxu0 0.0
    %5326 = vmatpush1.msra.mxu0 %v4572
    %5327 = vmatprep.subr.mxu0 0.0
    %5328 = vmatpush1.msra.mxu0 %v4573
    %5329 = vmatprep.subr.mxu0 0.0
    %5330 = vmatpush1.msra.mxu0 %v4574
    %5331 = vmatprep.subr.mxu0 0.0
    %5332 = vmatpush1.msra.mxu0 %v4575
    %5333 = vmatprep.subr.mxu0 0.0
    %5334 = vmatpush1.msra.mxu0 %v4576
    %5335 = vmatprep.subr.mxu0 0.0
    %5336 = vmatpush1.msra.mxu0 %v4577
    %5337 = vmatprep.subr.mxu0 0.0
    %5338 = vmatpush1.msra.mxu0 %v4578
    %5339 = vmatprep.subr.mxu0 0.0
    %5340 = vmatpush1.msra.mxu0 %v4579
    %5341 = vmatprep.subr.mxu0 0.0
    %5342 = vmatpush1.msra.mxu0 %v4580
    %5343 = vmatprep.subr.mxu0 0.0
    %5344 = vmatpush1.msra.mxu0 %v4581
    %5345 = vmatprep.subr.mxu0 0.0
    %5346 = vmatpush1.msra.mxu0 0.0
    %5347 = vmatprep.subr.mxu0 0.0
    %5348 = vmatpush1.msra.mxu0 0.0
    %5349 = vmatprep.subr.mxu0 0.0
    %5350 = vmatpush1.msra.mxu0 0.0
    %5351 = vmatprep.subr.mxu0 0.0
    %5352 = vmatpush1.msra.mxu0 0.0
    %5353 = vmatprep.subr.mxu0 0.0
    %5354 = vmatpush1.msra.mxu0 0.0
    %5355 = vmatprep.subr.mxu0 0.0
    %5356 = vmatpush1.msra.mxu0 0.0
    %5357 = vmatprep.subr.mxu0 0.0
    %5358 = vmatpush1.msra.mxu0 0.0
    %5359 = vmatprep.subr.mxu0 0.0
    %5360 = vmatpush1.msra.mxu0 0.0
    %5361 = vmatprep.subr.mxu0 0.0
    %5362 = vmatpush1.msra.mxu0 0.0
    %5363 = vmatprep.subr.mxu0 0.0
    %5364 = vmatpush1.msra.mxu0 0.0
    %5365 = vmatprep.subr.mxu0 0.0
    %5366 = vmatpush1.msra.mxu0 0.0
    %5367 = vmatprep.subr.mxu0 0.0
    %5368 = vmatpush1.msra.mxu0 0.0
    %5369 = vmatprep.subr.mxu0 0.0
    %5370 = vmatpush1.msra.mxu0 0.0
    %5371 = vmatprep.subr.mxu0 0.0
    %5372 = vmatpush1.msra.mxu0 0.0
    %5373 = vmatprep.subr.mxu0 0.0
    %5374 = vmatpush1.msra.mxu0 0.0
    %5375 = vmatprep.subr.mxu0 0.0
    %5376 = vmatpush1.msra.mxu0 0.0
    %5377 = vmatprep.mubr.f32.mxu0 0.0
    %5378 = vmatmul.mubr.f32.gmra.mrb[0].mxu0 %v5297
    %v5379 = vpop.f32.mrb[0].mxu0
    %v5380 = vadd.f32 0.0, %v5379
    %v5381 = vpop.f32.mrb[0].mxu0
    %5382 = vmatprep.mubr.f32.mxu0 0.0
    %5383 = vmatmul.mubr.f32.gmra.mrb[0].mxu0 %v5298
    %v5384 = vpop.f32.mrb[0].mxu0
    %v5385 = vadd.f32 0.0, %v5384
    %v5386 = vpop.f32.mrb[0].mxu0
    %5387 = vmatprep.mubr.f32.mxu0 0.0
    %5388 = vmatmul.mubr.f32.gmra.mrb[0].mxu0 %v5299
    %v5389 = vpop.f32.mrb[0].mxu0
    %v5390 = vadd.f32 0.0, %v5389
    %v5391 = vpop.f32.mrb[0].mxu0
    %5392 = vmatprep.mubr.f32.mxu0 0.0
    %5393 = vmatmul.mubr.f32.gmra.mrb[0].mxu0 %v5300
    %v5394 = vpop.f32.mrb[0].mxu0
    %v5395 = vadd.f32 0.0, %v5394
    %v5396 = vpop.f32.mrb[0].mxu0
    %5397 = vmatprep.mubr.f32.mxu0 0.0
    %5398 = vmatmul.mubr.f32.gmra.mrb[0].mxu0 %v5301
    %v5399 = vpop.f32.mrb[0].mxu0
    %v5400 = vadd.f32 0.0, %v5399
    %v5401 = vpop.f32.mrb[0].mxu0
    %5402 = vmatprep.mubr.f32.mxu0 0.0
    %5403 = vmatmul.mubr.f32.gmra.mrb[0].mxu0 %v5302
    %v5404 = vpop.f32.mrb[0].mxu0
    %v5405 = vadd.f32 0.0, %v5404
    %v5406 = vpop.f32.mrb[0].mxu0
    %5407 = vmatprep.mubr.f32.mxu0 0.0
    %5408 = vmatmul.mubr.f32.gmra.mrb[0].mxu0 %v5303
    %v5409 = vpop.f32.mrb[0].mxu0
    %v5410 = vadd.f32 0.0, %v5409
    %v5411 = vpop.f32.mrb[0].mxu0
    %5412 = vmatprep.mubr.f32.mxu0 0.0
    %5413 = vmatmul.mubr.f32.gmra.mrb[0].mxu0 %v5304
    %v5414 = vpop.f32.mrb[0].mxu0
    %v5415 = vadd.f32 0.0, %v5414
    %v5416 = vpop.f32.mrb[0].mxu0
    %5417 = vmatprep.mubr.f32.mxu0 0.0
    %5418 = vmatmul.mubr.f32.gmra.mrb[0].mxu0 %v5305
    %v5419 = vpop.f32.mrb[0].mxu0
    %v5420 = vadd.f32 0.0, %v5419
    %v5421 = vpop.f32.mrb[0].mxu0
    %5422 = vmatprep.mubr.f32.mxu0 0.0
    %5423 = vmatmul.mubr.f32.gmra.mrb[0].mxu0 %v5306
    %v5424 = vpop.f32.mrb[0].mxu0
    %v5425 = vadd.f32 0.0, %v5424
    %v5426 = vpop.f32.mrb[0].mxu0
    %5427 = vmatprep.mubr.f32.mxu0 0.0
    %5428 = vmatmul.mubr.f32.gmra.mrb[0].mxu0 %v5307
    %v5429 = vpop.f32.mrb[0].mxu0
    %v5430 = vadd.f32 0.0, %v5429
    %v5431 = vpop.f32.mrb[0].mxu0
    %5432 = vmatprep.mubr.f32.mxu0 0.0
    %5433 = vmatmul.mubr.f32.gmra.mrb[0].mxu0 %v5308
    %v5434 = vpop.f32.mrb[0].mxu0
    %v5435 = vadd.f32 0.0, %v5434
    %v5436 = vpop.f32.mrb[0].mxu0
    %5437 = vmatprep.mubr.f32.mxu0 0.0
    %5438 = vmatmul.mubr.f32.gmra.mrb[0].mxu0 %v5309
    %v5439 = vpop.f32.mrb[0].mxu0
    %v5440 = vadd.f32 0.0, %v5439
    %v5441 = vpop.f32.mrb[0].mxu0
    %5442 = vmatprep.mubr.f32.mxu0 0.0
    %5443 = vmatmul.mubr.f32.gmra.mrb[0].mxu0 %v5310
    %v5444 = vpop.f32.mrb[0].mxu0
    %v5445 = vadd.f32 0.0, %v5444
    %v5446 = vpop.f32.mrb[0].mxu0
    %5447 = vmatprep.mubr.f32.mxu0 0.0
    %5448 = vmatmul.mubr.f32.gmra.mrb[0].mxu0 %v5311
    %v5449 = vpop.f32.mrb[0].mxu0
    %v5450 = vadd.f32 0.0, %v5449
    %v5451 = vpop.f32.mrb[0].mxu0
    %5452 = vmatprep.mubr.f32.mxu0 0.0
    %5453 = vmatmul.mubr.f32.gmra.mrb[0].mxu0 %v5312
    %v5454 = vpop.f32.mrb[0].mxu0
    %v5455 = vadd.f32 0.0, %v5454
    %v5456 = vpop.f32.mrb[0].mxu0
    %5457 = vdwg.mxu0
    %s5458 = scalar_lea.vmem [#allocation9], 32
    %v5459 = vld [vmem:[%s5458] sm:$0xff]
    %v5460 = vld [vmem:[%s5458 + $0x8] sm:$0xff]
    %v5462 = vsel %vm199, %v5380, 0
    %v5465 = vsel %vm199, %v5385, 0
    %v5468 = vsel %vm199, %v5390, 0
    %v5471 = vsel %vm199, %v5395, 0
    %v5474 = vsel %vm199, %v5400, 0
    %v5477 = vsel %vm199, %v5405, 0
    %v5480 = vsel %vm199, %v5410, 0
    %v5483 = vsel %vm199, %v5415, 0
    %v5486 = vsel %vm199, %v5420, 0
    %v5489 = vsel %vm199, %v5425, 0
    %v5492 = vsel %vm199, %v5430, 0
    %v5495 = vsel %vm199, %v5435, 0
    %v5498 = vsel %vm199, %v5440, 0
    %v5501 = vsel %vm199, %v5445, 0
    %v5504 = vsel %vm199, %v5450, 0
    %v5507 = vsel %vm199, %v5455, 0
    %5509 = vmatprep.subr.mxu0 0.0
    %5510 = vmatpush1.msra.mxu0 %v5459
    %5511 = vmatprep.subr.mxu0 0.0
    %5512 = vmatpush1.msra.mxu0 %v5460
    %5513 = vmatprep.subr.mxu0 0.0
    %5514 = vmatpush1.msra.mxu0 0.0
    %5515 = vmatprep.subr.mxu0 0.0
    %5516 = vmatpush1.msra.mxu0 0.0
    %5517 = vmatprep.subr.mxu0 0.0
    %5518 = vmatpush1.msra.mxu0 0.0
    %5519 = vmatprep.subr.mxu0 0.0
    %5520 = vmatpush1.msra.mxu0 0.0
    %5521 = vmatprep.subr.mxu0 0.0
    %5522 = vmatpush1.msra.mxu0 0.0
    %5523 = vmatprep.subr.mxu0 0.0
    %5524 = vmatpush1.msra.mxu0 0.0
    %5525 = vmatprep.subr.mxu0 0.0
    %5526 = vmatpush1.msra.mxu0 0.0
    %5527 = vmatprep.subr.mxu0 0.0
    %5528 = vmatpush1.msra.mxu0 0.0
    %5529 = vmatprep.subr.mxu0 0.0
    %5530 = vmatpush1.msra.mxu0 0.0
    %5531 = vmatprep.subr.mxu0 0.0
    %5532 = vmatpush1.msra.mxu0 0.0
    %5533 = vmatprep.subr.mxu0 0.0
    %5534 = vmatpush1.msra.mxu0 0.0
    %5535 = vmatprep.subr.mxu0 0.0
    %5536 = vmatpush1.msra.mxu0 0.0
    %5537 = vmatprep.subr.mxu0 0.0
    %5538 = vmatpush1.msra.mxu0 0.0
    %5539 = vmatprep.subr.mxu0 0.0
    %5540 = vmatpush1.msra.mxu0 0.0
    %5541 = vmatprep.subr.mxu0 0.0
    %5542 = vmatpush1.msra.mxu0 0.0
    %5543 = vmatprep.subr.mxu0 0.0
    %5544 = vmatpush1.msra.mxu0 0.0
    %5545 = vmatprep.subr.mxu0 0.0
    %5546 = vmatpush1.msra.mxu0 0.0
    %5547 = vmatprep.subr.mxu0 0.0
    %5548 = vmatpush1.msra.mxu0 0.0
    %5549 = vmatprep.subr.mxu0 0.0
    %5550 = vmatpush1.msra.mxu0 0.0
    %5551 = vmatprep.subr.mxu0 0.0
    %5552 = vmatpush1.msra.mxu0 0.0
    %5553 = vmatprep.subr.mxu0 0.0
    %5554 = vmatpush1.msra.mxu0 0.0
    %5555 = vmatprep.subr.mxu0 0.0
    %5556 = vmatpush1.msra.mxu0 0.0
    %5557 = vmatprep.subr.mxu0 0.0
    %5558 = vmatpush1.msra.mxu0 0.0
    %5559 = vmatprep.subr.mxu0 0.0
    %5560 = vmatpush1.msra.mxu0 0.0
    %5561 = vmatprep.subr.mxu0 0.0
    %5562 = vmatpush1.msra.mxu0 0.0
    %5563 = vmatprep.subr.mxu0 0.0
    %5564 = vmatpush1.msra.mxu0 0.0
    %5565 = vmatprep.subr.mxu0 0.0
    %5566 = vmatpush1.msra.mxu0 0.0
    %5567 = vmatprep.subr.mxu0 0.0
    %5568 = vmatpush1.msra.mxu0 0.0
    %5569 = vmatprep.subr.mxu0 0.0
    %5570 = vmatpush1.msra.mxu0 0.0
    %5571 = vmatprep.subr.mxu0 0.0
    %5572 = vmatpush1.msra.mxu0 0.0
    %5573 = vmatprep.mubr.f32.mxu0 0.0
    %5574 = vmatmul.mubr.f32.gmra.mrb[0].mxu0 %v5462
    %v5575 = vpop.f32.mrb[0].mxu0
    %v5576 = vadd.f32 0.0, %v5575
    %v5577 = vpop.f32.mrb[0].mxu0
    %5578 = vmatprep.mubr.f32.mxu0 0.0
    %5579 = vmatmul.mubr.f32.gmra.mrb[0].mxu0 %v5465
    %v5580 = vpop.f32.mrb[0].mxu0
    %v5581 = vadd.f32 0.0, %v5580
    %v5582 = vpop.f32.mrb[0].mxu0
    %5583 = vmatprep.mubr.f32.mxu0 0.0
    %5584 = vmatmul.mubr.f32.gmra.mrb[0].mxu0 %v5468
    %v5585 = vpop.f32.mrb[0].mxu0
    %v5586 = vadd.f32 0.0, %v5585
    %v5587 = vpop.f32.mrb[0].mxu0
    %5588 = vmatprep.mubr.f32.mxu0 0.0
    %5589 = vmatmul.mubr.f32.gmra.mrb[0].mxu0 %v5471
    %v5590 = vpop.f32.mrb[0].mxu0
    %v5591 = vadd.f32 0.0, %v5590
    %v5592 = vpop.f32.mrb[0].mxu0
    %5593 = vmatprep.mubr.f32.mxu0 0.0
    %5594 = vmatmul.mubr.f32.gmra.mrb[0].mxu0 %v5474
    %v5595 = vpop.f32.mrb[0].mxu0
    %v5596 = vadd.f32 0.0, %v5595
    %v5597 = vpop.f32.mrb[0].mxu0
    %5598 = vmatprep.mubr.f32.mxu0 0.0
    %5599 = vmatmul.mubr.f32.gmra.mrb[0].mxu0 %v5477
    %v5600 = vpop.f32.mrb[0].mxu0
    %v5601 = vadd.f32 0.0, %v5600
    %v5602 = vpop.f32.mrb[0].mxu0
    %5603 = vmatprep.mubr.f32.mxu0 0.0
    %5604 = vmatmul.mubr.f32.gmra.mrb[0].mxu0 %v5480
    %v5605 = vpop.f32.mrb[0].mxu0
    %v5606 = vadd.f32 0.0, %v5605
    %v5607 = vpop.f32.mrb[0].mxu0
    %5608 = vmatprep.mubr.f32.mxu0 0.0
    %5609 = vmatmul.mubr.f32.gmra.mrb[0].mxu0 %v5483
    %v5610 = vpop.f32.mrb[0].mxu0
    %v5611 = vadd.f32 0.0, %v5610
    %v5612 = vpop.f32.mrb[0].mxu0
    %5613 = vmatprep.mubr.f32.mxu0 0.0
    %5614 = vmatmul.mubr.f32.gmra.mrb[0].mxu0 %v5486
    %v5615 = vpop.f32.mrb[0].mxu0
    %v5616 = vadd.f32 0.0, %v5615
    %v5617 = vpop.f32.mrb[0].mxu0
    %5618 = vmatprep.mubr.f32.mxu0 0.0
    %5619 = vmatmul.mubr.f32.gmra.mrb[0].mxu0 %v5489
    %v5620 = vpop.f32.mrb[0].mxu0
    %v5621 = vadd.f32 0.0, %v5620
    %v5622 = vpop.f32.mrb[0].mxu0
    %5623 = vmatprep.mubr.f32.mxu0 0.0
    %5624 = vmatmul.mubr.f32.gmra.mrb[0].mxu0 %v5492
    %v5625 = vpop.f32.mrb[0].mxu0
    %v5626 = vadd.f32 0.0, %v5625
    %v5627 = vpop.f32.mrb[0].mxu0
    %5628 = vmatprep.mubr.f32.mxu0 0.0
    %5629 = vmatmul.mubr.f32.gmra.mrb[0].mxu0 %v5495
    %v5630 = vpop.f32.mrb[0].mxu0
    %v5631 = vadd.f32 0.0, %v5630
    %v5632 = vpop.f32.mrb[0].mxu0
    %5633 = vmatprep.mubr.f32.mxu0 0.0
    %5634 = vmatmul.mubr.f32.gmra.mrb[0].mxu0 %v5498
    %v5635 = vpop.f32.mrb[0].mxu0
    %v5636 = vadd.f32 0.0, %v5635
    %v5637 = vpop.f32.mrb[0].mxu0
    %5638 = vmatprep.mubr.f32.mxu0 0.0
    %5639 = vmatmul.mubr.f32.gmra.mrb[0].mxu0 %v5501
    %v5640 = vpop.f32.mrb[0].mxu0
    %v5641 = vadd.f32 0.0, %v5640
    %v5642 = vpop.f32.mrb[0].mxu0
    %5643 = vmatprep.mubr.f32.mxu0 0.0
    %5644 = vmatmul.mubr.f32.gmra.mrb[0].mxu0 %v5504
    %v5645 = vpop.f32.mrb[0].mxu0
    %v5646 = vadd.f32 0.0, %v5645
    %v5647 = vpop.f32.mrb[0].mxu0
    %5648 = vmatprep.mubr.f32.mxu0 0.0
    %5649 = vmatmul.mubr.f32.gmra.mrb[0].mxu0 %v5507
    %v5650 = vpop.f32.mrb[0].mxu0
    %v5651 = vadd.f32 0.0, %v5650
    %v5652 = vpop.f32.mrb[0].mxu0
    %5653 = vdwg.mxu0
    %v5654 = vadd.f32 %v5218, %v5576
    %v5655 = vadd.f32 %v5223, %v5581
    %v5656 = vadd.f32 %v5228, %v5586
    %v5657 = vadd.f32 %v5233, %v5591
    %v5658 = vadd.f32 %v5238, %v5596
    %v5659 = vadd.f32 %v5243, %v5601
    %v5660 = vadd.f32 %v5248, %v5606
    %v5661 = vadd.f32 %v5253, %v5611
    %v5662 = vadd.f32 %v5258, %v5616
    %v5663 = vadd.f32 %v5263, %v5621
    %v5664 = vadd.f32 %v5268, %v5626
    %v5665 = vadd.f32 %v5273, %v5631
    %v5666 = vadd.f32 %v5278, %v5636
    %v5667 = vadd.f32 %v5283, %v5641
    %v5668 = vadd.f32 %v5288, %v5646
    %v5669 = vadd.f32 %v5293, %v5651
    %s5670 = scalar_lea.vmem %s12, 384
    %v5671 = vld [vmem:[%s5670] sm:$0xff]
    %v5672 = vld [vmem:[%s5670 + $0x8] sm:$0xff]
    %v5673 = vld [vmem:[%s5670 + $0x10] sm:$0xff]
    %v5674 = vld [vmem:[%s5670 + $0x18] sm:$0xff]
    %v5675 = vld [vmem:[%s5670 + $0x20] sm:$0xff]
    %v5676 = vld [vmem:[%s5670 + $0x28] sm:$0xff]
    %v5677 = vld [vmem:[%s5670 + $0x30] sm:$0xff]
    %v5678 = vld [vmem:[%s5670 + $0x38] sm:$0xff]
    %v5679 = vld [vmem:[%s5670 + $0x40] sm:$0xff]
    %v5680 = vld [vmem:[%s5670 + $0x48] sm:$0xff]
    %v5681 = vld [vmem:[%s5670 + $0x50] sm:$0xff]
    %v5682 = vld [vmem:[%s5670 + $0x58] sm:$0xff]
    %v5683 = vld [vmem:[%s5670 + $0x60] sm:$0xff]
    %v5684 = vld [vmem:[%s5670 + $0x68] sm:$0xff]
    %v5685 = vld [vmem:[%s5670 + $0x70] sm:$0xff]
    %v5686 = vld [vmem:[%s5670 + $0x78] sm:$0xff]
    %5687 = vmatprep.subr.mxu0 0.0
    %5688 = vmatpush1.msra.mxu0 %v4566
    %5689 = vmatprep.subr.mxu0 0.0
    %5690 = vmatpush1.msra.mxu0 %v4567
    %5691 = vmatprep.subr.mxu0 0.0
    %5692 = vmatpush1.msra.mxu0 %v4568
    %5693 = vmatprep.subr.mxu0 0.0
    %5694 = vmatpush1.msra.mxu0 %v4569
    %5695 = vmatprep.subr.mxu0 0.0
    %5696 = vmatpush1.msra.mxu0 %v4570
    %5697 = vmatprep.subr.mxu0 0.0
    %5698 = vmatpush1.msra.mxu0 %v4571
    %5699 = vmatprep.subr.mxu0 0.0
    %5700 = vmatpush1.msra.mxu0 %v4572
    %5701 = vmatprep.subr.mxu0 0.0
    %5702 = vmatpush1.msra.mxu0 %v4573
    %5703 = vmatprep.subr.mxu0 0.0
    %5704 = vmatpush1.msra.mxu0 %v4574
    %5705 = vmatprep.subr.mxu0 0.0
    %5706 = vmatpush1.msra.mxu0 %v4575
    %5707 = vmatprep.subr.mxu0 0.0
    %5708 = vmatpush1.msra.mxu0 %v4576
    %5709 = vmatprep.subr.mxu0 0.0
    %5710 = vmatpush1.msra.mxu0 %v4577
    %5711 = vmatprep.subr.mxu0 0.0
    %5712 = vmatpush1.msra.mxu0 %v4578
    %5713 = vmatprep.subr.mxu0 0.0
    %5714 = vmatpush1.msra.mxu0 %v4579
    %5715 = vmatprep.subr.mxu0 0.0
    %5716 = vmatpush1.msra.mxu0 %v4580
    %5717 = vmatprep.subr.mxu0 0.0
    %5718 = vmatpush1.msra.mxu0 %v4581
    %5719 = vmatprep.subr.mxu0 0.0
    %5720 = vmatpush1.msra.mxu0 0.0
    %5721 = vmatprep.subr.mxu0 0.0
    %5722 = vmatpush1.msra.mxu0 0.0
    %5723 = vmatprep.subr.mxu0 0.0
    %5724 = vmatpush1.msra.mxu0 0.0
    %5725 = vmatprep.subr.mxu0 0.0
    %5726 = vmatpush1.msra.mxu0 0.0
    %5727 = vmatprep.subr.mxu0 0.0
    %5728 = vmatpush1.msra.mxu0 0.0
    %5729 = vmatprep.subr.mxu0 0.0
    %5730 = vmatpush1.msra.mxu0 0.0
    %5731 = vmatprep.subr.mxu0 0.0
    %5732 = vmatpush1.msra.mxu0 0.0
    %5733 = vmatprep.subr.mxu0 0.0
    %5734 = vmatpush1.msra.mxu0 0.0
    %5735 = vmatprep.subr.mxu0 0.0
    %5736 = vmatpush1.msra.mxu0 0.0
    %5737 = vmatprep.subr.mxu0 0.0
    %5738 = vmatpush1.msra.mxu0 0.0
    %5739 = vmatprep.subr.mxu0 0.0
    %5740 = vmatpush1.msra.mxu0 0.0
    %5741 = vmatprep.subr.mxu0 0.0
    %5742 = vmatpush1.msra.mxu0 0.0
    %5743 = vmatprep.subr.mxu0 0.0
    %5744 = vmatpush1.msra.mxu0 0.0
    %5745 = vmatprep.subr.mxu0 0.0
    %5746 = vmatpush1.msra.mxu0 0.0
    %5747 = vmatprep.subr.mxu0 0.0
    %5748 = vmatpush1.msra.mxu0 0.0
    %5749 = vmatprep.subr.mxu0 0.0
    %5750 = vmatpush1.msra.mxu0 0.0
    %5751 = vmatprep.mubr.f32.mxu0 0.0
    %5752 = vmatmul.mubr.f32.gmra.mrb[0].mxu0 %v5671
    %v5753 = vpop.f32.mrb[0].mxu0
    %v5754 = vadd.f32 0.0, %v5753
    %v5755 = vpop.f32.mrb[0].mxu0
    %5756 = vmatprep.mubr.f32.mxu0 0.0
    %5757 = vmatmul.mubr.f32.gmra.mrb[0].mxu0 %v5672
    %v5758 = vpop.f32.mrb[0].mxu0
    %v5759 = vadd.f32 0.0, %v5758
    %v5760 = vpop.f32.mrb[0].mxu0
    %5761 = vmatprep.mubr.f32.mxu0 0.0
    %5762 = vmatmul.mubr.f32.gmra.mrb[0].mxu0 %v5673
    %v5763 = vpop.f32.mrb[0].mxu0
    %v5764 = vadd.f32 0.0, %v5763
    %v5765 = vpop.f32.mrb[0].mxu0
    %5766 = vmatprep.mubr.f32.mxu0 0.0
    %5767 = vmatmul.mubr.f32.gmra.mrb[0].mxu0 %v5674
    %v5768 = vpop.f32.mrb[0].mxu0
    %v5769 = vadd.f32 0.0, %v5768
    %v5770 = vpop.f32.mrb[0].mxu0
    %5771 = vmatprep.mubr.f32.mxu0 0.0
    %5772 = vmatmul.mubr.f32.gmra.mrb[0].mxu0 %v5675
    %v5773 = vpop.f32.mrb[0].mxu0
    %v5774 = vadd.f32 0.0, %v5773
    %v5775 = vpop.f32.mrb[0].mxu0
    %5776 = vmatprep.mubr.f32.mxu0 0.0
    %5777 = vmatmul.mubr.f32.gmra.mrb[0].mxu0 %v5676
    %v5778 = vpop.f32.mrb[0].mxu0
    %v5779 = vadd.f32 0.0, %v5778
    %v5780 = vpop.f32.mrb[0].mxu0
    %5781 = vmatprep.mubr.f32.mxu0 0.0
    %5782 = vmatmul.mubr.f32.gmra.mrb[0].mxu0 %v5677
    %v5783 = vpop.f32.mrb[0].mxu0
    %v5784 = vadd.f32 0.0, %v5783
    %v5785 = vpop.f32.mrb[0].mxu0
    %5786 = vmatprep.mubr.f32.mxu0 0.0
    %5787 = vmatmul.mubr.f32.gmra.mrb[0].mxu0 %v5678
    %v5788 = vpop.f32.mrb[0].mxu0
    %v5789 = vadd.f32 0.0, %v5788
    %v5790 = vpop.f32.mrb[0].mxu0
    %5791 = vmatprep.mubr.f32.mxu0 0.0
    %5792 = vmatmul.mubr.f32.gmra.mrb[0].mxu0 %v5679
    %v5793 = vpop.f32.mrb[0].mxu0
    %v5794 = vadd.f32 0.0, %v5793
    %v5795 = vpop.f32.mrb[0].mxu0
    %5796 = vmatprep.mubr.f32.mxu0 0.0
    %5797 = vmatmul.mubr.f32.gmra.mrb[0].mxu0 %v5680
    %v5798 = vpop.f32.mrb[0].mxu0
    %v5799 = vadd.f32 0.0, %v5798
    %v5800 = vpop.f32.mrb[0].mxu0
    %5801 = vmatprep.mubr.f32.mxu0 0.0
    %5802 = vmatmul.mubr.f32.gmra.mrb[0].mxu0 %v5681
    %v5803 = vpop.f32.mrb[0].mxu0
    %v5804 = vadd.f32 0.0, %v5803
    %v5805 = vpop.f32.mrb[0].mxu0
    %5806 = vmatprep.mubr.f32.mxu0 0.0
    %5807 = vmatmul.mubr.f32.gmra.mrb[0].mxu0 %v5682
    %v5808 = vpop.f32.mrb[0].mxu0
    %v5809 = vadd.f32 0.0, %v5808
    %v5810 = vpop.f32.mrb[0].mxu0
    %5811 = vmatprep.mubr.f32.mxu0 0.0
    %5812 = vmatmul.mubr.f32.gmra.mrb[0].mxu0 %v5683
    %v5813 = vpop.f32.mrb[0].mxu0
    %v5814 = vadd.f32 0.0, %v5813
    %v5815 = vpop.f32.mrb[0].mxu0
    %5816 = vmatprep.mubr.f32.mxu0 0.0
    %5817 = vmatmul.mubr.f32.gmra.mrb[0].mxu0 %v5684
    %v5818 = vpop.f32.mrb[0].mxu0
    %v5819 = vadd.f32 0.0, %v5818
    %v5820 = vpop.f32.mrb[0].mxu0
    %5821 = vmatprep.mubr.f32.mxu0 0.0
    %5822 = vmatmul.mubr.f32.gmra.mrb[0].mxu0 %v5685
    %v5823 = vpop.f32.mrb[0].mxu0
    %v5824 = vadd.f32 0.0, %v5823
    %v5825 = vpop.f32.mrb[0].mxu0
    %5826 = vmatprep.mubr.f32.mxu0 0.0
    %5827 = vmatmul.mubr.f32.gmra.mrb[0].mxu0 %v5686
    %v5828 = vpop.f32.mrb[0].mxu0
    %v5829 = vadd.f32 0.0, %v5828
    %v5830 = vpop.f32.mrb[0].mxu0
    %5831 = vdwg.mxu0
    %s5832 = scalar_lea.vmem [#allocation9], 48
    %v5833 = vld [vmem:[%s5832] sm:$0xff]
    %v5834 = vld [vmem:[%s5832 + $0x8] sm:$0xff]
    %v5836 = vsel %vm199, %v5754, 0
    %v5839 = vsel %vm199, %v5759, 0
    %v5842 = vsel %vm199, %v5764, 0
    %v5845 = vsel %vm199, %v5769, 0
    %v5848 = vsel %vm199, %v5774, 0
    %v5851 = vsel %vm199, %v5779, 0
    %v5854 = vsel %vm199, %v5784, 0
    %v5857 = vsel %vm199, %v5789, 0
    %v5860 = vsel %vm199, %v5794, 0
    %v5863 = vsel %vm199, %v5799, 0
    %v5866 = vsel %vm199, %v5804, 0
    %v5869 = vsel %vm199, %v5809, 0
    %v5872 = vsel %vm199, %v5814, 0
    %v5875 = vsel %vm199, %v5819, 0
    %v5878 = vsel %vm199, %v5824, 0
    %v5881 = vsel %vm199, %v5829, 0
    %5883 = vmatprep.subr.mxu0 0.0
    %5884 = vmatpush1.msra.mxu0 %v5833
    %5885 = vmatprep.subr.mxu0 0.0
    %5886 = vmatpush1.msra.mxu0 %v5834
    %5887 = vmatprep.subr.mxu0 0.0
    %5888 = vmatpush1.msra.mxu0 0.0
    %5889 = vmatprep.subr.mxu0 0.0
    %5890 = vmatpush1.msra.mxu0 0.0
    %5891 = vmatprep.subr.mxu0 0.0
    %5892 = vmatpush1.msra.mxu0 0.0
    %5893 = vmatprep.subr.mxu0 0.0
    %5894 = vmatpush1.msra.mxu0 0.0
    %5895 = vmatprep.subr.mxu0 0.0
    %5896 = vmatpush1.msra.mxu0 0.0
    %5897 = vmatprep.subr.mxu0 0.0
    %5898 = vmatpush1.msra.mxu0 0.0
    %5899 = vmatprep.subr.mxu0 0.0
    %5900 = vmatpush1.msra.mxu0 0.0
    %5901 = vmatprep.subr.mxu0 0.0
    %5902 = vmatpush1.msra.mxu0 0.0
    %5903 = vmatprep.subr.mxu0 0.0
    %5904 = vmatpush1.msra.mxu0 0.0
    %5905 = vmatprep.subr.mxu0 0.0
    %5906 = vmatpush1.msra.mxu0 0.0
    %5907 = vmatprep.subr.mxu0 0.0
    %5908 = vmatpush1.msra.mxu0 0.0
    %5909 = vmatprep.subr.mxu0 0.0
    %5910 = vmatpush1.msra.mxu0 0.0
    %5911 = vmatprep.subr.mxu0 0.0
    %5912 = vmatpush1.msra.mxu0 0.0
    %5913 = vmatprep.subr.mxu0 0.0
    %5914 = vmatpush1.msra.mxu0 0.0
    %5915 = vmatprep.subr.mxu0 0.0
    %5916 = vmatpush1.msra.mxu0 0.0
    %5917 = vmatprep.subr.mxu0 0.0
    %5918 = vmatpush1.msra.mxu0 0.0
    %5919 = vmatprep.subr.mxu0 0.0
    %5920 = vmatpush1.msra.mxu0 0.0
    %5921 = vmatprep.subr.mxu0 0.0
    %5922 = vmatpush1.msra.mxu0 0.0
    %5923 = vmatprep.subr.mxu0 0.0
    %5924 = vmatpush1.msra.mxu0 0.0
    %5925 = vmatprep.subr.mxu0 0.0
    %5926 = vmatpush1.msra.mxu0 0.0
    %5927 = vmatprep.subr.mxu0 0.0
    %5928 = vmatpush1.msra.mxu0 0.0
    %5929 = vmatprep.subr.mxu0 0.0
    %5930 = vmatpush1.msra.mxu0 0.0
    %5931 = vmatprep.subr.mxu0 0.0
    %5932 = vmatpush1.msra.mxu0 0.0
    %5933 = vmatprep.subr.mxu0 0.0
    %5934 = vmatpush1.msra.mxu0 0.0
    %5935 = vmatprep.subr.mxu0 0.0
    %5936 = vmatpush1.msra.mxu0 0.0
    %5937 = vmatprep.subr.mxu0 0.0
    %5938 = vmatpush1.msra.mxu0 0.0
    %5939 = vmatprep.subr.mxu0 0.0
    %5940 = vmatpush1.msra.mxu0 0.0
    %5941 = vmatprep.subr.mxu0 0.0
    %5942 = vmatpush1.msra.mxu0 0.0
    %5943 = vmatprep.subr.mxu0 0.0
    %5944 = vmatpush1.msra.mxu0 0.0
    %5945 = vmatprep.subr.mxu0 0.0
    %5946 = vmatpush1.msra.mxu0 0.0
    %5947 = vmatprep.mubr.f32.mxu0 0.0
    %5948 = vmatmul.mubr.f32.gmra.mrb[0].mxu0 %v5836
    %v5949 = vpop.f32.mrb[0].mxu0
    %v5950 = vadd.f32 0.0, %v5949
    %v5951 = vpop.f32.mrb[0].mxu0
    %5952 = vmatprep.mubr.f32.mxu0 0.0
    %5953 = vmatmul.mubr.f32.gmra.mrb[0].mxu0 %v5839
    %v5954 = vpop.f32.mrb[0].mxu0
    %v5955 = vadd.f32 0.0, %v5954
    %v5956 = vpop.f32.mrb[0].mxu0
    %5957 = vmatprep.mubr.f32.mxu0 0.0
    %5958 = vmatmul.mubr.f32.gmra.mrb[0].mxu0 %v5842
    %v5959 = vpop.f32.mrb[0].mxu0
    %v5960 = vadd.f32 0.0, %v5959
    %v5961 = vpop.f32.mrb[0].mxu0
    %5962 = vmatprep.mubr.f32.mxu0 0.0
    %5963 = vmatmul.mubr.f32.gmra.mrb[0].mxu0 %v5845
    %v5964 = vpop.f32.mrb[0].mxu0
    %v5965 = vadd.f32 0.0, %v5964
    %v5966 = vpop.f32.mrb[0].mxu0
    %5967 = vmatprep.mubr.f32.mxu0 0.0
    %5968 = vmatmul.mubr.f32.gmra.mrb[0].mxu0 %v5848
    %v5969 = vpop.f32.mrb[0].mxu0
    %v5970 = vadd.f32 0.0, %v5969
    %v5971 = vpop.f32.mrb[0].mxu0
    %5972 = vmatprep.mubr.f32.mxu0 0.0
    %5973 = vmatmul.mubr.f32.gmra.mrb[0].mxu0 %v5851
    %v5974 = vpop.f32.mrb[0].mxu0
    %v5975 = vadd.f32 0.0, %v5974
    %v5976 = vpop.f32.mrb[0].mxu0
    %5977 = vmatprep.mubr.f32.mxu0 0.0
    %5978 = vmatmul.mubr.f32.gmra.mrb[0].mxu0 %v5854
    %v5979 = vpop.f32.mrb[0].mxu0
    %v5980 = vadd.f32 0.0, %v5979
    %v5981 = vpop.f32.mrb[0].mxu0
    %5982 = vmatprep.mubr.f32.mxu0 0.0
    %5983 = vmatmul.mubr.f32.gmra.mrb[0].mxu0 %v5857
    %v5984 = vpop.f32.mrb[0].mxu0
    %v5985 = vadd.f32 0.0, %v5984
    %v5986 = vpop.f32.mrb[0].mxu0
    %5987 = vmatprep.mubr.f32.mxu0 0.0
    %5988 = vmatmul.mubr.f32.gmra.mrb[0].mxu0 %v5860
    %v5989 = vpop.f32.mrb[0].mxu0
    %v5990 = vadd.f32 0.0, %v5989
    %v5991 = vpop.f32.mrb[0].mxu0
    %5992 = vmatprep.mubr.f32.mxu0 0.0
    %5993 = vmatmul.mubr.f32.gmra.mrb[0].mxu0 %v5863
    %v5994 = vpop.f32.mrb[0].mxu0
    %v5995 = vadd.f32 0.0, %v5994
    %v5996 = vpop.f32.mrb[0].mxu0
    %5997 = vmatprep.mubr.f32.mxu0 0.0
    %5998 = vmatmul.mubr.f32.gmra.mrb[0].mxu0 %v5866
    %v5999 = vpop.f32.mrb[0].mxu0
    %v6000 = vadd.f32 0.0, %v5999
    %v6001 = vpop.f32.mrb[0].mxu0
    %6002 = vmatprep.mubr.f32.mxu0 0.0
    %6003 = vmatmul.mubr.f32.gmra.mrb[0].mxu0 %v5869
    %v6004 = vpop.f32.mrb[0].mxu0
    %v6005 = vadd.f32 0.0, %v6004
    %v6006 = vpop.f32.mrb[0].mxu0
    %6007 = vmatprep.mubr.f32.mxu0 0.0
    %6008 = vmatmul.mubr.f32.gmra.mrb[0].mxu0 %v5872
    %v6009 = vpop.f32.mrb[0].mxu0
    %v6010 = vadd.f32 0.0, %v6009
    %v6011 = vpop.f32.mrb[0].mxu0
    %6012 = vmatprep.mubr.f32.mxu0 0.0
    %6013 = vmatmul.mubr.f32.gmra.mrb[0].mxu0 %v5875
    %v6014 = vpop.f32.mrb[0].mxu0
    %v6015 = vadd.f32 0.0, %v6014
    %v6016 = vpop.f32.mrb[0].mxu0
    %6017 = vmatprep.mubr.f32.mxu0 0.0
    %6018 = vmatmul.mubr.f32.gmra.mrb[0].mxu0 %v5878
    %v6019 = vpop.f32.mrb[0].mxu0
    %v6020 = vadd.f32 0.0, %v6019
    %v6021 = vpop.f32.mrb[0].mxu0
    %6022 = vmatprep.mubr.f32.mxu0 0.0
    %6023 = vmatmul.mubr.f32.gmra.mrb[0].mxu0 %v5881
    %v6024 = vpop.f32.mrb[0].mxu0
    %v6025 = vadd.f32 0.0, %v6024
    %v6026 = vpop.f32.mrb[0].mxu0
    %6027 = vdwg.mxu0
    %v6028 = vadd.f32 %v5654, %v5950
    %v6029 = vadd.f32 %v5655, %v5955
    %v6030 = vadd.f32 %v5656, %v5960
    %v6031 = vadd.f32 %v5657, %v5965
    %v6032 = vadd.f32 %v5658, %v5970
    %v6033 = vadd.f32 %v5659, %v5975
    %v6034 = vadd.f32 %v5660, %v5980
    %v6035 = vadd.f32 %v5661, %v5985
    %v6036 = vadd.f32 %v5662, %v5990
    %v6037 = vadd.f32 %v5663, %v5995
    %v6038 = vadd.f32 %v5664, %v6000
    %v6039 = vadd.f32 %v5665, %v6005
    %v6040 = vadd.f32 %v5666, %v6010
    %v6041 = vadd.f32 %v5667, %v6015
    %v6042 = vadd.f32 %v5668, %v6020
    %v6043 = vadd.f32 %v5669, %v6025
    %s6044 = scalar_lea.vmem %s12, 512
    %v6045 = vld [vmem:[%s6044] sm:$0xff]
    %v6046 = vld [vmem:[%s6044 + $0x8] sm:$0xff]
    %v6047 = vld [vmem:[%s6044 + $0x10] sm:$0xff]
    %v6048 = vld [vmem:[%s6044 + $0x18] sm:$0xff]
    %v6049 = vld [vmem:[%s6044 + $0x20] sm:$0xff]
    %v6050 = vld [vmem:[%s6044 + $0x28] sm:$0xff]
    %v6051 = vld [vmem:[%s6044 + $0x30] sm:$0xff]
    %v6052 = vld [vmem:[%s6044 + $0x38] sm:$0xff]
    %v6053 = vld [vmem:[%s6044 + $0x40] sm:$0xff]
    %v6054 = vld [vmem:[%s6044 + $0x48] sm:$0xff]
    %v6055 = vld [vmem:[%s6044 + $0x50] sm:$0xff]
    %v6056 = vld [vmem:[%s6044 + $0x58] sm:$0xff]
    %v6057 = vld [vmem:[%s6044 + $0x60] sm:$0xff]
    %v6058 = vld [vmem:[%s6044 + $0x68] sm:$0xff]
    %v6059 = vld [vmem:[%s6044 + $0x70] sm:$0xff]
    %v6060 = vld [vmem:[%s6044 + $0x78] sm:$0xff]
    %6061 = vmatprep.subr.mxu0 0.0
    %6062 = vmatpush1.msra.mxu0 %v4566
    %6063 = vmatprep.subr.mxu0 0.0
    %6064 = vmatpush1.msra.mxu0 %v4567
    %6065 = vmatprep.subr.mxu0 0.0
    %6066 = vmatpush1.msra.mxu0 %v4568
    %6067 = vmatprep.subr.mxu0 0.0
    %6068 = vmatpush1.msra.mxu0 %v4569
    %6069 = vmatprep.subr.mxu0 0.0
    %6070 = vmatpush1.msra.mxu0 %v4570
    %6071 = vmatprep.subr.mxu0 0.0
    %6072 = vmatpush1.msra.mxu0 %v4571
    %6073 = vmatprep.subr.mxu0 0.0
    %6074 = vmatpush1.msra.mxu0 %v4572
    %6075 = vmatprep.subr.mxu0 0.0
    %6076 = vmatpush1.msra.mxu0 %v4573
    %6077 = vmatprep.subr.mxu0 0.0
    %6078 = vmatpush1.msra.mxu0 %v4574
    %6079 = vmatprep.subr.mxu0 0.0
    %6080 = vmatpush1.msra.mxu0 %v4575
    %6081 = vmatprep.subr.mxu0 0.0
    %6082 = vmatpush1.msra.mxu0 %v4576
    %6083 = vmatprep.subr.mxu0 0.0
    %6084 = vmatpush1.msra.mxu0 %v4577
    %6085 = vmatprep.subr.mxu0 0.0
    %6086 = vmatpush1.msra.mxu0 %v4578
    %6087 = vmatprep.subr.mxu0 0.0
    %6088 = vmatpush1.msra.mxu0 %v4579
    %6089 = vmatprep.subr.mxu0 0.0
    %6090 = vmatpush1.msra.mxu0 %v4580
    %6091 = vmatprep.subr.mxu0 0.0
    %6092 = vmatpush1.msra.mxu0 %v4581
    %6093 = vmatprep.subr.mxu0 0.0
    %6094 = vmatpush1.msra.mxu0 0.0
    %6095 = vmatprep.subr.mxu0 0.0
    %6096 = vmatpush1.msra.mxu0 0.0
    %6097 = vmatprep.subr.mxu0 0.0
    %6098 = vmatpush1.msra.mxu0 0.0
    %6099 = vmatprep.subr.mxu0 0.0
    %6100 = vmatpush1.msra.mxu0 0.0
    %6101 = vmatprep.subr.mxu0 0.0
    %6102 = vmatpush1.msra.mxu0 0.0
    %6103 = vmatprep.subr.mxu0 0.0
    %6104 = vmatpush1.msra.mxu0 0.0
    %6105 = vmatprep.subr.mxu0 0.0
    %6106 = vmatpush1.msra.mxu0 0.0
    %6107 = vmatprep.subr.mxu0 0.0
    %6108 = vmatpush1.msra.mxu0 0.0
    %6109 = vmatprep.subr.mxu0 0.0
    %6110 = vmatpush1.msra.mxu0 0.0
    %6111 = vmatprep.subr.mxu0 0.0
    %6112 = vmatpush1.msra.mxu0 0.0
    %6113 = vmatprep.subr.mxu0 0.0
    %6114 = vmatpush1.msra.mxu0 0.0
    %6115 = vmatprep.subr.mxu0 0.0
    %6116 = vmatpush1.msra.mxu0 0.0
    %6117 = vmatprep.subr.mxu0 0.0
    %6118 = vmatpush1.msra.mxu0 0.0
    %6119 = vmatprep.subr.mxu0 0.0
    %6120 = vmatpush1.msra.mxu0 0.0
    %6121 = vmatprep.subr.mxu0 0.0
    %6122 = vmatpush1.msra.mxu0 0.0
    %6123 = vmatprep.subr.mxu0 0.0
    %6124 = vmatpush1.msra.mxu0 0.0
    %6125 = vmatprep.mubr.f32.mxu0 0.0
    %6126 = vmatmul.mubr.f32.gmra.mrb[0].mxu0 %v6045
    %v6127 = vpop.f32.mrb[0].mxu0
    %v6128 = vadd.f32 0.0, %v6127
    %v6129 = vpop.f32.mrb[0].mxu0
    %6130 = vmatprep.mubr.f32.mxu0 0.0
    %6131 = vmatmul.mubr.f32.gmra.mrb[0].mxu0 %v6046
    %v6132 = vpop.f32.mrb[0].mxu0
    %v6133 = vadd.f32 0.0, %v6132
    %v6134 = vpop.f32.mrb[0].mxu0
    %6135 = vmatprep.mubr.f32.mxu0 0.0
    %6136 = vmatmul.mubr.f32.gmra.mrb[0].mxu0 %v6047
    %v6137 = vpop.f32.mrb[0].mxu0
    %v6138 = vadd.f32 0.0, %v6137
    %v6139 = vpop.f32.mrb[0].mxu0
    %6140 = vmatprep.mubr.f32.mxu0 0.0
    %6141 = vmatmul.mubr.f32.gmra.mrb[0].mxu0 %v6048
    %v6142 = vpop.f32.mrb[0].mxu0
    %v6143 = vadd.f32 0.0, %v6142
    %v6144 = vpop.f32.mrb[0].mxu0
    %6145 = vmatprep.mubr.f32.mxu0 0.0
    %6146 = vmatmul.mubr.f32.gmra.mrb[0].mxu0 %v6049
    %v6147 = vpop.f32.mrb[0].mxu0
    %v6148 = vadd.f32 0.0, %v6147
    %v6149 = vpop.f32.mrb[0].mxu0
    %6150 = vmatprep.mubr.f32.mxu0 0.0
    %6151 = vmatmul.mubr.f32.gmra.mrb[0].mxu0 %v6050
    %v6152 = vpop.f32.mrb[0].mxu0
    %v6153 = vadd.f32 0.0, %v6152
    %v6154 = vpop.f32.mrb[0].mxu0
    %6155 = vmatprep.mubr.f32.mxu0 0.0
    %6156 = vmatmul.mubr.f32.gmra.mrb[0].mxu0 %v6051
    %v6157 = vpop.f32.mrb[0].mxu0
    %v6158 = vadd.f32 0.0, %v6157
    %v6159 = vpop.f32.mrb[0].mxu0
    %6160 = vmatprep.mubr.f32.mxu0 0.0
    %6161 = vmatmul.mubr.f32.gmra.mrb[0].mxu0 %v6052
    %v6162 = vpop.f32.mrb[0].mxu0
    %v6163 = vadd.f32 0.0, %v6162
    %v6164 = vpop.f32.mrb[0].mxu0
    %6165 = vmatprep.mubr.f32.mxu0 0.0
    %6166 = vmatmul.mubr.f32.gmra.mrb[0].mxu0 %v6053
    %v6167 = vpop.f32.mrb[0].mxu0
    %v6168 = vadd.f32 0.0, %v6167
    %v6169 = vpop.f32.mrb[0].mxu0
    %6170 = vmatprep.mubr.f32.mxu0 0.0
    %6171 = vmatmul.mubr.f32.gmra.mrb[0].mxu0 %v6054
    %v6172 = vpop.f32.mrb[0].mxu0
    %v6173 = vadd.f32 0.0, %v6172
    %v6174 = vpop.f32.mrb[0].mxu0
    %6175 = vmatprep.mubr.f32.mxu0 0.0
    %6176 = vmatmul.mubr.f32.gmra.mrb[0].mxu0 %v6055
    %v6177 = vpop.f32.mrb[0].mxu0
    %v6178 = vadd.f32 0.0, %v6177
    %v6179 = vpop.f32.mrb[0].mxu0
    %6180 = vmatprep.mubr.f32.mxu0 0.0
    %6181 = vmatmul.mubr.f32.gmra.mrb[0].mxu0 %v6056
    %v6182 = vpop.f32.mrb[0].mxu0
    %v6183 = vadd.f32 0.0, %v6182
    %v6184 = vpop.f32.mrb[0].mxu0
    %6185 = vmatprep.mubr.f32.mxu0 0.0
    %6186 = vmatmul.mubr.f32.gmra.mrb[0].mxu0 %v6057
    %v6187 = vpop.f32.mrb[0].mxu0
    %v6188 = vadd.f32 0.0, %v6187
    %v6189 = vpop.f32.mrb[0].mxu0
    %6190 = vmatprep.mubr.f32.mxu0 0.0
    %6191 = vmatmul.mubr.f32.gmra.mrb[0].mxu0 %v6058
    %v6192 = vpop.f32.mrb[0].mxu0
    %v6193 = vadd.f32 0.0, %v6192
    %v6194 = vpop.f32.mrb[0].mxu0
    %6195 = vmatprep.mubr.f32.mxu0 0.0
    %6196 = vmatmul.mubr.f32.gmra.mrb[0].mxu0 %v6059
    %v6197 = vpop.f32.mrb[0].mxu0
    %v6198 = vadd.f32 0.0, %v6197
    %v6199 = vpop.f32.mrb[0].mxu0
    %6200 = vmatprep.mubr.f32.mxu0 0.0
    %6201 = vmatmul.mubr.f32.gmra.mrb[0].mxu0 %v6060
    %v6202 = vpop.f32.mrb[0].mxu0
    %v6203 = vadd.f32 0.0, %v6202
    %v6204 = vpop.f32.mrb[0].mxu0
    %6205 = vdwg.mxu0
    %s6206 = scalar_lea.vmem [#allocation9], 64
    %v6207 = vld [vmem:[%s6206] sm:$0xff]
    %v6208 = vld [vmem:[%s6206 + $0x8] sm:$0xff]
    %v6210 = vsel %vm199, %v6128, 0
    %v6213 = vsel %vm199, %v6133, 0
    %v6216 = vsel %vm199, %v6138, 0
    %v6219 = vsel %vm199, %v6143, 0
    %v6222 = vsel %vm199, %v6148, 0
    %v6225 = vsel %vm199, %v6153, 0
    %v6228 = vsel %vm199, %v6158, 0
    %v6231 = vsel %vm199, %v6163, 0
    %v6234 = vsel %vm199, %v6168, 0
    %v6237 = vsel %vm199, %v6173, 0
    %v6240 = vsel %vm199, %v6178, 0
    %v6243 = vsel %vm199, %v6183, 0
    %v6246 = vsel %vm199, %v6188, 0
    %v6249 = vsel %vm199, %v6193, 0
    %v6252 = vsel %vm199, %v6198, 0
    %v6255 = vsel %vm199, %v6203, 0
    %6257 = vmatprep.subr.mxu0 0.0
    %6258 = vmatpush1.msra.mxu0 %v6207
    %6259 = vmatprep.subr.mxu0 0.0
    %6260 = vmatpush1.msra.mxu0 %v6208
    %6261 = vmatprep.subr.mxu0 0.0
    %6262 = vmatpush1.msra.mxu0 0.0
    %6263 = vmatprep.subr.mxu0 0.0
    %6264 = vmatpush1.msra.mxu0 0.0
    %6265 = vmatprep.subr.mxu0 0.0
    %6266 = vmatpush1.msra.mxu0 0.0
    %6267 = vmatprep.subr.mxu0 0.0
    %6268 = vmatpush1.msra.mxu0 0.0
    %6269 = vmatprep.subr.mxu0 0.0
    %6270 = vmatpush1.msra.mxu0 0.0
    %6271 = vmatprep.subr.mxu0 0.0
    %6272 = vmatpush1.msra.mxu0 0.0
    %6273 = vmatprep.subr.mxu0 0.0
    %6274 = vmatpush1.msra.mxu0 0.0
    %6275 = vmatprep.subr.mxu0 0.0
    %6276 = vmatpush1.msra.mxu0 0.0
    %6277 = vmatprep.subr.mxu0 0.0
    %6278 = vmatpush1.msra.mxu0 0.0
    %6279 = vmatprep.subr.mxu0 0.0
    %6280 = vmatpush1.msra.mxu0 0.0
    %6281 = vmatprep.subr.mxu0 0.0
    %6282 = vmatpush1.msra.mxu0 0.0
    %6283 = vmatprep.subr.mxu0 0.0
    %6284 = vmatpush1.msra.mxu0 0.0
    %6285 = vmatprep.subr.mxu0 0.0
    %6286 = vmatpush1.msra.mxu0 0.0
    %6287 = vmatprep.subr.mxu0 0.0
    %6288 = vmatpush1.msra.mxu0 0.0
    %6289 = vmatprep.subr.mxu0 0.0
    %6290 = vmatpush1.msra.mxu0 0.0
    %6291 = vmatprep.subr.mxu0 0.0
    %6292 = vmatpush1.msra.mxu0 0.0
    %6293 = vmatprep.subr.mxu0 0.0
    %6294 = vmatpush1.msra.mxu0 0.0
    %6295 = vmatprep.subr.mxu0 0.0
    %6296 = vmatpush1.msra.mxu0 0.0
    %6297 = vmatprep.subr.mxu0 0.0
    %6298 = vmatpush1.msra.mxu0 0.0
    %6299 = vmatprep.subr.mxu0 0.0
    %6300 = vmatpush1.msra.mxu0 0.0
    %6301 = vmatprep.subr.mxu0 0.0
    %6302 = vmatpush1.msra.mxu0 0.0
    %6303 = vmatprep.subr.mxu0 0.0
    %6304 = vmatpush1.msra.mxu0 0.0
    %6305 = vmatprep.subr.mxu0 0.0
    %6306 = vmatpush1.msra.mxu0 0.0
    %6307 = vmatprep.subr.mxu0 0.0
    %6308 = vmatpush1.msra.mxu0 0.0
    %6309 = vmatprep.subr.mxu0 0.0
    %6310 = vmatpush1.msra.mxu0 0.0
    %6311 = vmatprep.subr.mxu0 0.0
    %6312 = vmatpush1.msra.mxu0 0.0
    %6313 = vmatprep.subr.mxu0 0.0
    %6314 = vmatpush1.msra.mxu0 0.0
    %6315 = vmatprep.subr.mxu0 0.0
    %6316 = vmatpush1.msra.mxu0 0.0
    %6317 = vmatprep.subr.mxu0 0.0
    %6318 = vmatpush1.msra.mxu0 0.0
    %6319 = vmatprep.subr.mxu0 0.0
    %6320 = vmatpush1.msra.mxu0 0.0
    %6321 = vmatprep.mubr.f32.mxu0 0.0
    %6322 = vmatmul.mubr.f32.gmra.mrb[0].mxu0 %v6210
    %v6323 = vpop.f32.mrb[0].mxu0
    %v6324 = vadd.f32 0.0, %v6323
    %v6325 = vpop.f32.mrb[0].mxu0
    %6326 = vmatprep.mubr.f32.mxu0 0.0
    %6327 = vmatmul.mubr.f32.gmra.mrb[0].mxu0 %v6213
    %v6328 = vpop.f32.mrb[0].mxu0
    %v6329 = vadd.f32 0.0, %v6328
    %v6330 = vpop.f32.mrb[0].mxu0
    %6331 = vmatprep.mubr.f32.mxu0 0.0
    %6332 = vmatmul.mubr.f32.gmra.mrb[0].mxu0 %v6216
    %v6333 = vpop.f32.mrb[0].mxu0
    %v6334 = vadd.f32 0.0, %v6333
    %v6335 = vpop.f32.mrb[0].mxu0
    %6336 = vmatprep.mubr.f32.mxu0 0.0
    %6337 = vmatmul.mubr.f32.gmra.mrb[0].mxu0 %v6219
    %v6338 = vpop.f32.mrb[0].mxu0
    %v6339 = vadd.f32 0.0, %v6338
    %v6340 = vpop.f32.mrb[0].mxu0
    %6341 = vmatprep.mubr.f32.mxu0 0.0
    %6342 = vmatmul.mubr.f32.gmra.mrb[0].mxu0 %v6222
    %v6343 = vpop.f32.mrb[0].mxu0
    %v6344 = vadd.f32 0.0, %v6343
    %v6345 = vpop.f32.mrb[0].mxu0
    %6346 = vmatprep.mubr.f32.mxu0 0.0
    %6347 = vmatmul.mubr.f32.gmra.mrb[0].mxu0 %v6225
    %v6348 = vpop.f32.mrb[0].mxu0
    %v6349 = vadd.f32 0.0, %v6348
    %v6350 = vpop.f32.mrb[0].mxu0
    %6351 = vmatprep.mubr.f32.mxu0 0.0
    %6352 = vmatmul.mubr.f32.gmra.mrb[0].mxu0 %v6228
    %v6353 = vpop.f32.mrb[0].mxu0
    %v6354 = vadd.f32 0.0, %v6353
    %v6355 = vpop.f32.mrb[0].mxu0
    %6356 = vmatprep.mubr.f32.mxu0 0.0
    %6357 = vmatmul.mubr.f32.gmra.mrb[0].mxu0 %v6231
    %v6358 = vpop.f32.mrb[0].mxu0
    %v6359 = vadd.f32 0.0, %v6358
    %v6360 = vpop.f32.mrb[0].mxu0
    %6361 = vmatprep.mubr.f32.mxu0 0.0
    %6362 = vmatmul.mubr.f32.gmra.mrb[0].mxu0 %v6234
    %v6363 = vpop.f32.mrb[0].mxu0
    %v6364 = vadd.f32 0.0, %v6363
    %v6365 = vpop.f32.mrb[0].mxu0
    %6366 = vmatprep.mubr.f32.mxu0 0.0
    %6367 = vmatmul.mubr.f32.gmra.mrb[0].mxu0 %v6237
    %v6368 = vpop.f32.mrb[0].mxu0
    %v6369 = vadd.f32 0.0, %v6368
    %v6370 = vpop.f32.mrb[0].mxu0
    %6371 = vmatprep.mubr.f32.mxu0 0.0
    %6372 = vmatmul.mubr.f32.gmra.mrb[0].mxu0 %v6240
    %v6373 = vpop.f32.mrb[0].mxu0
    %v6374 = vadd.f32 0.0, %v6373
    %v6375 = vpop.f32.mrb[0].mxu0
    %6376 = vmatprep.mubr.f32.mxu0 0.0
    %6377 = vmatmul.mubr.f32.gmra.mrb[0].mxu0 %v6243
    %v6378 = vpop.f32.mrb[0].mxu0
    %v6379 = vadd.f32 0.0, %v6378
    %v6380 = vpop.f32.mrb[0].mxu0
    %6381 = vmatprep.mubr.f32.mxu0 0.0
    %6382 = vmatmul.mubr.f32.gmra.mrb[0].mxu0 %v6246
    %v6383 = vpop.f32.mrb[0].mxu0
    %v6384 = vadd.f32 0.0, %v6383
    %v6385 = vpop.f32.mrb[0].mxu0
    %6386 = vmatprep.mubr.f32.mxu0 0.0
    %6387 = vmatmul.mubr.f32.gmra.mrb[0].mxu0 %v6249
    %v6388 = vpop.f32.mrb[0].mxu0
    %v6389 = vadd.f32 0.0, %v6388
    %v6390 = vpop.f32.mrb[0].mxu0
    %6391 = vmatprep.mubr.f32.mxu0 0.0
    %6392 = vmatmul.mubr.f32.gmra.mrb[0].mxu0 %v6252
    %v6393 = vpop.f32.mrb[0].mxu0
    %v6394 = vadd.f32 0.0, %v6393
    %v6395 = vpop.f32.mrb[0].mxu0
    %6396 = vmatprep.mubr.f32.mxu0 0.0
    %6397 = vmatmul.mubr.f32.gmra.mrb[0].mxu0 %v6255
    %v6398 = vpop.f32.mrb[0].mxu0
    %v6399 = vadd.f32 0.0, %v6398
    %v6400 = vpop.f32.mrb[0].mxu0
    %6401 = vdwg.mxu0
    %v6402 = vadd.f32 %v6028, %v6324
    %v6403 = vadd.f32 %v6029, %v6329
    %v6404 = vadd.f32 %v6030, %v6334
    %v6405 = vadd.f32 %v6031, %v6339
    %v6406 = vadd.f32 %v6032, %v6344
    %v6407 = vadd.f32 %v6033, %v6349
    %v6408 = vadd.f32 %v6034, %v6354
    %v6409 = vadd.f32 %v6035, %v6359
    %v6410 = vadd.f32 %v6036, %v6364
    %v6411 = vadd.f32 %v6037, %v6369
    %v6412 = vadd.f32 %v6038, %v6374
    %v6413 = vadd.f32 %v6039, %v6379
    %v6414 = vadd.f32 %v6040, %v6384
    %v6415 = vadd.f32 %v6041, %v6389
    %v6416 = vadd.f32 %v6042, %v6394
    %v6417 = vadd.f32 %v6043, %v6399
    %vm6418 = vcmask 261120
    %v6419 = vsel %vm6418, %v6402, 0.0
    %6420 = vadd.xlane.f32.xlu0 %v6419
    %v6421 = vpop.xlane.xlu0 %6420
    %v6422 = vsel %vm6418, %v6403, 0.0
    %6423 = vadd.xlane.f32.xlu0 %v6422
    %v6424 = vpop.xlane.xlu0 %6423
    %v6425 = vsel %vm6418, %v6404, 0.0
    %6426 = vadd.xlane.f32.xlu0 %v6425
    %v6427 = vpop.xlane.xlu0 %6426
    %v6428 = vsel %vm6418, %v6405, 0.0
    %6429 = vadd.xlane.f32.xlu0 %v6428
    %v6430 = vpop.xlane.xlu0 %6429
    %v6431 = vsel %vm6418, %v6406, 0.0
    %6432 = vadd.xlane.f32.xlu0 %v6431
    %v6433 = vpop.xlane.xlu0 %6432
    %v6434 = vsel %vm6418, %v6407, 0.0
    %6435 = vadd.xlane.f32.xlu0 %v6434
    %v6436 = vpop.xlane.xlu0 %6435
    %v6437 = vsel %vm6418, %v6408, 0.0
    %6438 = vadd.xlane.f32.xlu0 %v6437
    %v6439 = vpop.xlane.xlu0 %6438
    %v6440 = vsel %vm6418, %v6409, 0.0
    %6441 = vadd.xlane.f32.xlu0 %v6440
    %v6442 = vpop.xlane.xlu0 %6441
    %v6443 = vsel %vm6418, %v6410, 0.0
    %6444 = vadd.xlane.f32.xlu0 %v6443
    %v6445 = vpop.xlane.xlu0 %6444
    %v6446 = vsel %vm6418, %v6411, 0.0
    %6447 = vadd.xlane.f32.xlu0 %v6446
    %v6448 = vpop.xlane.xlu0 %6447
    %v6449 = vsel %vm6418, %v6412, 0.0
    %6450 = vadd.xlane.f32.xlu0 %v6449
    %v6451 = vpop.xlane.xlu0 %6450
    %v6452 = vsel %vm6418, %v6413, 0.0
    %6453 = vadd.xlane.f32.xlu0 %v6452
    %v6454 = vpop.xlane.xlu0 %6453
    %v6455 = vsel %vm6418, %v6414, 0.0
    %6456 = vadd.xlane.f32.xlu0 %v6455
    %v6457 = vpop.xlane.xlu0 %6456
    %v6458 = vsel %vm6418, %v6415, 0.0
    %6459 = vadd.xlane.f32.xlu0 %v6458
    %v6460 = vpop.xlane.xlu0 %6459
    %v6461 = vsel %vm6418, %v6416, 0.0
    %6462 = vadd.xlane.f32.xlu0 %v6461
    %v6463 = vpop.xlane.xlu0 %6462
    %v6464 = vsel %vm6418, %v6417, 0.0
    %6465 = vadd.xlane.f32.xlu0 %v6464
    %v6466 = vpop.xlane.xlu0 %6465
    %v6467 = vmul.f32 %v6402, %v6402
    %v6468 = vmul.f32 %v6403, %v6403
    %v6469 = vmul.f32 %v6404, %v6404
    %v6470 = vmul.f32 %v6405, %v6405
    %v6471 = vmul.f32 %v6406, %v6406
    %v6472 = vmul.f32 %v6407, %v6407
    %v6473 = vmul.f32 %v6408, %v6408
    %v6474 = vmul.f32 %v6409, %v6409
    %v6475 = vmul.f32 %v6410, %v6410
    %v6476 = vmul.f32 %v6411, %v6411
    %v6477 = vmul.f32 %v6412, %v6412
    %v6478 = vmul.f32 %v6413, %v6413
    %v6479 = vmul.f32 %v6414, %v6414
    %v6480 = vmul.f32 %v6415, %v6415
    %v6481 = vmul.f32 %v6416, %v6416
    %v6482 = vmul.f32 %v6417, %v6417
    %v6483 = vsel %vm6418, %v6467, 0.0
    %6484 = vadd.xlane.f32.xlu0 %v6483
    %v6485 = vpop.xlane.xlu0 %6484
    %v6486 = vsel %vm6418, %v6468, 0.0
    %6487 = vadd.xlane.f32.xlu0 %v6486
    %v6488 = vpop.xlane.xlu0 %6487
    %v6489 = vsel %vm6418, %v6469, 0.0
    %6490 = vadd.xlane.f32.xlu0 %v6489
    %v6491 = vpop.xlane.xlu0 %6490
    %v6492 = vsel %vm6418, %v6470, 0.0
    %6493 = vadd.xlane.f32.xlu0 %v6492
    %v6494 = vpop.xlane.xlu0 %6493
    %v6495 = vsel %vm6418, %v6471, 0.0
    %6496 = vadd.xlane.f32.xlu0 %v6495
    %v6497 = vpop.xlane.xlu0 %6496
    %v6498 = vsel %vm6418, %v6472, 0.0
    %6499 = vadd.xlane.f32.xlu0 %v6498
    %v6500 = vpop.xlane.xlu0 %6499
    %v6501 = vsel %vm6418, %v6473, 0.0
    %6502 = vadd.xlane.f32.xlu0 %v6501
    %v6503 = vpop.xlane.xlu0 %6502
    %v6504 = vsel %vm6418, %v6474, 0.0
    %6505 = vadd.xlane.f32.xlu0 %v6504
    %v6506 = vpop.xlane.xlu0 %6505
    %v6507 = vsel %vm6418, %v6475, 0.0
    %6508 = vadd.xlane.f32.xlu0 %v6507
    %v6509 = vpop.xlane.xlu0 %6508
    %v6510 = vsel %vm6418, %v6476, 0.0
    %6511 = vadd.xlane.f32.xlu0 %v6510
    %v6512 = vpop.xlane.xlu0 %6511
    %v6513 = vsel %vm6418, %v6477, 0.0
    %6514 = vadd.xlane.f32.xlu0 %v6513
    %v6515 = vpop.xlane.xlu0 %6514
    %v6516 = vsel %vm6418, %v6478, 0.0
    %6517 = vadd.xlane.f32.xlu0 %v6516
    %v6518 = vpop.xlane.xlu0 %6517
    %v6519 = vsel %vm6418, %v6479, 0.0
    %6520 = vadd.xlane.f32.xlu0 %v6519
    %v6521 = vpop.xlane.xlu0 %6520
    %v6522 = vsel %vm6418, %v6480, 0.0
    %6523 = vadd.xlane.f32.xlu0 %v6522
    %v6524 = vpop.xlane.xlu0 %6523
    %v6525 = vsel %vm6418, %v6481, 0.0
    %6526 = vadd.xlane.f32.xlu0 %v6525
    %v6527 = vpop.xlane.xlu0 %6526
    %v6528 = vsel %vm6418, %v6482, 0.0
    %6529 = vadd.xlane.f32.xlu0 %v6528
    %v6530 = vpop.xlane.xlu0 %6529
    %v6531 = vld [vmem:[#allocation10] sm:$0xff]
    %6532 = vmatprep.subr.mxu0 0.0
    %6533 = vmatpush1.msra.mxu0 %v6421
    %6534 = vmatprep.subr.mxu0 0.0
    %6535 = vmatpush1.msra.mxu0 %v6424
    %6536 = vmatprep.subr.mxu0 0.0
    %6537 = vmatpush1.msra.mxu0 %v6427
    %6538 = vmatprep.subr.mxu0 0.0
    %6539 = vmatpush1.msra.mxu0 %v6430
    %6540 = vmatprep.subr.mxu0 0.0
    %6541 = vmatpush1.msra.mxu0 %v6433
    %6542 = vmatprep.subr.mxu0 0.0
    %6543 = vmatpush1.msra.mxu0 %v6436
    %6544 = vmatprep.subr.mxu0 0.0
    %6545 = vmatpush1.msra.mxu0 %v6439
    %6546 = vmatprep.subr.mxu0 0.0
    %6547 = vmatpush1.msra.mxu0 %v6442
    %6548 = vmatprep.subr.mxu0 0.0
    %6549 = vmatpush1.msra.mxu0 %v6445
    %6550 = vmatprep.subr.mxu0 0.0
    %6551 = vmatpush1.msra.mxu0 %v6448
    %6552 = vmatprep.subr.mxu0 0.0
    %6553 = vmatpush1.msra.mxu0 %v6451
    %6554 = vmatprep.subr.mxu0 0.0
    %6555 = vmatpush1.msra.mxu0 %v6454
    %6556 = vmatprep.subr.mxu0 0.0
    %6557 = vmatpush1.msra.mxu0 %v6457
    %6558 = vmatprep.subr.mxu0 0.0
    %6559 = vmatpush1.msra.mxu0 %v6460
    %6560 = vmatprep.subr.mxu0 0.0
    %6561 = vmatpush1.msra.mxu0 %v6463
    %6562 = vmatprep.subr.mxu0 0.0
    %6563 = vmatpush1.msra.mxu0 %v6466
    %6564 = vmatprep.subr.mxu0 0.0
    %6565 = vmatpush1.msra.mxu0 0.0
    %6566 = vmatprep.subr.mxu0 0.0
    %6567 = vmatpush1.msra.mxu0 0.0
    %6568 = vmatprep.subr.mxu0 0.0
    %6569 = vmatpush1.msra.mxu0 0.0
    %6570 = vmatprep.subr.mxu0 0.0
    %6571 = vmatpush1.msra.mxu0 0.0
    %6572 = vmatprep.subr.mxu0 0.0
    %6573 = vmatpush1.msra.mxu0 0.0
    %6574 = vmatprep.subr.mxu0 0.0
    %6575 = vmatpush1.msra.mxu0 0.0
    %6576 = vmatprep.subr.mxu0 0.0
    %6577 = vmatpush1.msra.mxu0 0.0
    %6578 = vmatprep.subr.mxu0 0.0
    %6579 = vmatpush1.msra.mxu0 0.0
    %6580 = vmatprep.subr.mxu0 0.0
    %6581 = vmatpush1.msra.mxu0 0.0
    %6582 = vmatprep.subr.mxu0 0.0
    %6583 = vmatpush1.msra.mxu0 0.0
    %6584 = vmatprep.subr.mxu0 0.0
    %6585 = vmatpush1.msra.mxu0 0.0
    %6586 = vmatprep.subr.mxu0 0.0
    %6587 = vmatpush1.msra.mxu0 0.0
    %6588 = vmatprep.subr.mxu0 0.0
    %6589 = vmatpush1.msra.mxu0 0.0
    %6590 = vmatprep.subr.mxu0 0.0
    %6591 = vmatpush1.msra.mxu0 0.0
    %6592 = vmatprep.subr.mxu0 0.0
    %6593 = vmatpush1.msra.mxu0 0.0
    %6594 = vmatprep.subr.mxu0 0.0
    %6595 = vmatpush1.msra.mxu0 0.0
    %6596 = vmatprep.mubr.f32.mxu0 0.0
    %6597 = vmatmul.mubr.f32.gmra.mrb[0].mxu0 %v6531
    %v6598 = vpop.f32.mrb[0].mxu0
    %v6599 = vadd.f32 0.0, %v6598
    %v6600 = vpop.f32.mrb[0].mxu0
    %6601 = vdwg.mxu0
    %6602 = vmatprep.subr.mxu0 0.0
    %6603 = vmatpush1.msra.mxu0 %v6485
    %6604 = vmatprep.subr.mxu0 0.0
    %6605 = vmatpush1.msra.mxu0 %v6488
    %6606 = vmatprep.subr.mxu0 0.0
    %6607 = vmatpush1.msra.mxu0 %v6491
    %6608 = vmatprep.subr.mxu0 0.0
    %6609 = vmatpush1.msra.mxu0 %v6494
    %6610 = vmatprep.subr.mxu0 0.0
    %6611 = vmatpush1.msra.mxu0 %v6497
    %6612 = vmatprep.subr.mxu0 0.0
    %6613 = vmatpush1.msra.mxu0 %v6500
    %6614 = vmatprep.subr.mxu0 0.0
    %6615 = vmatpush1.msra.mxu0 %v6503
    %6616 = vmatprep.subr.mxu0 0.0
    %6617 = vmatpush1.msra.mxu0 %v6506
    %6618 = vmatprep.subr.mxu0 0.0
    %6619 = vmatpush1.msra.mxu0 %v6509
    %6620 = vmatprep.subr.mxu0 0.0
    %6621 = vmatpush1.msra.mxu0 %v6512
    %6622 = vmatprep.subr.mxu0 0.0
    %6623 = vmatpush1.msra.mxu0 %v6515
    %6624 = vmatprep.subr.mxu0 0.0
    %6625 = vmatpush1.msra.mxu0 %v6518
    %6626 = vmatprep.subr.mxu0 0.0
    %6627 = vmatpush1.msra.mxu0 %v6521
    %6628 = vmatprep.subr.mxu0 0.0
    %6629 = vmatpush1.msra.mxu0 %v6524
    %6630 = vmatprep.subr.mxu0 0.0
    %6631 = vmatpush1.msra.mxu0 %v6527
    %6632 = vmatprep.subr.mxu0 0.0
    %6633 = vmatpush1.msra.mxu0 %v6530
    %6634 = vmatprep.subr.mxu0 0.0
    %6635 = vmatpush1.msra.mxu0 0.0
    %6636 = vmatprep.subr.mxu0 0.0
    %6637 = vmatpush1.msra.mxu0 0.0
    %6638 = vmatprep.subr.mxu0 0.0
    %6639 = vmatpush1.msra.mxu0 0.0
    %6640 = vmatprep.subr.mxu0 0.0
    %6641 = vmatpush1.msra.mxu0 0.0
    %6642 = vmatprep.subr.mxu0 0.0
    %6643 = vmatpush1.msra.mxu0 0.0
    %6644 = vmatprep.subr.mxu0 0.0
    %6645 = vmatpush1.msra.mxu0 0.0
    %6646 = vmatprep.subr.mxu0 0.0
    %6647 = vmatpush1.msra.mxu0 0.0
    %6648 = vmatprep.subr.mxu0 0.0
    %6649 = vmatpush1.msra.mxu0 0.0
    %6650 = vmatprep.subr.mxu0 0.0
    %6651 = vmatpush1.msra.mxu0 0.0
    %6652 = vmatprep.subr.mxu0 0.0
    %6653 = vmatpush1.msra.mxu0 0.0
    %6654 = vmatprep.subr.mxu0 0.0
    %6655 = vmatpush1.msra.mxu0 0.0
    %6656 = vmatprep.subr.mxu0 0.0
    %6657 = vmatpush1.msra.mxu0 0.0
    %6658 = vmatprep.subr.mxu0 0.0
    %6659 = vmatpush1.msra.mxu0 0.0
    %6660 = vmatprep.subr.mxu0 0.0
    %6661 = vmatpush1.msra.mxu0 0.0
    %6662 = vmatprep.subr.mxu0 0.0
    %6663 = vmatpush1.msra.mxu0 0.0
    %6664 = vmatprep.subr.mxu0 0.0
    %6665 = vmatpush1.msra.mxu0 0.0
    %6666 = vmatprep.mubr.f32.mxu0 0.0
    %6667 = vmatmul.mubr.f32.gmra.mrb[0].mxu0 %v6531
    %v6668 = vpop.f32.mrb[0].mxu0
    %v6669 = vadd.f32 0.0, %v6668
    %v6670 = vpop.f32.mrb[0].mxu0
    %6671 = vdwg.mxu0
    %v6672 = vmul.f32 %v6599, 0.001953125
    %v6673 = vmul.f32 %v6669, 0.001953125
    %v6674 = vmul.f32 %v6672, %v6672
    %v6675 = vsub.f32 %v6673, %v6674
    %v6676 = vmax.f32 %v6675, 0.0
    %v6677 = vld [vmem:[%s16] sm:$0xff]
    %v6678 = vadd.f32 %v6676, 1e-05
    %v6679 = vrsqrt.pop %v6678
    %v6680 = vmul.f32 %v6677, %v6679
    %v6681 = vld [vmem:[%s17] sm:$0xff]
    %v6682 = vmul.f32 %v6672, %v6680
    %v6683 = vsub.f32 %v6681, %v6682
    %v6684 = vld [vmem:[%s15] sm:$0xff]
    %v6685 = vld [vmem:[%s15 + $0x8] sm:$0xff]
    %v6686 = vld [vmem:[%s15 + $0x10] sm:$0xff]
    %v6687 = vld [vmem:[%s15 + $0x18] sm:$0xff]
    %v6688 = vld [vmem:[%s15 + $0x20] sm:$0xff]
    %v6689 = vld [vmem:[%s15 + $0x28] sm:$0xff]
    %v6690 = vld [vmem:[%s15 + $0x30] sm:$0xff]
    %v6691 = vld [vmem:[%s15 + $0x38] sm:$0xff]
    %v6692 = vld [vmem:[%s15 + $0x40] sm:$0xff]
    %v6693 = vld [vmem:[%s15 + $0x48] sm:$0xff]
    %v6694 = vld [vmem:[%s15 + $0x50] sm:$0xff]
    %v6695 = vld [vmem:[%s15 + $0x58] sm:$0xff]
    %v6696 = vld [vmem:[%s15 + $0x60] sm:$0xff]
    %v6697 = vld [vmem:[%s15 + $0x68] sm:$0xff]
    %v6698 = vld [vmem:[%s15 + $0x70] sm:$0xff]
    %v6699 = vld [vmem:[%s15 + $0x78] sm:$0xff]
    %v6701 = vsel %vm1297, %v6684, 0
    %v6704 = vsel %vm1297, %v6685, 0
    %v6707 = vsel %vm1297, %v6686, 0
    %v6710 = vsel %vm1297, %v6687, 0
    %v6713 = vsel %vm1297, %v6688, 0
    %v6716 = vsel %vm1297, %v6689, 0
    %v6719 = vsel %vm1297, %v6690, 0
    %v6722 = vsel %vm1297, %v6691, 0
    %v6725 = vsel %vm1297, %v6692, 0
    %v6728 = vsel %vm1297, %v6693, 0
    %v6731 = vsel %vm1297, %v6694, 0
    %v6734 = vsel %vm1297, %v6695, 0
    %v6737 = vsel %vm1297, %v6696, 0
    %v6740 = vsel %vm1297, %v6697, 0
    %v6743 = vsel %vm1297, %v6698, 0
    %v6746 = vsel %vm1297, %v6699, 0
    %6748 = vmatprep.subr.mxu0 0.0
    %6749 = vmatpush1.msra.mxu0 %v6680
    %6750 = vmatprep.subr.mxu0 0.0
    %6751 = vmatpush1.msra.mxu0 0.0
    %6752 = vmatprep.subr.mxu0 0.0
    %6753 = vmatpush1.msra.mxu0 0.0
    %6754 = vmatprep.subr.mxu0 0.0
    %6755 = vmatpush1.msra.mxu0 0.0
    %6756 = vmatprep.subr.mxu0 0.0
    %6757 = vmatpush1.msra.mxu0 0.0
    %6758 = vmatprep.subr.mxu0 0.0
    %6759 = vmatpush1.msra.mxu0 0.0
    %6760 = vmatprep.subr.mxu0 0.0
    %6761 = vmatpush1.msra.mxu0 0.0
    %6762 = vmatprep.subr.mxu0 0.0
    %6763 = vmatpush1.msra.mxu0 0.0
    %6764 = vmatprep.subr.mxu0 0.0
    %6765 = vmatpush1.msra.mxu0 0.0
    %6766 = vmatprep.subr.mxu0 0.0
    %6767 = vmatpush1.msra.mxu0 0.0
    %6768 = vmatprep.subr.mxu0 0.0
    %6769 = vmatpush1.msra.mxu0 0.0
    %6770 = vmatprep.subr.mxu0 0.0
    %6771 = vmatpush1.msra.mxu0 0.0
    %6772 = vmatprep.subr.mxu0 0.0
    %6773 = vmatpush1.msra.mxu0 0.0
    %6774 = vmatprep.subr.mxu0 0.0
    %6775 = vmatpush1.msra.mxu0 0.0
    %6776 = vmatprep.subr.mxu0 0.0
    %6777 = vmatpush1.msra.mxu0 0.0
    %6778 = vmatprep.subr.mxu0 0.0
    %6779 = vmatpush1.msra.mxu0 0.0
    %6780 = vmatprep.subr.mxu0 0.0
    %6781 = vmatpush1.msra.mxu0 0.0
    %6782 = vmatprep.subr.mxu0 0.0
    %6783 = vmatpush1.msra.mxu0 0.0
    %6784 = vmatprep.subr.mxu0 0.0
    %6785 = vmatpush1.msra.mxu0 0.0
    %6786 = vmatprep.subr.mxu0 0.0
    %6787 = vmatpush1.msra.mxu0 0.0
    %6788 = vmatprep.subr.mxu0 0.0
    %6789 = vmatpush1.msra.mxu0 0.0
    %6790 = vmatprep.subr.mxu0 0.0
    %6791 = vmatpush1.msra.mxu0 0.0
    %6792 = vmatprep.subr.mxu0 0.0
    %6793 = vmatpush1.msra.mxu0 0.0
    %6794 = vmatprep.subr.mxu0 0.0
    %6795 = vmatpush1.msra.mxu0 0.0
    %6796 = vmatprep.subr.mxu0 0.0
    %6797 = vmatpush1.msra.mxu0 0.0
    %6798 = vmatprep.subr.mxu0 0.0
    %6799 = vmatpush1.msra.mxu0 0.0
    %6800 = vmatprep.subr.mxu0 0.0
    %6801 = vmatpush1.msra.mxu0 0.0
    %6802 = vmatprep.subr.mxu0 0.0
    %6803 = vmatpush1.msra.mxu0 0.0
    %6804 = vmatprep.subr.mxu0 0.0
    %6805 = vmatpush1.msra.mxu0 0.0
    %6806 = vmatprep.subr.mxu0 0.0
    %6807 = vmatpush1.msra.mxu0 0.0
    %6808 = vmatprep.subr.mxu0 0.0
    %6809 = vmatpush1.msra.mxu0 0.0
    %6810 = vmatprep.subr.mxu0 0.0
    %6811 = vmatpush1.msra.mxu0 0.0
    %6812 = vmatprep.mubr.f32.mxu0 0.0
    %6813 = vmatmul.mubr.f32.gmra.mrb[0].mxu0 %v6701
    %v6814 = vpop.f32.mrb[0].mxu0
    %v6815 = vadd.f32 0.0, %v6814
    %v6816 = vpop.f32.mrb[0].mxu0
    %6817 = vmatprep.mubr.f32.mxu0 0.0
    %6818 = vmatmul.mubr.f32.gmra.mrb[0].mxu0 %v6704
    %v6819 = vpop.f32.mrb[0].mxu0
    %v6820 = vadd.f32 0.0, %v6819
    %v6821 = vpop.f32.mrb[0].mxu0
    %6822 = vmatprep.mubr.f32.mxu0 0.0
    %6823 = vmatmul.mubr.f32.gmra.mrb[0].mxu0 %v6707
    %v6824 = vpop.f32.mrb[0].mxu0
    %v6825 = vadd.f32 0.0, %v6824
    %v6826 = vpop.f32.mrb[0].mxu0
    %6827 = vmatprep.mubr.f32.mxu0 0.0
    %6828 = vmatmul.mubr.f32.gmra.mrb[0].mxu0 %v6710
    %v6829 = vpop.f32.mrb[0].mxu0
    %v6830 = vadd.f32 0.0, %v6829
    %v6831 = vpop.f32.mrb[0].mxu0
    %6832 = vmatprep.mubr.f32.mxu0 0.0
    %6833 = vmatmul.mubr.f32.gmra.mrb[0].mxu0 %v6713
    %v6834 = vpop.f32.mrb[0].mxu0
    %v6835 = vadd.f32 0.0, %v6834
    %v6836 = vpop.f32.mrb[0].mxu0
    %6837 = vmatprep.mubr.f32.mxu0 0.0
    %6838 = vmatmul.mubr.f32.gmra.mrb[0].mxu0 %v6716
    %v6839 = vpop.f32.mrb[0].mxu0
    %v6840 = vadd.f32 0.0, %v6839
    %v6841 = vpop.f32.mrb[0].mxu0
    %6842 = vmatprep.mubr.f32.mxu0 0.0
    %6843 = vmatmul.mubr.f32.gmra.mrb[0].mxu0 %v6719
    %v6844 = vpop.f32.mrb[0].mxu0
    %v6845 = vadd.f32 0.0, %v6844
    %v6846 = vpop.f32.mrb[0].mxu0
    %6847 = vmatprep.mubr.f32.mxu0 0.0
    %6848 = vmatmul.mubr.f32.gmra.mrb[0].mxu0 %v6722
    %v6849 = vpop.f32.mrb[0].mxu0
    %v6850 = vadd.f32 0.0, %v6849
    %v6851 = vpop.f32.mrb[0].mxu0
    %6852 = vmatprep.mubr.f32.mxu0 0.0
    %6853 = vmatmul.mubr.f32.gmra.mrb[0].mxu0 %v6725
    %v6854 = vpop.f32.mrb[0].mxu0
    %v6855 = vadd.f32 0.0, %v6854
    %v6856 = vpop.f32.mrb[0].mxu0
    %6857 = vmatprep.mubr.f32.mxu0 0.0
    %6858 = vmatmul.mubr.f32.gmra.mrb[0].mxu0 %v6728
    %v6859 = vpop.f32.mrb[0].mxu0
    %v6860 = vadd.f32 0.0, %v6859
    %v6861 = vpop.f32.mrb[0].mxu0
    %6862 = vmatprep.mubr.f32.mxu0 0.0
    %6863 = vmatmul.mubr.f32.gmra.mrb[0].mxu0 %v6731
    %v6864 = vpop.f32.mrb[0].mxu0
    %v6865 = vadd.f32 0.0, %v6864
    %v6866 = vpop.f32.mrb[0].mxu0
    %6867 = vmatprep.mubr.f32.mxu0 0.0
    %6868 = vmatmul.mubr.f32.gmra.mrb[0].mxu0 %v6734
    %v6869 = vpop.f32.mrb[0].mxu0
    %v6870 = vadd.f32 0.0, %v6869
    %v6871 = vpop.f32.mrb[0].mxu0
    %6872 = vmatprep.mubr.f32.mxu0 0.0
    %6873 = vmatmul.mubr.f32.gmra.mrb[0].mxu0 %v6737
    %v6874 = vpop.f32.mrb[0].mxu0
    %v6875 = vadd.f32 0.0, %v6874
    %v6876 = vpop.f32.mrb[0].mxu0
    %6877 = vmatprep.mubr.f32.mxu0 0.0
    %6878 = vmatmul.mubr.f32.gmra.mrb[0].mxu0 %v6740
    %v6879 = vpop.f32.mrb[0].mxu0
    %v6880 = vadd.f32 0.0, %v6879
    %v6881 = vpop.f32.mrb[0].mxu0
    %6882 = vmatprep.mubr.f32.mxu0 0.0
    %6883 = vmatmul.mubr.f32.gmra.mrb[0].mxu0 %v6743
    %v6884 = vpop.f32.mrb[0].mxu0
    %v6885 = vadd.f32 0.0, %v6884
    %v6886 = vpop.f32.mrb[0].mxu0
    %6887 = vmatprep.mubr.f32.mxu0 0.0
    %6888 = vmatmul.mubr.f32.gmra.mrb[0].mxu0 %v6746
    %v6889 = vpop.f32.mrb[0].mxu0
    %v6890 = vadd.f32 0.0, %v6889
    %v6891 = vpop.f32.mrb[0].mxu0
    %6892 = vdwg.mxu0
    %6893 = vmatprep.subr.mxu0 0.0
    %6894 = vmatpush1.msra.mxu0 %v6683
    %6895 = vmatprep.subr.mxu0 0.0
    %6896 = vmatpush1.msra.mxu0 0.0
    %6897 = vmatprep.subr.mxu0 0.0
    %6898 = vmatpush1.msra.mxu0 0.0
    %6899 = vmatprep.subr.mxu0 0.0
    %6900 = vmatpush1.msra.mxu0 0.0
    %6901 = vmatprep.subr.mxu0 0.0
    %6902 = vmatpush1.msra.mxu0 0.0
    %6903 = vmatprep.subr.mxu0 0.0
    %6904 = vmatpush1.msra.mxu0 0.0
    %6905 = vmatprep.subr.mxu0 0.0
    %6906 = vmatpush1.msra.mxu0 0.0
    %6907 = vmatprep.subr.mxu0 0.0
    %6908 = vmatpush1.msra.mxu0 0.0
    %6909 = vmatprep.subr.mxu0 0.0
    %6910 = vmatpush1.msra.mxu0 0.0
    %6911 = vmatprep.subr.mxu0 0.0
    %6912 = vmatpush1.msra.mxu0 0.0
    %6913 = vmatprep.subr.mxu0 0.0
    %6914 = vmatpush1.msra.mxu0 0.0
    %6915 = vmatprep.subr.mxu0 0.0
    %6916 = vmatpush1.msra.mxu0 0.0
    %6917 = vmatprep.subr.mxu0 0.0
    %6918 = vmatpush1.msra.mxu0 0.0
    %6919 = vmatprep.subr.mxu0 0.0
    %6920 = vmatpush1.msra.mxu0 0.0
    %6921 = vmatprep.subr.mxu0 0.0
    %6922 = vmatpush1.msra.mxu0 0.0
    %6923 = vmatprep.subr.mxu0 0.0
    %6924 = vmatpush1.msra.mxu0 0.0
    %6925 = vmatprep.subr.mxu0 0.0
    %6926 = vmatpush1.msra.mxu0 0.0
    %6927 = vmatprep.subr.mxu0 0.0
    %6928 = vmatpush1.msra.mxu0 0.0
    %6929 = vmatprep.subr.mxu0 0.0
    %6930 = vmatpush1.msra.mxu0 0.0
    %6931 = vmatprep.subr.mxu0 0.0
    %6932 = vmatpush1.msra.mxu0 0.0
    %6933 = vmatprep.subr.mxu0 0.0
    %6934 = vmatpush1.msra.mxu0 0.0
    %6935 = vmatprep.subr.mxu0 0.0
    %6936 = vmatpush1.msra.mxu0 0.0
    %6937 = vmatprep.subr.mxu0 0.0
    %6938 = vmatpush1.msra.mxu0 0.0
    %6939 = vmatprep.subr.mxu0 0.0
    %6940 = vmatpush1.msra.mxu0 0.0
    %6941 = vmatprep.subr.mxu0 0.0
    %6942 = vmatpush1.msra.mxu0 0.0
    %6943 = vmatprep.subr.mxu0 0.0
    %6944 = vmatpush1.msra.mxu0 0.0
    %6945 = vmatprep.subr.mxu0 0.0
    %6946 = vmatpush1.msra.mxu0 0.0
    %6947 = vmatprep.subr.mxu0 0.0
    %6948 = vmatpush1.msra.mxu0 0.0
    %6949 = vmatprep.subr.mxu0 0.0
    %6950 = vmatpush1.msra.mxu0 0.0
    %6951 = vmatprep.subr.mxu0 0.0
    %6952 = vmatpush1.msra.mxu0 0.0
    %6953 = vmatprep.subr.mxu0 0.0
    %6954 = vmatpush1.msra.mxu0 0.0
    %6955 = vmatprep.subr.mxu0 0.0
    %6956 = vmatpush1.msra.mxu0 0.0
    %6957 = vmatprep.mubr.f32.mxu0 0.0
    %6958 = vmatmul.mubr.f32.gmra.mrb[0].mxu0 %v6701
    %v6959 = vpop.f32.mrb[0].mxu0
    %v6960 = vadd.f32 0.0, %v6959
    %v6961 = vpop.f32.mrb[0].mxu0
    %6962 = vmatprep.mubr.f32.mxu0 0.0
    %6963 = vmatmul.mubr.f32.gmra.mrb[0].mxu0 %v6704
    %v6964 = vpop.f32.mrb[0].mxu0
    %v6965 = vadd.f32 0.0, %v6964
    %v6966 = vpop.f32.mrb[0].mxu0
    %6967 = vmatprep.mubr.f32.mxu0 0.0
    %6968 = vmatmul.mubr.f32.gmra.mrb[0].mxu0 %v6707
    %v6969 = vpop.f32.mrb[0].mxu0
    %v6970 = vadd.f32 0.0, %v6969
    %v6971 = vpop.f32.mrb[0].mxu0
    %6972 = vmatprep.mubr.f32.mxu0 0.0
    %6973 = vmatmul.mubr.f32.gmra.mrb[0].mxu0 %v6710
    %v6974 = vpop.f32.mrb[0].mxu0
    %v6975 = vadd.f32 0.0, %v6974
    %v6976 = vpop.f32.mrb[0].mxu0
    %6977 = vmatprep.mubr.f32.mxu0 0.0
    %6978 = vmatmul.mubr.f32.gmra.mrb[0].mxu0 %v6713
    %v6979 = vpop.f32.mrb[0].mxu0
    %v6980 = vadd.f32 0.0, %v6979
    %v6981 = vpop.f32.mrb[0].mxu0
    %6982 = vmatprep.mubr.f32.mxu0 0.0
    %6983 = vmatmul.mubr.f32.gmra.mrb[0].mxu0 %v6716
    %v6984 = vpop.f32.mrb[0].mxu0
    %v6985 = vadd.f32 0.0, %v6984
    %v6986 = vpop.f32.mrb[0].mxu0
    %6987 = vmatprep.mubr.f32.mxu0 0.0
    %6988 = vmatmul.mubr.f32.gmra.mrb[0].mxu0 %v6719
    %v6989 = vpop.f32.mrb[0].mxu0
    %v6990 = vadd.f32 0.0, %v6989
    %v6991 = vpop.f32.mrb[0].mxu0
    %6992 = vmatprep.mubr.f32.mxu0 0.0
    %6993 = vmatmul.mubr.f32.gmra.mrb[0].mxu0 %v6722
    %v6994 = vpop.f32.mrb[0].mxu0
    %v6995 = vadd.f32 0.0, %v6994
    %v6996 = vpop.f32.mrb[0].mxu0
    %6997 = vmatprep.mubr.f32.mxu0 0.0
    %6998 = vmatmul.mubr.f32.gmra.mrb[0].mxu0 %v6725
    %v6999 = vpop.f32.mrb[0].mxu0
    %v7000 = vadd.f32 0.0, %v6999
    %v7001 = vpop.f32.mrb[0].mxu0
    %7002 = vmatprep.mubr.f32.mxu0 0.0
    %7003 = vmatmul.mubr.f32.gmra.mrb[0].mxu0 %v6728
    %v7004 = vpop.f32.mrb[0].mxu0
    %v7005 = vadd.f32 0.0, %v7004
    %v7006 = vpop.f32.mrb[0].mxu0
    %7007 = vmatprep.mubr.f32.mxu0 0.0
    %7008 = vmatmul.mubr.f32.gmra.mrb[0].mxu0 %v6731
    %v7009 = vpop.f32.mrb[0].mxu0
    %v7010 = vadd.f32 0.0, %v7009
    %v7011 = vpop.f32.mrb[0].mxu0
    %7012 = vmatprep.mubr.f32.mxu0 0.0
    %7013 = vmatmul.mubr.f32.gmra.mrb[0].mxu0 %v6734
    %v7014 = vpop.f32.mrb[0].mxu0
    %v7015 = vadd.f32 0.0, %v7014
    %v7016 = vpop.f32.mrb[0].mxu0
    %7017 = vmatprep.mubr.f32.mxu0 0.0
    %7018 = vmatmul.mubr.f32.gmra.mrb[0].mxu0 %v6737
    %v7019 = vpop.f32.mrb[0].mxu0
    %v7020 = vadd.f32 0.0, %v7019
    %v7021 = vpop.f32.mrb[0].mxu0
    %7022 = vmatprep.mubr.f32.mxu0 0.0
    %7023 = vmatmul.mubr.f32.gmra.mrb[0].mxu0 %v6740
    %v7024 = vpop.f32.mrb[0].mxu0
    %v7025 = vadd.f32 0.0, %v7024
    %v7026 = vpop.f32.mrb[0].mxu0
    %7027 = vmatprep.mubr.f32.mxu0 0.0
    %7028 = vmatmul.mubr.f32.gmra.mrb[0].mxu0 %v6743
    %v7029 = vpop.f32.mrb[0].mxu0
    %v7030 = vadd.f32 0.0, %v7029
    %v7031 = vpop.f32.mrb[0].mxu0
    %7032 = vmatprep.mubr.f32.mxu0 0.0
    %7033 = vmatmul.mubr.f32.gmra.mrb[0].mxu0 %v6746
    %v7034 = vpop.f32.mrb[0].mxu0
    %v7035 = vadd.f32 0.0, %v7034
    %v7036 = vpop.f32.mrb[0].mxu0
    %7037 = vdwg.mxu0
    %7039 = vset.pattern.permute.xlu0 0
    %7040 = vperm.xlu0 %7039, %v6815
    %v7041 = vpop.permute.xlu0 %7040
    %7044 = vset.pattern.permute.xlu0 0
    %7045 = vperm.xlu0 %7044, %v6820
    %v7046 = vpop.permute.xlu0 %7045
    %7049 = vset.pattern.permute.xlu0 0
    %7050 = vperm.xlu0 %7049, %v6825
    %v7051 = vpop.permute.xlu0 %7050
    %7054 = vset.pattern.permute.xlu0 0
    %7055 = vperm.xlu0 %7054, %v6830
    %v7056 = vpop.permute.xlu0 %7055
    %7059 = vset.pattern.permute.xlu0 0
    %7060 = vperm.xlu0 %7059, %v6835
    %v7061 = vpop.permute.xlu0 %7060
    %7064 = vset.pattern.permute.xlu0 0
    %7065 = vperm.xlu0 %7064, %v6840
    %v7066 = vpop.permute.xlu0 %7065
    %7069 = vset.pattern.permute.xlu0 0
    %7070 = vperm.xlu0 %7069, %v6845
    %v7071 = vpop.permute.xlu0 %7070
    %7074 = vset.pattern.permute.xlu0 0
    %7075 = vperm.xlu0 %7074, %v6850
    %v7076 = vpop.permute.xlu0 %7075
    %7079 = vset.pattern.permute.xlu0 0
    %7080 = vperm.xlu0 %7079, %v6855
    %v7081 = vpop.permute.xlu0 %7080
    %7084 = vset.pattern.permute.xlu0 0
    %7085 = vperm.xlu0 %7084, %v6860
    %v7086 = vpop.permute.xlu0 %7085
    %7089 = vset.pattern.permute.xlu0 0
    %7090 = vperm.xlu0 %7089, %v6865
    %v7091 = vpop.permute.xlu0 %7090
    %7094 = vset.pattern.permute.xlu0 0
    %7095 = vperm.xlu0 %7094, %v6870
    %v7096 = vpop.permute.xlu0 %7095
    %7099 = vset.pattern.permute.xlu0 0
    %7100 = vperm.xlu0 %7099, %v6875
    %v7101 = vpop.permute.xlu0 %7100
    %7104 = vset.pattern.permute.xlu0 0
    %7105 = vperm.xlu0 %7104, %v6880
    %v7106 = vpop.permute.xlu0 %7105
    %7109 = vset.pattern.permute.xlu0 0
    %7110 = vperm.xlu0 %7109, %v6885
    %v7111 = vpop.permute.xlu0 %7110
    %7114 = vset.pattern.permute.xlu0 0
    %7115 = vperm.xlu0 %7114, %v6890
    %v7116 = vpop.permute.xlu0 %7115
    %v7118 = vmul.f32 %v6402, %v7041
    %v7119 = vmul.f32 %v6403, %v7046
    %v7120 = vmul.f32 %v6404, %v7051
    %v7121 = vmul.f32 %v6405, %v7056
    %v7122 = vmul.f32 %v6406, %v7061
    %v7123 = vmul.f32 %v6407, %v7066
    %v7124 = vmul.f32 %v6408, %v7071
    %v7125 = vmul.f32 %v6409, %v7076
    %v7126 = vmul.f32 %v6410, %v7081
    %v7127 = vmul.f32 %v6411, %v7086
    %v7128 = vmul.f32 %v6412, %v7091
    %v7129 = vmul.f32 %v6413, %v7096
    %v7130 = vmul.f32 %v6414, %v7101
    %v7131 = vmul.f32 %v6415, %v7106
    %v7132 = vmul.f32 %v6416, %v7111
    %v7133 = vmul.f32 %v6417, %v7116
    %7135 = vset.pattern.permute.xlu0 0
    %7136 = vperm.xlu0 %7135, %v6960
    %v7137 = vpop.permute.xlu0 %7136
    %7140 = vset.pattern.permute.xlu0 0
    %7141 = vperm.xlu0 %7140, %v6965
    %v7142 = vpop.permute.xlu0 %7141
    %7145 = vset.pattern.permute.xlu0 0
    %7146 = vperm.xlu0 %7145, %v6970
    %v7147 = vpop.permute.xlu0 %7146
    %7150 = vset.pattern.permute.xlu0 0
    %7151 = vperm.xlu0 %7150, %v6975
    %v7152 = vpop.permute.xlu0 %7151
    %7155 = vset.pattern.permute.xlu0 0
    %7156 = vperm.xlu0 %7155, %v6980
    %v7157 = vpop.permute.xlu0 %7156
    %7160 = vset.pattern.permute.xlu0 0
    %7161 = vperm.xlu0 %7160, %v6985
    %v7162 = vpop.permute.xlu0 %7161
    %7165 = vset.pattern.permute.xlu0 0
    %7166 = vperm.xlu0 %7165, %v6990
    %v7167 = vpop.permute.xlu0 %7166
    %7170 = vset.pattern.permute.xlu0 0
    %7171 = vperm.xlu0 %7170, %v6995
    %v7172 = vpop.permute.xlu0 %7171
    %7175 = vset.pattern.permute.xlu0 0
    %7176 = vperm.xlu0 %7175, %v7000
    %v7177 = vpop.permute.xlu0 %7176
    %7180 = vset.pattern.permute.xlu0 0
    %7181 = vperm.xlu0 %7180, %v7005
    %v7182 = vpop.permute.xlu0 %7181
    %7185 = vset.pattern.permute.xlu0 0
    %7186 = vperm.xlu0 %7185, %v7010
    %v7187 = vpop.permute.xlu0 %7186
    %7190 = vset.pattern.permute.xlu0 0
    %7191 = vperm.xlu0 %7190, %v7015
    %v7192 = vpop.permute.xlu0 %7191
    %7195 = vset.pattern.permute.xlu0 0
    %7196 = vperm.xlu0 %7195, %v7020
    %v7197 = vpop.permute.xlu0 %7196
    %7200 = vset.pattern.permute.xlu0 0
    %7201 = vperm.xlu0 %7200, %v7025
    %v7202 = vpop.permute.xlu0 %7201
    %7205 = vset.pattern.permute.xlu0 0
    %7206 = vperm.xlu0 %7205, %v7030
    %v7207 = vpop.permute.xlu0 %7206
    %7210 = vset.pattern.permute.xlu0 0
    %7211 = vperm.xlu0 %7210, %v7035
    %v7212 = vpop.permute.xlu0 %7211
    %v7214 = vadd.f32 %v7118, %v7137
    %v7215 = vadd.f32 %v7119, %v7142
    %v7216 = vadd.f32 %v7120, %v7147
    %v7217 = vadd.f32 %v7121, %v7152
    %v7218 = vadd.f32 %v7122, %v7157
    %v7219 = vadd.f32 %v7123, %v7162
    %v7220 = vadd.f32 %v7124, %v7167
    %v7221 = vadd.f32 %v7125, %v7172
    %v7222 = vadd.f32 %v7126, %v7177
    %v7223 = vadd.f32 %v7127, %v7182
    %v7224 = vadd.f32 %v7128, %v7187
    %v7225 = vadd.f32 %v7129, %v7192
    %v7226 = vadd.f32 %v7130, %v7197
    %v7227 = vadd.f32 %v7131, %v7202
    %v7228 = vadd.f32 %v7132, %v7207
    %v7229 = vadd.f32 %v7133, %v7212
    %v7230 = vmax.f32 %v7214, 0.0
    %v7231 = vmax.f32 %v7215, 0.0
    %v7232 = vmax.f32 %v7216, 0.0
    %v7233 = vmax.f32 %v7217, 0.0
    %v7234 = vmax.f32 %v7218, 0.0
    %v7235 = vmax.f32 %v7219, 0.0
    %v7236 = vmax.f32 %v7220, 0.0
    %v7237 = vmax.f32 %v7221, 0.0
    %v7238 = vmax.f32 %v7222, 0.0
    %v7239 = vmax.f32 %v7223, 0.0
    %v7240 = vmax.f32 %v7224, 0.0
    %v7241 = vmax.f32 %v7225, 0.0
    %v7242 = vmax.f32 %v7226, 0.0
    %v7243 = vmax.f32 %v7227, 0.0
    %v7244 = vmax.f32 %v7228, 0.0
    %v7245 = vmax.f32 %v7229, 0.0
    %v7246 = vld [vmem:[%s18] sm:$0xff]
    %v7247 = vld [vmem:[%s18 + $0x8] sm:$0xff]
    %v7248 = vld [vmem:[%s18 + $0x10] sm:$0xff]
    %v7249 = vld [vmem:[%s18 + $0x18] sm:$0xff]
    %v7250 = vld [vmem:[%s18 + $0x20] sm:$0xff]
    %v7251 = vld [vmem:[%s18 + $0x28] sm:$0xff]
    %v7252 = vld [vmem:[%s18 + $0x30] sm:$0xff]
    %v7253 = vld [vmem:[%s18 + $0x38] sm:$0xff]
    %v7254 = vld [vmem:[%s18 + $0x40] sm:$0xff]
    %v7255 = vld [vmem:[%s18 + $0x48] sm:$0xff]
    %v7256 = vld [vmem:[%s18 + $0x50] sm:$0xff]
    %v7257 = vld [vmem:[%s18 + $0x58] sm:$0xff]
    %v7258 = vld [vmem:[%s18 + $0x60] sm:$0xff]
    %v7259 = vld [vmem:[%s18 + $0x68] sm:$0xff]
    %v7260 = vld [vmem:[%s18 + $0x70] sm:$0xff]
    %v7261 = vld [vmem:[%s18 + $0x78] sm:$0xff]
    %7262 = vmatprep.subr.mxu0 0.0
    %7263 = vmatpush1.msra.mxu0 %v7230
    %7264 = vmatprep.subr.mxu0 0.0
    %7265 = vmatpush1.msra.mxu0 %v7231
    %7266 = vmatprep.subr.mxu0 0.0
    %7267 = vmatpush1.msra.mxu0 %v7232
    %7268 = vmatprep.subr.mxu0 0.0
    %7269 = vmatpush1.msra.mxu0 %v7233
    %7270 = vmatprep.subr.mxu0 0.0
    %7271 = vmatpush1.msra.mxu0 %v7234
    %7272 = vmatprep.subr.mxu0 0.0
    %7273 = vmatpush1.msra.mxu0 %v7235
    %7274 = vmatprep.subr.mxu0 0.0
    %7275 = vmatpush1.msra.mxu0 %v7236
    %7276 = vmatprep.subr.mxu0 0.0
    %7277 = vmatpush1.msra.mxu0 %v7237
    %7278 = vmatprep.subr.mxu0 0.0
    %7279 = vmatpush1.msra.mxu0 %v7238
    %7280 = vmatprep.subr.mxu0 0.0
    %7281 = vmatpush1.msra.mxu0 %v7239
    %7282 = vmatprep.subr.mxu0 0.0
    %7283 = vmatpush1.msra.mxu0 %v7240
    %7284 = vmatprep.subr.mxu0 0.0
    %7285 = vmatpush1.msra.mxu0 %v7241
    %7286 = vmatprep.subr.mxu0 0.0
    %7287 = vmatpush1.msra.mxu0 %v7242
    %7288 = vmatprep.subr.mxu0 0.0
    %7289 = vmatpush1.msra.mxu0 %v7243
    %7290 = vmatprep.subr.mxu0 0.0
    %7291 = vmatpush1.msra.mxu0 %v7244
    %7292 = vmatprep.subr.mxu0 0.0
    %7293 = vmatpush1.msra.mxu0 %v7245
    %7294 = vmatprep.subr.mxu0 0.0
    %7295 = vmatpush1.msra.mxu0 0.0
    %7296 = vmatprep.subr.mxu0 0.0
    %7297 = vmatpush1.msra.mxu0 0.0
    %7298 = vmatprep.subr.mxu0 0.0
    %7299 = vmatpush1.msra.mxu0 0.0
    %7300 = vmatprep.subr.mxu0 0.0
    %7301 = vmatpush1.msra.mxu0 0.0
    %7302 = vmatprep.subr.mxu0 0.0
    %7303 = vmatpush1.msra.mxu0 0.0
    %7304 = vmatprep.subr.mxu0 0.0
    %7305 = vmatpush1.msra.mxu0 0.0
    %7306 = vmatprep.subr.mxu0 0.0
    %7307 = vmatpush1.msra.mxu0 0.0
    %7308 = vmatprep.subr.mxu0 0.0
    %7309 = vmatpush1.msra.mxu0 0.0
    %7310 = vmatprep.subr.mxu0 0.0
    %7311 = vmatpush1.msra.mxu0 0.0
    %7312 = vmatprep.subr.mxu0 0.0
    %7313 = vmatpush1.msra.mxu0 0.0
    %7314 = vmatprep.subr.mxu0 0.0
    %7315 = vmatpush1.msra.mxu0 0.0
    %7316 = vmatprep.subr.mxu0 0.0
    %7317 = vmatpush1.msra.mxu0 0.0
    %7318 = vmatprep.subr.mxu0 0.0
    %7319 = vmatpush1.msra.mxu0 0.0
    %7320 = vmatprep.subr.mxu0 0.0
    %7321 = vmatpush1.msra.mxu0 0.0
    %7322 = vmatprep.subr.mxu0 0.0
    %7323 = vmatpush1.msra.mxu0 0.0
    %7324 = vmatprep.subr.mxu0 0.0
    %7325 = vmatpush1.msra.mxu0 0.0
    %7326 = vmatprep.mubr.f32.mxu0 0.0
    %7327 = vmatmul.mubr.f32.gmra.mrb[0].mxu0 %v7246
    %v7328 = vpop.f32.mrb[0].mxu0
    %v7329 = vadd.f32 0.0, %v7328
    %v7330 = vpop.f32.mrb[0].mxu0
    %7331 = vmatprep.mubr.f32.mxu0 0.0
    %7332 = vmatmul.mubr.f32.gmra.mrb[0].mxu0 %v7247
    %v7333 = vpop.f32.mrb[0].mxu0
    %v7334 = vadd.f32 0.0, %v7333
    %v7335 = vpop.f32.mrb[0].mxu0
    %7336 = vmatprep.mubr.f32.mxu0 0.0
    %7337 = vmatmul.mubr.f32.gmra.mrb[0].mxu0 %v7248
    %v7338 = vpop.f32.mrb[0].mxu0
    %v7339 = vadd.f32 0.0, %v7338
    %v7340 = vpop.f32.mrb[0].mxu0
    %7341 = vmatprep.mubr.f32.mxu0 0.0
    %7342 = vmatmul.mubr.f32.gmra.mrb[0].mxu0 %v7249
    %v7343 = vpop.f32.mrb[0].mxu0
    %v7344 = vadd.f32 0.0, %v7343
    %v7345 = vpop.f32.mrb[0].mxu0
    %7346 = vmatprep.mubr.f32.mxu0 0.0
    %7347 = vmatmul.mubr.f32.gmra.mrb[0].mxu0 %v7250
    %v7348 = vpop.f32.mrb[0].mxu0
    %v7349 = vadd.f32 0.0, %v7348
    %v7350 = vpop.f32.mrb[0].mxu0
    %7351 = vmatprep.mubr.f32.mxu0 0.0
    %7352 = vmatmul.mubr.f32.gmra.mrb[0].mxu0 %v7251
    %v7353 = vpop.f32.mrb[0].mxu0
    %v7354 = vadd.f32 0.0, %v7353
    %v7355 = vpop.f32.mrb[0].mxu0
    %7356 = vmatprep.mubr.f32.mxu0 0.0
    %7357 = vmatmul.mubr.f32.gmra.mrb[0].mxu0 %v7252
    %v7358 = vpop.f32.mrb[0].mxu0
    %v7359 = vadd.f32 0.0, %v7358
    %v7360 = vpop.f32.mrb[0].mxu0
    %7361 = vmatprep.mubr.f32.mxu0 0.0
    %7362 = vmatmul.mubr.f32.gmra.mrb[0].mxu0 %v7253
    %v7363 = vpop.f32.mrb[0].mxu0
    %v7364 = vadd.f32 0.0, %v7363
    %v7365 = vpop.f32.mrb[0].mxu0
    %7366 = vmatprep.mubr.f32.mxu0 0.0
    %7367 = vmatmul.mubr.f32.gmra.mrb[0].mxu0 %v7254
    %v7368 = vpop.f32.mrb[0].mxu0
    %v7369 = vadd.f32 0.0, %v7368
    %v7370 = vpop.f32.mrb[0].mxu0
    %7371 = vmatprep.mubr.f32.mxu0 0.0
    %7372 = vmatmul.mubr.f32.gmra.mrb[0].mxu0 %v7255
    %v7373 = vpop.f32.mrb[0].mxu0
    %v7374 = vadd.f32 0.0, %v7373
    %v7375 = vpop.f32.mrb[0].mxu0
    %7376 = vmatprep.mubr.f32.mxu0 0.0
    %7377 = vmatmul.mubr.f32.gmra.mrb[0].mxu0 %v7256
    %v7378 = vpop.f32.mrb[0].mxu0
    %v7379 = vadd.f32 0.0, %v7378
    %v7380 = vpop.f32.mrb[0].mxu0
    %7381 = vmatprep.mubr.f32.mxu0 0.0
    %7382 = vmatmul.mubr.f32.gmra.mrb[0].mxu0 %v7257
    %v7383 = vpop.f32.mrb[0].mxu0
    %v7384 = vadd.f32 0.0, %v7383
    %v7385 = vpop.f32.mrb[0].mxu0
    %7386 = vmatprep.mubr.f32.mxu0 0.0
    %7387 = vmatmul.mubr.f32.gmra.mrb[0].mxu0 %v7258
    %v7388 = vpop.f32.mrb[0].mxu0
    %v7389 = vadd.f32 0.0, %v7388
    %v7390 = vpop.f32.mrb[0].mxu0
    %7391 = vmatprep.mubr.f32.mxu0 0.0
    %7392 = vmatmul.mubr.f32.gmra.mrb[0].mxu0 %v7259
    %v7393 = vpop.f32.mrb[0].mxu0
    %v7394 = vadd.f32 0.0, %v7393
    %v7395 = vpop.f32.mrb[0].mxu0
    %7396 = vmatprep.mubr.f32.mxu0 0.0
    %7397 = vmatmul.mubr.f32.gmra.mrb[0].mxu0 %v7260
    %v7398 = vpop.f32.mrb[0].mxu0
    %v7399 = vadd.f32 0.0, %v7398
    %v7400 = vpop.f32.mrb[0].mxu0
    %7401 = vmatprep.mubr.f32.mxu0 0.0
    %7402 = vmatmul.mubr.f32.gmra.mrb[0].mxu0 %v7261
    %v7403 = vpop.f32.mrb[0].mxu0
    %v7404 = vadd.f32 0.0, %v7403
    %v7405 = vpop.f32.mrb[0].mxu0
    %7406 = vdwg.mxu0
    %v7407 = vld [vmem:[#allocation12] sm:$0xff]
    %v7408 = vld [vmem:[#allocation12 + $0x8] sm:$0xff]
    %v7409 = vld [vmem:[#allocation12 + $0x10] sm:$0xff]
    %v7410 = vld [vmem:[#allocation12 + $0x18] sm:$0xff]
    %s7411 = scalar_lea.vmem %s18, 128
    %v7412 = vld [vmem:[%s7411] sm:$0xff]
    %v7413 = vld [vmem:[%s7411 + $0x8] sm:$0xff]
    %v7414 = vld [vmem:[%s7411 + $0x10] sm:$0xff]
    %v7415 = vld [vmem:[%s7411 + $0x18] sm:$0xff]
    %v7416 = vld [vmem:[%s7411 + $0x20] sm:$0xff]
    %v7417 = vld [vmem:[%s7411 + $0x28] sm:$0xff]
    %v7418 = vld [vmem:[%s7411 + $0x30] sm:$0xff]
    %v7419 = vld [vmem:[%s7411 + $0x38] sm:$0xff]
    %v7420 = vld [vmem:[%s7411 + $0x40] sm:$0xff]
    %v7421 = vld [vmem:[%s7411 + $0x48] sm:$0xff]
    %v7422 = vld [vmem:[%s7411 + $0x50] sm:$0xff]
    %v7423 = vld [vmem:[%s7411 + $0x58] sm:$0xff]
    %v7424 = vld [vmem:[%s7411 + $0x60] sm:$0xff]
    %v7425 = vld [vmem:[%s7411 + $0x68] sm:$0xff]
    %v7426 = vld [vmem:[%s7411 + $0x70] sm:$0xff]
    %v7427 = vld [vmem:[%s7411 + $0x78] sm:$0xff]
    %7428 = vmatprep.subr.mxu0 0.0
    %7429 = vmatpush1.msra.mxu0 %v7230
    %7430 = vmatprep.subr.mxu0 0.0
    %7431 = vmatpush1.msra.mxu0 %v7231
    %7432 = vmatprep.subr.mxu0 0.0
    %7433 = vmatpush1.msra.mxu0 %v7232
    %7434 = vmatprep.subr.mxu0 0.0
    %7435 = vmatpush1.msra.mxu0 %v7233
    %7436 = vmatprep.subr.mxu0 0.0
    %7437 = vmatpush1.msra.mxu0 %v7234
    %7438 = vmatprep.subr.mxu0 0.0
    %7439 = vmatpush1.msra.mxu0 %v7235
    %7440 = vmatprep.subr.mxu0 0.0
    %7441 = vmatpush1.msra.mxu0 %v7236
    %7442 = vmatprep.subr.mxu0 0.0
    %7443 = vmatpush1.msra.mxu0 %v7237
    %7444 = vmatprep.subr.mxu0 0.0
    %7445 = vmatpush1.msra.mxu0 %v7238
    %7446 = vmatprep.subr.mxu0 0.0
    %7447 = vmatpush1.msra.mxu0 %v7239
    %7448 = vmatprep.subr.mxu0 0.0
    %7449 = vmatpush1.msra.mxu0 %v7240
    %7450 = vmatprep.subr.mxu0 0.0
    %7451 = vmatpush1.msra.mxu0 %v7241
    %7452 = vmatprep.subr.mxu0 0.0
    %7453 = vmatpush1.msra.mxu0 %v7242
    %7454 = vmatprep.subr.mxu0 0.0
    %7455 = vmatpush1.msra.mxu0 %v7243
    %7456 = vmatprep.subr.mxu0 0.0
    %7457 = vmatpush1.msra.mxu0 %v7244
    %7458 = vmatprep.subr.mxu0 0.0
    %7459 = vmatpush1.msra.mxu0 %v7245
    %7460 = vmatprep.subr.mxu0 0.0
    %7461 = vmatpush1.msra.mxu0 0.0
    %7462 = vmatprep.subr.mxu0 0.0
    %7463 = vmatpush1.msra.mxu0 0.0
    %7464 = vmatprep.subr.mxu0 0.0
    %7465 = vmatpush1.msra.mxu0 0.0
    %7466 = vmatprep.subr.mxu0 0.0
    %7467 = vmatpush1.msra.mxu0 0.0
    %7468 = vmatprep.subr.mxu0 0.0
    %7469 = vmatpush1.msra.mxu0 0.0
    %7470 = vmatprep.subr.mxu0 0.0
    %7471 = vmatpush1.msra.mxu0 0.0
    %7472 = vmatprep.subr.mxu0 0.0
    %7473 = vmatpush1.msra.mxu0 0.0
    %7474 = vmatprep.subr.mxu0 0.0
    %7475 = vmatpush1.msra.mxu0 0.0
    %7476 = vmatprep.subr.mxu0 0.0
    %7477 = vmatpush1.msra.mxu0 0.0
    %7478 = vmatprep.subr.mxu0 0.0
    %7479 = vmatpush1.msra.mxu0 0.0
    %7480 = vmatprep.subr.mxu0 0.0
    %7481 = vmatpush1.msra.mxu0 0.0
    %7482 = vmatprep.subr.mxu0 0.0
    %7483 = vmatpush1.msra.mxu0 0.0
    %7484 = vmatprep.subr.mxu0 0.0
    %7485 = vmatpush1.msra.mxu0 0.0
    %7486 = vmatprep.subr.mxu0 0.0
    %7487 = vmatpush1.msra.mxu0 0.0
    %7488 = vmatprep.subr.mxu0 0.0
    %7489 = vmatpush1.msra.mxu0 0.0
    %7490 = vmatprep.subr.mxu0 0.0
    %7491 = vmatpush1.msra.mxu0 0.0
    %7492 = vmatprep.mubr.f32.mxu0 0.0
    %7493 = vmatmul.mubr.f32.gmra.mrb[0].mxu0 %v7412
    %v7494 = vpop.f32.mrb[0].mxu0
    %v7495 = vadd.f32 0.0, %v7494
    %v7496 = vpop.f32.mrb[0].mxu0
    %7497 = vmatprep.mubr.f32.mxu0 0.0
    %7498 = vmatmul.mubr.f32.gmra.mrb[0].mxu0 %v7413
    %v7499 = vpop.f32.mrb[0].mxu0
    %v7500 = vadd.f32 0.0, %v7499
    %v7501 = vpop.f32.mrb[0].mxu0
    %7502 = vmatprep.mubr.f32.mxu0 0.0
    %7503 = vmatmul.mubr.f32.gmra.mrb[0].mxu0 %v7414
    %v7504 = vpop.f32.mrb[0].mxu0
    %v7505 = vadd.f32 0.0, %v7504
    %v7506 = vpop.f32.mrb[0].mxu0
    %7507 = vmatprep.mubr.f32.mxu0 0.0
    %7508 = vmatmul.mubr.f32.gmra.mrb[0].mxu0 %v7415
    %v7509 = vpop.f32.mrb[0].mxu0
    %v7510 = vadd.f32 0.0, %v7509
    %v7511 = vpop.f32.mrb[0].mxu0
    %7512 = vmatprep.mubr.f32.mxu0 0.0
    %7513 = vmatmul.mubr.f32.gmra.mrb[0].mxu0 %v7416
    %v7514 = vpop.f32.mrb[0].mxu0
    %v7515 = vadd.f32 0.0, %v7514
    %v7516 = vpop.f32.mrb[0].mxu0
    %7517 = vmatprep.mubr.f32.mxu0 0.0
    %7518 = vmatmul.mubr.f32.gmra.mrb[0].mxu0 %v7417
    %v7519 = vpop.f32.mrb[0].mxu0
    %v7520 = vadd.f32 0.0, %v7519
    %v7521 = vpop.f32.mrb[0].mxu0
    %7522 = vmatprep.mubr.f32.mxu0 0.0
    %7523 = vmatmul.mubr.f32.gmra.mrb[0].mxu0 %v7418
    %v7524 = vpop.f32.mrb[0].mxu0
    %v7525 = vadd.f32 0.0, %v7524
    %v7526 = vpop.f32.mrb[0].mxu0
    %7527 = vmatprep.mubr.f32.mxu0 0.0
    %7528 = vmatmul.mubr.f32.gmra.mrb[0].mxu0 %v7419
    %v7529 = vpop.f32.mrb[0].mxu0
    %v7530 = vadd.f32 0.0, %v7529
    %v7531 = vpop.f32.mrb[0].mxu0
    %7532 = vmatprep.mubr.f32.mxu0 0.0
    %7533 = vmatmul.mubr.f32.gmra.mrb[0].mxu0 %v7420
    %v7534 = vpop.f32.mrb[0].mxu0
    %v7535 = vadd.f32 0.0, %v7534
    %v7536 = vpop.f32.mrb[0].mxu0
    %7537 = vmatprep.mubr.f32.mxu0 0.0
    %7538 = vmatmul.mubr.f32.gmra.mrb[0].mxu0 %v7421
    %v7539 = vpop.f32.mrb[0].mxu0
    %v7540 = vadd.f32 0.0, %v7539
    %v7541 = vpop.f32.mrb[0].mxu0
    %7542 = vmatprep.mubr.f32.mxu0 0.0
    %7543 = vmatmul.mubr.f32.gmra.mrb[0].mxu0 %v7422
    %v7544 = vpop.f32.mrb[0].mxu0
    %v7545 = vadd.f32 0.0, %v7544
    %v7546 = vpop.f32.mrb[0].mxu0
    %7547 = vmatprep.mubr.f32.mxu0 0.0
    %7548 = vmatmul.mubr.f32.gmra.mrb[0].mxu0 %v7423
    %v7549 = vpop.f32.mrb[0].mxu0
    %v7550 = vadd.f32 0.0, %v7549
    %v7551 = vpop.f32.mrb[0].mxu0
    %7552 = vmatprep.mubr.f32.mxu0 0.0
    %7553 = vmatmul.mubr.f32.gmra.mrb[0].mxu0 %v7424
    %v7554 = vpop.f32.mrb[0].mxu0
    %v7555 = vadd.f32 0.0, %v7554
    %v7556 = vpop.f32.mrb[0].mxu0
    %7557 = vmatprep.mubr.f32.mxu0 0.0
    %7558 = vmatmul.mubr.f32.gmra.mrb[0].mxu0 %v7425
    %v7559 = vpop.f32.mrb[0].mxu0
    %v7560 = vadd.f32 0.0, %v7559
    %v7561 = vpop.f32.mrb[0].mxu0
    %7562 = vmatprep.mubr.f32.mxu0 0.0
    %7563 = vmatmul.mubr.f32.gmra.mrb[0].mxu0 %v7426
    %v7564 = vpop.f32.mrb[0].mxu0
    %v7565 = vadd.f32 0.0, %v7564
    %v7566 = vpop.f32.mrb[0].mxu0
    %7567 = vmatprep.mubr.f32.mxu0 0.0
    %7568 = vmatmul.mubr.f32.gmra.mrb[0].mxu0 %v7427
    %v7569 = vpop.f32.mrb[0].mxu0
    %v7570 = vadd.f32 0.0, %v7569
    %v7571 = vpop.f32.mrb[0].mxu0
    %7572 = vdwg.mxu0
    %s7573 = scalar_lea.vmem [#allocation12], 32
    %v7574 = vld [vmem:[%s7573] sm:$0xff]
    %v7575 = vld [vmem:[%s7573 + $0x8] sm:$0xff]
    %v7576 = vld [vmem:[%s7573 + $0x10] sm:$0xff]
    %v7577 = vld [vmem:[%s7573 + $0x18] sm:$0xff]
    %v7579 = vsel %vm6418, %v7495, 0
    %v7582 = vsel %vm6418, %v7500, 0
    %v7585 = vsel %vm6418, %v7505, 0
    %v7588 = vsel %vm6418, %v7510, 0
    %v7591 = vsel %vm6418, %v7515, 0
    %v7594 = vsel %vm6418, %v7520, 0
    %v7597 = vsel %vm6418, %v7525, 0
    %v7600 = vsel %vm6418, %v7530, 0
    %v7603 = vsel %vm6418, %v7535, 0
    %v7606 = vsel %vm6418, %v7540, 0
    %v7609 = vsel %vm6418, %v7545, 0
    %v7612 = vsel %vm6418, %v7550, 0
    %v7615 = vsel %vm6418, %v7555, 0
    %v7618 = vsel %vm6418, %v7560, 0
    %v7621 = vsel %vm6418, %v7565, 0
    %v7624 = vsel %vm6418, %v7570, 0
    %7626 = vmatprep.subr.mxu0 0.0
    %7627 = vmatpush1.msra.mxu0 %v7574
    %7628 = vmatprep.subr.mxu0 0.0
    %7629 = vmatpush1.msra.mxu0 %v7575
    %7630 = vmatprep.subr.mxu0 0.0
    %7631 = vmatpush1.msra.mxu0 %v7576
    %7632 = vmatprep.subr.mxu0 0.0
    %7633 = vmatpush1.msra.mxu0 %v7577
    %7634 = vmatprep.subr.mxu0 0.0
    %7635 = vmatpush1.msra.mxu0 0.0
    %7636 = vmatprep.subr.mxu0 0.0
    %7637 = vmatpush1.msra.mxu0 0.0
    %7638 = vmatprep.subr.mxu0 0.0
    %7639 = vmatpush1.msra.mxu0 0.0
    %7640 = vmatprep.subr.mxu0 0.0
    %7641 = vmatpush1.msra.mxu0 0.0
    %7642 = vmatprep.subr.mxu0 0.0
    %7643 = vmatpush1.msra.mxu0 0.0
    %7644 = vmatprep.subr.mxu0 0.0
    %7645 = vmatpush1.msra.mxu0 0.0
    %7646 = vmatprep.subr.mxu0 0.0
    %7647 = vmatpush1.msra.mxu0 0.0
    %7648 = vmatprep.subr.mxu0 0.0
    %7649 = vmatpush1.msra.mxu0 0.0
    %7650 = vmatprep.subr.mxu0 0.0
    %7651 = vmatpush1.msra.mxu0 0.0
    %7652 = vmatprep.subr.mxu0 0.0
    %7653 = vmatpush1.msra.mxu0 0.0
    %7654 = vmatprep.subr.mxu0 0.0
    %7655 = vmatpush1.msra.mxu0 0.0
    %7656 = vmatprep.subr.mxu0 0.0
    %7657 = vmatpush1.msra.mxu0 0.0
    %7658 = vmatprep.subr.mxu0 0.0
    %7659 = vmatpush1.msra.mxu0 0.0
    %7660 = vmatprep.subr.mxu0 0.0
    %7661 = vmatpush1.msra.mxu0 0.0
    %7662 = vmatprep.subr.mxu0 0.0
    %7663 = vmatpush1.msra.mxu0 0.0
    %7664 = vmatprep.subr.mxu0 0.0
    %7665 = vmatpush1.msra.mxu0 0.0
    %7666 = vmatprep.subr.mxu0 0.0
    %7667 = vmatpush1.msra.mxu0 0.0
    %7668 = vmatprep.subr.mxu0 0.0
    %7669 = vmatpush1.msra.mxu0 0.0
    %7670 = vmatprep.subr.mxu0 0.0
    %7671 = vmatpush1.msra.mxu0 0.0
    %7672 = vmatprep.subr.mxu0 0.0
    %7673 = vmatpush1.msra.mxu0 0.0
    %7674 = vmatprep.subr.mxu0 0.0
    %7675 = vmatpush1.msra.mxu0 0.0
    %7676 = vmatprep.subr.mxu0 0.0
    %7677 = vmatpush1.msra.mxu0 0.0
    %7678 = vmatprep.subr.mxu0 0.0
    %7679 = vmatpush1.msra.mxu0 0.0
    %7680 = vmatprep.subr.mxu0 0.0
    %7681 = vmatpush1.msra.mxu0 0.0
    %7682 = vmatprep.subr.mxu0 0.0
    %7683 = vmatpush1.msra.mxu0 0.0
    %7684 = vmatprep.subr.mxu0 0.0
    %7685 = vmatpush1.msra.mxu0 0.0
    %7686 = vmatprep.subr.mxu0 0.0
    %7687 = vmatpush1.msra.mxu0 0.0
    %7688 = vmatprep.subr.mxu0 0.0
    %7689 = vmatpush1.msra.mxu0 0.0
    %7690 = vmatprep.mubr.f32.mxu0 0.0
    %7691 = vmatmul.mubr.f32.gmra.mrb[0].mxu0 %v7579
    %v7692 = vpop.f32.mrb[0].mxu0
    %v7693 = vadd.f32 0.0, %v7692
    %v7694 = vpop.f32.mrb[0].mxu0
    %7695 = vmatprep.mubr.f32.mxu0 0.0
    %7696 = vmatmul.mubr.f32.gmra.mrb[0].mxu0 %v7582
    %v7697 = vpop.f32.mrb[0].mxu0
    %v7698 = vadd.f32 0.0, %v7697
    %v7699 = vpop.f32.mrb[0].mxu0
    %7700 = vmatprep.mubr.f32.mxu0 0.0
    %7701 = vmatmul.mubr.f32.gmra.mrb[0].mxu0 %v7585
    %v7702 = vpop.f32.mrb[0].mxu0
    %v7703 = vadd.f32 0.0, %v7702
    %v7704 = vpop.f32.mrb[0].mxu0
    %7705 = vmatprep.mubr.f32.mxu0 0.0
    %7706 = vmatmul.mubr.f32.gmra.mrb[0].mxu0 %v7588
    %v7707 = vpop.f32.mrb[0].mxu0
    %v7708 = vadd.f32 0.0, %v7707
    %v7709 = vpop.f32.mrb[0].mxu0
    %7710 = vmatprep.mubr.f32.mxu0 0.0
    %7711 = vmatmul.mubr.f32.gmra.mrb[0].mxu0 %v7591
    %v7712 = vpop.f32.mrb[0].mxu0
    %v7713 = vadd.f32 0.0, %v7712
    %v7714 = vpop.f32.mrb[0].mxu0
    %7715 = vmatprep.mubr.f32.mxu0 0.0
    %7716 = vmatmul.mubr.f32.gmra.mrb[0].mxu0 %v7594
    %v7717 = vpop.f32.mrb[0].mxu0
    %v7718 = vadd.f32 0.0, %v7717
    %v7719 = vpop.f32.mrb[0].mxu0
    %7720 = vmatprep.mubr.f32.mxu0 0.0
    %7721 = vmatmul.mubr.f32.gmra.mrb[0].mxu0 %v7597
    %v7722 = vpop.f32.mrb[0].mxu0
    %v7723 = vadd.f32 0.0, %v7722
    %v7724 = vpop.f32.mrb[0].mxu0
    %7725 = vmatprep.mubr.f32.mxu0 0.0
    %7726 = vmatmul.mubr.f32.gmra.mrb[0].mxu0 %v7600
    %v7727 = vpop.f32.mrb[0].mxu0
    %v7728 = vadd.f32 0.0, %v7727
    %v7729 = vpop.f32.mrb[0].mxu0
    %7730 = vmatprep.mubr.f32.mxu0 0.0
    %7731 = vmatmul.mubr.f32.gmra.mrb[0].mxu0 %v7603
    %v7732 = vpop.f32.mrb[0].mxu0
    %v7733 = vadd.f32 0.0, %v7732
    %v7734 = vpop.f32.mrb[0].mxu0
    %7735 = vmatprep.mubr.f32.mxu0 0.0
    %7736 = vmatmul.mubr.f32.gmra.mrb[0].mxu0 %v7606
    %v7737 = vpop.f32.mrb[0].mxu0
    %v7738 = vadd.f32 0.0, %v7737
    %v7739 = vpop.f32.mrb[0].mxu0
    %7740 = vmatprep.mubr.f32.mxu0 0.0
    %7741 = vmatmul.mubr.f32.gmra.mrb[0].mxu0 %v7609
    %v7742 = vpop.f32.mrb[0].mxu0
    %v7743 = vadd.f32 0.0, %v7742
    %v7744 = vpop.f32.mrb[0].mxu0
    %7745 = vmatprep.mubr.f32.mxu0 0.0
    %7746 = vmatmul.mubr.f32.gmra.mrb[0].mxu0 %v7612
    %v7747 = vpop.f32.mrb[0].mxu0
    %v7748 = vadd.f32 0.0, %v7747
    %v7749 = vpop.f32.mrb[0].mxu0
    %7750 = vmatprep.mubr.f32.mxu0 0.0
    %7751 = vmatmul.mubr.f32.gmra.mrb[0].mxu0 %v7615
    %v7752 = vpop.f32.mrb[0].mxu0
    %v7753 = vadd.f32 0.0, %v7752
    %v7754 = vpop.f32.mrb[0].mxu0
    %7755 = vmatprep.mubr.f32.mxu0 0.0
    %7756 = vmatmul.mubr.f32.gmra.mrb[0].mxu0 %v7618
    %v7757 = vpop.f32.mrb[0].mxu0
    %v7758 = vadd.f32 0.0, %v7757
    %v7759 = vpop.f32.mrb[0].mxu0
    %7760 = vmatprep.mubr.f32.mxu0 0.0
    %7761 = vmatmul.mubr.f32.gmra.mrb[0].mxu0 %v7621
    %v7762 = vpop.f32.mrb[0].mxu0
    %v7763 = vadd.f32 0.0, %v7762
    %v7764 = vpop.f32.mrb[0].mxu0
    %7765 = vmatprep.mubr.f32.mxu0 0.0
    %7766 = vmatmul.mubr.f32.gmra.mrb[0].mxu0 %v7624
    %v7767 = vpop.f32.mrb[0].mxu0
    %v7768 = vadd.f32 0.0, %v7767
    %v7769 = vpop.f32.mrb[0].mxu0
    %7770 = vdwg.mxu0
    %v7772 = vsel %vm6418, %v7329, 0
    %v7775 = vsel %vm6418, %v7334, 0
    %v7778 = vsel %vm6418, %v7339, 0
    %v7781 = vsel %vm6418, %v7344, 0
    %v7784 = vsel %vm6418, %v7349, 0
    %v7787 = vsel %vm6418, %v7354, 0
    %v7790 = vsel %vm6418, %v7359, 0
    %v7793 = vsel %vm6418, %v7364, 0
    %v7796 = vsel %vm6418, %v7369, 0
    %v7799 = vsel %vm6418, %v7374, 0
    %v7802 = vsel %vm6418, %v7379, 0
    %v7805 = vsel %vm6418, %v7384, 0
    %v7808 = vsel %vm6418, %v7389, 0
    %v7811 = vsel %vm6418, %v7394, 0
    %v7814 = vsel %vm6418, %v7399, 0
    %v7817 = vsel %vm6418, %v7404, 0
    %7819 = vmatprep.subr.mxu0 0.0
    %7820 = vmatpush1.msra.mxu0 %v7407
    %7821 = vmatprep.subr.mxu0 0.0
    %7822 = vmatpush1.msra.mxu0 %v7408
    %7823 = vmatprep.subr.mxu0 0.0
    %7824 = vmatpush1.msra.mxu0 %v7409
    %7825 = vmatprep.subr.mxu0 0.0
    %7826 = vmatpush1.msra.mxu0 %v7410
    %7827 = vmatprep.subr.mxu0 0.0
    %7828 = vmatpush1.msra.mxu0 0.0
    %7829 = vmatprep.subr.mxu0 0.0
    %7830 = vmatpush1.msra.mxu0 0.0
    %7831 = vmatprep.subr.mxu0 0.0
    %7832 = vmatpush1.msra.mxu0 0.0
    %7833 = vmatprep.subr.mxu0 0.0
    %7834 = vmatpush1.msra.mxu0 0.0
    %7835 = vmatprep.subr.mxu0 0.0
    %7836 = vmatpush1.msra.mxu0 0.0
    %7837 = vmatprep.subr.mxu0 0.0
    %7838 = vmatpush1.msra.mxu0 0.0
    %7839 = vmatprep.subr.mxu0 0.0
    %7840 = vmatpush1.msra.mxu0 0.0
    %7841 = vmatprep.subr.mxu0 0.0
    %7842 = vmatpush1.msra.mxu0 0.0
    %7843 = vmatprep.subr.mxu0 0.0
    %7844 = vmatpush1.msra.mxu0 0.0
    %7845 = vmatprep.subr.mxu0 0.0
    %7846 = vmatpush1.msra.mxu0 0.0
    %7847 = vmatprep.subr.mxu0 0.0
    %7848 = vmatpush1.msra.mxu0 0.0
    %7849 = vmatprep.subr.mxu0 0.0
    %7850 = vmatpush1.msra.mxu0 0.0
    %7851 = vmatprep.subr.mxu0 0.0
    %7852 = vmatpush1.msra.mxu0 0.0
    %7853 = vmatprep.subr.mxu0 0.0
    %7854 = vmatpush1.msra.mxu0 0.0
    %7855 = vmatprep.subr.mxu0 0.0
    %7856 = vmatpush1.msra.mxu0 0.0
    %7857 = vmatprep.subr.mxu0 0.0
    %7858 = vmatpush1.msra.mxu0 0.0
    %7859 = vmatprep.subr.mxu0 0.0
    %7860 = vmatpush1.msra.mxu0 0.0
    %7861 = vmatprep.subr.mxu0 0.0
    %7862 = vmatpush1.msra.mxu0 0.0
    %7863 = vmatprep.subr.mxu0 0.0
    %7864 = vmatpush1.msra.mxu0 0.0
    %7865 = vmatprep.subr.mxu0 0.0
    %7866 = vmatpush1.msra.mxu0 0.0
    %7867 = vmatprep.subr.mxu0 0.0
    %7868 = vmatpush1.msra.mxu0 0.0
    %7869 = vmatprep.subr.mxu0 0.0
    %7870 = vmatpush1.msra.mxu0 0.0
    %7871 = vmatprep.subr.mxu0 0.0
    %7872 = vmatpush1.msra.mxu0 0.0
    %7873 = vmatprep.subr.mxu0 0.0
    %7874 = vmatpush1.msra.mxu0 0.0
    %7875 = vmatprep.subr.mxu0 0.0
    %7876 = vmatpush1.msra.mxu0 0.0
    %7877 = vmatprep.subr.mxu0 0.0
    %7878 = vmatpush1.msra.mxu0 0.0
    %7879 = vmatprep.subr.mxu0 0.0
    %7880 = vmatpush1.msra.mxu0 0.0
    %7881 = vmatprep.subr.mxu0 0.0
    %7882 = vmatpush1.msra.mxu0 0.0
    %7883 = vmatprep.mubr.f32.mxu0 0.0
    %7884 = vmatmul.mubr.f32.gmra.mrb[0].mxu0 %v7772
    %v7885 = vpop.f32.mrb[0].mxu0
    %v7886 = vadd.f32 %v7693, %v7885
    %v7887 = vpop.f32.mrb[0].mxu0
    %7888 = vmatprep.mubr.f32.mxu0 0.0
    %7889 = vmatmul.mubr.f32.gmra.mrb[0].mxu0 %v7775
    %v7890 = vpop.f32.mrb[0].mxu0
    %v7891 = vadd.f32 %v7698, %v7890
    %v7892 = vpop.f32.mrb[0].mxu0
    %7893 = vmatprep.mubr.f32.mxu0 0.0
    %7894 = vmatmul.mubr.f32.gmra.mrb[0].mxu0 %v7778
    %v7895 = vpop.f32.mrb[0].mxu0
    %v7896 = vadd.f32 %v7703, %v7895
    %v7897 = vpop.f32.mrb[0].mxu0
    %7898 = vmatprep.mubr.f32.mxu0 0.0
    %7899 = vmatmul.mubr.f32.gmra.mrb[0].mxu0 %v7781
    %v7900 = vpop.f32.mrb[0].mxu0
    %v7901 = vadd.f32 %v7708, %v7900
    %v7902 = vpop.f32.mrb[0].mxu0
    %7903 = vmatprep.mubr.f32.mxu0 0.0
    %7904 = vmatmul.mubr.f32.gmra.mrb[0].mxu0 %v7784
    %v7905 = vpop.f32.mrb[0].mxu0
    %v7906 = vadd.f32 %v7713, %v7905
    %v7907 = vpop.f32.mrb[0].mxu0
    %7908 = vmatprep.mubr.f32.mxu0 0.0
    %7909 = vmatmul.mubr.f32.gmra.mrb[0].mxu0 %v7787
    %v7910 = vpop.f32.mrb[0].mxu0
    %v7911 = vadd.f32 %v7718, %v7910
    %v7912 = vpop.f32.mrb[0].mxu0
    %7913 = vmatprep.mubr.f32.mxu0 0.0
    %7914 = vmatmul.mubr.f32.gmra.mrb[0].mxu0 %v7790
    %v7915 = vpop.f32.mrb[0].mxu0
    %v7916 = vadd.f32 %v7723, %v7915
    %v7917 = vpop.f32.mrb[0].mxu0
    %7918 = vmatprep.mubr.f32.mxu0 0.0
    %7919 = vmatmul.mubr.f32.gmra.mrb[0].mxu0 %v7793
    %v7920 = vpop.f32.mrb[0].mxu0
    %v7921 = vadd.f32 %v7728, %v7920
    %v7922 = vpop.f32.mrb[0].mxu0
    %7923 = vmatprep.mubr.f32.mxu0 0.0
    %7924 = vmatmul.mubr.f32.gmra.mrb[0].mxu0 %v7796
    %v7925 = vpop.f32.mrb[0].mxu0
    %v7926 = vadd.f32 %v7733, %v7925
    %v7927 = vpop.f32.mrb[0].mxu0
    %7928 = vmatprep.mubr.f32.mxu0 0.0
    %7929 = vmatmul.mubr.f32.gmra.mrb[0].mxu0 %v7799
    %v7930 = vpop.f32.mrb[0].mxu0
    %v7931 = vadd.f32 %v7738, %v7930
    %v7932 = vpop.f32.mrb[0].mxu0
    %7933 = vmatprep.mubr.f32.mxu0 0.0
    %7934 = vmatmul.mubr.f32.gmra.mrb[0].mxu0 %v7802
    %v7935 = vpop.f32.mrb[0].mxu0
    %v7936 = vadd.f32 %v7743, %v7935
    %v7937 = vpop.f32.mrb[0].mxu0
    %7938 = vmatprep.mubr.f32.mxu0 0.0
    %7939 = vmatmul.mubr.f32.gmra.mrb[0].mxu0 %v7805
    %v7940 = vpop.f32.mrb[0].mxu0
    %v7941 = vadd.f32 %v7748, %v7940
    %v7942 = vpop.f32.mrb[0].mxu0
    %7943 = vmatprep.mubr.f32.mxu0 0.0
    %7944 = vmatmul.mubr.f32.gmra.mrb[0].mxu0 %v7808
    %v7945 = vpop.f32.mrb[0].mxu0
    %v7946 = vadd.f32 %v7753, %v7945
    %v7947 = vpop.f32.mrb[0].mxu0
    %7948 = vmatprep.mubr.f32.mxu0 0.0
    %7949 = vmatmul.mubr.f32.gmra.mrb[0].mxu0 %v7811
    %v7950 = vpop.f32.mrb[0].mxu0
    %v7951 = vadd.f32 %v7758, %v7950
    %v7952 = vpop.f32.mrb[0].mxu0
    %7953 = vmatprep.mubr.f32.mxu0 0.0
    %7954 = vmatmul.mubr.f32.gmra.mrb[0].mxu0 %v7814
    %v7955 = vpop.f32.mrb[0].mxu0
    %v7956 = vadd.f32 %v7763, %v7955
    %v7957 = vpop.f32.mrb[0].mxu0
    %7958 = vmatprep.mubr.f32.mxu0 0.0
    %7959 = vmatmul.mubr.f32.gmra.mrb[0].mxu0 %v7817
    %v7960 = vpop.f32.mrb[0].mxu0
    %v7961 = vadd.f32 %v7768, %v7960
    %v7962 = vpop.f32.mrb[0].mxu0
    %7963 = vdwg.mxu0
    %s7964 = scalar_lea.vmem %s18, 256
    %v7965 = vld [vmem:[%s7964] sm:$0xff]
    %v7966 = vld [vmem:[%s7964 + $0x8] sm:$0xff]
    %v7967 = vld [vmem:[%s7964 + $0x10] sm:$0xff]
    %v7968 = vld [vmem:[%s7964 + $0x18] sm:$0xff]
    %v7969 = vld [vmem:[%s7964 + $0x20] sm:$0xff]
    %v7970 = vld [vmem:[%s7964 + $0x28] sm:$0xff]
    %v7971 = vld [vmem:[%s7964 + $0x30] sm:$0xff]
    %v7972 = vld [vmem:[%s7964 + $0x38] sm:$0xff]
    %v7973 = vld [vmem:[%s7964 + $0x40] sm:$0xff]
    %v7974 = vld [vmem:[%s7964 + $0x48] sm:$0xff]
    %v7975 = vld [vmem:[%s7964 + $0x50] sm:$0xff]
    %v7976 = vld [vmem:[%s7964 + $0x58] sm:$0xff]
    %v7977 = vld [vmem:[%s7964 + $0x60] sm:$0xff]
    %v7978 = vld [vmem:[%s7964 + $0x68] sm:$0xff]
    %v7979 = vld [vmem:[%s7964 + $0x70] sm:$0xff]
    %v7980 = vld [vmem:[%s7964 + $0x78] sm:$0xff]
    %7981 = vmatprep.subr.mxu0 0.0
    %7982 = vmatpush1.msra.mxu0 %v7230
    %7983 = vmatprep.subr.mxu0 0.0
    %7984 = vmatpush1.msra.mxu0 %v7231
    %7985 = vmatprep.subr.mxu0 0.0
    %7986 = vmatpush1.msra.mxu0 %v7232
    %7987 = vmatprep.subr.mxu0 0.0
    %7988 = vmatpush1.msra.mxu0 %v7233
    %7989 = vmatprep.subr.mxu0 0.0
    %7990 = vmatpush1.msra.mxu0 %v7234
    %7991 = vmatprep.subr.mxu0 0.0
    %7992 = vmatpush1.msra.mxu0 %v7235
    %7993 = vmatprep.subr.mxu0 0.0
    %7994 = vmatpush1.msra.mxu0 %v7236
    %7995 = vmatprep.subr.mxu0 0.0
    %7996 = vmatpush1.msra.mxu0 %v7237
    %7997 = vmatprep.subr.mxu0 0.0
    %7998 = vmatpush1.msra.mxu0 %v7238
    %7999 = vmatprep.subr.mxu0 0.0
    %8000 = vmatpush1.msra.mxu0 %v7239
    %8001 = vmatprep.subr.mxu0 0.0
    %8002 = vmatpush1.msra.mxu0 %v7240
    %8003 = vmatprep.subr.mxu0 0.0
    %8004 = vmatpush1.msra.mxu0 %v7241
    %8005 = vmatprep.subr.mxu0 0.0
    %8006 = vmatpush1.msra.mxu0 %v7242
    %8007 = vmatprep.subr.mxu0 0.0
    %8008 = vmatpush1.msra.mxu0 %v7243
    %8009 = vmatprep.subr.mxu0 0.0
    %8010 = vmatpush1.msra.mxu0 %v7244
    %8011 = vmatprep.subr.mxu0 0.0
    %8012 = vmatpush1.msra.mxu0 %v7245
    %8013 = vmatprep.subr.mxu0 0.0
    %8014 = vmatpush1.msra.mxu0 0.0
    %8015 = vmatprep.subr.mxu0 0.0
    %8016 = vmatpush1.msra.mxu0 0.0
    %8017 = vmatprep.subr.mxu0 0.0
    %8018 = vmatpush1.msra.mxu0 0.0
    %8019 = vmatprep.subr.mxu0 0.0
    %8020 = vmatpush1.msra.mxu0 0.0
    %8021 = vmatprep.subr.mxu0 0.0
    %8022 = vmatpush1.msra.mxu0 0.0
    %8023 = vmatprep.subr.mxu0 0.0
    %8024 = vmatpush1.msra.mxu0 0.0
    %8025 = vmatprep.subr.mxu0 0.0
    %8026 = vmatpush1.msra.mxu0 0.0
    %8027 = vmatprep.subr.mxu0 0.0
    %8028 = vmatpush1.msra.mxu0 0.0
    %8029 = vmatprep.subr.mxu0 0.0
    %8030 = vmatpush1.msra.mxu0 0.0
    %8031 = vmatprep.subr.mxu0 0.0
    %8032 = vmatpush1.msra.mxu0 0.0
    %8033 = vmatprep.subr.mxu0 0.0
    %8034 = vmatpush1.msra.mxu0 0.0
    %8035 = vmatprep.subr.mxu0 0.0
    %8036 = vmatpush1.msra.mxu0 0.0
    %8037 = vmatprep.subr.mxu0 0.0
    %8038 = vmatpush1.msra.mxu0 0.0
    %8039 = vmatprep.subr.mxu0 0.0
    %8040 = vmatpush1.msra.mxu0 0.0
    %8041 = vmatprep.subr.mxu0 0.0
    %8042 = vmatpush1.msra.mxu0 0.0
    %8043 = vmatprep.subr.mxu0 0.0
    %8044 = vmatpush1.msra.mxu0 0.0
    %8045 = vmatprep.mubr.f32.mxu0 0.0
    %8046 = vmatmul.mubr.f32.gmra.mrb[0].mxu0 %v7965
    %v8047 = vpop.f32.mrb[0].mxu0
    %v8048 = vadd.f32 0.0, %v8047
    %v8049 = vpop.f32.mrb[0].mxu0
    %8050 = vmatprep.mubr.f32.mxu0 0.0
    %8051 = vmatmul.mubr.f32.gmra.mrb[0].mxu0 %v7966
    %v8052 = vpop.f32.mrb[0].mxu0
    %v8053 = vadd.f32 0.0, %v8052
    %v8054 = vpop.f32.mrb[0].mxu0
    %8055 = vmatprep.mubr.f32.mxu0 0.0
    %8056 = vmatmul.mubr.f32.gmra.mrb[0].mxu0 %v7967
    %v8057 = vpop.f32.mrb[0].mxu0
    %v8058 = vadd.f32 0.0, %v8057
    %v8059 = vpop.f32.mrb[0].mxu0
    %8060 = vmatprep.mubr.f32.mxu0 0.0
    %8061 = vmatmul.mubr.f32.gmra.mrb[0].mxu0 %v7968
    %v8062 = vpop.f32.mrb[0].mxu0
    %v8063 = vadd.f32 0.0, %v8062
    %v8064 = vpop.f32.mrb[0].mxu0
    %8065 = vmatprep.mubr.f32.mxu0 0.0
    %8066 = vmatmul.mubr.f32.gmra.mrb[0].mxu0 %v7969
    %v8067 = vpop.f32.mrb[0].mxu0
    %v8068 = vadd.f32 0.0, %v8067
    %v8069 = vpop.f32.mrb[0].mxu0
    %8070 = vmatprep.mubr.f32.mxu0 0.0
    %8071 = vmatmul.mubr.f32.gmra.mrb[0].mxu0 %v7970
    %v8072 = vpop.f32.mrb[0].mxu0
    %v8073 = vadd.f32 0.0, %v8072
    %v8074 = vpop.f32.mrb[0].mxu0
    %8075 = vmatprep.mubr.f32.mxu0 0.0
    %8076 = vmatmul.mubr.f32.gmra.mrb[0].mxu0 %v7971
    %v8077 = vpop.f32.mrb[0].mxu0
    %v8078 = vadd.f32 0.0, %v8077
    %v8079 = vpop.f32.mrb[0].mxu0
    %8080 = vmatprep.mubr.f32.mxu0 0.0
    %8081 = vmatmul.mubr.f32.gmra.mrb[0].mxu0 %v7972
    %v8082 = vpop.f32.mrb[0].mxu0
    %v8083 = vadd.f32 0.0, %v8082
    %v8084 = vpop.f32.mrb[0].mxu0
    %8085 = vmatprep.mubr.f32.mxu0 0.0
    %8086 = vmatmul.mubr.f32.gmra.mrb[0].mxu0 %v7973
    %v8087 = vpop.f32.mrb[0].mxu0
    %v8088 = vadd.f32 0.0, %v8087
    %v8089 = vpop.f32.mrb[0].mxu0
    %8090 = vmatprep.mubr.f32.mxu0 0.0
    %8091 = vmatmul.mubr.f32.gmra.mrb[0].mxu0 %v7974
    %v8092 = vpop.f32.mrb[0].mxu0
    %v8093 = vadd.f32 0.0, %v8092
    %v8094 = vpop.f32.mrb[0].mxu0
    %8095 = vmatprep.mubr.f32.mxu0 0.0
    %8096 = vmatmul.mubr.f32.gmra.mrb[0].mxu0 %v7975
    %v8097 = vpop.f32.mrb[0].mxu0
    %v8098 = vadd.f32 0.0, %v8097
    %v8099 = vpop.f32.mrb[0].mxu0
    %8100 = vmatprep.mubr.f32.mxu0 0.0
    %8101 = vmatmul.mubr.f32.gmra.mrb[0].mxu0 %v7976
    %v8102 = vpop.f32.mrb[0].mxu0
    %v8103 = vadd.f32 0.0, %v8102
    %v8104 = vpop.f32.mrb[0].mxu0
    %8105 = vmatprep.mubr.f32.mxu0 0.0
    %8106 = vmatmul.mubr.f32.gmra.mrb[0].mxu0 %v7977
    %v8107 = vpop.f32.mrb[0].mxu0
    %v8108 = vadd.f32 0.0, %v8107
    %v8109 = vpop.f32.mrb[0].mxu0
    %8110 = vmatprep.mubr.f32.mxu0 0.0
    %8111 = vmatmul.mubr.f32.gmra.mrb[0].mxu0 %v7978
    %v8112 = vpop.f32.mrb[0].mxu0
    %v8113 = vadd.f32 0.0, %v8112
    %v8114 = vpop.f32.mrb[0].mxu0
    %8115 = vmatprep.mubr.f32.mxu0 0.0
    %8116 = vmatmul.mubr.f32.gmra.mrb[0].mxu0 %v7979
    %v8117 = vpop.f32.mrb[0].mxu0
    %v8118 = vadd.f32 0.0, %v8117
    %v8119 = vpop.f32.mrb[0].mxu0
    %8120 = vmatprep.mubr.f32.mxu0 0.0
    %8121 = vmatmul.mubr.f32.gmra.mrb[0].mxu0 %v7980
    %v8122 = vpop.f32.mrb[0].mxu0
    %v8123 = vadd.f32 0.0, %v8122
    %v8124 = vpop.f32.mrb[0].mxu0
    %8125 = vdwg.mxu0
    %s8126 = scalar_lea.vmem [#allocation12], 64
    %v8127 = vld [vmem:[%s8126] sm:$0xff]
    %v8128 = vld [vmem:[%s8126 + $0x8] sm:$0xff]
    %v8129 = vld [vmem:[%s8126 + $0x10] sm:$0xff]
    %v8130 = vld [vmem:[%s8126 + $0x18] sm:$0xff]
    %v8132 = vsel %vm6418, %v8048, 0
    %v8135 = vsel %vm6418, %v8053, 0
    %v8138 = vsel %vm6418, %v8058, 0
    %v8141 = vsel %vm6418, %v8063, 0
    %v8144 = vsel %vm6418, %v8068, 0
    %v8147 = vsel %vm6418, %v8073, 0
    %v8150 = vsel %vm6418, %v8078, 0
    %v8153 = vsel %vm6418, %v8083, 0
    %v8156 = vsel %vm6418, %v8088, 0
    %v8159 = vsel %vm6418, %v8093, 0
    %v8162 = vsel %vm6418, %v8098, 0
    %v8165 = vsel %vm6418, %v8103, 0
    %v8168 = vsel %vm6418, %v8108, 0
    %v8171 = vsel %vm6418, %v8113, 0
    %v8174 = vsel %vm6418, %v8118, 0
    %v8177 = vsel %vm6418, %v8123, 0
    %8179 = vmatprep.subr.mxu0 0.0
    %8180 = vmatpush1.msra.mxu0 %v8127
    %8181 = vmatprep.subr.mxu0 0.0
    %8182 = vmatpush1.msra.mxu0 %v8128
    %8183 = vmatprep.subr.mxu0 0.0
    %8184 = vmatpush1.msra.mxu0 %v8129
    %8185 = vmatprep.subr.mxu0 0.0
    %8186 = vmatpush1.msra.mxu0 %v8130
    %8187 = vmatprep.subr.mxu0 0.0
    %8188 = vmatpush1.msra.mxu0 0.0
    %8189 = vmatprep.subr.mxu0 0.0
    %8190 = vmatpush1.msra.mxu0 0.0
    %8191 = vmatprep.subr.mxu0 0.0
    %8192 = vmatpush1.msra.mxu0 0.0
    %8193 = vmatprep.subr.mxu0 0.0
    %8194 = vmatpush1.msra.mxu0 0.0
    %8195 = vmatprep.subr.mxu0 0.0
    %8196 = vmatpush1.msra.mxu0 0.0
    %8197 = vmatprep.subr.mxu0 0.0
    %8198 = vmatpush1.msra.mxu0 0.0
    %8199 = vmatprep.subr.mxu0 0.0
    %8200 = vmatpush1.msra.mxu0 0.0
    %8201 = vmatprep.subr.mxu0 0.0
    %8202 = vmatpush1.msra.mxu0 0.0
    %8203 = vmatprep.subr.mxu0 0.0
    %8204 = vmatpush1.msra.mxu0 0.0
    %8205 = vmatprep.subr.mxu0 0.0
    %8206 = vmatpush1.msra.mxu0 0.0
    %8207 = vmatprep.subr.mxu0 0.0
    %8208 = vmatpush1.msra.mxu0 0.0
    %8209 = vmatprep.subr.mxu0 0.0
    %8210 = vmatpush1.msra.mxu0 0.0
    %8211 = vmatprep.subr.mxu0 0.0
    %8212 = vmatpush1.msra.mxu0 0.0
    %8213 = vmatprep.subr.mxu0 0.0
    %8214 = vmatpush1.msra.mxu0 0.0
    %8215 = vmatprep.subr.mxu0 0.0
    %8216 = vmatpush1.msra.mxu0 0.0
    %8217 = vmatprep.subr.mxu0 0.0
    %8218 = vmatpush1.msra.mxu0 0.0
    %8219 = vmatprep.subr.mxu0 0.0
    %8220 = vmatpush1.msra.mxu0 0.0
    %8221 = vmatprep.subr.mxu0 0.0
    %8222 = vmatpush1.msra.mxu0 0.0
    %8223 = vmatprep.subr.mxu0 0.0
    %8224 = vmatpush1.msra.mxu0 0.0
    %8225 = vmatprep.subr.mxu0 0.0
    %8226 = vmatpush1.msra.mxu0 0.0
    %8227 = vmatprep.subr.mxu0 0.0
    %8228 = vmatpush1.msra.mxu0 0.0
    %8229 = vmatprep.subr.mxu0 0.0
    %8230 = vmatpush1.msra.mxu0 0.0
    %8231 = vmatprep.subr.mxu0 0.0
    %8232 = vmatpush1.msra.mxu0 0.0
    %8233 = vmatprep.subr.mxu0 0.0
    %8234 = vmatpush1.msra.mxu0 0.0
    %8235 = vmatprep.subr.mxu0 0.0
    %8236 = vmatpush1.msra.mxu0 0.0
    %8237 = vmatprep.subr.mxu0 0.0
    %8238 = vmatpush1.msra.mxu0 0.0
    %8239 = vmatprep.subr.mxu0 0.0
    %8240 = vmatpush1.msra.mxu0 0.0
    %8241 = vmatprep.subr.mxu0 0.0
    %8242 = vmatpush1.msra.mxu0 0.0
    %8243 = vmatprep.mubr.f32.mxu0 0.0
    %8244 = vmatmul.mubr.f32.gmra.mrb[0].mxu0 %v8132
    %v8245 = vpop.f32.mrb[0].mxu0
    %v8246 = vadd.f32 0.0, %v8245
    %v8247 = vpop.f32.mrb[0].mxu0
    %8248 = vmatprep.mubr.f32.mxu0 0.0
    %8249 = vmatmul.mubr.f32.gmra.mrb[0].mxu0 %v8135
    %v8250 = vpop.f32.mrb[0].mxu0
    %v8251 = vadd.f32 0.0, %v8250
    %v8252 = vpop.f32.mrb[0].mxu0
    %8253 = vmatprep.mubr.f32.mxu0 0.0
    %8254 = vmatmul.mubr.f32.gmra.mrb[0].mxu0 %v8138
    %v8255 = vpop.f32.mrb[0].mxu0
    %v8256 = vadd.f32 0.0, %v8255
    %v8257 = vpop.f32.mrb[0].mxu0
    %8258 = vmatprep.mubr.f32.mxu0 0.0
    %8259 = vmatmul.mubr.f32.gmra.mrb[0].mxu0 %v8141
    %v8260 = vpop.f32.mrb[0].mxu0
    %v8261 = vadd.f32 0.0, %v8260
    %v8262 = vpop.f32.mrb[0].mxu0
    %8263 = vmatprep.mubr.f32.mxu0 0.0
    %8264 = vmatmul.mubr.f32.gmra.mrb[0].mxu0 %v8144
    %v8265 = vpop.f32.mrb[0].mxu0
    %v8266 = vadd.f32 0.0, %v8265
    %v8267 = vpop.f32.mrb[0].mxu0
    %8268 = vmatprep.mubr.f32.mxu0 0.0
    %8269 = vmatmul.mubr.f32.gmra.mrb[0].mxu0 %v8147
    %v8270 = vpop.f32.mrb[0].mxu0
    %v8271 = vadd.f32 0.0, %v8270
    %v8272 = vpop.f32.mrb[0].mxu0
    %8273 = vmatprep.mubr.f32.mxu0 0.0
    %8274 = vmatmul.mubr.f32.gmra.mrb[0].mxu0 %v8150
    %v8275 = vpop.f32.mrb[0].mxu0
    %v8276 = vadd.f32 0.0, %v8275
    %v8277 = vpop.f32.mrb[0].mxu0
    %8278 = vmatprep.mubr.f32.mxu0 0.0
    %8279 = vmatmul.mubr.f32.gmra.mrb[0].mxu0 %v8153
    %v8280 = vpop.f32.mrb[0].mxu0
    %v8281 = vadd.f32 0.0, %v8280
    %v8282 = vpop.f32.mrb[0].mxu0
    %8283 = vmatprep.mubr.f32.mxu0 0.0
    %8284 = vmatmul.mubr.f32.gmra.mrb[0].mxu0 %v8156
    %v8285 = vpop.f32.mrb[0].mxu0
    %v8286 = vadd.f32 0.0, %v8285
    %v8287 = vpop.f32.mrb[0].mxu0
    %8288 = vmatprep.mubr.f32.mxu0 0.0
    %8289 = vmatmul.mubr.f32.gmra.mrb[0].mxu0 %v8159
    %v8290 = vpop.f32.mrb[0].mxu0
    %v8291 = vadd.f32 0.0, %v8290
    %v8292 = vpop.f32.mrb[0].mxu0
    %8293 = vmatprep.mubr.f32.mxu0 0.0
    %8294 = vmatmul.mubr.f32.gmra.mrb[0].mxu0 %v8162
    %v8295 = vpop.f32.mrb[0].mxu0
    %v8296 = vadd.f32 0.0, %v8295
    %v8297 = vpop.f32.mrb[0].mxu0
    %8298 = vmatprep.mubr.f32.mxu0 0.0
    %8299 = vmatmul.mubr.f32.gmra.mrb[0].mxu0 %v8165
    %v8300 = vpop.f32.mrb[0].mxu0
    %v8301 = vadd.f32 0.0, %v8300
    %v8302 = vpop.f32.mrb[0].mxu0
    %8303 = vmatprep.mubr.f32.mxu0 0.0
    %8304 = vmatmul.mubr.f32.gmra.mrb[0].mxu0 %v8168
    %v8305 = vpop.f32.mrb[0].mxu0
    %v8306 = vadd.f32 0.0, %v8305
    %v8307 = vpop.f32.mrb[0].mxu0
    %8308 = vmatprep.mubr.f32.mxu0 0.0
    %8309 = vmatmul.mubr.f32.gmra.mrb[0].mxu0 %v8171
    %v8310 = vpop.f32.mrb[0].mxu0
    %v8311 = vadd.f32 0.0, %v8310
    %v8312 = vpop.f32.mrb[0].mxu0
    %8313 = vmatprep.mubr.f32.mxu0 0.0
    %8314 = vmatmul.mubr.f32.gmra.mrb[0].mxu0 %v8174
    %v8315 = vpop.f32.mrb[0].mxu0
    %v8316 = vadd.f32 0.0, %v8315
    %v8317 = vpop.f32.mrb[0].mxu0
    %8318 = vmatprep.mubr.f32.mxu0 0.0
    %8319 = vmatmul.mubr.f32.gmra.mrb[0].mxu0 %v8177
    %v8320 = vpop.f32.mrb[0].mxu0
    %v8321 = vadd.f32 0.0, %v8320
    %v8322 = vpop.f32.mrb[0].mxu0
    %8323 = vdwg.mxu0
    %v8324 = vadd.f32 %v7886, %v8246
    %v8325 = vadd.f32 %v7891, %v8251
    %v8326 = vadd.f32 %v7896, %v8256
    %v8327 = vadd.f32 %v7901, %v8261
    %v8328 = vadd.f32 %v7906, %v8266
    %v8329 = vadd.f32 %v7911, %v8271
    %v8330 = vadd.f32 %v7916, %v8276
    %v8331 = vadd.f32 %v7921, %v8281
    %v8332 = vadd.f32 %v7926, %v8286
    %v8333 = vadd.f32 %v7931, %v8291
    %v8334 = vadd.f32 %v7936, %v8296
    %v8335 = vadd.f32 %v7941, %v8301
    %v8336 = vadd.f32 %v7946, %v8306
    %v8337 = vadd.f32 %v7951, %v8311
    %v8338 = vadd.f32 %v7956, %v8316
    %v8339 = vadd.f32 %v7961, %v8321
    %s8340 = scalar_lea.vmem %s18, 384
    %v8341 = vld [vmem:[%s8340] sm:$0xff]
    %v8342 = vld [vmem:[%s8340 + $0x8] sm:$0xff]
    %v8343 = vld [vmem:[%s8340 + $0x10] sm:$0xff]
    %v8344 = vld [vmem:[%s8340 + $0x18] sm:$0xff]
    %v8345 = vld [vmem:[%s8340 + $0x20] sm:$0xff]
    %v8346 = vld [vmem:[%s8340 + $0x28] sm:$0xff]
    %v8347 = vld [vmem:[%s8340 + $0x30] sm:$0xff]
    %v8348 = vld [vmem:[%s8340 + $0x38] sm:$0xff]
    %v8349 = vld [vmem:[%s8340 + $0x40] sm:$0xff]
    %v8350 = vld [vmem:[%s8340 + $0x48] sm:$0xff]
    %v8351 = vld [vmem:[%s8340 + $0x50] sm:$0xff]
    %v8352 = vld [vmem:[%s8340 + $0x58] sm:$0xff]
    %v8353 = vld [vmem:[%s8340 + $0x60] sm:$0xff]
    %v8354 = vld [vmem:[%s8340 + $0x68] sm:$0xff]
    %v8355 = vld [vmem:[%s8340 + $0x70] sm:$0xff]
    %v8356 = vld [vmem:[%s8340 + $0x78] sm:$0xff]
    %8357 = vmatprep.subr.mxu0 0.0
    %8358 = vmatpush1.msra.mxu0 %v7230
    %8359 = vmatprep.subr.mxu0 0.0
    %8360 = vmatpush1.msra.mxu0 %v7231
    %8361 = vmatprep.subr.mxu0 0.0
    %8362 = vmatpush1.msra.mxu0 %v7232
    %8363 = vmatprep.subr.mxu0 0.0
    %8364 = vmatpush1.msra.mxu0 %v7233
    %8365 = vmatprep.subr.mxu0 0.0
    %8366 = vmatpush1.msra.mxu0 %v7234
    %8367 = vmatprep.subr.mxu0 0.0
    %8368 = vmatpush1.msra.mxu0 %v7235
    %8369 = vmatprep.subr.mxu0 0.0
    %8370 = vmatpush1.msra.mxu0 %v7236
    %8371 = vmatprep.subr.mxu0 0.0
    %8372 = vmatpush1.msra.mxu0 %v7237
    %8373 = vmatprep.subr.mxu0 0.0
    %8374 = vmatpush1.msra.mxu0 %v7238
    %8375 = vmatprep.subr.mxu0 0.0
    %8376 = vmatpush1.msra.mxu0 %v7239
    %8377 = vmatprep.subr.mxu0 0.0
    %8378 = vmatpush1.msra.mxu0 %v7240
    %8379 = vmatprep.subr.mxu0 0.0
    %8380 = vmatpush1.msra.mxu0 %v7241
    %8381 = vmatprep.subr.mxu0 0.0
    %8382 = vmatpush1.msra.mxu0 %v7242
    %8383 = vmatprep.subr.mxu0 0.0
    %8384 = vmatpush1.msra.mxu0 %v7243
    %8385 = vmatprep.subr.mxu0 0.0
    %8386 = vmatpush1.msra.mxu0 %v7244
    %8387 = vmatprep.subr.mxu0 0.0
    %8388 = vmatpush1.msra.mxu0 %v7245
    %8389 = vmatprep.subr.mxu0 0.0
    %8390 = vmatpush1.msra.mxu0 0.0
    %8391 = vmatprep.subr.mxu0 0.0
    %8392 = vmatpush1.msra.mxu0 0.0
    %8393 = vmatprep.subr.mxu0 0.0
    %8394 = vmatpush1.msra.mxu0 0.0
    %8395 = vmatprep.subr.mxu0 0.0
    %8396 = vmatpush1.msra.mxu0 0.0
    %8397 = vmatprep.subr.mxu0 0.0
    %8398 = vmatpush1.msra.mxu0 0.0
    %8399 = vmatprep.subr.mxu0 0.0
    %8400 = vmatpush1.msra.mxu0 0.0
    %8401 = vmatprep.subr.mxu0 0.0
    %8402 = vmatpush1.msra.mxu0 0.0
    %8403 = vmatprep.subr.mxu0 0.0
    %8404 = vmatpush1.msra.mxu0 0.0
    %8405 = vmatprep.subr.mxu0 0.0
    %8406 = vmatpush1.msra.mxu0 0.0
    %8407 = vmatprep.subr.mxu0 0.0
    %8408 = vmatpush1.msra.mxu0 0.0
    %8409 = vmatprep.subr.mxu0 0.0
    %8410 = vmatpush1.msra.mxu0 0.0
    %8411 = vmatprep.subr.mxu0 0.0
    %8412 = vmatpush1.msra.mxu0 0.0
    %8413 = vmatprep.subr.mxu0 0.0
    %8414 = vmatpush1.msra.mxu0 0.0
    %8415 = vmatprep.subr.mxu0 0.0
    %8416 = vmatpush1.msra.mxu0 0.0
    %8417 = vmatprep.subr.mxu0 0.0
    %8418 = vmatpush1.msra.mxu0 0.0
    %8419 = vmatprep.subr.mxu0 0.0
    %8420 = vmatpush1.msra.mxu0 0.0
    %8421 = vmatprep.mubr.f32.mxu0 0.0
    %8422 = vmatmul.mubr.f32.gmra.mrb[0].mxu0 %v8341
    %v8423 = vpop.f32.mrb[0].mxu0
    %v8424 = vadd.f32 0.0, %v8423
    %v8425 = vpop.f32.mrb[0].mxu0
    %8426 = vmatprep.mubr.f32.mxu0 0.0
    %8427 = vmatmul.mubr.f32.gmra.mrb[0].mxu0 %v8342
    %v8428 = vpop.f32.mrb[0].mxu0
    %v8429 = vadd.f32 0.0, %v8428
    %v8430 = vpop.f32.mrb[0].mxu0
    %8431 = vmatprep.mubr.f32.mxu0 0.0
    %8432 = vmatmul.mubr.f32.gmra.mrb[0].mxu0 %v8343
    %v8433 = vpop.f32.mrb[0].mxu0
    %v8434 = vadd.f32 0.0, %v8433
    %v8435 = vpop.f32.mrb[0].mxu0
    %8436 = vmatprep.mubr.f32.mxu0 0.0
    %8437 = vmatmul.mubr.f32.gmra.mrb[0].mxu0 %v8344
    %v8438 = vpop.f32.mrb[0].mxu0
    %v8439 = vadd.f32 0.0, %v8438
    %v8440 = vpop.f32.mrb[0].mxu0
    %8441 = vmatprep.mubr.f32.mxu0 0.0
    %8442 = vmatmul.mubr.f32.gmra.mrb[0].mxu0 %v8345
    %v8443 = vpop.f32.mrb[0].mxu0
    %v8444 = vadd.f32 0.0, %v8443
    %v8445 = vpop.f32.mrb[0].mxu0
    %8446 = vmatprep.mubr.f32.mxu0 0.0
    %8447 = vmatmul.mubr.f32.gmra.mrb[0].mxu0 %v8346
    %v8448 = vpop.f32.mrb[0].mxu0
    %v8449 = vadd.f32 0.0, %v8448
    %v8450 = vpop.f32.mrb[0].mxu0
    %8451 = vmatprep.mubr.f32.mxu0 0.0
    %8452 = vmatmul.mubr.f32.gmra.mrb[0].mxu0 %v8347
    %v8453 = vpop.f32.mrb[0].mxu0
    %v8454 = vadd.f32 0.0, %v8453
    %v8455 = vpop.f32.mrb[0].mxu0
    %8456 = vmatprep.mubr.f32.mxu0 0.0
    %8457 = vmatmul.mubr.f32.gmra.mrb[0].mxu0 %v8348
    %v8458 = vpop.f32.mrb[0].mxu0
    %v8459 = vadd.f32 0.0, %v8458
    %v8460 = vpop.f32.mrb[0].mxu0
    %8461 = vmatprep.mubr.f32.mxu0 0.0
    %8462 = vmatmul.mubr.f32.gmra.mrb[0].mxu0 %v8349
    %v8463 = vpop.f32.mrb[0].mxu0
    %v8464 = vadd.f32 0.0, %v8463
    %v8465 = vpop.f32.mrb[0].mxu0
    %8466 = vmatprep.mubr.f32.mxu0 0.0
    %8467 = vmatmul.mubr.f32.gmra.mrb[0].mxu0 %v8350
    %v8468 = vpop.f32.mrb[0].mxu0
    %v8469 = vadd.f32 0.0, %v8468
    %v8470 = vpop.f32.mrb[0].mxu0
    %8471 = vmatprep.mubr.f32.mxu0 0.0
    %8472 = vmatmul.mubr.f32.gmra.mrb[0].mxu0 %v8351
    %v8473 = vpop.f32.mrb[0].mxu0
    %v8474 = vadd.f32 0.0, %v8473
    %v8475 = vpop.f32.mrb[0].mxu0
    %8476 = vmatprep.mubr.f32.mxu0 0.0
    %8477 = vmatmul.mubr.f32.gmra.mrb[0].mxu0 %v8352
    %v8478 = vpop.f32.mrb[0].mxu0
    %v8479 = vadd.f32 0.0, %v8478
    %v8480 = vpop.f32.mrb[0].mxu0
    %8481 = vmatprep.mubr.f32.mxu0 0.0
    %8482 = vmatmul.mubr.f32.gmra.mrb[0].mxu0 %v8353
    %v8483 = vpop.f32.mrb[0].mxu0
    %v8484 = vadd.f32 0.0, %v8483
    %v8485 = vpop.f32.mrb[0].mxu0
    %8486 = vmatprep.mubr.f32.mxu0 0.0
    %8487 = vmatmul.mubr.f32.gmra.mrb[0].mxu0 %v8354
    %v8488 = vpop.f32.mrb[0].mxu0
    %v8489 = vadd.f32 0.0, %v8488
    %v8490 = vpop.f32.mrb[0].mxu0
    %8491 = vmatprep.mubr.f32.mxu0 0.0
    %8492 = vmatmul.mubr.f32.gmra.mrb[0].mxu0 %v8355
    %v8493 = vpop.f32.mrb[0].mxu0
    %v8494 = vadd.f32 0.0, %v8493
    %v8495 = vpop.f32.mrb[0].mxu0
    %8496 = vmatprep.mubr.f32.mxu0 0.0
    %8497 = vmatmul.mubr.f32.gmra.mrb[0].mxu0 %v8356
    %v8498 = vpop.f32.mrb[0].mxu0
    %v8499 = vadd.f32 0.0, %v8498
    %v8500 = vpop.f32.mrb[0].mxu0
    %8501 = vdwg.mxu0
    %s8502 = scalar_lea.vmem [#allocation12], 96
    %v8503 = vld [vmem:[%s8502] sm:$0xff]
    %v8504 = vld [vmem:[%s8502 + $0x8] sm:$0xff]
    %v8505 = vld [vmem:[%s8502 + $0x10] sm:$0xff]
    %v8506 = vld [vmem:[%s8502 + $0x18] sm:$0xff]
    %v8508 = vsel %vm6418, %v8424, 0
    %v8511 = vsel %vm6418, %v8429, 0
    %v8514 = vsel %vm6418, %v8434, 0
    %v8517 = vsel %vm6418, %v8439, 0
    %v8520 = vsel %vm6418, %v8444, 0
    %v8523 = vsel %vm6418, %v8449, 0
    %v8526 = vsel %vm6418, %v8454, 0
    %v8529 = vsel %vm6418, %v8459, 0
    %v8532 = vsel %vm6418, %v8464, 0
    %v8535 = vsel %vm6418, %v8469, 0
    %v8538 = vsel %vm6418, %v8474, 0
    %v8541 = vsel %vm6418, %v8479, 0
    %v8544 = vsel %vm6418, %v8484, 0
    %v8547 = vsel %vm6418, %v8489, 0
    %v8550 = vsel %vm6418, %v8494, 0
    %v8553 = vsel %vm6418, %v8499, 0
    %8555 = vmatprep.subr.mxu0 0.0
    %8556 = vmatpush1.msra.mxu0 %v8503
    %8557 = vmatprep.subr.mxu0 0.0
    %8558 = vmatpush1.msra.mxu0 %v8504
    %8559 = vmatprep.subr.mxu0 0.0
    %8560 = vmatpush1.msra.mxu0 %v8505
    %8561 = vmatprep.subr.mxu0 0.0
    %8562 = vmatpush1.msra.mxu0 %v8506
    %8563 = vmatprep.subr.mxu0 0.0
    %8564 = vmatpush1.msra.mxu0 0.0
    %8565 = vmatprep.subr.mxu0 0.0
    %8566 = vmatpush1.msra.mxu0 0.0
    %8567 = vmatprep.subr.mxu0 0.0
    %8568 = vmatpush1.msra.mxu0 0.0
    %8569 = vmatprep.subr.mxu0 0.0
    %8570 = vmatpush1.msra.mxu0 0.0
    %8571 = vmatprep.subr.mxu0 0.0
    %8572 = vmatpush1.msra.mxu0 0.0
    %8573 = vmatprep.subr.mxu0 0.0
    %8574 = vmatpush1.msra.mxu0 0.0
    %8575 = vmatprep.subr.mxu0 0.0
    %8576 = vmatpush1.msra.mxu0 0.0
    %8577 = vmatprep.subr.mxu0 0.0
    %8578 = vmatpush1.msra.mxu0 0.0
    %8579 = vmatprep.subr.mxu0 0.0
    %8580 = vmatpush1.msra.mxu0 0.0
    %8581 = vmatprep.subr.mxu0 0.0
    %8582 = vmatpush1.msra.mxu0 0.0
    %8583 = vmatprep.subr.mxu0 0.0
    %8584 = vmatpush1.msra.mxu0 0.0
    %8585 = vmatprep.subr.mxu0 0.0
    %8586 = vmatpush1.msra.mxu0 0.0
    %8587 = vmatprep.subr.mxu0 0.0
    %8588 = vmatpush1.msra.mxu0 0.0
    %8589 = vmatprep.subr.mxu0 0.0
    %8590 = vmatpush1.msra.mxu0 0.0
    %8591 = vmatprep.subr.mxu0 0.0
    %8592 = vmatpush1.msra.mxu0 0.0
    %8593 = vmatprep.subr.mxu0 0.0
    %8594 = vmatpush1.msra.mxu0 0.0
    %8595 = vmatprep.subr.mxu0 0.0
    %8596 = vmatpush1.msra.mxu0 0.0
    %8597 = vmatprep.subr.mxu0 0.0
    %8598 = vmatpush1.msra.mxu0 0.0
    %8599 = vmatprep.subr.mxu0 0.0
    %8600 = vmatpush1.msra.mxu0 0.0
    %8601 = vmatprep.subr.mxu0 0.0
    %8602 = vmatpush1.msra.mxu0 0.0
    %8603 = vmatprep.subr.mxu0 0.0
    %8604 = vmatpush1.msra.mxu0 0.0
    %8605 = vmatprep.subr.mxu0 0.0
    %8606 = vmatpush1.msra.mxu0 0.0
    %8607 = vmatprep.subr.mxu0 0.0
    %8608 = vmatpush1.msra.mxu0 0.0
    %8609 = vmatprep.subr.mxu0 0.0
    %8610 = vmatpush1.msra.mxu0 0.0
    %8611 = vmatprep.subr.mxu0 0.0
    %8612 = vmatpush1.msra.mxu0 0.0
    %8613 = vmatprep.subr.mxu0 0.0
    %8614 = vmatpush1.msra.mxu0 0.0
    %8615 = vmatprep.subr.mxu0 0.0
    %8616 = vmatpush1.msra.mxu0 0.0
    %8617 = vmatprep.subr.mxu0 0.0
    %8618 = vmatpush1.msra.mxu0 0.0
    %8619 = vmatprep.mubr.f32.mxu0 0.0
    %8620 = vmatmul.mubr.f32.gmra.mrb[0].mxu0 %v8508
    %v8621 = vpop.f32.mrb[0].mxu0
    %v8622 = vadd.f32 0.0, %v8621
    %v8623 = vpop.f32.mrb[0].mxu0
    %8624 = vmatprep.mubr.f32.mxu0 0.0
    %8625 = vmatmul.mubr.f32.gmra.mrb[0].mxu0 %v8511
    %v8626 = vpop.f32.mrb[0].mxu0
    %v8627 = vadd.f32 0.0, %v8626
    %v8628 = vpop.f32.mrb[0].mxu0
    %8629 = vmatprep.mubr.f32.mxu0 0.0
    %8630 = vmatmul.mubr.f32.gmra.mrb[0].mxu0 %v8514
    %v8631 = vpop.f32.mrb[0].mxu0
    %v8632 = vadd.f32 0.0, %v8631
    %v8633 = vpop.f32.mrb[0].mxu0
    %8634 = vmatprep.mubr.f32.mxu0 0.0
    %8635 = vmatmul.mubr.f32.gmra.mrb[0].mxu0 %v8517
    %v8636 = vpop.f32.mrb[0].mxu0
    %v8637 = vadd.f32 0.0, %v8636
    %v8638 = vpop.f32.mrb[0].mxu0
    %8639 = vmatprep.mubr.f32.mxu0 0.0
    %8640 = vmatmul.mubr.f32.gmra.mrb[0].mxu0 %v8520
    %v8641 = vpop.f32.mrb[0].mxu0
    %v8642 = vadd.f32 0.0, %v8641
    %v8643 = vpop.f32.mrb[0].mxu0
    %8644 = vmatprep.mubr.f32.mxu0 0.0
    %8645 = vmatmul.mubr.f32.gmra.mrb[0].mxu0 %v8523
    %v8646 = vpop.f32.mrb[0].mxu0
    %v8647 = vadd.f32 0.0, %v8646
    %v8648 = vpop.f32.mrb[0].mxu0
    %8649 = vmatprep.mubr.f32.mxu0 0.0
    %8650 = vmatmul.mubr.f32.gmra.mrb[0].mxu0 %v8526
    %v8651 = vpop.f32.mrb[0].mxu0
    %v8652 = vadd.f32 0.0, %v8651
    %v8653 = vpop.f32.mrb[0].mxu0
    %8654 = vmatprep.mubr.f32.mxu0 0.0
    %8655 = vmatmul.mubr.f32.gmra.mrb[0].mxu0 %v8529
    %v8656 = vpop.f32.mrb[0].mxu0
    %v8657 = vadd.f32 0.0, %v8656
    %v8658 = vpop.f32.mrb[0].mxu0
    %8659 = vmatprep.mubr.f32.mxu0 0.0
    %8660 = vmatmul.mubr.f32.gmra.mrb[0].mxu0 %v8532
    %v8661 = vpop.f32.mrb[0].mxu0
    %v8662 = vadd.f32 0.0, %v8661
    %v8663 = vpop.f32.mrb[0].mxu0
    %8664 = vmatprep.mubr.f32.mxu0 0.0
    %8665 = vmatmul.mubr.f32.gmra.mrb[0].mxu0 %v8535
    %v8666 = vpop.f32.mrb[0].mxu0
    %v8667 = vadd.f32 0.0, %v8666
    %v8668 = vpop.f32.mrb[0].mxu0
    %8669 = vmatprep.mubr.f32.mxu0 0.0
    %8670 = vmatmul.mubr.f32.gmra.mrb[0].mxu0 %v8538
    %v8671 = vpop.f32.mrb[0].mxu0
    %v8672 = vadd.f32 0.0, %v8671
    %v8673 = vpop.f32.mrb[0].mxu0
    %8674 = vmatprep.mubr.f32.mxu0 0.0
    %8675 = vmatmul.mubr.f32.gmra.mrb[0].mxu0 %v8541
    %v8676 = vpop.f32.mrb[0].mxu0
    %v8677 = vadd.f32 0.0, %v8676
    %v8678 = vpop.f32.mrb[0].mxu0
    %8679 = vmatprep.mubr.f32.mxu0 0.0
    %8680 = vmatmul.mubr.f32.gmra.mrb[0].mxu0 %v8544
    %v8681 = vpop.f32.mrb[0].mxu0
    %v8682 = vadd.f32 0.0, %v8681
    %v8683 = vpop.f32.mrb[0].mxu0
    %8684 = vmatprep.mubr.f32.mxu0 0.0
    %8685 = vmatmul.mubr.f32.gmra.mrb[0].mxu0 %v8547
    %v8686 = vpop.f32.mrb[0].mxu0
    %v8687 = vadd.f32 0.0, %v8686
    %v8688 = vpop.f32.mrb[0].mxu0
    %8689 = vmatprep.mubr.f32.mxu0 0.0
    %8690 = vmatmul.mubr.f32.gmra.mrb[0].mxu0 %v8550
    %v8691 = vpop.f32.mrb[0].mxu0
    %v8692 = vadd.f32 0.0, %v8691
    %v8693 = vpop.f32.mrb[0].mxu0
    %8694 = vmatprep.mubr.f32.mxu0 0.0
    %8695 = vmatmul.mubr.f32.gmra.mrb[0].mxu0 %v8553
    %v8696 = vpop.f32.mrb[0].mxu0
    %v8697 = vadd.f32 0.0, %v8696
    %v8698 = vpop.f32.mrb[0].mxu0
    %8699 = vdwg.mxu0
    %v8700 = vadd.f32 %v8324, %v8622
    %v8701 = vadd.f32 %v8325, %v8627
    %v8702 = vadd.f32 %v8326, %v8632
    %v8703 = vadd.f32 %v8327, %v8637
    %v8704 = vadd.f32 %v8328, %v8642
    %v8705 = vadd.f32 %v8329, %v8647
    %v8706 = vadd.f32 %v8330, %v8652
    %v8707 = vadd.f32 %v8331, %v8657
    %v8708 = vadd.f32 %v8332, %v8662
    %v8709 = vadd.f32 %v8333, %v8667
    %v8710 = vadd.f32 %v8334, %v8672
    %v8711 = vadd.f32 %v8335, %v8677
    %v8712 = vadd.f32 %v8336, %v8682
    %v8713 = vadd.f32 %v8337, %v8687
    %v8714 = vadd.f32 %v8338, %v8692
    %v8715 = vadd.f32 %v8339, %v8697
    %s8716 = scalar_lea.vmem %s18, 512
    %v8717 = vld [vmem:[%s8716] sm:$0xff]
    %v8718 = vld [vmem:[%s8716 + $0x8] sm:$0xff]
    %v8719 = vld [vmem:[%s8716 + $0x10] sm:$0xff]
    %v8720 = vld [vmem:[%s8716 + $0x18] sm:$0xff]
    %v8721 = vld [vmem:[%s8716 + $0x20] sm:$0xff]
    %v8722 = vld [vmem:[%s8716 + $0x28] sm:$0xff]
    %v8723 = vld [vmem:[%s8716 + $0x30] sm:$0xff]
    %v8724 = vld [vmem:[%s8716 + $0x38] sm:$0xff]
    %v8725 = vld [vmem:[%s8716 + $0x40] sm:$0xff]
    %v8726 = vld [vmem:[%s8716 + $0x48] sm:$0xff]
    %v8727 = vld [vmem:[%s8716 + $0x50] sm:$0xff]
    %v8728 = vld [vmem:[%s8716 + $0x58] sm:$0xff]
    %v8729 = vld [vmem:[%s8716 + $0x60] sm:$0xff]
    %v8730 = vld [vmem:[%s8716 + $0x68] sm:$0xff]
    %v8731 = vld [vmem:[%s8716 + $0x70] sm:$0xff]
    %v8732 = vld [vmem:[%s8716 + $0x78] sm:$0xff]
    %8733 = vmatprep.subr.mxu0 0.0
    %8734 = vmatpush1.msra.mxu0 %v7230
    %8735 = vmatprep.subr.mxu0 0.0
    %8736 = vmatpush1.msra.mxu0 %v7231
    %8737 = vmatprep.subr.mxu0 0.0
    %8738 = vmatpush1.msra.mxu0 %v7232
    %8739 = vmatprep.subr.mxu0 0.0
    %8740 = vmatpush1.msra.mxu0 %v7233
    %8741 = vmatprep.subr.mxu0 0.0
    %8742 = vmatpush1.msra.mxu0 %v7234
    %8743 = vmatprep.subr.mxu0 0.0
    %8744 = vmatpush1.msra.mxu0 %v7235
    %8745 = vmatprep.subr.mxu0 0.0
    %8746 = vmatpush1.msra.mxu0 %v7236
    %8747 = vmatprep.subr.mxu0 0.0
    %8748 = vmatpush1.msra.mxu0 %v7237
    %8749 = vmatprep.subr.mxu0 0.0
    %8750 = vmatpush1.msra.mxu0 %v7238
    %8751 = vmatprep.subr.mxu0 0.0
    %8752 = vmatpush1.msra.mxu0 %v7239
    %8753 = vmatprep.subr.mxu0 0.0
    %8754 = vmatpush1.msra.mxu0 %v7240
    %8755 = vmatprep.subr.mxu0 0.0
    %8756 = vmatpush1.msra.mxu0 %v7241
    %8757 = vmatprep.subr.mxu0 0.0
    %8758 = vmatpush1.msra.mxu0 %v7242
    %8759 = vmatprep.subr.mxu0 0.0
    %8760 = vmatpush1.msra.mxu0 %v7243
    %8761 = vmatprep.subr.mxu0 0.0
    %8762 = vmatpush1.msra.mxu0 %v7244
    %8763 = vmatprep.subr.mxu0 0.0
    %8764 = vmatpush1.msra.mxu0 %v7245
    %8765 = vmatprep.subr.mxu0 0.0
    %8766 = vmatpush1.msra.mxu0 0.0
    %8767 = vmatprep.subr.mxu0 0.0
    %8768 = vmatpush1.msra.mxu0 0.0
    %8769 = vmatprep.subr.mxu0 0.0
    %8770 = vmatpush1.msra.mxu0 0.0
    %8771 = vmatprep.subr.mxu0 0.0
    %8772 = vmatpush1.msra.mxu0 0.0
    %8773 = vmatprep.subr.mxu0 0.0
    %8774 = vmatpush1.msra.mxu0 0.0
    %8775 = vmatprep.subr.mxu0 0.0
    %8776 = vmatpush1.msra.mxu0 0.0
    %8777 = vmatprep.subr.mxu0 0.0
    %8778 = vmatpush1.msra.mxu0 0.0
    %8779 = vmatprep.subr.mxu0 0.0
    %8780 = vmatpush1.msra.mxu0 0.0
    %8781 = vmatprep.subr.mxu0 0.0
    %8782 = vmatpush1.msra.mxu0 0.0
    %8783 = vmatprep.subr.mxu0 0.0
    %8784 = vmatpush1.msra.mxu0 0.0
    %8785 = vmatprep.subr.mxu0 0.0
    %8786 = vmatpush1.msra.mxu0 0.0
    %8787 = vmatprep.subr.mxu0 0.0
    %8788 = vmatpush1.msra.mxu0 0.0
    %8789 = vmatprep.subr.mxu0 0.0
    %8790 = vmatpush1.msra.mxu0 0.0
    %8791 = vmatprep.subr.mxu0 0.0
    %8792 = vmatpush1.msra.mxu0 0.0
    %8793 = vmatprep.subr.mxu0 0.0
    %8794 = vmatpush1.msra.mxu0 0.0
    %8795 = vmatprep.subr.mxu0 0.0
    %8796 = vmatpush1.msra.mxu0 0.0
    %8797 = vmatprep.mubr.f32.mxu0 0.0
    %8798 = vmatmul.mubr.f32.gmra.mrb[0].mxu0 %v8717
    %v8799 = vpop.f32.mrb[0].mxu0
    %v8800 = vadd.f32 0.0, %v8799
    %v8801 = vpop.f32.mrb[0].mxu0
    %8802 = vmatprep.mubr.f32.mxu0 0.0
    %8803 = vmatmul.mubr.f32.gmra.mrb[0].mxu0 %v8718
    %v8804 = vpop.f32.mrb[0].mxu0
    %v8805 = vadd.f32 0.0, %v8804
    %v8806 = vpop.f32.mrb[0].mxu0
    %8807 = vmatprep.mubr.f32.mxu0 0.0
    %8808 = vmatmul.mubr.f32.gmra.mrb[0].mxu0 %v8719
    %v8809 = vpop.f32.mrb[0].mxu0
    %v8810 = vadd.f32 0.0, %v8809
    %v8811 = vpop.f32.mrb[0].mxu0
    %8812 = vmatprep.mubr.f32.mxu0 0.0
    %8813 = vmatmul.mubr.f32.gmra.mrb[0].mxu0 %v8720
    %v8814 = vpop.f32.mrb[0].mxu0
    %v8815 = vadd.f32 0.0, %v8814
    %v8816 = vpop.f32.mrb[0].mxu0
    %8817 = vmatprep.mubr.f32.mxu0 0.0
    %8818 = vmatmul.mubr.f32.gmra.mrb[0].mxu0 %v8721
    %v8819 = vpop.f32.mrb[0].mxu0
    %v8820 = vadd.f32 0.0, %v8819
    %v8821 = vpop.f32.mrb[0].mxu0
    %8822 = vmatprep.mubr.f32.mxu0 0.0
    %8823 = vmatmul.mubr.f32.gmra.mrb[0].mxu0 %v8722
    %v8824 = vpop.f32.mrb[0].mxu0
    %v8825 = vadd.f32 0.0, %v8824
    %v8826 = vpop.f32.mrb[0].mxu0
    %8827 = vmatprep.mubr.f32.mxu0 0.0
    %8828 = vmatmul.mubr.f32.gmra.mrb[0].mxu0 %v8723
    %v8829 = vpop.f32.mrb[0].mxu0
    %v8830 = vadd.f32 0.0, %v8829
    %v8831 = vpop.f32.mrb[0].mxu0
    %8832 = vmatprep.mubr.f32.mxu0 0.0
    %8833 = vmatmul.mubr.f32.gmra.mrb[0].mxu0 %v8724
    %v8834 = vpop.f32.mrb[0].mxu0
    %v8835 = vadd.f32 0.0, %v8834
    %v8836 = vpop.f32.mrb[0].mxu0
    %8837 = vmatprep.mubr.f32.mxu0 0.0
    %8838 = vmatmul.mubr.f32.gmra.mrb[0].mxu0 %v8725
    %v8839 = vpop.f32.mrb[0].mxu0
    %v8840 = vadd.f32 0.0, %v8839
    %v8841 = vpop.f32.mrb[0].mxu0
    %8842 = vmatprep.mubr.f32.mxu0 0.0
    %8843 = vmatmul.mubr.f32.gmra.mrb[0].mxu0 %v8726
    %v8844 = vpop.f32.mrb[0].mxu0
    %v8845 = vadd.f32 0.0, %v8844
    %v8846 = vpop.f32.mrb[0].mxu0
    %8847 = vmatprep.mubr.f32.mxu0 0.0
    %8848 = vmatmul.mubr.f32.gmra.mrb[0].mxu0 %v8727
    %v8849 = vpop.f32.mrb[0].mxu0
    %v8850 = vadd.f32 0.0, %v8849
    %v8851 = vpop.f32.mrb[0].mxu0
    %8852 = vmatprep.mubr.f32.mxu0 0.0
    %8853 = vmatmul.mubr.f32.gmra.mrb[0].mxu0 %v8728
    %v8854 = vpop.f32.mrb[0].mxu0
    %v8855 = vadd.f32 0.0, %v8854
    %v8856 = vpop.f32.mrb[0].mxu0
    %8857 = vmatprep.mubr.f32.mxu0 0.0
    %8858 = vmatmul.mubr.f32.gmra.mrb[0].mxu0 %v8729
    %v8859 = vpop.f32.mrb[0].mxu0
    %v8860 = vadd.f32 0.0, %v8859
    %v8861 = vpop.f32.mrb[0].mxu0
    %8862 = vmatprep.mubr.f32.mxu0 0.0
    %8863 = vmatmul.mubr.f32.gmra.mrb[0].mxu0 %v8730
    %v8864 = vpop.f32.mrb[0].mxu0
    %v8865 = vadd.f32 0.0, %v8864
    %v8866 = vpop.f32.mrb[0].mxu0
    %8867 = vmatprep.mubr.f32.mxu0 0.0
    %8868 = vmatmul.mubr.f32.gmra.mrb[0].mxu0 %v8731
    %v8869 = vpop.f32.mrb[0].mxu0
    %v8870 = vadd.f32 0.0, %v8869
    %v8871 = vpop.f32.mrb[0].mxu0
    %8872 = vmatprep.mubr.f32.mxu0 0.0
    %8873 = vmatmul.mubr.f32.gmra.mrb[0].mxu0 %v8732
    %v8874 = vpop.f32.mrb[0].mxu0
    %v8875 = vadd.f32 0.0, %v8874
    %v8876 = vpop.f32.mrb[0].mxu0
    %8877 = vdwg.mxu0
    %s8878 = scalar_lea.vmem [#allocation12], 128
    %v8879 = vld [vmem:[%s8878] sm:$0xff]
    %v8880 = vld [vmem:[%s8878 + $0x8] sm:$0xff]
    %v8881 = vld [vmem:[%s8878 + $0x10] sm:$0xff]
    %v8882 = vld [vmem:[%s8878 + $0x18] sm:$0xff]
    %v8884 = vsel %vm6418, %v8800, 0
    %v8887 = vsel %vm6418, %v8805, 0
    %v8890 = vsel %vm6418, %v8810, 0
    %v8893 = vsel %vm6418, %v8815, 0
    %v8896 = vsel %vm6418, %v8820, 0
    %v8899 = vsel %vm6418, %v8825, 0
    %v8902 = vsel %vm6418, %v8830, 0
    %v8905 = vsel %vm6418, %v8835, 0
    %v8908 = vsel %vm6418, %v8840, 0
    %v8911 = vsel %vm6418, %v8845, 0
    %v8914 = vsel %vm6418, %v8850, 0
    %v8917 = vsel %vm6418, %v8855, 0
    %v8920 = vsel %vm6418, %v8860, 0
    %v8923 = vsel %vm6418, %v8865, 0
    %v8926 = vsel %vm6418, %v8870, 0
    %v8929 = vsel %vm6418, %v8875, 0
    %8931 = vmatprep.subr.mxu0 0.0
    %8932 = vmatpush1.msra.mxu0 %v8879
    %8933 = vmatprep.subr.mxu0 0.0
    %8934 = vmatpush1.msra.mxu0 %v8880
    %8935 = vmatprep.subr.mxu0 0.0
    %8936 = vmatpush1.msra.mxu0 %v8881
    %8937 = vmatprep.subr.mxu0 0.0
    %8938 = vmatpush1.msra.mxu0 %v8882
    %8939 = vmatprep.subr.mxu0 0.0
    %8940 = vmatpush1.msra.mxu0 0.0
    %8941 = vmatprep.subr.mxu0 0.0
    %8942 = vmatpush1.msra.mxu0 0.0
    %8943 = vmatprep.subr.mxu0 0.0
    %8944 = vmatpush1.msra.mxu0 0.0
    %8945 = vmatprep.subr.mxu0 0.0
    %8946 = vmatpush1.msra.mxu0 0.0
    %8947 = vmatprep.subr.mxu0 0.0
    %8948 = vmatpush1.msra.mxu0 0.0
    %8949 = vmatprep.subr.mxu0 0.0
    %8950 = vmatpush1.msra.mxu0 0.0
    %8951 = vmatprep.subr.mxu0 0.0
    %8952 = vmatpush1.msra.mxu0 0.0
    %8953 = vmatprep.subr.mxu0 0.0
    %8954 = vmatpush1.msra.mxu0 0.0
    %8955 = vmatprep.subr.mxu0 0.0
    %8956 = vmatpush1.msra.mxu0 0.0
    %8957 = vmatprep.subr.mxu0 0.0
    %8958 = vmatpush1.msra.mxu0 0.0
    %8959 = vmatprep.subr.mxu0 0.0
    %8960 = vmatpush1.msra.mxu0 0.0
    %8961 = vmatprep.subr.mxu0 0.0
    %8962 = vmatpush1.msra.mxu0 0.0
    %8963 = vmatprep.subr.mxu0 0.0
    %8964 = vmatpush1.msra.mxu0 0.0
    %8965 = vmatprep.subr.mxu0 0.0
    %8966 = vmatpush1.msra.mxu0 0.0
    %8967 = vmatprep.subr.mxu0 0.0
    %8968 = vmatpush1.msra.mxu0 0.0
    %8969 = vmatprep.subr.mxu0 0.0
    %8970 = vmatpush1.msra.mxu0 0.0
    %8971 = vmatprep.subr.mxu0 0.0
    %8972 = vmatpush1.msra.mxu0 0.0
    %8973 = vmatprep.subr.mxu0 0.0
    %8974 = vmatpush1.msra.mxu0 0.0
    %8975 = vmatprep.subr.mxu0 0.0
    %8976 = vmatpush1.msra.mxu0 0.0
    %8977 = vmatprep.subr.mxu0 0.0
    %8978 = vmatpush1.msra.mxu0 0.0
    %8979 = vmatprep.subr.mxu0 0.0
    %8980 = vmatpush1.msra.mxu0 0.0
    %8981 = vmatprep.subr.mxu0 0.0
    %8982 = vmatpush1.msra.mxu0 0.0
    %8983 = vmatprep.subr.mxu0 0.0
    %8984 = vmatpush1.msra.mxu0 0.0
    %8985 = vmatprep.subr.mxu0 0.0
    %8986 = vmatpush1.msra.mxu0 0.0
    %8987 = vmatprep.subr.mxu0 0.0
    %8988 = vmatpush1.msra.mxu0 0.0
    %8989 = vmatprep.subr.mxu0 0.0
    %8990 = vmatpush1.msra.mxu0 0.0
    %8991 = vmatprep.subr.mxu0 0.0
    %8992 = vmatpush1.msra.mxu0 0.0
    %8993 = vmatprep.subr.mxu0 0.0
    %8994 = vmatpush1.msra.mxu0 0.0
    %8995 = vmatprep.mubr.f32.mxu0 0.0
    %8996 = vmatmul.mubr.f32.gmra.mrb[0].mxu0 %v8884
    %v8997 = vpop.f32.mrb[0].mxu0
    %v8998 = vadd.f32 0.0, %v8997
    %v8999 = vpop.f32.mrb[0].mxu0
    %9000 = vmatprep.mubr.f32.mxu0 0.0
    %9001 = vmatmul.mubr.f32.gmra.mrb[0].mxu0 %v8887
    %v9002 = vpop.f32.mrb[0].mxu0
    %v9003 = vadd.f32 0.0, %v9002
    %v9004 = vpop.f32.mrb[0].mxu0
    %9005 = vmatprep.mubr.f32.mxu0 0.0
    %9006 = vmatmul.mubr.f32.gmra.mrb[0].mxu0 %v8890
    %v9007 = vpop.f32.mrb[0].mxu0
    %v9008 = vadd.f32 0.0, %v9007
    %v9009 = vpop.f32.mrb[0].mxu0
    %9010 = vmatprep.mubr.f32.mxu0 0.0
    %9011 = vmatmul.mubr.f32.gmra.mrb[0].mxu0 %v8893
    %v9012 = vpop.f32.mrb[0].mxu0
    %v9013 = vadd.f32 0.0, %v9012
    %v9014 = vpop.f32.mrb[0].mxu0
    %9015 = vmatprep.mubr.f32.mxu0 0.0
    %9016 = vmatmul.mubr.f32.gmra.mrb[0].mxu0 %v8896
    %v9017 = vpop.f32.mrb[0].mxu0
    %v9018 = vadd.f32 0.0, %v9017
    %v9019 = vpop.f32.mrb[0].mxu0
    %9020 = vmatprep.mubr.f32.mxu0 0.0
    %9021 = vmatmul.mubr.f32.gmra.mrb[0].mxu0 %v8899
    %v9022 = vpop.f32.mrb[0].mxu0
    %v9023 = vadd.f32 0.0, %v9022
    %v9024 = vpop.f32.mrb[0].mxu0
    %9025 = vmatprep.mubr.f32.mxu0 0.0
    %9026 = vmatmul.mubr.f32.gmra.mrb[0].mxu0 %v8902
    %v9027 = vpop.f32.mrb[0].mxu0
    %v9028 = vadd.f32 0.0, %v9027
    %v9029 = vpop.f32.mrb[0].mxu0
    %9030 = vmatprep.mubr.f32.mxu0 0.0
    %9031 = vmatmul.mubr.f32.gmra.mrb[0].mxu0 %v8905
    %v9032 = vpop.f32.mrb[0].mxu0
    %v9033 = vadd.f32 0.0, %v9032
    %v9034 = vpop.f32.mrb[0].mxu0
    %9035 = vmatprep.mubr.f32.mxu0 0.0
    %9036 = vmatmul.mubr.f32.gmra.mrb[0].mxu0 %v8908
    %v9037 = vpop.f32.mrb[0].mxu0
    %v9038 = vadd.f32 0.0, %v9037
    %v9039 = vpop.f32.mrb[0].mxu0
    %9040 = vmatprep.mubr.f32.mxu0 0.0
    %9041 = vmatmul.mubr.f32.gmra.mrb[0].mxu0 %v8911
    %v9042 = vpop.f32.mrb[0].mxu0
    %v9043 = vadd.f32 0.0, %v9042
    %v9044 = vpop.f32.mrb[0].mxu0
    %9045 = vmatprep.mubr.f32.mxu0 0.0
    %9046 = vmatmul.mubr.f32.gmra.mrb[0].mxu0 %v8914
    %v9047 = vpop.f32.mrb[0].mxu0
    %v9048 = vadd.f32 0.0, %v9047
    %v9049 = vpop.f32.mrb[0].mxu0
    %9050 = vmatprep.mubr.f32.mxu0 0.0
    %9051 = vmatmul.mubr.f32.gmra.mrb[0].mxu0 %v8917
    %v9052 = vpop.f32.mrb[0].mxu0
    %v9053 = vadd.f32 0.0, %v9052
    %v9054 = vpop.f32.mrb[0].mxu0
    %9055 = vmatprep.mubr.f32.mxu0 0.0
    %9056 = vmatmul.mubr.f32.gmra.mrb[0].mxu0 %v8920
    %v9057 = vpop.f32.mrb[0].mxu0
    %v9058 = vadd.f32 0.0, %v9057
    %v9059 = vpop.f32.mrb[0].mxu0
    %9060 = vmatprep.mubr.f32.mxu0 0.0
    %9061 = vmatmul.mubr.f32.gmra.mrb[0].mxu0 %v8923
    %v9062 = vpop.f32.mrb[0].mxu0
    %v9063 = vadd.f32 0.0, %v9062
    %v9064 = vpop.f32.mrb[0].mxu0
    %9065 = vmatprep.mubr.f32.mxu0 0.0
    %9066 = vmatmul.mubr.f32.gmra.mrb[0].mxu0 %v8926
    %v9067 = vpop.f32.mrb[0].mxu0
    %v9068 = vadd.f32 0.0, %v9067
    %v9069 = vpop.f32.mrb[0].mxu0
    %9070 = vmatprep.mubr.f32.mxu0 0.0
    %9071 = vmatmul.mubr.f32.gmra.mrb[0].mxu0 %v8929
    %v9072 = vpop.f32.mrb[0].mxu0
    %v9073 = vadd.f32 0.0, %v9072
    %v9074 = vpop.f32.mrb[0].mxu0
    %9075 = vdwg.mxu0
    %v9076 = vadd.f32 %v8700, %v8998
    %v9077 = vadd.f32 %v8701, %v9003
    %v9078 = vadd.f32 %v8702, %v9008
    %v9079 = vadd.f32 %v8703, %v9013
    %v9080 = vadd.f32 %v8704, %v9018
    %v9081 = vadd.f32 %v8705, %v9023
    %v9082 = vadd.f32 %v8706, %v9028
    %v9083 = vadd.f32 %v8707, %v9033
    %v9084 = vadd.f32 %v8708, %v9038
    %v9085 = vadd.f32 %v8709, %v9043
    %v9086 = vadd.f32 %v8710, %v9048
    %v9087 = vadd.f32 %v8711, %v9053
    %v9088 = vadd.f32 %v8712, %v9058
    %v9089 = vadd.f32 %v8713, %v9063
    %v9090 = vadd.f32 %v8714, %v9068
    %v9091 = vadd.f32 %v8715, %v9073
    %v9092 = vsel %vm1676, %v9076, 0.0
    %9093 = vadd.xlane.f32.xlu0 %v9092
    %v9094 = vpop.xlane.xlu0 %9093
    %v9095 = vsel %vm1676, %v9077, 0.0
    %9096 = vadd.xlane.f32.xlu0 %v9095
    %v9097 = vpop.xlane.xlu0 %9096
    %v9098 = vsel %vm1676, %v9078, 0.0
    %9099 = vadd.xlane.f32.xlu0 %v9098
    %v9100 = vpop.xlane.xlu0 %9099
    %v9101 = vsel %vm1676, %v9079, 0.0
    %9102 = vadd.xlane.f32.xlu0 %v9101
    %v9103 = vpop.xlane.xlu0 %9102
    %v9104 = vsel %vm1676, %v9080, 0.0
    %9105 = vadd.xlane.f32.xlu0 %v9104
    %v9106 = vpop.xlane.xlu0 %9105
    %v9107 = vsel %vm1676, %v9081, 0.0
    %9108 = vadd.xlane.f32.xlu0 %v9107
    %v9109 = vpop.xlane.xlu0 %9108
    %v9110 = vsel %vm1676, %v9082, 0.0
    %9111 = vadd.xlane.f32.xlu0 %v9110
    %v9112 = vpop.xlane.xlu0 %9111
    %v9113 = vsel %vm1676, %v9083, 0.0
    %9114 = vadd.xlane.f32.xlu0 %v9113
    %v9115 = vpop.xlane.xlu0 %9114
    %v9116 = vsel %vm1676, %v9084, 0.0
    %9117 = vadd.xlane.f32.xlu0 %v9116
    %v9118 = vpop.xlane.xlu0 %9117
    %v9119 = vsel %vm1676, %v9085, 0.0
    %9120 = vadd.xlane.f32.xlu0 %v9119
    %v9121 = vpop.xlane.xlu0 %9120
    %v9122 = vsel %vm1676, %v9086, 0.0
    %9123 = vadd.xlane.f32.xlu0 %v9122
    %v9124 = vpop.xlane.xlu0 %9123
    %v9125 = vsel %vm1676, %v9087, 0.0
    %9126 = vadd.xlane.f32.xlu0 %v9125
    %v9127 = vpop.xlane.xlu0 %9126
    %v9128 = vsel %vm1676, %v9088, 0.0
    %9129 = vadd.xlane.f32.xlu0 %v9128
    %v9130 = vpop.xlane.xlu0 %9129
    %v9131 = vsel %vm1676, %v9089, 0.0
    %9132 = vadd.xlane.f32.xlu0 %v9131
    %v9133 = vpop.xlane.xlu0 %9132
    %v9134 = vsel %vm1676, %v9090, 0.0
    %9135 = vadd.xlane.f32.xlu0 %v9134
    %v9136 = vpop.xlane.xlu0 %9135
    %v9137 = vsel %vm1676, %v9091, 0.0
    %9138 = vadd.xlane.f32.xlu0 %v9137
    %v9139 = vpop.xlane.xlu0 %9138
    %v9140 = vmul.f32 %v9076, %v9076
    %v9141 = vmul.f32 %v9077, %v9077
    %v9142 = vmul.f32 %v9078, %v9078
    %v9143 = vmul.f32 %v9079, %v9079
    %v9144 = vmul.f32 %v9080, %v9080
    %v9145 = vmul.f32 %v9081, %v9081
    %v9146 = vmul.f32 %v9082, %v9082
    %v9147 = vmul.f32 %v9083, %v9083
    %v9148 = vmul.f32 %v9084, %v9084
    %v9149 = vmul.f32 %v9085, %v9085
    %v9150 = vmul.f32 %v9086, %v9086
    %v9151 = vmul.f32 %v9087, %v9087
    %v9152 = vmul.f32 %v9088, %v9088
    %v9153 = vmul.f32 %v9089, %v9089
    %v9154 = vmul.f32 %v9090, %v9090
    %v9155 = vmul.f32 %v9091, %v9091
    %v9156 = vsel %vm1676, %v9140, 0.0
    %9157 = vadd.xlane.f32.xlu0 %v9156
    %v9158 = vpop.xlane.xlu0 %9157
    %v9159 = vsel %vm1676, %v9141, 0.0
    %9160 = vadd.xlane.f32.xlu0 %v9159
    %v9161 = vpop.xlane.xlu0 %9160
    %v9162 = vsel %vm1676, %v9142, 0.0
    %9163 = vadd.xlane.f32.xlu0 %v9162
    %v9164 = vpop.xlane.xlu0 %9163
    %v9165 = vsel %vm1676, %v9143, 0.0
    %9166 = vadd.xlane.f32.xlu0 %v9165
    %v9167 = vpop.xlane.xlu0 %9166
    %v9168 = vsel %vm1676, %v9144, 0.0
    %9169 = vadd.xlane.f32.xlu0 %v9168
    %v9170 = vpop.xlane.xlu0 %9169
    %v9171 = vsel %vm1676, %v9145, 0.0
    %9172 = vadd.xlane.f32.xlu0 %v9171
    %v9173 = vpop.xlane.xlu0 %9172
    %v9174 = vsel %vm1676, %v9146, 0.0
    %9175 = vadd.xlane.f32.xlu0 %v9174
    %v9176 = vpop.xlane.xlu0 %9175
    %v9177 = vsel %vm1676, %v9147, 0.0
    %9178 = vadd.xlane.f32.xlu0 %v9177
    %v9179 = vpop.xlane.xlu0 %9178
    %v9180 = vsel %vm1676, %v9148, 0.0
    %9181 = vadd.xlane.f32.xlu0 %v9180
    %v9182 = vpop.xlane.xlu0 %9181
    %v9183 = vsel %vm1676, %v9149, 0.0
    %9184 = vadd.xlane.f32.xlu0 %v9183
    %v9185 = vpop.xlane.xlu0 %9184
    %v9186 = vsel %vm1676, %v9150, 0.0
    %9187 = vadd.xlane.f32.xlu0 %v9186
    %v9188 = vpop.xlane.xlu0 %9187
    %v9189 = vsel %vm1676, %v9151, 0.0
    %9190 = vadd.xlane.f32.xlu0 %v9189
    %v9191 = vpop.xlane.xlu0 %9190
    %v9192 = vsel %vm1676, %v9152, 0.0
    %9193 = vadd.xlane.f32.xlu0 %v9192
    %v9194 = vpop.xlane.xlu0 %9193
    %v9195 = vsel %vm1676, %v9153, 0.0
    %9196 = vadd.xlane.f32.xlu0 %v9195
    %v9197 = vpop.xlane.xlu0 %9196
    %v9198 = vsel %vm1676, %v9154, 0.0
    %9199 = vadd.xlane.f32.xlu0 %v9198
    %v9200 = vpop.xlane.xlu0 %9199
    %v9201 = vsel %vm1676, %v9155, 0.0
    %9202 = vadd.xlane.f32.xlu0 %v9201
    %v9203 = vpop.xlane.xlu0 %9202
    %v9204 = vld [vmem:[#allocation13] sm:$0xf]
    %9205 = vmatprep.subr.mxu0 0.0
    %9206 = vmatpush1.msra.mxu0 %v9094
    %9207 = vmatprep.subr.mxu0 0.0
    %9208 = vmatpush1.msra.mxu0 %v9097
    %9209 = vmatprep.subr.mxu0 0.0
    %9210 = vmatpush1.msra.mxu0 %v9100
    %9211 = vmatprep.subr.mxu0 0.0
    %9212 = vmatpush1.msra.mxu0 %v9103
    %9213 = vmatprep.subr.mxu0 0.0
    %9214 = vmatpush1.msra.mxu0 %v9106
    %9215 = vmatprep.subr.mxu0 0.0
    %9216 = vmatpush1.msra.mxu0 %v9109
    %9217 = vmatprep.subr.mxu0 0.0
    %9218 = vmatpush1.msra.mxu0 %v9112
    %9219 = vmatprep.subr.mxu0 0.0
    %9220 = vmatpush1.msra.mxu0 %v9115
    %9221 = vmatprep.subr.mxu0 0.0
    %9222 = vmatpush1.msra.mxu0 %v9118
    %9223 = vmatprep.subr.mxu0 0.0
    %9224 = vmatpush1.msra.mxu0 %v9121
    %9225 = vmatprep.subr.mxu0 0.0
    %9226 = vmatpush1.msra.mxu0 %v9124
    %9227 = vmatprep.subr.mxu0 0.0
    %9228 = vmatpush1.msra.mxu0 %v9127
    %9229 = vmatprep.subr.mxu0 0.0
    %9230 = vmatpush1.msra.mxu0 %v9130
    %9231 = vmatprep.subr.mxu0 0.0
    %9232 = vmatpush1.msra.mxu0 %v9133
    %9233 = vmatprep.subr.mxu0 0.0
    %9234 = vmatpush1.msra.mxu0 %v9136
    %9235 = vmatprep.subr.mxu0 0.0
    %9236 = vmatpush1.msra.mxu0 %v9139
    %9237 = vmatprep.subr.mxu0 0.0
    %9238 = vmatpush1.msra.mxu0 0.0
    %9239 = vmatprep.subr.mxu0 0.0
    %9240 = vmatpush1.msra.mxu0 0.0
    %9241 = vmatprep.subr.mxu0 0.0
    %9242 = vmatpush1.msra.mxu0 0.0
    %9243 = vmatprep.subr.mxu0 0.0
    %9244 = vmatpush1.msra.mxu0 0.0
    %9245 = vmatprep.subr.mxu0 0.0
    %9246 = vmatpush1.msra.mxu0 0.0
    %9247 = vmatprep.subr.mxu0 0.0
    %9248 = vmatpush1.msra.mxu0 0.0
    %9249 = vmatprep.subr.mxu0 0.0
    %9250 = vmatpush1.msra.mxu0 0.0
    %9251 = vmatprep.subr.mxu0 0.0
    %9252 = vmatpush1.msra.mxu0 0.0
    %9253 = vmatprep.subr.mxu0 0.0
    %9254 = vmatpush1.msra.mxu0 0.0
    %9255 = vmatprep.subr.mxu0 0.0
    %9256 = vmatpush1.msra.mxu0 0.0
    %9257 = vmatprep.subr.mxu0 0.0
    %9258 = vmatpush1.msra.mxu0 0.0
    %9259 = vmatprep.subr.mxu0 0.0
    %9260 = vmatpush1.msra.mxu0 0.0
    %9261 = vmatprep.subr.mxu0 0.0
    %9262 = vmatpush1.msra.mxu0 0.0
    %9263 = vmatprep.subr.mxu0 0.0
    %9264 = vmatpush1.msra.mxu0 0.0
    %9265 = vmatprep.subr.mxu0 0.0
    %9266 = vmatpush1.msra.mxu0 0.0
    %9267 = vmatprep.subr.mxu0 0.0
    %9268 = vmatpush1.msra.mxu0 0.0
    %9269 = vmatprep.mubr.f32.mxu0 0.0
    %9270 = vmatmul.mubr.f32.gmra.mrb[0].mxu0 %v9204
    %v9271 = vpop.f32.mrb[0].mxu0
    %v9272 = vadd.f32 0.0, %v9271
    %v9273 = vpop.f32.mrb[0].mxu0
    %9274 = vdwg.mxu0
    %9275 = vmatprep.subr.mxu0 0.0
    %9276 = vmatpush1.msra.mxu0 %v9158
    %9277 = vmatprep.subr.mxu0 0.0
    %9278 = vmatpush1.msra.mxu0 %v9161
    %9279 = vmatprep.subr.mxu0 0.0
    %9280 = vmatpush1.msra.mxu0 %v9164
    %9281 = vmatprep.subr.mxu0 0.0
    %9282 = vmatpush1.msra.mxu0 %v9167
    %9283 = vmatprep.subr.mxu0 0.0
    %9284 = vmatpush1.msra.mxu0 %v9170
    %9285 = vmatprep.subr.mxu0 0.0
    %9286 = vmatpush1.msra.mxu0 %v9173
    %9287 = vmatprep.subr.mxu0 0.0
    %9288 = vmatpush1.msra.mxu0 %v9176
    %9289 = vmatprep.subr.mxu0 0.0
    %9290 = vmatpush1.msra.mxu0 %v9179
    %9291 = vmatprep.subr.mxu0 0.0
    %9292 = vmatpush1.msra.mxu0 %v9182
    %9293 = vmatprep.subr.mxu0 0.0
    %9294 = vmatpush1.msra.mxu0 %v9185
    %9295 = vmatprep.subr.mxu0 0.0
    %9296 = vmatpush1.msra.mxu0 %v9188
    %9297 = vmatprep.subr.mxu0 0.0
    %9298 = vmatpush1.msra.mxu0 %v9191
    %9299 = vmatprep.subr.mxu0 0.0
    %9300 = vmatpush1.msra.mxu0 %v9194
    %9301 = vmatprep.subr.mxu0 0.0
    %9302 = vmatpush1.msra.mxu0 %v9197
    %9303 = vmatprep.subr.mxu0 0.0
    %9304 = vmatpush1.msra.mxu0 %v9200
    %9305 = vmatprep.subr.mxu0 0.0
    %9306 = vmatpush1.msra.mxu0 %v9203
    %9307 = vmatprep.subr.mxu0 0.0
    %9308 = vmatpush1.msra.mxu0 0.0
    %9309 = vmatprep.subr.mxu0 0.0
    %9310 = vmatpush1.msra.mxu0 0.0
    %9311 = vmatprep.subr.mxu0 0.0
    %9312 = vmatpush1.msra.mxu0 0.0
    %9313 = vmatprep.subr.mxu0 0.0
    %9314 = vmatpush1.msra.mxu0 0.0
    %9315 = vmatprep.subr.mxu0 0.0
    %9316 = vmatpush1.msra.mxu0 0.0
    %9317 = vmatprep.subr.mxu0 0.0
    %9318 = vmatpush1.msra.mxu0 0.0
    %9319 = vmatprep.subr.mxu0 0.0
    %9320 = vmatpush1.msra.mxu0 0.0
    %9321 = vmatprep.subr.mxu0 0.0
    %9322 = vmatpush1.msra.mxu0 0.0
    %9323 = vmatprep.subr.mxu0 0.0
    %9324 = vmatpush1.msra.mxu0 0.0
    %9325 = vmatprep.subr.mxu0 0.0
    %9326 = vmatpush1.msra.mxu0 0.0
    %9327 = vmatprep.subr.mxu0 0.0
    %9328 = vmatpush1.msra.mxu0 0.0
    %9329 = vmatprep.subr.mxu0 0.0
    %9330 = vmatpush1.msra.mxu0 0.0
    %9331 = vmatprep.subr.mxu0 0.0
    %9332 = vmatpush1.msra.mxu0 0.0
    %9333 = vmatprep.subr.mxu0 0.0
    %9334 = vmatpush1.msra.mxu0 0.0
    %9335 = vmatprep.subr.mxu0 0.0
    %9336 = vmatpush1.msra.mxu0 0.0
    %9337 = vmatprep.subr.mxu0 0.0
    %9338 = vmatpush1.msra.mxu0 0.0
    %9339 = vmatprep.mubr.f32.mxu0 0.0
    %9340 = vmatmul.mubr.f32.gmra.mrb[0].mxu0 %v9204
    %v9341 = vpop.f32.mrb[0].mxu0
    %v9342 = vadd.f32 0.0, %v9341
    %v9343 = vpop.f32.mrb[0].mxu0
    %9344 = vdwg.mxu0
    %v9345 = vmul.f32 %v9272, 0.00048828125
    %v9346 = vmul.f32 %v9342, 0.00048828125
    %v9347 = vmul.f32 %v9345, %v9345
    %v9348 = vsub.f32 %v9346, %v9347
    %v9349 = vmax.f32 %v9348, 0.0
    %v9350 = vld [vmem:[%s22] sm:$0xf]
    %v9351 = vadd.f32 %v9349, 1e-05
    %v9352 = vrsqrt.pop %v9351
    %v9353 = vmul.f32 %v9350, %v9352
    %v9354 = vld [vmem:[%s23] sm:$0xf]
    %v9355 = vmul.f32 %v9345, %v9353
    %v9356 = vsub.f32 %v9354, %v9355
    %v9357 = vld [vmem:[%s21] sm:$0xff]
    %v9358 = vld [vmem:[%s21 + $0x8] sm:$0xff]
    %v9359 = vld [vmem:[%s21 + $0x10] sm:$0xff]
    %v9360 = vld [vmem:[%s21 + $0x18] sm:$0xff]
    %v9361 = vld [vmem:[%s21 + $0x20] sm:$0xff]
    %v9362 = vld [vmem:[%s21 + $0x28] sm:$0xff]
    %v9363 = vld [vmem:[%s21 + $0x30] sm:$0xff]
    %v9364 = vld [vmem:[%s21 + $0x38] sm:$0xff]
    %v9365 = vld [vmem:[%s21 + $0x40] sm:$0xff]
    %v9366 = vld [vmem:[%s21 + $0x48] sm:$0xff]
    %v9367 = vld [vmem:[%s21 + $0x50] sm:$0xff]
    %v9368 = vld [vmem:[%s21 + $0x58] sm:$0xff]
    %v9369 = vld [vmem:[%s21 + $0x60] sm:$0xff]
    %v9370 = vld [vmem:[%s21 + $0x68] sm:$0xff]
    %v9371 = vld [vmem:[%s21 + $0x70] sm:$0xff]
    %v9372 = vld [vmem:[%s21 + $0x78] sm:$0xff]
    %vm9373 = vcmask 31744
    %v9375 = vsel %vm9373, %v9357, 0
    %v9378 = vsel %vm9373, %v9358, 0
    %v9381 = vsel %vm9373, %v9359, 0
    %v9384 = vsel %vm9373, %v9360, 0
    %v9387 = vsel %vm9373, %v9361, 0
    %v9390 = vsel %vm9373, %v9362, 0
    %v9393 = vsel %vm9373, %v9363, 0
    %v9396 = vsel %vm9373, %v9364, 0
    %v9399 = vsel %vm9373, %v9365, 0
    %v9402 = vsel %vm9373, %v9366, 0
    %v9405 = vsel %vm9373, %v9367, 0
    %v9408 = vsel %vm9373, %v9368, 0
    %v9411 = vsel %vm9373, %v9369, 0
    %v9414 = vsel %vm9373, %v9370, 0
    %v9417 = vsel %vm9373, %v9371, 0
    %v9420 = vsel %vm9373, %v9372, 0
    %vm9422 = vcmask 1043456
    %v9424 = vsel %vm9422, %v9353, 0
    %9426 = vmatprep.subr.mxu0 0.0
    %9427 = vmatpush1.msra.mxu0 %v9424
    %9428 = vmatprep.subr.mxu0 0.0
    %9429 = vmatpush1.msra.mxu0 0.0
    %9430 = vmatprep.subr.mxu0 0.0
    %9431 = vmatpush1.msra.mxu0 0.0
    %9432 = vmatprep.subr.mxu0 0.0
    %9433 = vmatpush1.msra.mxu0 0.0
    %9434 = vmatprep.subr.mxu0 0.0
    %9435 = vmatpush1.msra.mxu0 0.0
    %9436 = vmatprep.subr.mxu0 0.0
    %9437 = vmatpush1.msra.mxu0 0.0
    %9438 = vmatprep.subr.mxu0 0.0
    %9439 = vmatpush1.msra.mxu0 0.0
    %9440 = vmatprep.subr.mxu0 0.0
    %9441 = vmatpush1.msra.mxu0 0.0
    %9442 = vmatprep.subr.mxu0 0.0
    %9443 = vmatpush1.msra.mxu0 0.0
    %9444 = vmatprep.subr.mxu0 0.0
    %9445 = vmatpush1.msra.mxu0 0.0
    %9446 = vmatprep.subr.mxu0 0.0
    %9447 = vmatpush1.msra.mxu0 0.0
    %9448 = vmatprep.subr.mxu0 0.0
    %9449 = vmatpush1.msra.mxu0 0.0
    %9450 = vmatprep.subr.mxu0 0.0
    %9451 = vmatpush1.msra.mxu0 0.0
    %9452 = vmatprep.subr.mxu0 0.0
    %9453 = vmatpush1.msra.mxu0 0.0
    %9454 = vmatprep.subr.mxu0 0.0
    %9455 = vmatpush1.msra.mxu0 0.0
    %9456 = vmatprep.subr.mxu0 0.0
    %9457 = vmatpush1.msra.mxu0 0.0
    %9458 = vmatprep.subr.mxu0 0.0
    %9459 = vmatpush1.msra.mxu0 0.0
    %9460 = vmatprep.subr.mxu0 0.0
    %9461 = vmatpush1.msra.mxu0 0.0
    %9462 = vmatprep.subr.mxu0 0.0
    %9463 = vmatpush1.msra.mxu0 0.0
    %9464 = vmatprep.subr.mxu0 0.0
    %9465 = vmatpush1.msra.mxu0 0.0
    %9466 = vmatprep.subr.mxu0 0.0
    %9467 = vmatpush1.msra.mxu0 0.0
    %9468 = vmatprep.subr.mxu0 0.0
    %9469 = vmatpush1.msra.mxu0 0.0
    %9470 = vmatprep.subr.mxu0 0.0
    %9471 = vmatpush1.msra.mxu0 0.0
    %9472 = vmatprep.subr.mxu0 0.0
    %9473 = vmatpush1.msra.mxu0 0.0
    %9474 = vmatprep.subr.mxu0 0.0
    %9475 = vmatpush1.msra.mxu0 0.0
    %9476 = vmatprep.subr.mxu0 0.0
    %9477 = vmatpush1.msra.mxu0 0.0
    %9478 = vmatprep.subr.mxu0 0.0
    %9479 = vmatpush1.msra.mxu0 0.0
    %9480 = vmatprep.subr.mxu0 0.0
    %9481 = vmatpush1.msra.mxu0 0.0
    %9482 = vmatprep.subr.mxu0 0.0
    %9483 = vmatpush1.msra.mxu0 0.0
    %9484 = vmatprep.subr.mxu0 0.0
    %9485 = vmatpush1.msra.mxu0 0.0
    %9486 = vmatprep.subr.mxu0 0.0
    %9487 = vmatpush1.msra.mxu0 0.0
    %9488 = vmatprep.subr.mxu0 0.0
    %9489 = vmatpush1.msra.mxu0 0.0
    %9490 = vmatprep.mubr.f32.mxu0 0.0
    %9491 = vmatmul.mubr.f32.gmra.mrb[0].mxu0 %v9375
    %v9492 = vpop.f32.mrb[0].mxu0
    %v9493 = vadd.f32 0.0, %v9492
    %v9494 = vpop.f32.mrb[0].mxu0
    %9495 = vmatprep.mubr.f32.mxu0 0.0
    %9496 = vmatmul.mubr.f32.gmra.mrb[0].mxu0 %v9378
    %v9497 = vpop.f32.mrb[0].mxu0
    %v9498 = vadd.f32 0.0, %v9497
    %v9499 = vpop.f32.mrb[0].mxu0
    %9500 = vmatprep.mubr.f32.mxu0 0.0
    %9501 = vmatmul.mubr.f32.gmra.mrb[0].mxu0 %v9381
    %v9502 = vpop.f32.mrb[0].mxu0
    %v9503 = vadd.f32 0.0, %v9502
    %v9504 = vpop.f32.mrb[0].mxu0
    %9505 = vmatprep.mubr.f32.mxu0 0.0
    %9506 = vmatmul.mubr.f32.gmra.mrb[0].mxu0 %v9384
    %v9507 = vpop.f32.mrb[0].mxu0
    %v9508 = vadd.f32 0.0, %v9507
    %v9509 = vpop.f32.mrb[0].mxu0
    %9510 = vmatprep.mubr.f32.mxu0 0.0
    %9511 = vmatmul.mubr.f32.gmra.mrb[0].mxu0 %v9387
    %v9512 = vpop.f32.mrb[0].mxu0
    %v9513 = vadd.f32 0.0, %v9512
    %v9514 = vpop.f32.mrb[0].mxu0
    %9515 = vmatprep.mubr.f32.mxu0 0.0
    %9516 = vmatmul.mubr.f32.gmra.mrb[0].mxu0 %v9390
    %v9517 = vpop.f32.mrb[0].mxu0
    %v9518 = vadd.f32 0.0, %v9517
    %v9519 = vpop.f32.mrb[0].mxu0
    %9520 = vmatprep.mubr.f32.mxu0 0.0
    %9521 = vmatmul.mubr.f32.gmra.mrb[0].mxu0 %v9393
    %v9522 = vpop.f32.mrb[0].mxu0
    %v9523 = vadd.f32 0.0, %v9522
    %v9524 = vpop.f32.mrb[0].mxu0
    %9525 = vmatprep.mubr.f32.mxu0 0.0
    %9526 = vmatmul.mubr.f32.gmra.mrb[0].mxu0 %v9396
    %v9527 = vpop.f32.mrb[0].mxu0
    %v9528 = vadd.f32 0.0, %v9527
    %v9529 = vpop.f32.mrb[0].mxu0
    %9530 = vmatprep.mubr.f32.mxu0 0.0
    %9531 = vmatmul.mubr.f32.gmra.mrb[0].mxu0 %v9399
    %v9532 = vpop.f32.mrb[0].mxu0
    %v9533 = vadd.f32 0.0, %v9532
    %v9534 = vpop.f32.mrb[0].mxu0
    %9535 = vmatprep.mubr.f32.mxu0 0.0
    %9536 = vmatmul.mubr.f32.gmra.mrb[0].mxu0 %v9402
    %v9537 = vpop.f32.mrb[0].mxu0
    %v9538 = vadd.f32 0.0, %v9537
    %v9539 = vpop.f32.mrb[0].mxu0
    %9540 = vmatprep.mubr.f32.mxu0 0.0
    %9541 = vmatmul.mubr.f32.gmra.mrb[0].mxu0 %v9405
    %v9542 = vpop.f32.mrb[0].mxu0
    %v9543 = vadd.f32 0.0, %v9542
    %v9544 = vpop.f32.mrb[0].mxu0
    %9545 = vmatprep.mubr.f32.mxu0 0.0
    %9546 = vmatmul.mubr.f32.gmra.mrb[0].mxu0 %v9408
    %v9547 = vpop.f32.mrb[0].mxu0
    %v9548 = vadd.f32 0.0, %v9547
    %v9549 = vpop.f32.mrb[0].mxu0
    %9550 = vmatprep.mubr.f32.mxu0 0.0
    %9551 = vmatmul.mubr.f32.gmra.mrb[0].mxu0 %v9411
    %v9552 = vpop.f32.mrb[0].mxu0
    %v9553 = vadd.f32 0.0, %v9552
    %v9554 = vpop.f32.mrb[0].mxu0
    %9555 = vmatprep.mubr.f32.mxu0 0.0
    %9556 = vmatmul.mubr.f32.gmra.mrb[0].mxu0 %v9414
    %v9557 = vpop.f32.mrb[0].mxu0
    %v9558 = vadd.f32 0.0, %v9557
    %v9559 = vpop.f32.mrb[0].mxu0
    %9560 = vmatprep.mubr.f32.mxu0 0.0
    %9561 = vmatmul.mubr.f32.gmra.mrb[0].mxu0 %v9417
    %v9562 = vpop.f32.mrb[0].mxu0
    %v9563 = vadd.f32 0.0, %v9562
    %v9564 = vpop.f32.mrb[0].mxu0
    %9565 = vmatprep.mubr.f32.mxu0 0.0
    %9566 = vmatmul.mubr.f32.gmra.mrb[0].mxu0 %v9420
    %v9567 = vpop.f32.mrb[0].mxu0
    %v9568 = vadd.f32 0.0, %v9567
    %v9569 = vpop.f32.mrb[0].mxu0
    %9570 = vdwg.mxu0
    %v9572 = vsel %vm9422, %v9356, 0
    %9574 = vmatprep.subr.mxu0 0.0
    %9575 = vmatpush1.msra.mxu0 %v9572
    %9576 = vmatprep.subr.mxu0 0.0
    %9577 = vmatpush1.msra.mxu0 0.0
    %9578 = vmatprep.subr.mxu0 0.0
    %9579 = vmatpush1.msra.mxu0 0.0
    %9580 = vmatprep.subr.mxu0 0.0
    %9581 = vmatpush1.msra.mxu0 0.0
    %9582 = vmatprep.subr.mxu0 0.0
    %9583 = vmatpush1.msra.mxu0 0.0
    %9584 = vmatprep.subr.mxu0 0.0
    %9585 = vmatpush1.msra.mxu0 0.0
    %9586 = vmatprep.subr.mxu0 0.0
    %9587 = vmatpush1.msra.mxu0 0.0
    %9588 = vmatprep.subr.mxu0 0.0
    %9589 = vmatpush1.msra.mxu0 0.0
    %9590 = vmatprep.subr.mxu0 0.0
    %9591 = vmatpush1.msra.mxu0 0.0
    %9592 = vmatprep.subr.mxu0 0.0
    %9593 = vmatpush1.msra.mxu0 0.0
    %9594 = vmatprep.subr.mxu0 0.0
    %9595 = vmatpush1.msra.mxu0 0.0
    %9596 = vmatprep.subr.mxu0 0.0
    %9597 = vmatpush1.msra.mxu0 0.0
    %9598 = vmatprep.subr.mxu0 0.0
    %9599 = vmatpush1.msra.mxu0 0.0
    %9600 = vmatprep.subr.mxu0 0.0
    %9601 = vmatpush1.msra.mxu0 0.0
    %9602 = vmatprep.subr.mxu0 0.0
    %9603 = vmatpush1.msra.mxu0 0.0
    %9604 = vmatprep.subr.mxu0 0.0
    %9605 = vmatpush1.msra.mxu0 0.0
    %9606 = vmatprep.subr.mxu0 0.0
    %9607 = vmatpush1.msra.mxu0 0.0
    %9608 = vmatprep.subr.mxu0 0.0
    %9609 = vmatpush1.msra.mxu0 0.0
    %9610 = vmatprep.subr.mxu0 0.0
    %9611 = vmatpush1.msra.mxu0 0.0
    %9612 = vmatprep.subr.mxu0 0.0
    %9613 = vmatpush1.msra.mxu0 0.0
    %9614 = vmatprep.subr.mxu0 0.0
    %9615 = vmatpush1.msra.mxu0 0.0
    %9616 = vmatprep.subr.mxu0 0.0
    %9617 = vmatpush1.msra.mxu0 0.0
    %9618 = vmatprep.subr.mxu0 0.0
    %9619 = vmatpush1.msra.mxu0 0.0
    %9620 = vmatprep.subr.mxu0 0.0
    %9621 = vmatpush1.msra.mxu0 0.0
    %9622 = vmatprep.subr.mxu0 0.0
    %9623 = vmatpush1.msra.mxu0 0.0
    %9624 = vmatprep.subr.mxu0 0.0
    %9625 = vmatpush1.msra.mxu0 0.0
    %9626 = vmatprep.subr.mxu0 0.0
    %9627 = vmatpush1.msra.mxu0 0.0
    %9628 = vmatprep.subr.mxu0 0.0
    %9629 = vmatpush1.msra.mxu0 0.0
    %9630 = vmatprep.subr.mxu0 0.0
    %9631 = vmatpush1.msra.mxu0 0.0
    %9632 = vmatprep.subr.mxu0 0.0
    %9633 = vmatpush1.msra.mxu0 0.0
    %9634 = vmatprep.subr.mxu0 0.0
    %9635 = vmatpush1.msra.mxu0 0.0
    %9636 = vmatprep.subr.mxu0 0.0
    %9637 = vmatpush1.msra.mxu0 0.0
    %9638 = vmatprep.mubr.f32.mxu0 0.0
    %9639 = vmatmul.mubr.f32.gmra.mrb[0].mxu0 %v9375
    %v9640 = vpop.f32.mrb[0].mxu0
    %v9641 = vadd.f32 0.0, %v9640
    %v9642 = vpop.f32.mrb[0].mxu0
    %9643 = vmatprep.mubr.f32.mxu0 0.0
    %9644 = vmatmul.mubr.f32.gmra.mrb[0].mxu0 %v9378
    %v9645 = vpop.f32.mrb[0].mxu0
    %v9646 = vadd.f32 0.0, %v9645
    %v9647 = vpop.f32.mrb[0].mxu0
    %9648 = vmatprep.mubr.f32.mxu0 0.0
    %9649 = vmatmul.mubr.f32.gmra.mrb[0].mxu0 %v9381
    %v9650 = vpop.f32.mrb[0].mxu0
    %v9651 = vadd.f32 0.0, %v9650
    %v9652 = vpop.f32.mrb[0].mxu0
    %9653 = vmatprep.mubr.f32.mxu0 0.0
    %9654 = vmatmul.mubr.f32.gmra.mrb[0].mxu0 %v9384
    %v9655 = vpop.f32.mrb[0].mxu0
    %v9656 = vadd.f32 0.0, %v9655
    %v9657 = vpop.f32.mrb[0].mxu0
    %9658 = vmatprep.mubr.f32.mxu0 0.0
    %9659 = vmatmul.mubr.f32.gmra.mrb[0].mxu0 %v9387
    %v9660 = vpop.f32.mrb[0].mxu0
    %v9661 = vadd.f32 0.0, %v9660
    %v9662 = vpop.f32.mrb[0].mxu0
    %9663 = vmatprep.mubr.f32.mxu0 0.0
    %9664 = vmatmul.mubr.f32.gmra.mrb[0].mxu0 %v9390
    %v9665 = vpop.f32.mrb[0].mxu0
    %v9666 = vadd.f32 0.0, %v9665
    %v9667 = vpop.f32.mrb[0].mxu0
    %9668 = vmatprep.mubr.f32.mxu0 0.0
    %9669 = vmatmul.mubr.f32.gmra.mrb[0].mxu0 %v9393
    %v9670 = vpop.f32.mrb[0].mxu0
    %v9671 = vadd.f32 0.0, %v9670
    %v9672 = vpop.f32.mrb[0].mxu0
    %9673 = vmatprep.mubr.f32.mxu0 0.0
    %9674 = vmatmul.mubr.f32.gmra.mrb[0].mxu0 %v9396
    %v9675 = vpop.f32.mrb[0].mxu0
    %v9676 = vadd.f32 0.0, %v9675
    %v9677 = vpop.f32.mrb[0].mxu0
    %9678 = vmatprep.mubr.f32.mxu0 0.0
    %9679 = vmatmul.mubr.f32.gmra.mrb[0].mxu0 %v9399
    %v9680 = vpop.f32.mrb[0].mxu0
    %v9681 = vadd.f32 0.0, %v9680
    %v9682 = vpop.f32.mrb[0].mxu0
    %9683 = vmatprep.mubr.f32.mxu0 0.0
    %9684 = vmatmul.mubr.f32.gmra.mrb[0].mxu0 %v9402
    %v9685 = vpop.f32.mrb[0].mxu0
    %v9686 = vadd.f32 0.0, %v9685
    %v9687 = vpop.f32.mrb[0].mxu0
    %9688 = vmatprep.mubr.f32.mxu0 0.0
    %9689 = vmatmul.mubr.f32.gmra.mrb[0].mxu0 %v9405
    %v9690 = vpop.f32.mrb[0].mxu0
    %v9691 = vadd.f32 0.0, %v9690
    %v9692 = vpop.f32.mrb[0].mxu0
    %9693 = vmatprep.mubr.f32.mxu0 0.0
    %9694 = vmatmul.mubr.f32.gmra.mrb[0].mxu0 %v9408
    %v9695 = vpop.f32.mrb[0].mxu0
    %v9696 = vadd.f32 0.0, %v9695
    %v9697 = vpop.f32.mrb[0].mxu0
    %9698 = vmatprep.mubr.f32.mxu0 0.0
    %9699 = vmatmul.mubr.f32.gmra.mrb[0].mxu0 %v9411
    %v9700 = vpop.f32.mrb[0].mxu0
    %v9701 = vadd.f32 0.0, %v9700
    %v9702 = vpop.f32.mrb[0].mxu0
    %9703 = vmatprep.mubr.f32.mxu0 0.0
    %9704 = vmatmul.mubr.f32.gmra.mrb[0].mxu0 %v9414
    %v9705 = vpop.f32.mrb[0].mxu0
    %v9706 = vadd.f32 0.0, %v9705
    %v9707 = vpop.f32.mrb[0].mxu0
    %9708 = vmatprep.mubr.f32.mxu0 0.0
    %9709 = vmatmul.mubr.f32.gmra.mrb[0].mxu0 %v9417
    %v9710 = vpop.f32.mrb[0].mxu0
    %v9711 = vadd.f32 0.0, %v9710
    %v9712 = vpop.f32.mrb[0].mxu0
    %9713 = vmatprep.mubr.f32.mxu0 0.0
    %9714 = vmatmul.mubr.f32.gmra.mrb[0].mxu0 %v9420
    %v9715 = vpop.f32.mrb[0].mxu0
    %v9716 = vadd.f32 0.0, %v9715
    %v9717 = vpop.f32.mrb[0].mxu0
    %9718 = vdwg.mxu0
    %9720 = vset.pattern.permute.xlu0 0
    %9721 = vperm.xlu0 %9720, %v9493
    %v9722 = vpop.permute.xlu0 %9721
    %9725 = vset.pattern.permute.xlu0 0
    %9726 = vperm.xlu0 %9725, %v9498
    %v9727 = vpop.permute.xlu0 %9726
    %9730 = vset.pattern.permute.xlu0 0
    %9731 = vperm.xlu0 %9730, %v9503
    %v9732 = vpop.permute.xlu0 %9731
    %9735 = vset.pattern.permute.xlu0 0
    %9736 = vperm.xlu0 %9735, %v9508
    %v9737 = vpop.permute.xlu0 %9736
    %9740 = vset.pattern.permute.xlu0 0
    %9741 = vperm.xlu0 %9740, %v9513
    %v9742 = vpop.permute.xlu0 %9741
    %9745 = vset.pattern.permute.xlu0 0
    %9746 = vperm.xlu0 %9745, %v9518
    %v9747 = vpop.permute.xlu0 %9746
    %9750 = vset.pattern.permute.xlu0 0
    %9751 = vperm.xlu0 %9750, %v9523
    %v9752 = vpop.permute.xlu0 %9751
    %9755 = vset.pattern.permute.xlu0 0
    %9756 = vperm.xlu0 %9755, %v9528
    %v9757 = vpop.permute.xlu0 %9756
    %9760 = vset.pattern.permute.xlu0 0
    %9761 = vperm.xlu0 %9760, %v9533
    %v9762 = vpop.permute.xlu0 %9761
    %9765 = vset.pattern.permute.xlu0 0
    %9766 = vperm.xlu0 %9765, %v9538
    %v9767 = vpop.permute.xlu0 %9766
    %9770 = vset.pattern.permute.xlu0 0
    %9771 = vperm.xlu0 %9770, %v9543
    %v9772 = vpop.permute.xlu0 %9771
    %9775 = vset.pattern.permute.xlu0 0
    %9776 = vperm.xlu0 %9775, %v9548
    %v9777 = vpop.permute.xlu0 %9776
    %9780 = vset.pattern.permute.xlu0 0
    %9781 = vperm.xlu0 %9780, %v9553
    %v9782 = vpop.permute.xlu0 %9781
    %9785 = vset.pattern.permute.xlu0 0
    %9786 = vperm.xlu0 %9785, %v9558
    %v9787 = vpop.permute.xlu0 %9786
    %9790 = vset.pattern.permute.xlu0 0
    %9791 = vperm.xlu0 %9790, %v9563
    %v9792 = vpop.permute.xlu0 %9791
    %9795 = vset.pattern.permute.xlu0 0
    %9796 = vperm.xlu0 %9795, %v9568
    %v9797 = vpop.permute.xlu0 %9796
    %v9799 = vmul.f32 %v9076, %v9722
    %v9800 = vmul.f32 %v9077, %v9727
    %v9801 = vmul.f32 %v9078, %v9732
    %v9802 = vmul.f32 %v9079, %v9737
    %v9803 = vmul.f32 %v9080, %v9742
    %v9804 = vmul.f32 %v9081, %v9747
    %v9805 = vmul.f32 %v9082, %v9752
    %v9806 = vmul.f32 %v9083, %v9757
    %v9807 = vmul.f32 %v9084, %v9762
    %v9808 = vmul.f32 %v9085, %v9767
    %v9809 = vmul.f32 %v9086, %v9772
    %v9810 = vmul.f32 %v9087, %v9777
    %v9811 = vmul.f32 %v9088, %v9782
    %v9812 = vmul.f32 %v9089, %v9787
    %v9813 = vmul.f32 %v9090, %v9792
    %v9814 = vmul.f32 %v9091, %v9797
    %9816 = vset.pattern.permute.xlu0 0
    %9817 = vperm.xlu0 %9816, %v9641
    %v9818 = vpop.permute.xlu0 %9817
    %9821 = vset.pattern.permute.xlu0 0
    %9822 = vperm.xlu0 %9821, %v9646
    %v9823 = vpop.permute.xlu0 %9822
    %9826 = vset.pattern.permute.xlu0 0
    %9827 = vperm.xlu0 %9826, %v9651
    %v9828 = vpop.permute.xlu0 %9827
    %9831 = vset.pattern.permute.xlu0 0
    %9832 = vperm.xlu0 %9831, %v9656
    %v9833 = vpop.permute.xlu0 %9832
    %9836 = vset.pattern.permute.xlu0 0
    %9837 = vperm.xlu0 %9836, %v9661
    %v9838 = vpop.permute.xlu0 %9837
    %9841 = vset.pattern.permute.xlu0 0
    %9842 = vperm.xlu0 %9841, %v9666
    %v9843 = vpop.permute.xlu0 %9842
    %9846 = vset.pattern.permute.xlu0 0
    %9847 = vperm.xlu0 %9846, %v9671
    %v9848 = vpop.permute.xlu0 %9847
    %9851 = vset.pattern.permute.xlu0 0
    %9852 = vperm.xlu0 %9851, %v9676
    %v9853 = vpop.permute.xlu0 %9852
    %9856 = vset.pattern.permute.xlu0 0
    %9857 = vperm.xlu0 %9856, %v9681
    %v9858 = vpop.permute.xlu0 %9857
    %9861 = vset.pattern.permute.xlu0 0
    %9862 = vperm.xlu0 %9861, %v9686
    %v9863 = vpop.permute.xlu0 %9862
    %9866 = vset.pattern.permute.xlu0 0
    %9867 = vperm.xlu0 %9866, %v9691
    %v9868 = vpop.permute.xlu0 %9867
    %9871 = vset.pattern.permute.xlu0 0
    %9872 = vperm.xlu0 %9871, %v9696
    %v9873 = vpop.permute.xlu0 %9872
    %9876 = vset.pattern.permute.xlu0 0
    %9877 = vperm.xlu0 %9876, %v9701
    %v9878 = vpop.permute.xlu0 %9877
    %9881 = vset.pattern.permute.xlu0 0
    %9882 = vperm.xlu0 %9881, %v9706
    %v9883 = vpop.permute.xlu0 %9882
    %9886 = vset.pattern.permute.xlu0 0
    %9887 = vperm.xlu0 %9886, %v9711
    %v9888 = vpop.permute.xlu0 %9887
    %9891 = vset.pattern.permute.xlu0 0
    %9892 = vperm.xlu0 %9891, %v9716
    %v9893 = vpop.permute.xlu0 %9892
    %v9895 = vadd.f32 %v9799, %v9818
    %v9896 = vadd.f32 %v9800, %v9823
    %v9897 = vadd.f32 %v9801, %v9828
    %v9898 = vadd.f32 %v9802, %v9833
    %v9899 = vadd.f32 %v9803, %v9838
    %v9900 = vadd.f32 %v9804, %v9843
    %v9901 = vadd.f32 %v9805, %v9848
    %v9902 = vadd.f32 %v9806, %v9853
    %v9903 = vadd.f32 %v9807, %v9858
    %v9904 = vadd.f32 %v9808, %v9863
    %v9905 = vadd.f32 %v9809, %v9868
    %v9906 = vadd.f32 %v9810, %v9873
    %v9907 = vadd.f32 %v9811, %v9878
    %v9908 = vadd.f32 %v9812, %v9883
    %v9909 = vadd.f32 %v9813, %v9888
    %v9910 = vadd.f32 %v9814, %v9893
    %v9911 = vmax.f32 %v9895, 0.0
    %v9912 = vmax.f32 %v9896, 0.0
    %v9913 = vmax.f32 %v9897, 0.0
    %v9914 = vmax.f32 %v9898, 0.0
    %v9915 = vmax.f32 %v9899, 0.0
    %v9916 = vmax.f32 %v9900, 0.0
    %v9917 = vmax.f32 %v9901, 0.0
    %v9918 = vmax.f32 %v9902, 0.0
    %v9919 = vmax.f32 %v9903, 0.0
    %v9920 = vmax.f32 %v9904, 0.0
    %v9921 = vmax.f32 %v9905, 0.0
    %v9922 = vmax.f32 %v9906, 0.0
    %v9923 = vmax.f32 %v9907, 0.0
    %v9924 = vmax.f32 %v9908, 0.0
    %v9925 = vmax.f32 %v9909, 0.0
    %v9926 = vmax.f32 %v9910, 0.0
    %v9927 = vld [vmem:[%s24] sm:$0xff]
    %v9928 = vld [vmem:[%s24 + $0x8] sm:$0xff]
    %v9929 = vld [vmem:[%s24 + $0x10] sm:$0xff]
    %v9930 = vld [vmem:[%s24 + $0x18] sm:$0xff]
    %v9931 = vld [vmem:[%s24 + $0x20] sm:$0xff]
    %v9932 = vld [vmem:[%s24 + $0x28] sm:$0xff]
    %v9933 = vld [vmem:[%s24 + $0x30] sm:$0xff]
    %v9934 = vld [vmem:[%s24 + $0x38] sm:$0xff]
    %v9935 = vld [vmem:[%s24 + $0x40] sm:$0xff]
    %v9936 = vld [vmem:[%s24 + $0x48] sm:$0xff]
    %v9937 = vld [vmem:[%s24 + $0x50] sm:$0xff]
    %v9938 = vld [vmem:[%s24 + $0x58] sm:$0xff]
    %9939 = vmatprep.subr.mxu0 0.0
    %9940 = vmatpush1.msra.mxu0 %v9911
    %9941 = vmatprep.subr.mxu0 0.0
    %9942 = vmatpush1.msra.mxu0 %v9912
    %9943 = vmatprep.subr.mxu0 0.0
    %9944 = vmatpush1.msra.mxu0 %v9913
    %9945 = vmatprep.subr.mxu0 0.0
    %9946 = vmatpush1.msra.mxu0 %v9914
    %9947 = vmatprep.subr.mxu0 0.0
    %9948 = vmatpush1.msra.mxu0 %v9915
    %9949 = vmatprep.subr.mxu0 0.0
    %9950 = vmatpush1.msra.mxu0 %v9916
    %9951 = vmatprep.subr.mxu0 0.0
    %9952 = vmatpush1.msra.mxu0 %v9917
    %9953 = vmatprep.subr.mxu0 0.0
    %9954 = vmatpush1.msra.mxu0 %v9918
    %9955 = vmatprep.subr.mxu0 0.0
    %9956 = vmatpush1.msra.mxu0 %v9919
    %9957 = vmatprep.subr.mxu0 0.0
    %9958 = vmatpush1.msra.mxu0 %v9920
    %9959 = vmatprep.subr.mxu0 0.0
    %9960 = vmatpush1.msra.mxu0 %v9921
    %9961 = vmatprep.subr.mxu0 0.0
    %9962 = vmatpush1.msra.mxu0 %v9922
    %9963 = vmatprep.subr.mxu0 0.0
    %9964 = vmatpush1.msra.mxu0 %v9923
    %9965 = vmatprep.subr.mxu0 0.0
    %9966 = vmatpush1.msra.mxu0 %v9924
    %9967 = vmatprep.subr.mxu0 0.0
    %9968 = vmatpush1.msra.mxu0 %v9925
    %9969 = vmatprep.subr.mxu0 0.0
    %9970 = vmatpush1.msra.mxu0 %v9926
    %9971 = vmatprep.subr.mxu0 0.0
    %9972 = vmatpush1.msra.mxu0 0.0
    %9973 = vmatprep.subr.mxu0 0.0
    %9974 = vmatpush1.msra.mxu0 0.0
    %9975 = vmatprep.subr.mxu0 0.0
    %9976 = vmatpush1.msra.mxu0 0.0
    %9977 = vmatprep.subr.mxu0 0.0
    %9978 = vmatpush1.msra.mxu0 0.0
    %9979 = vmatprep.subr.mxu0 0.0
    %9980 = vmatpush1.msra.mxu0 0.0
    %9981 = vmatprep.subr.mxu0 0.0
    %9982 = vmatpush1.msra.mxu0 0.0
    %9983 = vmatprep.subr.mxu0 0.0
    %9984 = vmatpush1.msra.mxu0 0.0
    %9985 = vmatprep.subr.mxu0 0.0
    %9986 = vmatpush1.msra.mxu0 0.0
    %9987 = vmatprep.subr.mxu0 0.0
    %9988 = vmatpush1.msra.mxu0 0.0
    %9989 = vmatprep.subr.mxu0 0.0
    %9990 = vmatpush1.msra.mxu0 0.0
    %9991 = vmatprep.subr.mxu0 0.0
    %9992 = vmatpush1.msra.mxu0 0.0
    %9993 = vmatprep.subr.mxu0 0.0
    %9994 = vmatpush1.msra.mxu0 0.0
    %9995 = vmatprep.subr.mxu0 0.0
    %9996 = vmatpush1.msra.mxu0 0.0
    %9997 = vmatprep.subr.mxu0 0.0
    %9998 = vmatpush1.msra.mxu0 0.0
    %9999 = vmatprep.subr.mxu0 0.0
    %10000 = vmatpush1.msra.mxu0 0.0
    %10001 = vmatprep.subr.mxu0 0.0
    %10002 = vmatpush1.msra.mxu0 0.0
    %10003 = vmatprep.mubr.f32.mxu0 0.0
    %10004 = vmatmul.mubr.f32.gmra.mrb[0].mxu0 %v9927
    %v10005 = vpop.f32.mrb[0].mxu0
    %v10006 = vadd.f32 0.0, %v10005
    %v10007 = vpop.f32.mrb[0].mxu0
    %10008 = vmatprep.mubr.f32.mxu0 0.0
    %10009 = vmatmul.mubr.f32.gmra.mrb[0].mxu0 %v9928
    %v10010 = vpop.f32.mrb[0].mxu0
    %v10011 = vadd.f32 0.0, %v10010
    %v10012 = vpop.f32.mrb[0].mxu0
    %10013 = vmatprep.mubr.f32.mxu0 0.0
    %10014 = vmatmul.mubr.f32.gmra.mrb[0].mxu0 %v9929
    %v10015 = vpop.f32.mrb[0].mxu0
    %v10016 = vadd.f32 0.0, %v10015
    %v10017 = vpop.f32.mrb[0].mxu0
    %10018 = vmatprep.mubr.f32.mxu0 0.0
    %10019 = vmatmul.mubr.f32.gmra.mrb[0].mxu0 %v9930
    %v10020 = vpop.f32.mrb[0].mxu0
    %v10021 = vadd.f32 0.0, %v10020
    %v10022 = vpop.f32.mrb[0].mxu0
    %10023 = vmatprep.mubr.f32.mxu0 0.0
    %10024 = vmatmul.mubr.f32.gmra.mrb[0].mxu0 %v9931
    %v10025 = vpop.f32.mrb[0].mxu0
    %v10026 = vadd.f32 0.0, %v10025
    %v10027 = vpop.f32.mrb[0].mxu0
    %10028 = vmatprep.mubr.f32.mxu0 0.0
    %10029 = vmatmul.mubr.f32.gmra.mrb[0].mxu0 %v9932
    %v10030 = vpop.f32.mrb[0].mxu0
    %v10031 = vadd.f32 0.0, %v10030
    %v10032 = vpop.f32.mrb[0].mxu0
    %10033 = vmatprep.mubr.f32.mxu0 0.0
    %10034 = vmatmul.mubr.f32.gmra.mrb[0].mxu0 %v9933
    %v10035 = vpop.f32.mrb[0].mxu0
    %v10036 = vadd.f32 0.0, %v10035
    %v10037 = vpop.f32.mrb[0].mxu0
    %10038 = vmatprep.mubr.f32.mxu0 0.0
    %10039 = vmatmul.mubr.f32.gmra.mrb[0].mxu0 %v9934
    %v10040 = vpop.f32.mrb[0].mxu0
    %v10041 = vadd.f32 0.0, %v10040
    %v10042 = vpop.f32.mrb[0].mxu0
    %10043 = vmatprep.mubr.f32.mxu0 0.0
    %10044 = vmatmul.mubr.f32.gmra.mrb[0].mxu0 %v9935
    %v10045 = vpop.f32.mrb[0].mxu0
    %v10046 = vadd.f32 0.0, %v10045
    %v10047 = vpop.f32.mrb[0].mxu0
    %10048 = vmatprep.mubr.f32.mxu0 0.0
    %10049 = vmatmul.mubr.f32.gmra.mrb[0].mxu0 %v9936
    %v10050 = vpop.f32.mrb[0].mxu0
    %v10051 = vadd.f32 0.0, %v10050
    %v10052 = vpop.f32.mrb[0].mxu0
    %10053 = vmatprep.mubr.f32.mxu0 0.0
    %10054 = vmatmul.mubr.f32.gmra.mrb[0].mxu0 %v9937
    %v10055 = vpop.f32.mrb[0].mxu0
    %v10056 = vadd.f32 0.0, %v10055
    %v10057 = vpop.f32.mrb[0].mxu0
    %10058 = vmatprep.mubr.f32.mxu0 0.0
    %10059 = vmatmul.mubr.f32.gmra.mrb[0].mxu0 %v9938
    %v10060 = vpop.f32.mrb[0].mxu0
    %v10061 = vadd.f32 0.0, %v10060
    %v10062 = vpop.f32.mrb[0].mxu0
    %10063 = vdwg.mxu0
    %v10064 = vld [vmem:[%s25] sm:$0xff]
    %v10065 = vld [vmem:[%s25 + $0x8] sm:$0xff]
    %v10066 = vld [vmem:[%s25 + $0x10] sm:$0xff]
    %v10067 = vld [vmem:[%s25 + $0x18] sm:$0xff]
    %v10068 = vld [vmem:[%s25 + $0x20] sm:$0xff]
    %v10069 = vld [vmem:[%s25 + $0x28] sm:$0xff]
    %v10070 = vld [vmem:[%s25 + $0x30] sm:$0xff]
    %v10071 = vld [vmem:[%s25 + $0x38] sm:$0xff]
    %s10072 = scalar_lea.vmem %s24, 96
    %v10073 = vld [vmem:[%s10072] sm:$0xff]
    %v10074 = vld [vmem:[%s10072 + $0x8] sm:$0xff]
    %v10075 = vld [vmem:[%s10072 + $0x10] sm:$0xff]
    %v10076 = vld [vmem:[%s10072 + $0x18] sm:$0xff]
    %v10077 = vld [vmem:[%s10072 + $0x20] sm:$0xff]
    %v10078 = vld [vmem:[%s10072 + $0x28] sm:$0xff]
    %v10079 = vld [vmem:[%s10072 + $0x30] sm:$0xff]
    %v10080 = vld [vmem:[%s10072 + $0x38] sm:$0xff]
    %v10081 = vld [vmem:[%s10072 + $0x40] sm:$0xff]
    %v10082 = vld [vmem:[%s10072 + $0x48] sm:$0xff]
    %v10083 = vld [vmem:[%s10072 + $0x50] sm:$0xff]
    %v10084 = vld [vmem:[%s10072 + $0x58] sm:$0xff]
    %10085 = vmatprep.subr.mxu0 0.0
    %10086 = vmatpush1.msra.mxu0 %v9911
    %10087 = vmatprep.subr.mxu0 0.0
    %10088 = vmatpush1.msra.mxu0 %v9912
    %10089 = vmatprep.subr.mxu0 0.0
    %10090 = vmatpush1.msra.mxu0 %v9913
    %10091 = vmatprep.subr.mxu0 0.0
    %10092 = vmatpush1.msra.mxu0 %v9914
    %10093 = vmatprep.subr.mxu0 0.0
    %10094 = vmatpush1.msra.mxu0 %v9915
    %10095 = vmatprep.subr.mxu0 0.0
    %10096 = vmatpush1.msra.mxu0 %v9916
    %10097 = vmatprep.subr.mxu0 0.0
    %10098 = vmatpush1.msra.mxu0 %v9917
    %10099 = vmatprep.subr.mxu0 0.0
    %10100 = vmatpush1.msra.mxu0 %v9918
    %10101 = vmatprep.subr.mxu0 0.0
    %10102 = vmatpush1.msra.mxu0 %v9919
    %10103 = vmatprep.subr.mxu0 0.0
    %10104 = vmatpush1.msra.mxu0 %v9920
    %10105 = vmatprep.subr.mxu0 0.0
    %10106 = vmatpush1.msra.mxu0 %v9921
    %10107 = vmatprep.subr.mxu0 0.0
    %10108 = vmatpush1.msra.mxu0 %v9922
    %10109 = vmatprep.subr.mxu0 0.0
    %10110 = vmatpush1.msra.mxu0 %v9923
    %10111 = vmatprep.subr.mxu0 0.0
    %10112 = vmatpush1.msra.mxu0 %v9924
    %10113 = vmatprep.subr.mxu0 0.0
    %10114 = vmatpush1.msra.mxu0 %v9925
    %10115 = vmatprep.subr.mxu0 0.0
    %10116 = vmatpush1.msra.mxu0 %v9926
    %10117 = vmatprep.subr.mxu0 0.0
    %10118 = vmatpush1.msra.mxu0 0.0
    %10119 = vmatprep.subr.mxu0 0.0
    %10120 = vmatpush1.msra.mxu0 0.0
    %10121 = vmatprep.subr.mxu0 0.0
    %10122 = vmatpush1.msra.mxu0 0.0
    %10123 = vmatprep.subr.mxu0 0.0
    %10124 = vmatpush1.msra.mxu0 0.0
    %10125 = vmatprep.subr.mxu0 0.0
    %10126 = vmatpush1.msra.mxu0 0.0
    %10127 = vmatprep.subr.mxu0 0.0
    %10128 = vmatpush1.msra.mxu0 0.0
    %10129 = vmatprep.subr.mxu0 0.0
    %10130 = vmatpush1.msra.mxu0 0.0
    %10131 = vmatprep.subr.mxu0 0.0
    %10132 = vmatpush1.msra.mxu0 0.0
    %10133 = vmatprep.subr.mxu0 0.0
    %10134 = vmatpush1.msra.mxu0 0.0
    %10135 = vmatprep.subr.mxu0 0.0
    %10136 = vmatpush1.msra.mxu0 0.0
    %10137 = vmatprep.subr.mxu0 0.0
    %10138 = vmatpush1.msra.mxu0 0.0
    %10139 = vmatprep.subr.mxu0 0.0
    %10140 = vmatpush1.msra.mxu0 0.0
    %10141 = vmatprep.subr.mxu0 0.0
    %10142 = vmatpush1.msra.mxu0 0.0
    %10143 = vmatprep.subr.mxu0 0.0
    %10144 = vmatpush1.msra.mxu0 0.0
    %10145 = vmatprep.subr.mxu0 0.0
    %10146 = vmatpush1.msra.mxu0 0.0
    %10147 = vmatprep.subr.mxu0 0.0
    %10148 = vmatpush1.msra.mxu0 0.0
    %10149 = vmatprep.mubr.f32.mxu0 0.0
    %10150 = vmatmul.mubr.f32.gmra.mrb[0].mxu0 %v10073
    %v10151 = vpop.f32.mrb[0].mxu0
    %v10152 = vadd.f32 0.0, %v10151
    %v10153 = vpop.f32.mrb[0].mxu0
    %10154 = vmatprep.mubr.f32.mxu0 0.0
    %10155 = vmatmul.mubr.f32.gmra.mrb[0].mxu0 %v10074
    %v10156 = vpop.f32.mrb[0].mxu0
    %v10157 = vadd.f32 0.0, %v10156
    %v10158 = vpop.f32.mrb[0].mxu0
    %10159 = vmatprep.mubr.f32.mxu0 0.0
    %10160 = vmatmul.mubr.f32.gmra.mrb[0].mxu0 %v10075
    %v10161 = vpop.f32.mrb[0].mxu0
    %v10162 = vadd.f32 0.0, %v10161
    %v10163 = vpop.f32.mrb[0].mxu0
    %10164 = vmatprep.mubr.f32.mxu0 0.0
    %10165 = vmatmul.mubr.f32.gmra.mrb[0].mxu0 %v10076
    %v10166 = vpop.f32.mrb[0].mxu0
    %v10167 = vadd.f32 0.0, %v10166
    %v10168 = vpop.f32.mrb[0].mxu0
    %10169 = vmatprep.mubr.f32.mxu0 0.0
    %10170 = vmatmul.mubr.f32.gmra.mrb[0].mxu0 %v10077
    %v10171 = vpop.f32.mrb[0].mxu0
    %v10172 = vadd.f32 0.0, %v10171
    %v10173 = vpop.f32.mrb[0].mxu0
    %10174 = vmatprep.mubr.f32.mxu0 0.0
    %10175 = vmatmul.mubr.f32.gmra.mrb[0].mxu0 %v10078
    %v10176 = vpop.f32.mrb[0].mxu0
    %v10177 = vadd.f32 0.0, %v10176
    %v10178 = vpop.f32.mrb[0].mxu0
    %10179 = vmatprep.mubr.f32.mxu0 0.0
    %10180 = vmatmul.mubr.f32.gmra.mrb[0].mxu0 %v10079
    %v10181 = vpop.f32.mrb[0].mxu0
    %v10182 = vadd.f32 0.0, %v10181
    %v10183 = vpop.f32.mrb[0].mxu0
    %10184 = vmatprep.mubr.f32.mxu0 0.0
    %10185 = vmatmul.mubr.f32.gmra.mrb[0].mxu0 %v10080
    %v10186 = vpop.f32.mrb[0].mxu0
    %v10187 = vadd.f32 0.0, %v10186
    %v10188 = vpop.f32.mrb[0].mxu0
    %10189 = vmatprep.mubr.f32.mxu0 0.0
    %10190 = vmatmul.mubr.f32.gmra.mrb[0].mxu0 %v10081
    %v10191 = vpop.f32.mrb[0].mxu0
    %v10192 = vadd.f32 0.0, %v10191
    %v10193 = vpop.f32.mrb[0].mxu0
    %10194 = vmatprep.mubr.f32.mxu0 0.0
    %10195 = vmatmul.mubr.f32.gmra.mrb[0].mxu0 %v10082
    %v10196 = vpop.f32.mrb[0].mxu0
    %v10197 = vadd.f32 0.0, %v10196
    %v10198 = vpop.f32.mrb[0].mxu0
    %10199 = vmatprep.mubr.f32.mxu0 0.0
    %10200 = vmatmul.mubr.f32.gmra.mrb[0].mxu0 %v10083
    %v10201 = vpop.f32.mrb[0].mxu0
    %v10202 = vadd.f32 0.0, %v10201
    %v10203 = vpop.f32.mrb[0].mxu0
    %10204 = vmatprep.mubr.f32.mxu0 0.0
    %10205 = vmatmul.mubr.f32.gmra.mrb[0].mxu0 %v10084
    %v10206 = vpop.f32.mrb[0].mxu0
    %v10207 = vadd.f32 0.0, %v10206
    %v10208 = vpop.f32.mrb[0].mxu0
    %10209 = vdwg.mxu0
    %s10210 = scalar_lea.vmem %s25, 64
    %v10211 = vld [vmem:[%s10210] sm:$0xff]
    %v10212 = vld [vmem:[%s10210 + $0x8] sm:$0xff]
    %v10213 = vld [vmem:[%s10210 + $0x10] sm:$0xff]
    %v10214 = vld [vmem:[%s10210 + $0x18] sm:$0xff]
    %v10215 = vld [vmem:[%s10210 + $0x20] sm:$0xff]
    %v10216 = vld [vmem:[%s10210 + $0x28] sm:$0xff]
    %v10217 = vld [vmem:[%s10210 + $0x30] sm:$0xff]
    %v10218 = vld [vmem:[%s10210 + $0x38] sm:$0xff]
    %v10220 = vsel %vm1676, %v10152, 0
    %v10223 = vsel %vm1676, %v10157, 0
    %v10226 = vsel %vm1676, %v10162, 0
    %v10229 = vsel %vm1676, %v10167, 0
    %v10232 = vsel %vm1676, %v10172, 0
    %v10235 = vsel %vm1676, %v10177, 0
    %v10238 = vsel %vm1676, %v10182, 0
    %v10241 = vsel %vm1676, %v10187, 0
    %v10244 = vsel %vm1676, %v10192, 0
    %v10247 = vsel %vm1676, %v10197, 0
    %v10250 = vsel %vm1676, %v10202, 0
    %v10253 = vsel %vm1676, %v10207, 0
    %10255 = vmatprep.subr.mxu0 0.0
    %10256 = vmatpush1.msra.mxu0 %v10211
    %10257 = vmatprep.subr.mxu0 0.0
    %10258 = vmatpush1.msra.mxu0 %v10212
    %10259 = vmatprep.subr.mxu0 0.0
    %10260 = vmatpush1.msra.mxu0 %v10213
    %10261 = vmatprep.subr.mxu0 0.0
    %10262 = vmatpush1.msra.mxu0 %v10214
    %10263 = vmatprep.subr.mxu0 0.0
    %10264 = vmatpush1.msra.mxu0 %v10215
    %10265 = vmatprep.subr.mxu0 0.0
    %10266 = vmatpush1.msra.mxu0 %v10216
    %10267 = vmatprep.subr.mxu0 0.0
    %10268 = vmatpush1.msra.mxu0 %v10217
    %10269 = vmatprep.subr.mxu0 0.0
    %10270 = vmatpush1.msra.mxu0 %v10218
    %10271 = vmatprep.subr.mxu0 0.0
    %10272 = vmatpush1.msra.mxu0 0.0
    %10273 = vmatprep.subr.mxu0 0.0
    %10274 = vmatpush1.msra.mxu0 0.0
    %10275 = vmatprep.subr.mxu0 0.0
    %10276 = vmatpush1.msra.mxu0 0.0
    %10277 = vmatprep.subr.mxu0 0.0
    %10278 = vmatpush1.msra.mxu0 0.0
    %10279 = vmatprep.subr.mxu0 0.0
    %10280 = vmatpush1.msra.mxu0 0.0
    %10281 = vmatprep.subr.mxu0 0.0
    %10282 = vmatpush1.msra.mxu0 0.0
    %10283 = vmatprep.subr.mxu0 0.0
    %10284 = vmatpush1.msra.mxu0 0.0
    %10285 = vmatprep.subr.mxu0 0.0
    %10286 = vmatpush1.msra.mxu0 0.0
    %10287 = vmatprep.subr.mxu0 0.0
    %10288 = vmatpush1.msra.mxu0 0.0
    %10289 = vmatprep.subr.mxu0 0.0
    %10290 = vmatpush1.msra.mxu0 0.0
    %10291 = vmatprep.subr.mxu0 0.0
    %10292 = vmatpush1.msra.mxu0 0.0
    %10293 = vmatprep.subr.mxu0 0.0
    %10294 = vmatpush1.msra.mxu0 0.0
    %10295 = vmatprep.subr.mxu0 0.0
    %10296 = vmatpush1.msra.mxu0 0.0
    %10297 = vmatprep.subr.mxu0 0.0
    %10298 = vmatpush1.msra.mxu0 0.0
    %10299 = vmatprep.subr.mxu0 0.0
    %10300 = vmatpush1.msra.mxu0 0.0
    %10301 = vmatprep.subr.mxu0 0.0
    %10302 = vmatpush1.msra.mxu0 0.0
    %10303 = vmatprep.subr.mxu0 0.0
    %10304 = vmatpush1.msra.mxu0 0.0
    %10305 = vmatprep.subr.mxu0 0.0
    %10306 = vmatpush1.msra.mxu0 0.0
    %10307 = vmatprep.subr.mxu0 0.0
    %10308 = vmatpush1.msra.mxu0 0.0
    %10309 = vmatprep.subr.mxu0 0.0
    %10310 = vmatpush1.msra.mxu0 0.0
    %10311 = vmatprep.subr.mxu0 0.0
    %10312 = vmatpush1.msra.mxu0 0.0
    %10313 = vmatprep.subr.mxu0 0.0
    %10314 = vmatpush1.msra.mxu0 0.0
    %10315 = vmatprep.subr.mxu0 0.0
    %10316 = vmatpush1.msra.mxu0 0.0
    %10317 = vmatprep.subr.mxu0 0.0
    %10318 = vmatpush1.msra.mxu0 0.0
    %10319 = vmatprep.mubr.f32.mxu0 0.0
    %10320 = vmatmul.mubr.f32.gmra.mrb[0].mxu0 %v10220
    %v10321 = vpop.f32.mrb[0].mxu0
    %v10322 = vadd.f32 0.0, %v10321
    %v10323 = vpop.f32.mrb[0].mxu0
    %10324 = vmatprep.mubr.f32.mxu0 0.0
    %10325 = vmatmul.mubr.f32.gmra.mrb[0].mxu0 %v10223
    %v10326 = vpop.f32.mrb[0].mxu0
    %v10327 = vadd.f32 0.0, %v10326
    %v10328 = vpop.f32.mrb[0].mxu0
    %10329 = vmatprep.mubr.f32.mxu0 0.0
    %10330 = vmatmul.mubr.f32.gmra.mrb[0].mxu0 %v10226
    %v10331 = vpop.f32.mrb[0].mxu0
    %v10332 = vadd.f32 0.0, %v10331
    %v10333 = vpop.f32.mrb[0].mxu0
    %10334 = vmatprep.mubr.f32.mxu0 0.0
    %10335 = vmatmul.mubr.f32.gmra.mrb[0].mxu0 %v10229
    %v10336 = vpop.f32.mrb[0].mxu0
    %v10337 = vadd.f32 0.0, %v10336
    %v10338 = vpop.f32.mrb[0].mxu0
    %10339 = vmatprep.mubr.f32.mxu0 0.0
    %10340 = vmatmul.mubr.f32.gmra.mrb[0].mxu0 %v10232
    %v10341 = vpop.f32.mrb[0].mxu0
    %v10342 = vadd.f32 0.0, %v10341
    %v10343 = vpop.f32.mrb[0].mxu0
    %10344 = vmatprep.mubr.f32.mxu0 0.0
    %10345 = vmatmul.mubr.f32.gmra.mrb[0].mxu0 %v10235
    %v10346 = vpop.f32.mrb[0].mxu0
    %v10347 = vadd.f32 0.0, %v10346
    %v10348 = vpop.f32.mrb[0].mxu0
    %10349 = vmatprep.mubr.f32.mxu0 0.0
    %10350 = vmatmul.mubr.f32.gmra.mrb[0].mxu0 %v10238
    %v10351 = vpop.f32.mrb[0].mxu0
    %v10352 = vadd.f32 0.0, %v10351
    %v10353 = vpop.f32.mrb[0].mxu0
    %10354 = vmatprep.mubr.f32.mxu0 0.0
    %10355 = vmatmul.mubr.f32.gmra.mrb[0].mxu0 %v10241
    %v10356 = vpop.f32.mrb[0].mxu0
    %v10357 = vadd.f32 0.0, %v10356
    %v10358 = vpop.f32.mrb[0].mxu0
    %10359 = vmatprep.mubr.f32.mxu0 0.0
    %10360 = vmatmul.mubr.f32.gmra.mrb[0].mxu0 %v10244
    %v10361 = vpop.f32.mrb[0].mxu0
    %v10362 = vadd.f32 0.0, %v10361
    %v10363 = vpop.f32.mrb[0].mxu0
    %10364 = vmatprep.mubr.f32.mxu0 0.0
    %10365 = vmatmul.mubr.f32.gmra.mrb[0].mxu0 %v10247
    %v10366 = vpop.f32.mrb[0].mxu0
    %v10367 = vadd.f32 0.0, %v10366
    %v10368 = vpop.f32.mrb[0].mxu0
    %10369 = vmatprep.mubr.f32.mxu0 0.0
    %10370 = vmatmul.mubr.f32.gmra.mrb[0].mxu0 %v10250
    %v10371 = vpop.f32.mrb[0].mxu0
    %v10372 = vadd.f32 0.0, %v10371
    %v10373 = vpop.f32.mrb[0].mxu0
    %10374 = vmatprep.mubr.f32.mxu0 0.0
    %10375 = vmatmul.mubr.f32.gmra.mrb[0].mxu0 %v10253
    %v10376 = vpop.f32.mrb[0].mxu0
    %v10377 = vadd.f32 0.0, %v10376
    %v10378 = vpop.f32.mrb[0].mxu0
    %10379 = vdwg.mxu0
    %v10381 = vsel %vm1676, %v10006, 0
    %v10384 = vsel %vm1676, %v10011, 0
    %v10387 = vsel %vm1676, %v10016, 0
    %v10390 = vsel %vm1676, %v10021, 0
    %v10393 = vsel %vm1676, %v10026, 0
    %v10396 = vsel %vm1676, %v10031, 0
    %v10399 = vsel %vm1676, %v10036, 0
    %v10402 = vsel %vm1676, %v10041, 0
    %v10405 = vsel %vm1676, %v10046, 0
    %v10408 = vsel %vm1676, %v10051, 0
    %v10411 = vsel %vm1676, %v10056, 0
    %v10414 = vsel %vm1676, %v10061, 0
    %10416 = vmatprep.subr.mxu0 0.0
    %10417 = vmatpush1.msra.mxu0 %v10064
    %10418 = vmatprep.subr.mxu0 0.0
    %10419 = vmatpush1.msra.mxu0 %v10065
    %10420 = vmatprep.subr.mxu0 0.0
    %10421 = vmatpush1.msra.mxu0 %v10066
    %10422 = vmatprep.subr.mxu0 0.0
    %10423 = vmatpush1.msra.mxu0 %v10067
    %10424 = vmatprep.subr.mxu0 0.0
    %10425 = vmatpush1.msra.mxu0 %v10068
    %10426 = vmatprep.subr.mxu0 0.0
    %10427 = vmatpush1.msra.mxu0 %v10069
    %10428 = vmatprep.subr.mxu0 0.0
    %10429 = vmatpush1.msra.mxu0 %v10070
    %10430 = vmatprep.subr.mxu0 0.0
    %10431 = vmatpush1.msra.mxu0 %v10071
    %10432 = vmatprep.subr.mxu0 0.0
    %10433 = vmatpush1.msra.mxu0 0.0
    %10434 = vmatprep.subr.mxu0 0.0
    %10435 = vmatpush1.msra.mxu0 0.0
    %10436 = vmatprep.subr.mxu0 0.0
    %10437 = vmatpush1.msra.mxu0 0.0
    %10438 = vmatprep.subr.mxu0 0.0
    %10439 = vmatpush1.msra.mxu0 0.0
    %10440 = vmatprep.subr.mxu0 0.0
    %10441 = vmatpush1.msra.mxu0 0.0
    %10442 = vmatprep.subr.mxu0 0.0
    %10443 = vmatpush1.msra.mxu0 0.0
    %10444 = vmatprep.subr.mxu0 0.0
    %10445 = vmatpush1.msra.mxu0 0.0
    %10446 = vmatprep.subr.mxu0 0.0
    %10447 = vmatpush1.msra.mxu0 0.0
    %10448 = vmatprep.subr.mxu0 0.0
    %10449 = vmatpush1.msra.mxu0 0.0
    %10450 = vmatprep.subr.mxu0 0.0
    %10451 = vmatpush1.msra.mxu0 0.0
    %10452 = vmatprep.subr.mxu0 0.0
    %10453 = vmatpush1.msra.mxu0 0.0
    %10454 = vmatprep.subr.mxu0 0.0
    %10455 = vmatpush1.msra.mxu0 0.0
    %10456 = vmatprep.subr.mxu0 0.0
    %10457 = vmatpush1.msra.mxu0 0.0
    %10458 = vmatprep.subr.mxu0 0.0
    %10459 = vmatpush1.msra.mxu0 0.0
    %10460 = vmatprep.subr.mxu0 0.0
    %10461 = vmatpush1.msra.mxu0 0.0
    %10462 = vmatprep.subr.mxu0 0.0
    %10463 = vmatpush1.msra.mxu0 0.0
    %10464 = vmatprep.subr.mxu0 0.0
    %10465 = vmatpush1.msra.mxu0 0.0
    %10466 = vmatprep.subr.mxu0 0.0
    %10467 = vmatpush1.msra.mxu0 0.0
    %10468 = vmatprep.subr.mxu0 0.0
    %10469 = vmatpush1.msra.mxu0 0.0
    %10470 = vmatprep.subr.mxu0 0.0
    %10471 = vmatpush1.msra.mxu0 0.0
    %10472 = vmatprep.subr.mxu0 0.0
    %10473 = vmatpush1.msra.mxu0 0.0
    %10474 = vmatprep.subr.mxu0 0.0
    %10475 = vmatpush1.msra.mxu0 0.0
    %10476 = vmatprep.subr.mxu0 0.0
    %10477 = vmatpush1.msra.mxu0 0.0
    %10478 = vmatprep.subr.mxu0 0.0
    %10479 = vmatpush1.msra.mxu0 0.0
    %10480 = vmatprep.mubr.f32.mxu0 0.0
    %10481 = vmatmul.mubr.f32.gmra.mrb[0].mxu0 %v10381
    %v10482 = vpop.f32.mrb[0].mxu0
    %v10483 = vadd.f32 %v10322, %v10482
    %v10484 = vpop.f32.mrb[0].mxu0
    %10485 = vmatprep.mubr.f32.mxu0 0.0
    %10486 = vmatmul.mubr.f32.gmra.mrb[0].mxu0 %v10384
    %v10487 = vpop.f32.mrb[0].mxu0
    %v10488 = vadd.f32 %v10327, %v10487
    %v10489 = vpop.f32.mrb[0].mxu0
    %10490 = vmatprep.mubr.f32.mxu0 0.0
    %10491 = vmatmul.mubr.f32.gmra.mrb[0].mxu0 %v10387
    %v10492 = vpop.f32.mrb[0].mxu0
    %v10493 = vadd.f32 %v10332, %v10492
    %v10494 = vpop.f32.mrb[0].mxu0
    %10495 = vmatprep.mubr.f32.mxu0 0.0
    %10496 = vmatmul.mubr.f32.gmra.mrb[0].mxu0 %v10390
    %v10497 = vpop.f32.mrb[0].mxu0
    %v10498 = vadd.f32 %v10337, %v10497
    %v10499 = vpop.f32.mrb[0].mxu0
    %10500 = vmatprep.mubr.f32.mxu0 0.0
    %10501 = vmatmul.mubr.f32.gmra.mrb[0].mxu0 %v10393
    %v10502 = vpop.f32.mrb[0].mxu0
    %v10503 = vadd.f32 %v10342, %v10502
    %v10504 = vpop.f32.mrb[0].mxu0
    %10505 = vmatprep.mubr.f32.mxu0 0.0
    %10506 = vmatmul.mubr.f32.gmra.mrb[0].mxu0 %v10396
    %v10507 = vpop.f32.mrb[0].mxu0
    %v10508 = vadd.f32 %v10347, %v10507
    %v10509 = vpop.f32.mrb[0].mxu0
    %10510 = vmatprep.mubr.f32.mxu0 0.0
    %10511 = vmatmul.mubr.f32.gmra.mrb[0].mxu0 %v10399
    %v10512 = vpop.f32.mrb[0].mxu0
    %v10513 = vadd.f32 %v10352, %v10512
    %v10514 = vpop.f32.mrb[0].mxu0
    %10515 = vmatprep.mubr.f32.mxu0 0.0
    %10516 = vmatmul.mubr.f32.gmra.mrb[0].mxu0 %v10402
    %v10517 = vpop.f32.mrb[0].mxu0
    %v10518 = vadd.f32 %v10357, %v10517
    %v10519 = vpop.f32.mrb[0].mxu0
    %10520 = vmatprep.mubr.f32.mxu0 0.0
    %10521 = vmatmul.mubr.f32.gmra.mrb[0].mxu0 %v10405
    %v10522 = vpop.f32.mrb[0].mxu0
    %v10523 = vadd.f32 %v10362, %v10522
    %v10524 = vpop.f32.mrb[0].mxu0
    %10525 = vmatprep.mubr.f32.mxu0 0.0
    %10526 = vmatmul.mubr.f32.gmra.mrb[0].mxu0 %v10408
    %v10527 = vpop.f32.mrb[0].mxu0
    %v10528 = vadd.f32 %v10367, %v10527
    %v10529 = vpop.f32.mrb[0].mxu0
    %10530 = vmatprep.mubr.f32.mxu0 0.0
    %10531 = vmatmul.mubr.f32.gmra.mrb[0].mxu0 %v10411
    %v10532 = vpop.f32.mrb[0].mxu0
    %v10533 = vadd.f32 %v10372, %v10532
    %v10534 = vpop.f32.mrb[0].mxu0
    %10535 = vmatprep.mubr.f32.mxu0 0.0
    %10536 = vmatmul.mubr.f32.gmra.mrb[0].mxu0 %v10414
    %v10537 = vpop.f32.mrb[0].mxu0
    %v10538 = vadd.f32 %v10377, %v10537
    %v10539 = vpop.f32.mrb[0].mxu0
    %10540 = vdwg.mxu0
    %s10541 = scalar_lea.vmem %s24, 192
    %v10542 = vld [vmem:[%s10541] sm:$0xff]
    %v10543 = vld [vmem:[%s10541 + $0x8] sm:$0xff]
    %v10544 = vld [vmem:[%s10541 + $0x10] sm:$0xff]
    %v10545 = vld [vmem:[%s10541 + $0x18] sm:$0xff]
    %v10546 = vld [vmem:[%s10541 + $0x20] sm:$0xff]
    %v10547 = vld [vmem:[%s10541 + $0x28] sm:$0xff]
    %v10548 = vld [vmem:[%s10541 + $0x30] sm:$0xff]
    %v10549 = vld [vmem:[%s10541 + $0x38] sm:$0xff]
    %v10550 = vld [vmem:[%s10541 + $0x40] sm:$0xff]
    %v10551 = vld [vmem:[%s10541 + $0x48] sm:$0xff]
    %v10552 = vld [vmem:[%s10541 + $0x50] sm:$0xff]
    %v10553 = vld [vmem:[%s10541 + $0x58] sm:$0xff]
    %10554 = vmatprep.subr.mxu0 0.0
    %10555 = vmatpush1.msra.mxu0 %v9911
    %10556 = vmatprep.subr.mxu0 0.0
    %10557 = vmatpush1.msra.mxu0 %v9912
    %10558 = vmatprep.subr.mxu0 0.0
    %10559 = vmatpush1.msra.mxu0 %v9913
    %10560 = vmatprep.subr.mxu0 0.0
    %10561 = vmatpush1.msra.mxu0 %v9914
    %10562 = vmatprep.subr.mxu0 0.0
    %10563 = vmatpush1.msra.mxu0 %v9915
    %10564 = vmatprep.subr.mxu0 0.0
    %10565 = vmatpush1.msra.mxu0 %v9916
    %10566 = vmatprep.subr.mxu0 0.0
    %10567 = vmatpush1.msra.mxu0 %v9917
    %10568 = vmatprep.subr.mxu0 0.0
    %10569 = vmatpush1.msra.mxu0 %v9918
    %10570 = vmatprep.subr.mxu0 0.0
    %10571 = vmatpush1.msra.mxu0 %v9919
    %10572 = vmatprep.subr.mxu0 0.0
    %10573 = vmatpush1.msra.mxu0 %v9920
    %10574 = vmatprep.subr.mxu0 0.0
    %10575 = vmatpush1.msra.mxu0 %v9921
    %10576 = vmatprep.subr.mxu0 0.0
    %10577 = vmatpush1.msra.mxu0 %v9922
    %10578 = vmatprep.subr.mxu0 0.0
    %10579 = vmatpush1.msra.mxu0 %v9923
    %10580 = vmatprep.subr.mxu0 0.0
    %10581 = vmatpush1.msra.mxu0 %v9924
    %10582 = vmatprep.subr.mxu0 0.0
    %10583 = vmatpush1.msra.mxu0 %v9925
    %10584 = vmatprep.subr.mxu0 0.0
    %10585 = vmatpush1.msra.mxu0 %v9926
    %10586 = vmatprep.subr.mxu0 0.0
    %10587 = vmatpush1.msra.mxu0 0.0
    %10588 = vmatprep.subr.mxu0 0.0
    %10589 = vmatpush1.msra.mxu0 0.0
    %10590 = vmatprep.subr.mxu0 0.0
    %10591 = vmatpush1.msra.mxu0 0.0
    %10592 = vmatprep.subr.mxu0 0.0
    %10593 = vmatpush1.msra.mxu0 0.0
    %10594 = vmatprep.subr.mxu0 0.0
    %10595 = vmatpush1.msra.mxu0 0.0
    %10596 = vmatprep.subr.mxu0 0.0
    %10597 = vmatpush1.msra.mxu0 0.0
    %10598 = vmatprep.subr.mxu0 0.0
    %10599 = vmatpush1.msra.mxu0 0.0
    %10600 = vmatprep.subr.mxu0 0.0
    %10601 = vmatpush1.msra.mxu0 0.0
    %10602 = vmatprep.subr.mxu0 0.0
    %10603 = vmatpush1.msra.mxu0 0.0
    %10604 = vmatprep.subr.mxu0 0.0
    %10605 = vmatpush1.msra.mxu0 0.0
    %10606 = vmatprep.subr.mxu0 0.0
    %10607 = vmatpush1.msra.mxu0 0.0
    %10608 = vmatprep.subr.mxu0 0.0
    %10609 = vmatpush1.msra.mxu0 0.0
    %10610 = vmatprep.subr.mxu0 0.0
    %10611 = vmatpush1.msra.mxu0 0.0
    %10612 = vmatprep.subr.mxu0 0.0
    %10613 = vmatpush1.msra.mxu0 0.0
    %10614 = vmatprep.subr.mxu0 0.0
    %10615 = vmatpush1.msra.mxu0 0.0
    %10616 = vmatprep.subr.mxu0 0.0
    %10617 = vmatpush1.msra.mxu0 0.0
    %10618 = vmatprep.mubr.f32.mxu0 0.0
    %10619 = vmatmul.mubr.f32.gmra.mrb[0].mxu0 %v10542
    %v10620 = vpop.f32.mrb[0].mxu0
    %v10621 = vadd.f32 0.0, %v10620
    %v10622 = vpop.f32.mrb[0].mxu0
    %10623 = vmatprep.mubr.f32.mxu0 0.0
    %10624 = vmatmul.mubr.f32.gmra.mrb[0].mxu0 %v10543
    %v10625 = vpop.f32.mrb[0].mxu0
    %v10626 = vadd.f32 0.0, %v10625
    %v10627 = vpop.f32.mrb[0].mxu0
    %10628 = vmatprep.mubr.f32.mxu0 0.0
    %10629 = vmatmul.mubr.f32.gmra.mrb[0].mxu0 %v10544
    %v10630 = vpop.f32.mrb[0].mxu0
    %v10631 = vadd.f32 0.0, %v10630
    %v10632 = vpop.f32.mrb[0].mxu0
    %10633 = vmatprep.mubr.f32.mxu0 0.0
    %10634 = vmatmul.mubr.f32.gmra.mrb[0].mxu0 %v10545
    %v10635 = vpop.f32.mrb[0].mxu0
    %v10636 = vadd.f32 0.0, %v10635
    %v10637 = vpop.f32.mrb[0].mxu0
    %10638 = vmatprep.mubr.f32.mxu0 0.0
    %10639 = vmatmul.mubr.f32.gmra.mrb[0].mxu0 %v10546
    %v10640 = vpop.f32.mrb[0].mxu0
    %v10641 = vadd.f32 0.0, %v10640
    %v10642 = vpop.f32.mrb[0].mxu0
    %10643 = vmatprep.mubr.f32.mxu0 0.0
    %10644 = vmatmul.mubr.f32.gmra.mrb[0].mxu0 %v10547
    %v10645 = vpop.f32.mrb[0].mxu0
    %v10646 = vadd.f32 0.0, %v10645
    %v10647 = vpop.f32.mrb[0].mxu0
    %10648 = vmatprep.mubr.f32.mxu0 0.0
    %10649 = vmatmul.mubr.f32.gmra.mrb[0].mxu0 %v10548
    %v10650 = vpop.f32.mrb[0].mxu0
    %v10651 = vadd.f32 0.0, %v10650
    %v10652 = vpop.f32.mrb[0].mxu0
    %10653 = vmatprep.mubr.f32.mxu0 0.0
    %10654 = vmatmul.mubr.f32.gmra.mrb[0].mxu0 %v10549
    %v10655 = vpop.f32.mrb[0].mxu0
    %v10656 = vadd.f32 0.0, %v10655
    %v10657 = vpop.f32.mrb[0].mxu0
    %10658 = vmatprep.mubr.f32.mxu0 0.0
    %10659 = vmatmul.mubr.f32.gmra.mrb[0].mxu0 %v10550
    %v10660 = vpop.f32.mrb[0].mxu0
    %v10661 = vadd.f32 0.0, %v10660
    %v10662 = vpop.f32.mrb[0].mxu0
    %10663 = vmatprep.mubr.f32.mxu0 0.0
    %10664 = vmatmul.mubr.f32.gmra.mrb[0].mxu0 %v10551
    %v10665 = vpop.f32.mrb[0].mxu0
    %v10666 = vadd.f32 0.0, %v10665
    %v10667 = vpop.f32.mrb[0].mxu0
    %10668 = vmatprep.mubr.f32.mxu0 0.0
    %10669 = vmatmul.mubr.f32.gmra.mrb[0].mxu0 %v10552
    %v10670 = vpop.f32.mrb[0].mxu0
    %v10671 = vadd.f32 0.0, %v10670
    %v10672 = vpop.f32.mrb[0].mxu0
    %10673 = vmatprep.mubr.f32.mxu0 0.0
    %10674 = vmatmul.mubr.f32.gmra.mrb[0].mxu0 %v10553
    %v10675 = vpop.f32.mrb[0].mxu0
    %v10676 = vadd.f32 0.0, %v10675
    %v10677 = vpop.f32.mrb[0].mxu0
    %10678 = vdwg.mxu0
    %s10679 = scalar_lea.vmem %s25, 128
    %v10680 = vld [vmem:[%s10679] sm:$0xff]
    %v10681 = vld [vmem:[%s10679 + $0x8] sm:$0xff]
    %v10682 = vld [vmem:[%s10679 + $0x10] sm:$0xff]
    %v10683 = vld [vmem:[%s10679 + $0x18] sm:$0xff]
    %v10684 = vld [vmem:[%s10679 + $0x20] sm:$0xff]
    %v10685 = vld [vmem:[%s10679 + $0x28] sm:$0xff]
    %v10686 = vld [vmem:[%s10679 + $0x30] sm:$0xff]
    %v10687 = vld [vmem:[%s10679 + $0x38] sm:$0xff]
    %v10689 = vsel %vm1676, %v10621, 0
    %v10692 = vsel %vm1676, %v10626, 0
    %v10695 = vsel %vm1676, %v10631, 0
    %v10698 = vsel %vm1676, %v10636, 0
    %v10701 = vsel %vm1676, %v10641, 0
    %v10704 = vsel %vm1676, %v10646, 0
    %v10707 = vsel %vm1676, %v10651, 0
    %v10710 = vsel %vm1676, %v10656, 0
    %v10713 = vsel %vm1676, %v10661, 0
    %v10716 = vsel %vm1676, %v10666, 0
    %v10719 = vsel %vm1676, %v10671, 0
    %v10722 = vsel %vm1676, %v10676, 0
    %10724 = vmatprep.subr.mxu0 0.0
    %10725 = vmatpush1.msra.mxu0 %v10680
    %10726 = vmatprep.subr.mxu0 0.0
    %10727 = vmatpush1.msra.mxu0 %v10681
    %10728 = vmatprep.subr.mxu0 0.0
    %10729 = vmatpush1.msra.mxu0 %v10682
    %10730 = vmatprep.subr.mxu0 0.0
    %10731 = vmatpush1.msra.mxu0 %v10683
    %10732 = vmatprep.subr.mxu0 0.0
    %10733 = vmatpush1.msra.mxu0 %v10684
    %10734 = vmatprep.subr.mxu0 0.0
    %10735 = vmatpush1.msra.mxu0 %v10685
    %10736 = vmatprep.subr.mxu0 0.0
    %10737 = vmatpush1.msra.mxu0 %v10686
    %10738 = vmatprep.subr.mxu0 0.0
    %10739 = vmatpush1.msra.mxu0 %v10687
    %10740 = vmatprep.subr.mxu0 0.0
    %10741 = vmatpush1.msra.mxu0 0.0
    %10742 = vmatprep.subr.mxu0 0.0
    %10743 = vmatpush1.msra.mxu0 0.0
    %10744 = vmatprep.subr.mxu0 0.0
    %10745 = vmatpush1.msra.mxu0 0.0
    %10746 = vmatprep.subr.mxu0 0.0
    %10747 = vmatpush1.msra.mxu0 0.0
    %10748 = vmatprep.subr.mxu0 0.0
    %10749 = vmatpush1.msra.mxu0 0.0
    %10750 = vmatprep.subr.mxu0 0.0
    %10751 = vmatpush1.msra.mxu0 0.0
    %10752 = vmatprep.subr.mxu0 0.0
    %10753 = vmatpush1.msra.mxu0 0.0
    %10754 = vmatprep.subr.mxu0 0.0
    %10755 = vmatpush1.msra.mxu0 0.0
    %10756 = vmatprep.subr.mxu0 0.0
    %10757 = vmatpush1.msra.mxu0 0.0
    %10758 = vmatprep.subr.mxu0 0.0
    %10759 = vmatpush1.msra.mxu0 0.0
    %10760 = vmatprep.subr.mxu0 0.0
    %10761 = vmatpush1.msra.mxu0 0.0
    %10762 = vmatprep.subr.mxu0 0.0
    %10763 = vmatpush1.msra.mxu0 0.0
    %10764 = vmatprep.subr.mxu0 0.0
    %10765 = vmatpush1.msra.mxu0 0.0
    %10766 = vmatprep.subr.mxu0 0.0
    %10767 = vmatpush1.msra.mxu0 0.0
    %10768 = vmatprep.subr.mxu0 0.0
    %10769 = vmatpush1.msra.mxu0 0.0
    %10770 = vmatprep.subr.mxu0 0.0
    %10771 = vmatpush1.msra.mxu0 0.0
    %10772 = vmatprep.subr.mxu0 0.0
    %10773 = vmatpush1.msra.mxu0 0.0
    %10774 = vmatprep.subr.mxu0 0.0
    %10775 = vmatpush1.msra.mxu0 0.0
    %10776 = vmatprep.subr.mxu0 0.0
    %10777 = vmatpush1.msra.mxu0 0.0
    %10778 = vmatprep.subr.mxu0 0.0
    %10779 = vmatpush1.msra.mxu0 0.0
    %10780 = vmatprep.subr.mxu0 0.0
    %10781 = vmatpush1.msra.mxu0 0.0
    %10782 = vmatprep.subr.mxu0 0.0
    %10783 = vmatpush1.msra.mxu0 0.0
    %10784 = vmatprep.subr.mxu0 0.0
    %10785 = vmatpush1.msra.mxu0 0.0
    %10786 = vmatprep.subr.mxu0 0.0
    %10787 = vmatpush1.msra.mxu0 0.0
    %10788 = vmatprep.mubr.f32.mxu0 0.0
    %10789 = vmatmul.mubr.f32.gmra.mrb[0].mxu0 %v10689
    %v10790 = vpop.f32.mrb[0].mxu0
    %v10791 = vadd.f32 0.0, %v10790
    %v10792 = vpop.f32.mrb[0].mxu0
    %10793 = vmatprep.mubr.f32.mxu0 0.0
    %10794 = vmatmul.mubr.f32.gmra.mrb[0].mxu0 %v10692
    %v10795 = vpop.f32.mrb[0].mxu0
    %v10796 = vadd.f32 0.0, %v10795
    %v10797 = vpop.f32.mrb[0].mxu0
    %10798 = vmatprep.mubr.f32.mxu0 0.0
    %10799 = vmatmul.mubr.f32.gmra.mrb[0].mxu0 %v10695
    %v10800 = vpop.f32.mrb[0].mxu0
    %v10801 = vadd.f32 0.0, %v10800
    %v10802 = vpop.f32.mrb[0].mxu0
    %10803 = vmatprep.mubr.f32.mxu0 0.0
    %10804 = vmatmul.mubr.f32.gmra.mrb[0].mxu0 %v10698
    %v10805 = vpop.f32.mrb[0].mxu0
    %v10806 = vadd.f32 0.0, %v10805
    %v10807 = vpop.f32.mrb[0].mxu0
    %10808 = vmatprep.mubr.f32.mxu0 0.0
    %10809 = vmatmul.mubr.f32.gmra.mrb[0].mxu0 %v10701
    %v10810 = vpop.f32.mrb[0].mxu0
    %v10811 = vadd.f32 0.0, %v10810
    %v10812 = vpop.f32.mrb[0].mxu0
    %10813 = vmatprep.mubr.f32.mxu0 0.0
    %10814 = vmatmul.mubr.f32.gmra.mrb[0].mxu0 %v10704
    %v10815 = vpop.f32.mrb[0].mxu0
    %v10816 = vadd.f32 0.0, %v10815
    %v10817 = vpop.f32.mrb[0].mxu0
    %10818 = vmatprep.mubr.f32.mxu0 0.0
    %10819 = vmatmul.mubr.f32.gmra.mrb[0].mxu0 %v10707
    %v10820 = vpop.f32.mrb[0].mxu0
    %v10821 = vadd.f32 0.0, %v10820
    %v10822 = vpop.f32.mrb[0].mxu0
    %10823 = vmatprep.mubr.f32.mxu0 0.0
    %10824 = vmatmul.mubr.f32.gmra.mrb[0].mxu0 %v10710
    %v10825 = vpop.f32.mrb[0].mxu0
    %v10826 = vadd.f32 0.0, %v10825
    %v10827 = vpop.f32.mrb[0].mxu0
    %10828 = vmatprep.mubr.f32.mxu0 0.0
    %10829 = vmatmul.mubr.f32.gmra.mrb[0].mxu0 %v10713
    %v10830 = vpop.f32.mrb[0].mxu0
    %v10831 = vadd.f32 0.0, %v10830
    %v10832 = vpop.f32.mrb[0].mxu0
    %10833 = vmatprep.mubr.f32.mxu0 0.0
    %10834 = vmatmul.mubr.f32.gmra.mrb[0].mxu0 %v10716
    %v10835 = vpop.f32.mrb[0].mxu0
    %v10836 = vadd.f32 0.0, %v10835
    %v10837 = vpop.f32.mrb[0].mxu0
    %10838 = vmatprep.mubr.f32.mxu0 0.0
    %10839 = vmatmul.mubr.f32.gmra.mrb[0].mxu0 %v10719
    %v10840 = vpop.f32.mrb[0].mxu0
    %v10841 = vadd.f32 0.0, %v10840
    %v10842 = vpop.f32.mrb[0].mxu0
    %10843 = vmatprep.mubr.f32.mxu0 0.0
    %10844 = vmatmul.mubr.f32.gmra.mrb[0].mxu0 %v10722
    %v10845 = vpop.f32.mrb[0].mxu0
    %v10846 = vadd.f32 0.0, %v10845
    %v10847 = vpop.f32.mrb[0].mxu0
    %10848 = vdwg.mxu0
    %v10849 = vadd.f32 %v10483, %v10791
    %v10850 = vadd.f32 %v10488, %v10796
    %v10851 = vadd.f32 %v10493, %v10801
    %v10852 = vadd.f32 %v10498, %v10806
    %v10853 = vadd.f32 %v10503, %v10811
    %v10854 = vadd.f32 %v10508, %v10816
    %v10855 = vadd.f32 %v10513, %v10821
    %v10856 = vadd.f32 %v10518, %v10826
    %v10857 = vadd.f32 %v10523, %v10831
    %v10858 = vadd.f32 %v10528, %v10836
    %v10859 = vadd.f32 %v10533, %v10841
    %v10860 = vadd.f32 %v10538, %v10846
    %s10861 = scalar_lea.vmem %s24, 288
    %v10862 = vld [vmem:[%s10861] sm:$0xff]
    %v10863 = vld [vmem:[%s10861 + $0x8] sm:$0xff]
    %v10864 = vld [vmem:[%s10861 + $0x10] sm:$0xff]
    %v10865 = vld [vmem:[%s10861 + $0x18] sm:$0xff]
    %v10866 = vld [vmem:[%s10861 + $0x20] sm:$0xff]
    %v10867 = vld [vmem:[%s10861 + $0x28] sm:$0xff]
    %v10868 = vld [vmem:[%s10861 + $0x30] sm:$0xff]
    %v10869 = vld [vmem:[%s10861 + $0x38] sm:$0xff]
    %v10870 = vld [vmem:[%s10861 + $0x40] sm:$0xff]
    %v10871 = vld [vmem:[%s10861 + $0x48] sm:$0xff]
    %v10872 = vld [vmem:[%s10861 + $0x50] sm:$0xff]
    %v10873 = vld [vmem:[%s10861 + $0x58] sm:$0xff]
    %10874 = vmatprep.subr.mxu0 0.0
    %10875 = vmatpush1.msra.mxu0 %v9911
    %10876 = vmatprep.subr.mxu0 0.0
    %10877 = vmatpush1.msra.mxu0 %v9912
    %10878 = vmatprep.subr.mxu0 0.0
    %10879 = vmatpush1.msra.mxu0 %v9913
    %10880 = vmatprep.subr.mxu0 0.0
    %10881 = vmatpush1.msra.mxu0 %v9914
    %10882 = vmatprep.subr.mxu0 0.0
    %10883 = vmatpush1.msra.mxu0 %v9915
    %10884 = vmatprep.subr.mxu0 0.0
    %10885 = vmatpush1.msra.mxu0 %v9916
    %10886 = vmatprep.subr.mxu0 0.0
    %10887 = vmatpush1.msra.mxu0 %v9917
    %10888 = vmatprep.subr.mxu0 0.0
    %10889 = vmatpush1.msra.mxu0 %v9918
    %10890 = vmatprep.subr.mxu0 0.0
    %10891 = vmatpush1.msra.mxu0 %v9919
    %10892 = vmatprep.subr.mxu0 0.0
    %10893 = vmatpush1.msra.mxu0 %v9920
    %10894 = vmatprep.subr.mxu0 0.0
    %10895 = vmatpush1.msra.mxu0 %v9921
    %10896 = vmatprep.subr.mxu0 0.0
    %10897 = vmatpush1.msra.mxu0 %v9922
    %10898 = vmatprep.subr.mxu0 0.0
    %10899 = vmatpush1.msra.mxu0 %v9923
    %10900 = vmatprep.subr.mxu0 0.0
    %10901 = vmatpush1.msra.mxu0 %v9924
    %10902 = vmatprep.subr.mxu0 0.0
    %10903 = vmatpush1.msra.mxu0 %v9925
    %10904 = vmatprep.subr.mxu0 0.0
    %10905 = vmatpush1.msra.mxu0 %v9926
    %10906 = vmatprep.subr.mxu0 0.0
    %10907 = vmatpush1.msra.mxu0 0.0
    %10908 = vmatprep.subr.mxu0 0.0
    %10909 = vmatpush1.msra.mxu0 0.0
    %10910 = vmatprep.subr.mxu0 0.0
    %10911 = vmatpush1.msra.mxu0 0.0
    %10912 = vmatprep.subr.mxu0 0.0
    %10913 = vmatpush1.msra.mxu0 0.0
    %10914 = vmatprep.subr.mxu0 0.0
    %10915 = vmatpush1.msra.mxu0 0.0
    %10916 = vmatprep.subr.mxu0 0.0
    %10917 = vmatpush1.msra.mxu0 0.0
    %10918 = vmatprep.subr.mxu0 0.0
    %10919 = vmatpush1.msra.mxu0 0.0
    %10920 = vmatprep.subr.mxu0 0.0
    %10921 = vmatpush1.msra.mxu0 0.0
    %10922 = vmatprep.subr.mxu0 0.0
    %10923 = vmatpush1.msra.mxu0 0.0
    %10924 = vmatprep.subr.mxu0 0.0
    %10925 = vmatpush1.msra.mxu0 0.0
    %10926 = vmatprep.subr.mxu0 0.0
    %10927 = vmatpush1.msra.mxu0 0.0
    %10928 = vmatprep.subr.mxu0 0.0
    %10929 = vmatpush1.msra.mxu0 0.0
    %10930 = vmatprep.subr.mxu0 0.0
    %10931 = vmatpush1.msra.mxu0 0.0
    %10932 = vmatprep.subr.mxu0 0.0
    %10933 = vmatpush1.msra.mxu0 0.0
    %10934 = vmatprep.subr.mxu0 0.0
    %10935 = vmatpush1.msra.mxu0 0.0
    %10936 = vmatprep.subr.mxu0 0.0
    %10937 = vmatpush1.msra.mxu0 0.0
    %10938 = vmatprep.mubr.f32.mxu0 0.0
    %10939 = vmatmul.mubr.f32.gmra.mrb[0].mxu0 %v10862
    %v10940 = vpop.f32.mrb[0].mxu0
    %v10941 = vadd.f32 0.0, %v10940
    %v10942 = vpop.f32.mrb[0].mxu0
    %10943 = vmatprep.mubr.f32.mxu0 0.0
    %10944 = vmatmul.mubr.f32.gmra.mrb[0].mxu0 %v10863
    %v10945 = vpop.f32.mrb[0].mxu0
    %v10946 = vadd.f32 0.0, %v10945
    %v10947 = vpop.f32.mrb[0].mxu0
    %10948 = vmatprep.mubr.f32.mxu0 0.0
    %10949 = vmatmul.mubr.f32.gmra.mrb[0].mxu0 %v10864
    %v10950 = vpop.f32.mrb[0].mxu0
    %v10951 = vadd.f32 0.0, %v10950
    %v10952 = vpop.f32.mrb[0].mxu0
    %10953 = vmatprep.mubr.f32.mxu0 0.0
    %10954 = vmatmul.mubr.f32.gmra.mrb[0].mxu0 %v10865
    %v10955 = vpop.f32.mrb[0].mxu0
    %v10956 = vadd.f32 0.0, %v10955
    %v10957 = vpop.f32.mrb[0].mxu0
    %10958 = vmatprep.mubr.f32.mxu0 0.0
    %10959 = vmatmul.mubr.f32.gmra.mrb[0].mxu0 %v10866
    %v10960 = vpop.f32.mrb[0].mxu0
    %v10961 = vadd.f32 0.0, %v10960
    %v10962 = vpop.f32.mrb[0].mxu0
    %10963 = vmatprep.mubr.f32.mxu0 0.0
    %10964 = vmatmul.mubr.f32.gmra.mrb[0].mxu0 %v10867
    %v10965 = vpop.f32.mrb[0].mxu0
    %v10966 = vadd.f32 0.0, %v10965
    %v10967 = vpop.f32.mrb[0].mxu0
    %10968 = vmatprep.mubr.f32.mxu0 0.0
    %10969 = vmatmul.mubr.f32.gmra.mrb[0].mxu0 %v10868
    %v10970 = vpop.f32.mrb[0].mxu0
    %v10971 = vadd.f32 0.0, %v10970
    %v10972 = vpop.f32.mrb[0].mxu0
    %10973 = vmatprep.mubr.f32.mxu0 0.0
    %10974 = vmatmul.mubr.f32.gmra.mrb[0].mxu0 %v10869
    %v10975 = vpop.f32.mrb[0].mxu0
    %v10976 = vadd.f32 0.0, %v10975
    %v10977 = vpop.f32.mrb[0].mxu0
    %10978 = vmatprep.mubr.f32.mxu0 0.0
    %10979 = vmatmul.mubr.f32.gmra.mrb[0].mxu0 %v10870
    %v10980 = vpop.f32.mrb[0].mxu0
    %v10981 = vadd.f32 0.0, %v10980
    %v10982 = vpop.f32.mrb[0].mxu0
    %10983 = vmatprep.mubr.f32.mxu0 0.0
    %10984 = vmatmul.mubr.f32.gmra.mrb[0].mxu0 %v10871
    %v10985 = vpop.f32.mrb[0].mxu0
    %v10986 = vadd.f32 0.0, %v10985
    %v10987 = vpop.f32.mrb[0].mxu0
    %10988 = vmatprep.mubr.f32.mxu0 0.0
    %10989 = vmatmul.mubr.f32.gmra.mrb[0].mxu0 %v10872
    %v10990 = vpop.f32.mrb[0].mxu0
    %v10991 = vadd.f32 0.0, %v10990
    %v10992 = vpop.f32.mrb[0].mxu0
    %10993 = vmatprep.mubr.f32.mxu0 0.0
    %10994 = vmatmul.mubr.f32.gmra.mrb[0].mxu0 %v10873
    %v10995 = vpop.f32.mrb[0].mxu0
    %v10996 = vadd.f32 0.0, %v10995
    %v10997 = vpop.f32.mrb[0].mxu0
    %10998 = vdwg.mxu0
    %s10999 = scalar_lea.vmem %s25, 192
    %v11000 = vld [vmem:[%s10999] sm:$0xff]
    %v11001 = vld [vmem:[%s10999 + $0x8] sm:$0xff]
    %v11002 = vld [vmem:[%s10999 + $0x10] sm:$0xff]
    %v11003 = vld [vmem:[%s10999 + $0x18] sm:$0xff]
    %v11004 = vld [vmem:[%s10999 + $0x20] sm:$0xff]
    %v11005 = vld [vmem:[%s10999 + $0x28] sm:$0xff]
    %v11006 = vld [vmem:[%s10999 + $0x30] sm:$0xff]
    %v11007 = vld [vmem:[%s10999 + $0x38] sm:$0xff]
    %v11009 = vsel %vm1676, %v10941, 0
    %v11012 = vsel %vm1676, %v10946, 0
    %v11015 = vsel %vm1676, %v10951, 0
    %v11018 = vsel %vm1676, %v10956, 0
    %v11021 = vsel %vm1676, %v10961, 0
    %v11024 = vsel %vm1676, %v10966, 0
    %v11027 = vsel %vm1676, %v10971, 0
    %v11030 = vsel %vm1676, %v10976, 0
    %v11033 = vsel %vm1676, %v10981, 0
    %v11036 = vsel %vm1676, %v10986, 0
    %v11039 = vsel %vm1676, %v10991, 0
    %v11042 = vsel %vm1676, %v10996, 0
    %11044 = vmatprep.subr.mxu0 0.0
    %11045 = vmatpush1.msra.mxu0 %v11000
    %11046 = vmatprep.subr.mxu0 0.0
    %11047 = vmatpush1.msra.mxu0 %v11001
    %11048 = vmatprep.subr.mxu0 0.0
    %11049 = vmatpush1.msra.mxu0 %v11002
    %11050 = vmatprep.subr.mxu0 0.0
    %11051 = vmatpush1.msra.mxu0 %v11003
    %11052 = vmatprep.subr.mxu0 0.0
    %11053 = vmatpush1.msra.mxu0 %v11004
    %11054 = vmatprep.subr.mxu0 0.0
    %11055 = vmatpush1.msra.mxu0 %v11005
    %11056 = vmatprep.subr.mxu0 0.0
    %11057 = vmatpush1.msra.mxu0 %v11006
    %11058 = vmatprep.subr.mxu0 0.0
    %11059 = vmatpush1.msra.mxu0 %v11007
    %11060 = vmatprep.subr.mxu0 0.0
    %11061 = vmatpush1.msra.mxu0 0.0
    %11062 = vmatprep.subr.mxu0 0.0
    %11063 = vmatpush1.msra.mxu0 0.0
    %11064 = vmatprep.subr.mxu0 0.0
    %11065 = vmatpush1.msra.mxu0 0.0
    %11066 = vmatprep.subr.mxu0 0.0
    %11067 = vmatpush1.msra.mxu0 0.0
    %11068 = vmatprep.subr.mxu0 0.0
    %11069 = vmatpush1.msra.mxu0 0.0
    %11070 = vmatprep.subr.mxu0 0.0
    %11071 = vmatpush1.msra.mxu0 0.0
    %11072 = vmatprep.subr.mxu0 0.0
    %11073 = vmatpush1.msra.mxu0 0.0
    %11074 = vmatprep.subr.mxu0 0.0
    %11075 = vmatpush1.msra.mxu0 0.0
    %11076 = vmatprep.subr.mxu0 0.0
    %11077 = vmatpush1.msra.mxu0 0.0
    %11078 = vmatprep.subr.mxu0 0.0
    %11079 = vmatpush1.msra.mxu0 0.0
    %11080 = vmatprep.subr.mxu0 0.0
    %11081 = vmatpush1.msra.mxu0 0.0
    %11082 = vmatprep.subr.mxu0 0.0
    %11083 = vmatpush1.msra.mxu0 0.0
    %11084 = vmatprep.subr.mxu0 0.0
    %11085 = vmatpush1.msra.mxu0 0.0
    %11086 = vmatprep.subr.mxu0 0.0
    %11087 = vmatpush1.msra.mxu0 0.0
    %11088 = vmatprep.subr.mxu0 0.0
    %11089 = vmatpush1.msra.mxu0 0.0
    %11090 = vmatprep.subr.mxu0 0.0
    %11091 = vmatpush1.msra.mxu0 0.0
    %11092 = vmatprep.subr.mxu0 0.0
    %11093 = vmatpush1.msra.mxu0 0.0
    %11094 = vmatprep.subr.mxu0 0.0
    %11095 = vmatpush1.msra.mxu0 0.0
    %11096 = vmatprep.subr.mxu0 0.0
    %11097 = vmatpush1.msra.mxu0 0.0
    %11098 = vmatprep.subr.mxu0 0.0
    %11099 = vmatpush1.msra.mxu0 0.0
    %11100 = vmatprep.subr.mxu0 0.0
    %11101 = vmatpush1.msra.mxu0 0.0
    %11102 = vmatprep.subr.mxu0 0.0
    %11103 = vmatpush1.msra.mxu0 0.0
    %11104 = vmatprep.subr.mxu0 0.0
    %11105 = vmatpush1.msra.mxu0 0.0
    %11106 = vmatprep.subr.mxu0 0.0
    %11107 = vmatpush1.msra.mxu0 0.0
    %11108 = vmatprep.mubr.f32.mxu0 0.0
    %11109 = vmatmul.mubr.f32.gmra.mrb[0].mxu0 %v11009
    %v11110 = vpop.f32.mrb[0].mxu0
    %v11111 = vadd.f32 0.0, %v11110
    %v11112 = vpop.f32.mrb[0].mxu0
    %11113 = vmatprep.mubr.f32.mxu0 0.0
    %11114 = vmatmul.mubr.f32.gmra.mrb[0].mxu0 %v11012
    %v11115 = vpop.f32.mrb[0].mxu0
    %v11116 = vadd.f32 0.0, %v11115
    %v11117 = vpop.f32.mrb[0].mxu0
    %11118 = vmatprep.mubr.f32.mxu0 0.0
    %11119 = vmatmul.mubr.f32.gmra.mrb[0].mxu0 %v11015
    %v11120 = vpop.f32.mrb[0].mxu0
    %v11121 = vadd.f32 0.0, %v11120
    %v11122 = vpop.f32.mrb[0].mxu0
    %11123 = vmatprep.mubr.f32.mxu0 0.0
    %11124 = vmatmul.mubr.f32.gmra.mrb[0].mxu0 %v11018
    %v11125 = vpop.f32.mrb[0].mxu0
    %v11126 = vadd.f32 0.0, %v11125
    %v11127 = vpop.f32.mrb[0].mxu0
    %11128 = vmatprep.mubr.f32.mxu0 0.0
    %11129 = vmatmul.mubr.f32.gmra.mrb[0].mxu0 %v11021
    %v11130 = vpop.f32.mrb[0].mxu0
    %v11131 = vadd.f32 0.0, %v11130
    %v11132 = vpop.f32.mrb[0].mxu0
    %11133 = vmatprep.mubr.f32.mxu0 0.0
    %11134 = vmatmul.mubr.f32.gmra.mrb[0].mxu0 %v11024
    %v11135 = vpop.f32.mrb[0].mxu0
    %v11136 = vadd.f32 0.0, %v11135
    %v11137 = vpop.f32.mrb[0].mxu0
    %11138 = vmatprep.mubr.f32.mxu0 0.0
    %11139 = vmatmul.mubr.f32.gmra.mrb[0].mxu0 %v11027
    %v11140 = vpop.f32.mrb[0].mxu0
    %v11141 = vadd.f32 0.0, %v11140
    %v11142 = vpop.f32.mrb[0].mxu0
    %11143 = vmatprep.mubr.f32.mxu0 0.0
    %11144 = vmatmul.mubr.f32.gmra.mrb[0].mxu0 %v11030
    %v11145 = vpop.f32.mrb[0].mxu0
    %v11146 = vadd.f32 0.0, %v11145
    %v11147 = vpop.f32.mrb[0].mxu0
    %11148 = vmatprep.mubr.f32.mxu0 0.0
    %11149 = vmatmul.mubr.f32.gmra.mrb[0].mxu0 %v11033
    %v11150 = vpop.f32.mrb[0].mxu0
    %v11151 = vadd.f32 0.0, %v11150
    %v11152 = vpop.f32.mrb[0].mxu0
    %11153 = vmatprep.mubr.f32.mxu0 0.0
    %11154 = vmatmul.mubr.f32.gmra.mrb[0].mxu0 %v11036
    %v11155 = vpop.f32.mrb[0].mxu0
    %v11156 = vadd.f32 0.0, %v11155
    %v11157 = vpop.f32.mrb[0].mxu0
    %11158 = vmatprep.mubr.f32.mxu0 0.0
    %11159 = vmatmul.mubr.f32.gmra.mrb[0].mxu0 %v11039
    %v11160 = vpop.f32.mrb[0].mxu0
    %v11161 = vadd.f32 0.0, %v11160
    %v11162 = vpop.f32.mrb[0].mxu0
    %11163 = vmatprep.mubr.f32.mxu0 0.0
    %11164 = vmatmul.mubr.f32.gmra.mrb[0].mxu0 %v11042
    %v11165 = vpop.f32.mrb[0].mxu0
    %v11166 = vadd.f32 0.0, %v11165
    %v11167 = vpop.f32.mrb[0].mxu0
    %11168 = vdwg.mxu0
    %v11169 = vadd.f32 %v10849, %v11111
    %v11170 = vadd.f32 %v10850, %v11116
    %v11171 = vadd.f32 %v10851, %v11121
    %v11172 = vadd.f32 %v10852, %v11126
    %v11173 = vadd.f32 %v10853, %v11131
    %v11174 = vadd.f32 %v10854, %v11136
    %v11175 = vadd.f32 %v10855, %v11141
    %v11176 = vadd.f32 %v10856, %v11146
    %v11177 = vadd.f32 %v10857, %v11151
    %v11178 = vadd.f32 %v10858, %v11156
    %v11179 = vadd.f32 %v10859, %v11161
    %v11180 = vadd.f32 %v10860, %v11166
    %s11181 = scalar_lea.vmem %s24, 384
    %v11182 = vld [vmem:[%s11181] sm:$0xff]
    %v11183 = vld [vmem:[%s11181 + $0x8] sm:$0xff]
    %v11184 = vld [vmem:[%s11181 + $0x10] sm:$0xff]
    %v11185 = vld [vmem:[%s11181 + $0x18] sm:$0xff]
    %v11186 = vld [vmem:[%s11181 + $0x20] sm:$0xff]
    %v11187 = vld [vmem:[%s11181 + $0x28] sm:$0xff]
    %v11188 = vld [vmem:[%s11181 + $0x30] sm:$0xff]
    %v11189 = vld [vmem:[%s11181 + $0x38] sm:$0xff]
    %v11190 = vld [vmem:[%s11181 + $0x40] sm:$0xff]
    %v11191 = vld [vmem:[%s11181 + $0x48] sm:$0xff]
    %v11192 = vld [vmem:[%s11181 + $0x50] sm:$0xff]
    %v11193 = vld [vmem:[%s11181 + $0x58] sm:$0xff]
    %11194 = vmatprep.subr.mxu0 0.0
    %11195 = vmatpush1.msra.mxu0 %v9911
    %11196 = vmatprep.subr.mxu0 0.0
    %11197 = vmatpush1.msra.mxu0 %v9912
    %11198 = vmatprep.subr.mxu0 0.0
    %11199 = vmatpush1.msra.mxu0 %v9913
    %11200 = vmatprep.subr.mxu0 0.0
    %11201 = vmatpush1.msra.mxu0 %v9914
    %11202 = vmatprep.subr.mxu0 0.0
    %11203 = vmatpush1.msra.mxu0 %v9915
    %11204 = vmatprep.subr.mxu0 0.0
    %11205 = vmatpush1.msra.mxu0 %v9916
    %11206 = vmatprep.subr.mxu0 0.0
    %11207 = vmatpush1.msra.mxu0 %v9917
    %11208 = vmatprep.subr.mxu0 0.0
    %11209 = vmatpush1.msra.mxu0 %v9918
    %11210 = vmatprep.subr.mxu0 0.0
    %11211 = vmatpush1.msra.mxu0 %v9919
    %11212 = vmatprep.subr.mxu0 0.0
    %11213 = vmatpush1.msra.mxu0 %v9920
    %11214 = vmatprep.subr.mxu0 0.0
    %11215 = vmatpush1.msra.mxu0 %v9921
    %11216 = vmatprep.subr.mxu0 0.0
    %11217 = vmatpush1.msra.mxu0 %v9922
    %11218 = vmatprep.subr.mxu0 0.0
    %11219 = vmatpush1.msra.mxu0 %v9923
    %11220 = vmatprep.subr.mxu0 0.0
    %11221 = vmatpush1.msra.mxu0 %v9924
    %11222 = vmatprep.subr.mxu0 0.0
    %11223 = vmatpush1.msra.mxu0 %v9925
    %11224 = vmatprep.subr.mxu0 0.0
    %11225 = vmatpush1.msra.mxu0 %v9926
    %11226 = vmatprep.subr.mxu0 0.0
    %11227 = vmatpush1.msra.mxu0 0.0
    %11228 = vmatprep.subr.mxu0 0.0
    %11229 = vmatpush1.msra.mxu0 0.0
    %11230 = vmatprep.subr.mxu0 0.0
    %11231 = vmatpush1.msra.mxu0 0.0
    %11232 = vmatprep.subr.mxu0 0.0
    %11233 = vmatpush1.msra.mxu0 0.0
    %11234 = vmatprep.subr.mxu0 0.0
    %11235 = vmatpush1.msra.mxu0 0.0
    %11236 = vmatprep.subr.mxu0 0.0
    %11237 = vmatpush1.msra.mxu0 0.0
    %11238 = vmatprep.subr.mxu0 0.0
    %11239 = vmatpush1.msra.mxu0 0.0
    %11240 = vmatprep.subr.mxu0 0.0
    %11241 = vmatpush1.msra.mxu0 0.0
    %11242 = vmatprep.subr.mxu0 0.0
    %11243 = vmatpush1.msra.mxu0 0.0
    %11244 = vmatprep.subr.mxu0 0.0
    %11245 = vmatpush1.msra.mxu0 0.0
    %11246 = vmatprep.subr.mxu0 0.0
    %11247 = vmatpush1.msra.mxu0 0.0
    %11248 = vmatprep.subr.mxu0 0.0
    %11249 = vmatpush1.msra.mxu0 0.0
    %11250 = vmatprep.subr.mxu0 0.0
    %11251 = vmatpush1.msra.mxu0 0.0
    %11252 = vmatprep.subr.mxu0 0.0
    %11253 = vmatpush1.msra.mxu0 0.0
    %11254 = vmatprep.subr.mxu0 0.0
    %11255 = vmatpush1.msra.mxu0 0.0
    %11256 = vmatprep.subr.mxu0 0.0
    %11257 = vmatpush1.msra.mxu0 0.0
    %11258 = vmatprep.mubr.f32.mxu0 0.0
    %11259 = vmatmul.mubr.f32.gmra.mrb[0].mxu0 %v11182
    %v11260 = vpop.f32.mrb[0].mxu0
    %v11261 = vadd.f32 0.0, %v11260
    %v11262 = vpop.f32.mrb[0].mxu0
    %11263 = vmatprep.mubr.f32.mxu0 0.0
    %11264 = vmatmul.mubr.f32.gmra.mrb[0].mxu0 %v11183
    %v11265 = vpop.f32.mrb[0].mxu0
    %v11266 = vadd.f32 0.0, %v11265
    %v11267 = vpop.f32.mrb[0].mxu0
    %11268 = vmatprep.mubr.f32.mxu0 0.0
    %11269 = vmatmul.mubr.f32.gmra.mrb[0].mxu0 %v11184
    %v11270 = vpop.f32.mrb[0].mxu0
    %v11271 = vadd.f32 0.0, %v11270
    %v11272 = vpop.f32.mrb[0].mxu0
    %11273 = vmatprep.mubr.f32.mxu0 0.0
    %11274 = vmatmul.mubr.f32.gmra.mrb[0].mxu0 %v11185
    %v11275 = vpop.f32.mrb[0].mxu0
    %v11276 = vadd.f32 0.0, %v11275
    %v11277 = vpop.f32.mrb[0].mxu0
    %11278 = vmatprep.mubr.f32.mxu0 0.0
    %11279 = vmatmul.mubr.f32.gmra.mrb[0].mxu0 %v11186
    %v11280 = vpop.f32.mrb[0].mxu0
    %v11281 = vadd.f32 0.0, %v11280
    %v11282 = vpop.f32.mrb[0].mxu0
    %11283 = vmatprep.mubr.f32.mxu0 0.0
    %11284 = vmatmul.mubr.f32.gmra.mrb[0].mxu0 %v11187
    %v11285 = vpop.f32.mrb[0].mxu0
    %v11286 = vadd.f32 0.0, %v11285
    %v11287 = vpop.f32.mrb[0].mxu0
    %11288 = vmatprep.mubr.f32.mxu0 0.0
    %11289 = vmatmul.mubr.f32.gmra.mrb[0].mxu0 %v11188
    %v11290 = vpop.f32.mrb[0].mxu0
    %v11291 = vadd.f32 0.0, %v11290
    %v11292 = vpop.f32.mrb[0].mxu0
    %11293 = vmatprep.mubr.f32.mxu0 0.0
    %11294 = vmatmul.mubr.f32.gmra.mrb[0].mxu0 %v11189
    %v11295 = vpop.f32.mrb[0].mxu0
    %v11296 = vadd.f32 0.0, %v11295
    %v11297 = vpop.f32.mrb[0].mxu0
    %11298 = vmatprep.mubr.f32.mxu0 0.0
    %11299 = vmatmul.mubr.f32.gmra.mrb[0].mxu0 %v11190
    %v11300 = vpop.f32.mrb[0].mxu0
    %v11301 = vadd.f32 0.0, %v11300
    %v11302 = vpop.f32.mrb[0].mxu0
    %11303 = vmatprep.mubr.f32.mxu0 0.0
    %11304 = vmatmul.mubr.f32.gmra.mrb[0].mxu0 %v11191
    %v11305 = vpop.f32.mrb[0].mxu0
    %v11306 = vadd.f32 0.0, %v11305
    %v11307 = vpop.f32.mrb[0].mxu0
    %11308 = vmatprep.mubr.f32.mxu0 0.0
    %11309 = vmatmul.mubr.f32.gmra.mrb[0].mxu0 %v11192
    %v11310 = vpop.f32.mrb[0].mxu0
    %v11311 = vadd.f32 0.0, %v11310
    %v11312 = vpop.f32.mrb[0].mxu0
    %11313 = vmatprep.mubr.f32.mxu0 0.0
    %11314 = vmatmul.mubr.f32.gmra.mrb[0].mxu0 %v11193
    %v11315 = vpop.f32.mrb[0].mxu0
    %v11316 = vadd.f32 0.0, %v11315
    %v11317 = vpop.f32.mrb[0].mxu0
    %11318 = vdwg.mxu0
    %s11319 = scalar_lea.vmem %s25, 256
    %v11320 = vld [vmem:[%s11319] sm:$0xff]
    %v11321 = vld [vmem:[%s11319 + $0x8] sm:$0xff]
    %v11322 = vld [vmem:[%s11319 + $0x10] sm:$0xff]
    %v11323 = vld [vmem:[%s11319 + $0x18] sm:$0xff]
    %v11324 = vld [vmem:[%s11319 + $0x20] sm:$0xff]
    %v11325 = vld [vmem:[%s11319 + $0x28] sm:$0xff]
    %v11326 = vld [vmem:[%s11319 + $0x30] sm:$0xff]
    %v11327 = vld [vmem:[%s11319 + $0x38] sm:$0xff]
    %v11329 = vsel %vm1676, %v11261, 0
    %v11332 = vsel %vm1676, %v11266, 0
    %v11335 = vsel %vm1676, %v11271, 0
    %v11338 = vsel %vm1676, %v11276, 0
    %v11341 = vsel %vm1676, %v11281, 0
    %v11344 = vsel %vm1676, %v11286, 0
    %v11347 = vsel %vm1676, %v11291, 0
    %v11350 = vsel %vm1676, %v11296, 0
    %v11353 = vsel %vm1676, %v11301, 0
    %v11356 = vsel %vm1676, %v11306, 0
    %v11359 = vsel %vm1676, %v11311, 0
    %v11362 = vsel %vm1676, %v11316, 0
    %11364 = vmatprep.subr.mxu0 0.0
    %11365 = vmatpush1.msra.mxu0 %v11320
    %11366 = vmatprep.subr.mxu0 0.0
    %11367 = vmatpush1.msra.mxu0 %v11321
    %11368 = vmatprep.subr.mxu0 0.0
    %11369 = vmatpush1.msra.mxu0 %v11322
    %11370 = vmatprep.subr.mxu0 0.0
    %11371 = vmatpush1.msra.mxu0 %v11323
    %11372 = vmatprep.subr.mxu0 0.0
    %11373 = vmatpush1.msra.mxu0 %v11324
    %11374 = vmatprep.subr.mxu0 0.0
    %11375 = vmatpush1.msra.mxu0 %v11325
    %11376 = vmatprep.subr.mxu0 0.0
    %11377 = vmatpush1.msra.mxu0 %v11326
    %11378 = vmatprep.subr.mxu0 0.0
    %11379 = vmatpush1.msra.mxu0 %v11327
    %11380 = vmatprep.subr.mxu0 0.0
    %11381 = vmatpush1.msra.mxu0 0.0
    %11382 = vmatprep.subr.mxu0 0.0
    %11383 = vmatpush1.msra.mxu0 0.0
    %11384 = vmatprep.subr.mxu0 0.0
    %11385 = vmatpush1.msra.mxu0 0.0
    %11386 = vmatprep.subr.mxu0 0.0
    %11387 = vmatpush1.msra.mxu0 0.0
    %11388 = vmatprep.subr.mxu0 0.0
    %11389 = vmatpush1.msra.mxu0 0.0
    %11390 = vmatprep.subr.mxu0 0.0
    %11391 = vmatpush1.msra.mxu0 0.0
    %11392 = vmatprep.subr.mxu0 0.0
    %11393 = vmatpush1.msra.mxu0 0.0
    %11394 = vmatprep.subr.mxu0 0.0
    %11395 = vmatpush1.msra.mxu0 0.0
    %11396 = vmatprep.subr.mxu0 0.0
    %11397 = vmatpush1.msra.mxu0 0.0
    %11398 = vmatprep.subr.mxu0 0.0
    %11399 = vmatpush1.msra.mxu0 0.0
    %11400 = vmatprep.subr.mxu0 0.0
    %11401 = vmatpush1.msra.mxu0 0.0
    %11402 = vmatprep.subr.mxu0 0.0
    %11403 = vmatpush1.msra.mxu0 0.0
    %11404 = vmatprep.subr.mxu0 0.0
    %11405 = vmatpush1.msra.mxu0 0.0
    %11406 = vmatprep.subr.mxu0 0.0
    %11407 = vmatpush1.msra.mxu0 0.0
    %11408 = vmatprep.subr.mxu0 0.0
    %11409 = vmatpush1.msra.mxu0 0.0
    %11410 = vmatprep.subr.mxu0 0.0
    %11411 = vmatpush1.msra.mxu0 0.0
    %11412 = vmatprep.subr.mxu0 0.0
    %11413 = vmatpush1.msra.mxu0 0.0
    %11414 = vmatprep.subr.mxu0 0.0
    %11415 = vmatpush1.msra.mxu0 0.0
    %11416 = vmatprep.subr.mxu0 0.0
    %11417 = vmatpush1.msra.mxu0 0.0
    %11418 = vmatprep.subr.mxu0 0.0
    %11419 = vmatpush1.msra.mxu0 0.0
    %11420 = vmatprep.subr.mxu0 0.0
    %11421 = vmatpush1.msra.mxu0 0.0
    %11422 = vmatprep.subr.mxu0 0.0
    %11423 = vmatpush1.msra.mxu0 0.0
    %11424 = vmatprep.subr.mxu0 0.0
    %11425 = vmatpush1.msra.mxu0 0.0
    %11426 = vmatprep.subr.mxu0 0.0
    %11427 = vmatpush1.msra.mxu0 0.0
    %11428 = vmatprep.mubr.f32.mxu0 0.0
    %11429 = vmatmul.mubr.f32.gmra.mrb[0].mxu0 %v11329
    %v11430 = vpop.f32.mrb[0].mxu0
    %v11431 = vadd.f32 0.0, %v11430
    %v11432 = vpop.f32.mrb[0].mxu0
    %11433 = vmatprep.mubr.f32.mxu0 0.0
    %11434 = vmatmul.mubr.f32.gmra.mrb[0].mxu0 %v11332
    %v11435 = vpop.f32.mrb[0].mxu0
    %v11436 = vadd.f32 0.0, %v11435
    %v11437 = vpop.f32.mrb[0].mxu0
    %11438 = vmatprep.mubr.f32.mxu0 0.0
    %11439 = vmatmul.mubr.f32.gmra.mrb[0].mxu0 %v11335
    %v11440 = vpop.f32.mrb[0].mxu0
    %v11441 = vadd.f32 0.0, %v11440
    %v11442 = vpop.f32.mrb[0].mxu0
    %11443 = vmatprep.mubr.f32.mxu0 0.0
    %11444 = vmatmul.mubr.f32.gmra.mrb[0].mxu0 %v11338
    %v11445 = vpop.f32.mrb[0].mxu0
    %v11446 = vadd.f32 0.0, %v11445
    %v11447 = vpop.f32.mrb[0].mxu0
    %11448 = vmatprep.mubr.f32.mxu0 0.0
    %11449 = vmatmul.mubr.f32.gmra.mrb[0].mxu0 %v11341
    %v11450 = vpop.f32.mrb[0].mxu0
    %v11451 = vadd.f32 0.0, %v11450
    %v11452 = vpop.f32.mrb[0].mxu0
    %11453 = vmatprep.mubr.f32.mxu0 0.0
    %11454 = vmatmul.mubr.f32.gmra.mrb[0].mxu0 %v11344
    %v11455 = vpop.f32.mrb[0].mxu0
    %v11456 = vadd.f32 0.0, %v11455
    %v11457 = vpop.f32.mrb[0].mxu0
    %11458 = vmatprep.mubr.f32.mxu0 0.0
    %11459 = vmatmul.mubr.f32.gmra.mrb[0].mxu0 %v11347
    %v11460 = vpop.f32.mrb[0].mxu0
    %v11461 = vadd.f32 0.0, %v11460
    %v11462 = vpop.f32.mrb[0].mxu0
    %11463 = vmatprep.mubr.f32.mxu0 0.0
    %11464 = vmatmul.mubr.f32.gmra.mrb[0].mxu0 %v11350
    %v11465 = vpop.f32.mrb[0].mxu0
    %v11466 = vadd.f32 0.0, %v11465
    %v11467 = vpop.f32.mrb[0].mxu0
    %11468 = vmatprep.mubr.f32.mxu0 0.0
    %11469 = vmatmul.mubr.f32.gmra.mrb[0].mxu0 %v11353
    %v11470 = vpop.f32.mrb[0].mxu0
    %v11471 = vadd.f32 0.0, %v11470
    %v11472 = vpop.f32.mrb[0].mxu0
    %11473 = vmatprep.mubr.f32.mxu0 0.0
    %11474 = vmatmul.mubr.f32.gmra.mrb[0].mxu0 %v11356
    %v11475 = vpop.f32.mrb[0].mxu0
    %v11476 = vadd.f32 0.0, %v11475
    %v11477 = vpop.f32.mrb[0].mxu0
    %11478 = vmatprep.mubr.f32.mxu0 0.0
    %11479 = vmatmul.mubr.f32.gmra.mrb[0].mxu0 %v11359
    %v11480 = vpop.f32.mrb[0].mxu0
    %v11481 = vadd.f32 0.0, %v11480
    %v11482 = vpop.f32.mrb[0].mxu0
    %11483 = vmatprep.mubr.f32.mxu0 0.0
    %11484 = vmatmul.mubr.f32.gmra.mrb[0].mxu0 %v11362
    %v11485 = vpop.f32.mrb[0].mxu0
    %v11486 = vadd.f32 0.0, %v11485
    %v11487 = vpop.f32.mrb[0].mxu0
    %11488 = vdwg.mxu0
    %v11489 = vadd.f32 %v11169, %v11431
    %v11490 = vadd.f32 %v11170, %v11436
    %v11491 = vadd.f32 %v11171, %v11441
    %v11492 = vadd.f32 %v11172, %v11446
    %v11493 = vadd.f32 %v11173, %v11451
    %v11494 = vadd.f32 %v11174, %v11456
    %v11495 = vadd.f32 %v11175, %v11461
    %v11496 = vadd.f32 %v11176, %v11466
    %v11497 = vadd.f32 %v11177, %v11471
    %v11498 = vadd.f32 %v11178, %v11476
    %v11499 = vadd.f32 %v11179, %v11481
    %v11500 = vadd.f32 %v11180, %v11486
    %v11501 = vld [vmem:[%s26] sm:$0xff]
    %v11502 = vld [vmem:[%s26 + $0x8] sm:$0xff]
    %v11503 = vld [vmem:[%s26 + $0x10] sm:$0xff]
    %v11504 = vld [vmem:[%s26 + $0x18] sm:$0xff]
    %v11505 = vld [vmem:[%s26 + $0x20] sm:$0xff]
    %v11506 = vld [vmem:[%s26 + $0x28] sm:$0xff]
    %v11507 = vld [vmem:[%s26 + $0x30] sm:$0xff]
    %v11508 = vld [vmem:[%s26 + $0x38] sm:$0xff]
    %v11509 = vld [vmem:[%s26 + $0x40] sm:$0xff]
    %v11510 = vld [vmem:[%s26 + $0x48] sm:$0xff]
    %v11511 = vld [vmem:[%s26 + $0x50] sm:$0xff]
    %v11512 = vld [vmem:[%s26 + $0x58] sm:$0xff]
    %11514 = vset.pattern.permute.xlu0 0
    %11515 = vperm.xlu0 %11514, %v11501
    %v11516 = vpop.permute.xlu0 %11515
    %11519 = vset.pattern.permute.xlu0 0
    %11520 = vperm.xlu0 %11519, %v11502
    %v11521 = vpop.permute.xlu0 %11520
    %11524 = vset.pattern.permute.xlu0 0
    %11525 = vperm.xlu0 %11524, %v11503
    %v11526 = vpop.permute.xlu0 %11525
    %11529 = vset.pattern.permute.xlu0 0
    %11530 = vperm.xlu0 %11529, %v11504
    %v11531 = vpop.permute.xlu0 %11530
    %11534 = vset.pattern.permute.xlu0 0
    %11535 = vperm.xlu0 %11534, %v11505
    %v11536 = vpop.permute.xlu0 %11535
    %11539 = vset.pattern.permute.xlu0 0
    %11540 = vperm.xlu0 %11539, %v11506
    %v11541 = vpop.permute.xlu0 %11540
    %11544 = vset.pattern.permute.xlu0 0
    %11545 = vperm.xlu0 %11544, %v11507
    %v11546 = vpop.permute.xlu0 %11545
    %11549 = vset.pattern.permute.xlu0 0
    %11550 = vperm.xlu0 %11549, %v11508
    %v11551 = vpop.permute.xlu0 %11550
    %11554 = vset.pattern.permute.xlu0 0
    %11555 = vperm.xlu0 %11554, %v11509
    %v11556 = vpop.permute.xlu0 %11555
    %11559 = vset.pattern.permute.xlu0 0
    %11560 = vperm.xlu0 %11559, %v11510
    %v11561 = vpop.permute.xlu0 %11560
    %11564 = vset.pattern.permute.xlu0 0
    %11565 = vperm.xlu0 %11564, %v11511
    %v11566 = vpop.permute.xlu0 %11565
    %11569 = vset.pattern.permute.xlu0 0
    %11570 = vperm.xlu0 %11569, %v11512
    %v11571 = vpop.permute.xlu0 %11570
    %v11573 = vadd.f32 %v11489, %v11516
    %v11574 = vadd.f32 %v11490, %v11521
    %v11575 = vadd.f32 %v11491, %v11526
    %v11576 = vadd.f32 %v11492, %v11531
    %v11577 = vadd.f32 %v11493, %v11536
    %v11578 = vadd.f32 %v11494, %v11541
    %v11579 = vadd.f32 %v11495, %v11546
    %v11580 = vadd.f32 %v11496, %v11551
    %v11581 = vadd.f32 %v11497, %v11556
    %v11582 = vadd.f32 %v11498, %v11561
    %v11583 = vadd.f32 %v11499, %v11566
    %v11584 = vadd.f32 %v11500, %v11571
    %v11585 = vtanh.pop %v11573
    %v11586 = vtanh.pop %v11574
    %v11587 = vtanh.pop %v11575
    %v11588 = vtanh.pop %v11576
    %v11589 = vtanh.pop %v11577
    %v11590 = vtanh.pop %v11578
    %v11591 = vtanh.pop %v11579
    %v11592 = vtanh.pop %v11580
    %v11593 = vtanh.pop %v11581
    %v11594 = vtanh.pop %v11582
    %v11595 = vtanh.pop %v11583
    %v11596 = vtanh.pop %v11584
    %11597 = vst.msk [vmem:[%s27] sm:$0xff] %vm1676, %v11585
    %11598 = vst.msk [vmem:[%s27 + $0x8] sm:$0xff] %vm1676, %v11586
    %11599 = vst.msk [vmem:[%s27 + $0x10] sm:$0xff] %vm1676, %v11587
    %11600 = vst.msk [vmem:[%s27 + $0x18] sm:$0xff] %vm1676, %v11588
    %11601 = vst.msk [vmem:[%s27 + $0x20] sm:$0xff] %vm1676, %v11589
    %11602 = vst.msk [vmem:[%s27 + $0x28] sm:$0xff] %vm1676, %v11590
    %11603 = vst.msk [vmem:[%s27 + $0x30] sm:$0xff] %vm1676, %v11591
    %11604 = vst.msk [vmem:[%s27 + $0x38] sm:$0xff] %vm1676, %v11592
    %11605 = vst.msk [vmem:[%s27 + $0x40] sm:$0xff] %vm1676, %v11593
    %11606 = vst.msk [vmem:[%s27 + $0x48] sm:$0xff] %vm1676, %v11594
    %11607 = vst.msk [vmem:[%s27 + $0x50] sm:$0xff] %vm1676, %v11595
    %11608 = vst.msk [vmem:[%s27 + $0x58] sm:$0xff] %vm1676, %v11596
    // Predicated region
    $region142: #{decoder_forward.1} parent=1 // pred_check
      _
    $region143: #{decoder_forward.1} parent=1 // pred_check_branch
      %11610 = sbr.rel (0) target = $region145
    $region144: #{decoder_forward.1} parent=1 // pred_region
      _
    $region145: #{decoder_forward.1} parent=1 // pred_fallthru
      _
    // Predicated region
    $region146: #{decoder_forward.1} parent=1 // pred_check
      _
    $region147: #{decoder_forward.1} parent=1 // pred_check_branch
      %11612 = sbr.rel (0) target = $region149
    $region148: #{decoder_forward.1} parent=1 // pred_region
      _
    $region149: #{decoder_forward.1} parent=1 // pred_fallthru
      _
    %11613 = vsyncpa [#allocation3], 1
    %11614 = vsyncpa [#allocation5], 1
    %11615 = vsyncpa [#allocation8], 1
    %11616 = vsyncpa [#allocation11], 1
    %11617 = vsyncpa [#allocation14], 1

</llo_original>
